<compile_context>
chip_gen: v7x
topology: tpu7x:2x2x1
jax: 0.10.0
libtpu: 0.0.40
codegen_flags: <defaults>
</compile_context>

<pallas_src>
import functools

import numpy as np
import jax
import jax.numpy as jnp
from jax import lax
from jax.experimental import pallas as pl
from jax.experimental.pallas import tpu as pltpu


def _preact_bottleneck_kernel(x_ref, s1_ref, b1_ref, w1_ref, s2_ref, b2_ref,
                              w2_ref, s3_ref, b3_ref, w3_ref, *rest,
                              has_shortcut_conv, H, W, compute_dtype):
    if has_shortcut_conv:
        wsc_ref, out_ref, pad_ref = rest
    else:
        wsc_ref = None
        out_ref, pad_ref = rest

    tile_n, _, Cin = x_ref.shape
    P = w1_ref.shape[-1]
    Cout = w3_ref.shape[-1]
    M = tile_n * H * W
    Wp = W + 2
    f32 = jnp.float32

    def bn1_relu_bf16():
        # Recomputed for the shortcut at the end: cheap VPU work hidden under
        # the MXU, shortens the live range of the (M, Cin) bf16 value.
        x = x_ref[...].reshape(M, Cin)
        pre = jnp.maximum(x.astype(f32) * s1_ref[...] + b1_ref[...], 0.0)
        return pre.astype(compute_dtype)

    # ---- BN1 + ReLU -> conv1 (1x1) -> BN2 -> ReLU ----------------------------
    t = jnp.dot(bn1_relu_bf16(), w1_ref[...], preferred_element_type=f32)
    t = jnp.maximum(t * s2_ref[...] + b2_ref[...], 0.0)

    # ---- conv2 (3x3, stride=1, pad=1) -----------------------------------------
    # Fill the bf16 padded scratch with full-width row stores only (offsets on
    # a leading, untiled axis), so no unaligned packed-dtype stores.  The
    # top/bottom halo rows are re-zeroed every step because the grid axis is
    # "parallel" (cannot gate on program_id == 0).
    zrow = jnp.zeros((tile_n, 1, Wp, P), compute_dtype)
    pad_ref[:, 0:1, :, :] = zrow
    pad_ref[:, H + 1:H + 2, :, :] = zrow
    zcol = jnp.zeros((tile_n, H, 1, P), f32)
    t_wide = jnp.concatenate([zcol, t.reshape(tile_n, H, W, P), zcol], axis=2)
    pad_ref[:, 1:H + 1, :, :] = t_wide.astype(compute_dtype)

    # "Shift the outputs, not the inputs": per row-tap dh the LHS is the
    # contiguous (tile_n*H*(W+2), P) slab; each column tap dw is a K=P matmul
    # over the full padded width and only the interior W result columns are
    # accumulated in a local f32 value (~(W+2)/W extra FLOPs, no im2col copy,
    # no accumulator scratch round-trip).
    acc = None
    for dh in range(3):
        lhs = pad_ref[:, dh:dh + H, :, :].reshape(tile_n * H * Wp, P)
        for dw in range(3):
            full = jnp.dot(lhs, w2_ref[dh, dw], preferred_element_type=f32)
            tap = full.reshape(tile_n, H, Wp, P)[:, :, dw:dw + W, :]
            acc = tap if acc is None else acc + tap
    acc = acc.reshape(M, P)

    # ---- BN3 -> ReLU -> conv3 (1x1) -------------------------------------------
    t3 = jnp.maximum(acc * s3_ref[...] + b3_ref[...], 0.0)
    out = jnp.dot(t3.astype(compute_dtype), w3_ref[...],
                  preferred_element_type=f32)

    # ---- shortcut + residual add (f32), single cast to the output dtype -------
    if wsc_ref is not None:
        out = out + jnp.dot(bn1_relu_bf16(), wsc_ref[...],
                            preferred_element_type=f32)
    else:
        out = out + x_ref[...].reshape(M, Cin).astype(f32)   # Cin == Cout

    out_ref[...] = out.reshape(tile_n, H * W, Cout).astype(out_ref.dtype)


# ----------------------------- tiling heuristics -------------------------------

def _vmem_limit_bytes():
    cap = 64 << 20                      # conservative default (v7x physical)
    try:
        info = pltpu.get_tpu_info()
        cap = int(getattr(info, "vmem_capacity_bytes", cap)) or cap
    except Exception:
        pass
    # Leave headroom for Mosaic-internal scratch:
    #   v5e/v6e (128 MiB physical) -> 96 MiB, v7x (64 MiB physical) -> 48 MiB.
    return max(32 << 20, min(int(0.75 * cap), cap - (16 << 20)))


def _auto_tile_n(N, H, W, Cin, P, Cout, has_sc, compute_dtype, out_dtype,
                 budget):
    cbytes = jnp.dtype(compute_dtype).itemsize
    obytes = jnp.dtype(out_dtype).itemsize
    # Resident weights (Pallas double-buffers them by default; see TODO above).
    wbytes = 2 * cbytes * (Cin * P + 9 * P * P + P * Cout
                           + (Cin * Cout if has_sc else 0))

    def footprint(tn):
        M = tn * H * W
        x_blk = 2 * M * Cin * cbytes                  # double-buffered in block
        o_blk = 2 * M * Cout * obytes                 # double-buffered out block
        pad = tn * (H + 2) * (W + 2) * P * cbytes     # bf16 padded scratch
        live = M * (Cin + 4 * P + Cout) * 4           # rough f32 intermediates
        return wbytes + x_blk + o_blk + pad + live

    divisors = [d for d in range(1, N + 1) if N % d == 0]
    fitting = [d for d in divisors if footprint(d) <= budget] or [1]
    # Smallest tile that already amortizes the ~0.35us per-step overhead
    # (M >= 2048 rows); otherwise the largest tile that fits VMEM.
    big_enough = [d for d in fitting if d * H * W >= 2048]
    return big_enough[0] if big_enough else fitting[-1]


# ----------------------------- wrapper ------------------------------------------

def preact_bottleneck(x_nhwc, params, *, stride=1, tile_n=None,
                      compute_dtype=jnp.bfloat16, out_dtype=None):
    """Pallas forward matching PreActBottleneck.forward (eval-mode BN), NHWC."""
    assert stride == 1, "TODO(synk): stride>1 not implemented"
    N, H, W, Cin = x_nhwc.shape
    P = params["w1"].shape[1]
    Cout = params["w3"].shape[1]
    has_sc = params["wsc"] is not None
    if not has_sc:
        assert Cin == Cout, "identity shortcut requires Cin == Cout"
    out_dtype = compute_dtype if out_dtype is None else out_dtype

    vmem_limit = _vmem_limit_bytes()
    if tile_n is None:
        tile_n = _auto_tile_n(N, H, W, Cin, P, Cout, has_sc, compute_dtype,
                              out_dtype, budget=max(8 << 20,
                                                    vmem_limit - (8 << 20)))
    assert N % tile_n == 0

    # Activations / weights in bf16 (halves HBM traffic, native MXU input).
    x = x_nhwc.astype(compute_dtype).reshape(N, H * W, Cin)
    w1 = params["w1"].astype(compute_dtype)                  # (Cin, P)
    w2 = params["w2"].astype(compute_dtype)                  # (3, 3, P, P) HWIO
    w3 = params["w3"].astype(compute_dtype)                  # (P, Cout)

    const2 = lambda i: (0, 0)
    const4 = lambda i: (0, 0, 0, 0)
    operands = [x, params["s1"], params["b1"], w1,
                params["s2"], params["b2"], w2,
                params["s3"], params["b3"], w3]
    in_specs = [
        pl.BlockSpec((tile_n, H * W, Cin), lambda i: (i, 0, 0)),
        pl.BlockSpec((1, Cin), const2), pl.BlockSpec((1, Cin), const2),
        pl.BlockSpec((Cin, P), const2),
        pl.BlockSpec((1, P), const2), pl.BlockSpec((1, P), const2),
        pl.BlockSpec((3, 3, P, P), const4),
        pl.BlockSpec((1, P), const2), pl.BlockSpec((1, P), const2),
        pl.BlockSpec((P, Cout), const2),
    ]
    if has_sc:
        operands.append(params["wsc"].astype(compute_dtype))
        in_specs.append(pl.BlockSpec((Cin, Cout), const2))

    M_total = N * H * W
    flops = (2 * M_total * (Cin * P + P * Cout)
             + 2 * N * H * (W + 2) * 9 * P * P)
    if has_sc:
        flops += 2 * M_total * Cin * Cout
    weight_bytes = sum(int(np.prod(op.shape)) * op.dtype.itemsize
                       for op in operands[1:])
    bytes_accessed = (int(x.size) * x.dtype.itemsize
                      + M_total * Cout * jnp.dtype(out_dtype).itemsize
                      + weight_bytes)

    kernel = functools.partial(_preact_bottleneck_kernel,
                               has_shortcut_conv=has_sc, H=H, W=W,
                               compute_dtype=compute_dtype)

    out = pl.pallas_call(
        kernel,
        out_shape=jax.ShapeDtypeStruct((N, H * W, Cout), out_dtype),
        grid_spec=pltpu.PrefetchScalarGridSpec(
            num_scalar_prefetch=0,
            grid=(N // tile_n,),
            in_specs=in_specs,
            out_specs=pl.BlockSpec((tile_n, H * W, Cout), lambda i: (i, 0, 0)),
            scratch_shapes=[
                pltpu.VMEM((tile_n, H + 2, W + 2, P), compute_dtype),
            ]),
        compiler_params=pltpu.CompilerParams(
            dimension_semantics=("parallel",),
            vmem_limit_bytes=int(vmem_limit)),
        cost_estimate=pl.CostEstimate(flops=int(flops), transcendentals=0,
                                      bytes_accessed=int(bytes_accessed)),
    )(*operands)
    return out.reshape(N, H, W, Cout)


# ----------------------------- parameter setup --------------------------------

def _fold_bn(kg, kb, km, kv, c, eps=1e-5):
    gamma = 1.0 + 0.1 * jax.random.normal(kg, (c,), jnp.float32)
    beta = 0.1 * jax.random.normal(kb, (c,), jnp.float32)
    mean = 0.1 * jax.random.normal(km, (c,), jnp.float32)
    var = jax.nn.softplus(jax.random.normal(kv, (c,), jnp.float32)) + 0.5
    s = gamma / jnp.sqrt(var + eps)
    b = beta - mean * s
    return s.reshape(1, c), b.reshape(1, c)


def init_params(key, in_planes, planes, stride=1, expansion=4):
    ks = jax.random.split(key, 16)
    out_planes = expansion * planes
    s1, b1 = _fold_bn(ks[0], ks[1], ks[2], ks[3], in_planes)
    s2, b2 = _fold_bn(ks[4], ks[5], ks[6], ks[7], planes)
    s3, b3 = _fold_bn(ks[8], ks[9], ks[10], ks[11], planes)
    w1 = 0.1 * jax.random.normal(ks[12], (in_planes, planes), jnp.float32)
    w2 = 0.1 * jax.random.normal(ks[13], (3, 3, planes, planes), jnp.float32)
    w3 = 0.1 * jax.random.normal(ks[14], (planes, out_planes), jnp.float32)
    if stride != 1 or in_planes != out_planes:
        wsc = 0.1 * jax.random.normal(ks[15], (in_planes, out_planes),
                                      jnp.float32)
    else:
        wsc = None
    return dict(s1=s1, b1=b1, s2=s2, b2=b2, s3=s3, b3=b3,
                w1=w1, w2=w2, w3=w3, wsc=wsc)


# ----------------------------- pure-JAX reference ------------------------------

def reference_forward(x_nhwc, params, compute_dtype=jnp.bfloat16):
    Cin = x_nhwc.shape[-1]
    P = params["w1"].shape[1]
    xf = x_nhwc.astype(compute_dtype).astype(jnp.float32)

    def conv1x1(v, w):
        return jnp.einsum("nhwc,cd->nhwd", v.astype(compute_dtype),
                          w.astype(compute_dtype),
                          preferred_element_type=jnp.float32)

    pre = jax.nn.relu(xf * params["s1"].reshape(1, 1, 1, Cin)
                      + params["b1"].reshape(1, 1, 1, Cin))
    shortcut = conv1x1(pre, params["wsc"]) if params["wsc"] is not None else xf
    t = conv1x1(pre, params["w1"])
    t = jax.nn.relu(t * params["s2"].reshape(1, 1, 1, P)
                    + params["b2"].reshape(1, 1, 1, P))
    t = lax.conv_general_dilated(
        t.astype(compute_dtype), params["w2"].astype(compute_dtype),
        (1, 1), ((1, 1), (1, 1)),
        dimension_numbers=("NHWC", "HWIO", "NHWC"),
        preferred_element_type=jnp.float32)
    t = jax.nn.relu(t * params["s3"].reshape(1, 1, 1, P)
                    + params["b3"].reshape(1, 1, 1, P))
    out = conv1x1(t, params["w3"]) + shortcut
    return out.astype(jnp.float32)


if __name__ == "__main__":
    N, H, W = 2, 8, 8
    key = jax.random.PRNGKey(0)

    # (name, in_planes, planes): first case exercises the 1x1 shortcut conv,
    # second exercises the identity shortcut (in_planes == 4*planes).
    cases = [("conv_shortcut", 16, 8), ("identity_shortcut", 32, 8)]
    for idx, (name, in_planes, planes) in enumerate(cases):
        kx, kp = jax.random.split(jax.random.fold_in(key, idx))
        x = jax.random.normal(kx, (N, H, W, in_planes), jnp.float32)   # NHWC
        params = init_params(kp, in_planes, planes, stride=1)

        out = jax.block_until_ready(preact_bottleneck(x, params, stride=1))
        ref = jax.block_until_ready(reference_forward(x, params))

        assert out.shape == (N, H, W, 4 * planes), (name, out.shape)
        np.testing.assert_allclose(np.asarray(out, dtype=np.float32),
                                   np.asarray(ref), rtol=2e-2, atol=2e-2)

    print("KERNEL_OK")
</pallas_src>

<mosaic_0001>
module attributes {stable_mosaic.version = 11 : i64} {
  func.func @_preact_bottleneck_kernel(%arg0: i32, %arg1: memref<2x64x16xbf16, #tpu.memory_space<vmem>>, %arg2: memref<1x16xf32, #tpu.memory_space<vmem>>, %arg3: memref<1x16xf32, #tpu.memory_space<vmem>>, %arg4: memref<16x8xbf16, #tpu.memory_space<vmem>>, %arg5: memref<1x8xf32, #tpu.memory_space<vmem>>, %arg6: memref<1x8xf32, #tpu.memory_space<vmem>>, %arg7: memref<3x3x8x8xbf16, #tpu.memory_space<vmem>>, %arg8: memref<1x8xf32, #tpu.memory_space<vmem>>, %arg9: memref<1x8xf32, #tpu.memory_space<vmem>>, %arg10: memref<8x32xbf16, #tpu.memory_space<vmem>>, %arg11: memref<16x32xbf16, #tpu.memory_space<vmem>>, %arg12: memref<2x64x32xbf16, #tpu.memory_space<vmem>>, %arg13: memref<2x10x10x8xbf16, #tpu.memory_space<vmem>>) attributes {dimension_semantics = [#tpu.dimension_semantics<parallel>], iteration_bounds = array<i64: 1>, scalar_prefetch = 0 : i64, scratch_operands = 1 : i64, tpu.core_type = #tpu.core_type<tc>, window_params = [{transform_indices = @transform_0, window_bounds = array<i64: 2, 64, 16>}, {pipeline_mode = #tpu.pipeline_mode<synchronous>, transform_indices = @transform_1, window_bounds = array<i64: 1, 16>}, {pipeline_mode = #tpu.pipeline_mode<synchronous>, transform_indices = @transform_2, window_bounds = array<i64: 1, 16>}, {pipeline_mode = #tpu.pipeline_mode<synchronous>, transform_indices = @transform_3, window_bounds = array<i64: 16, 8>}, {pipeline_mode = #tpu.pipeline_mode<synchronous>, transform_indices = @transform_4, window_bounds = array<i64: 1, 8>}, {pipeline_mode = #tpu.pipeline_mode<synchronous>, transform_indices = @transform_5, window_bounds = array<i64: 1, 8>}, {pipeline_mode = #tpu.pipeline_mode<synchronous>, transform_indices = @transform_6, window_bounds = array<i64: 3, 3, 8, 8>}, {pipeline_mode = #tpu.pipeline_mode<synchronous>, transform_indices = @transform_7, window_bounds = array<i64: 1, 8>}, {pipeline_mode = #tpu.pipeline_mode<synchronous>, transform_indices = @transform_8, window_bounds = array<i64: 1, 8>}, {pipeline_mode = #tpu.pipeline_mode<synchronous>, transform_indices = @transform_9, window_bounds = array<i64: 8, 32>}, {pipeline_mode = #tpu.pipeline_mode<synchronous>, transform_indices = @transform_10, window_bounds = array<i64: 16, 32>}, {transform_indices = @transform_11, window_bounds = array<i64: 2, 64, 32>}]} {
    %c0 = arith.constant 0 : index
    %c0_0 = arith.constant 0 : index
    %c0_1 = arith.constant 0 : index
    %0 = vector.load %arg1[%c0, %c0_0, %c0_1] : memref<2x64x16xbf16, #tpu.memory_space<vmem>>, vector<2x64x16xbf16>
    %1 = vector.shape_cast %0 : vector<2x64x16xbf16> to vector<128x16xbf16>
    %2 = arith.extf %1 : vector<128x16xbf16> to vector<128x16xf32>
    %c0_2 = arith.constant 0 : index
    %c0_3 = arith.constant 0 : index
    %3 = vector.load %arg2[%c0_2, %c0_3] : memref<1x16xf32, #tpu.memory_space<vmem>>, vector<1x16xf32>
    %4 = vector.broadcast %3 : vector<1x16xf32> to vector<128x16xf32>
    %5 = arith.mulf %2, %4 : vector<128x16xf32>
    %c0_4 = arith.constant 0 : index
    %c0_5 = arith.constant 0 : index
    %6 = vector.load %arg3[%c0_4, %c0_5] : memref<1x16xf32, #tpu.memory_space<vmem>>, vector<1x16xf32>
    %7 = vector.broadcast %6 : vector<1x16xf32> to vector<128x16xf32>
    %8 = arith.addf %5, %7 : vector<128x16xf32>
    %cst = arith.constant 0.000000e+00 : f32
    %9 = vector.broadcast %cst : f32 to vector<128x16xf32>
    %10 = arith.maximumf %8, %9 : vector<128x16xf32>
    %11 = arith.truncf %10 : vector<128x16xf32> to vector<128x16xbf16>
    %c0_6 = arith.constant 0 : index
    %c0_7 = arith.constant 0 : index
    %12 = vector.load %arg4[%c0_6, %c0_7] : memref<16x8xbf16, #tpu.memory_space<vmem>>, vector<16x8xbf16>
    %cst_8 = arith.constant dense<0.000000e+00> : vector<128x8xf32>
    %13 = tpu.matmul %11, %12, %cst_8 {dimension_numbers = #tpu.dot_dimension_numbers<[1], [0], [0], [1], [0, 0, 1, 1], [], []>} : vector<128x16xbf16>, vector<16x8xbf16>, vector<128x8xf32> -> vector<128x8xf32>
    %c0_9 = arith.constant 0 : index
    %c0_10 = arith.constant 0 : index
    %14 = vector.load %arg5[%c0_9, %c0_10] : memref<1x8xf32, #tpu.memory_space<vmem>>, vector<1x8xf32>
    %15 = vector.broadcast %14 : vector<1x8xf32> to vector<128x8xf32>
    %16 = arith.mulf %13, %15 : vector<128x8xf32>
    %c0_11 = arith.constant 0 : index
    %c0_12 = arith.constant 0 : index
    %17 = vector.load %arg6[%c0_11, %c0_12] : memref<1x8xf32, #tpu.memory_space<vmem>>, vector<1x8xf32>
    %18 = vector.broadcast %17 : vector<1x8xf32> to vector<128x8xf32>
    %19 = arith.addf %16, %18 : vector<128x8xf32>
    %cst_13 = arith.constant 0.000000e+00 : f32
    %20 = vector.broadcast %cst_13 : f32 to vector<128x8xf32>
    %21 = arith.maximumf %19, %20 : vector<128x8xf32>
    %cst_14 = arith.constant 0.000000e+00 : bf16
    %22 = vector.broadcast %cst_14 : bf16 to vector<2x1x10x8xbf16>
    %c0_15 = arith.constant 0 : index
    %c0_16 = arith.constant 0 : index
    %c0_17 = arith.constant 0 : index
    %c0_18 = arith.constant 0 : index
    %23 = vector.load %arg13[%c0_15, %c0_16, %c0_17, %c0_18] : memref<2x10x10x8xbf16, #tpu.memory_space<vmem>>, vector<2x1x10x8xbf16>
    tpu.vector_store %arg13[%c0_15, %c0_16, %c0_17, %c0_18], %22 {strides = array<i32>} : memref<2x10x10x8xbf16, #tpu.memory_space<vmem>>, vector<2x1x10x8xbf16>,
    %c0_19 = arith.constant 0 : index
    %c9 = arith.constant 9 : index
    %c0_20 = arith.constant 0 : index
    %c0_21 = arith.constant 0 : index
    %24 = vector.load %arg13[%c0_19, %c9, %c0_20, %c0_21] : memref<2x10x10x8xbf16, #tpu.memory_space<vmem>>, vector<2x1x10x8xbf16>
    tpu.vector_store %arg13[%c0_19, %c9, %c0_20, %c0_21], %22 {strides = array<i32>} : memref<2x10x10x8xbf16, #tpu.memory_space<vmem>>, vector<2x1x10x8xbf16>,
    %cst_22 = arith.constant 0.000000e+00 : f32
    %25 = vector.broadcast %cst_22 : f32 to vector<2x8x1x8xf32>
    %26 = vector.shape_cast %21 : vector<128x8xf32> to vector<2x8x8x8xf32>
    %27 = tpu.concatenate %25, %26, %25 in 2 : vector<2x8x1x8xf32>, vector<2x8x8x8xf32>, vector<2x8x1x8xf32> -> vector<2x8x10x8xf32>
    %28 = arith.truncf %27 : vector<2x8x10x8xf32> to vector<2x8x10x8xbf16>
    %c0_23 = arith.constant 0 : index
    %c1 = arith.constant 1 : index
    %c0_24 = arith.constant 0 : index
    %c0_25 = arith.constant 0 : index
    %29 = vector.load %arg13[%c0_23, %c1, %c0_24, %c0_25] : memref<2x10x10x8xbf16, #tpu.memory_space<vmem>>, vector<2x8x10x8xbf16>
    tpu.vector_store %arg13[%c0_23, %c1, %c0_24, %c0_25], %28 {strides = array<i32>} : memref<2x10x10x8xbf16, #tpu.memory_space<vmem>>, vector<2x8x10x8xbf16>,
    %c0_26 = arith.constant 0 : index
    %c0_27 = arith.constant 0 : index
    %c0_28 = arith.constant 0 : index
    %c0_29 = arith.constant 0 : index
    %30 = vector.load %arg13[%c0_26, %c0_27, %c0_28, %c0_29] : memref<2x10x10x8xbf16, #tpu.memory_space<vmem>>, vector<2x8x10x8xbf16>
    %31 = vector.shape_cast %30 : vector<2x8x10x8xbf16> to vector<160x8xbf16>
    %c0_30 = arith.constant 0 : index
    %c0_31 = arith.constant 0 : index
    %c0_32 = arith.constant 0 : index
    %c0_33 = arith.constant 0 : index
    %32 = vector.load %arg7[%c0_30, %c0_31, %c0_32, %c0_33] : memref<3x3x8x8xbf16, #tpu.memory_space<vmem>>, vector<1x1x8x8xbf16>
    %33 = vector.shape_cast %32 : vector<1x1x8x8xbf16> to vector<8x8xbf16>
    %cst_34 = arith.constant dense<0.000000e+00> : vector<160x8xf32>
    %34 = tpu.matmul %31, %33, %cst_34 {dimension_numbers = #tpu.dot_dimension_numbers<[1], [0], [0], [1], [0, 0, 1, 1], [], []>} : vector<160x8xbf16>, vector<8x8xbf16>, vector<160x8xf32> -> vector<160x8xf32>
    %35 = vector.shape_cast %34 : vector<160x8xf32> to vector<2x8x10x8xf32>
    %36 = vector.extract_strided_slice %35 {offsets = [0, 0, 0, 0], sizes = [2, 8, 8, 8], strides = [1, 1, 1, 1]} : vector<2x8x10x8xf32> to vector<2x8x8x8xf32>
    %c0_35 = arith.constant 0 : index
    %c1_36 = arith.constant 1 : index
    %c0_37 = arith.constant 0 : index
    %c0_38 = arith.constant 0 : index
    %37 = vector.load %arg7[%c0_35, %c1_36, %c0_37, %c0_38] : memref<3x3x8x8xbf16, #tpu.memory_space<vmem>>, vector<1x1x8x8xbf16>
    %38 = vector.shape_cast %37 : vector<1x1x8x8xbf16> to vector<8x8xbf16>
    %cst_39 = arith.constant dense<0.000000e+00> : vector<160x8xf32>
    %39 = tpu.matmul %31, %38, %cst_39 {dimension_numbers = #tpu.dot_dimension_numbers<[1], [0], [0], [1], [0, 0, 1, 1], [], []>} : vector<160x8xbf16>, vector<8x8xbf16>, vector<160x8xf32> -> vector<160x8xf32>
    %40 = vector.shape_cast %39 : vector<160x8xf32> to vector<2x8x10x8xf32>
    %41 = vector.extract_strided_slice %40 {offsets = [0, 0, 1, 0], sizes = [2, 8, 8, 8], strides = [1, 1, 1, 1]} : vector<2x8x10x8xf32> to vector<2x8x8x8xf32>
    %42 = arith.addf %36, %41 : vector<2x8x8x8xf32>
    %c0_40 = arith.constant 0 : index
    %c2 = arith.constant 2 : index
    %c0_41 = arith.constant 0 : index
    %c0_42 = arith.constant 0 : index
    %43 = vector.load %arg7[%c0_40, %c2, %c0_41, %c0_42] : memref<3x3x8x8xbf16, #tpu.memory_space<vmem>>, vector<1x1x8x8xbf16>
    %44 = vector.shape_cast %43 : vector<1x1x8x8xbf16> to vector<8x8xbf16>
    %cst_43 = arith.constant dense<0.000000e+00> : vector<160x8xf32>
    %45 = tpu.matmul %31, %44, %cst_43 {dimension_numbers = #tpu.dot_dimension_numbers<[1], [0], [0], [1], [0, 0, 1, 1], [], []>} : vector<160x8xbf16>, vector<8x8xbf16>, vector<160x8xf32> -> vector<160x8xf32>
    %46 = vector.shape_cast %45 : vector<160x8xf32> to vector<2x8x10x8xf32>
    %47 = vector.extract_strided_slice %46 {offsets = [0, 0, 2, 0], sizes = [2, 8, 8, 8], strides = [1, 1, 1, 1]} : vector<2x8x10x8xf32> to vector<2x8x8x8xf32>
    %48 = arith.addf %42, %47 : vector<2x8x8x8xf32>
    %c0_44 = arith.constant 0 : index
    %c1_45 = arith.constant 1 : index
    %c0_46 = arith.constant 0 : index
    %c0_47 = arith.constant 0 : index
    %49 = vector.load %arg13[%c0_44, %c1_45, %c0_46, %c0_47] : memref<2x10x10x8xbf16, #tpu.memory_space<vmem>>, vector<2x8x10x8xbf16>
    %50 = vector.shape_cast %49 : vector<2x8x10x8xbf16> to vector<160x8xbf16>
    %c1_48 = arith.constant 1 : index
    %c0_49 = arith.constant 0 : index
    %c0_50 = arith.constant 0 : index
    %c0_51 = arith.constant 0 : index
    %51 = vector.load %arg7[%c1_48, %c0_49, %c0_50, %c0_51] : memref<3x3x8x8xbf16, #tpu.memory_space<vmem>>, vector<1x1x8x8xbf16>
    %52 = vector.shape_cast %51 : vector<1x1x8x8xbf16> to vector<8x8xbf16>
    %cst_52 = arith.constant dense<0.000000e+00> : vector<160x8xf32>
    %53 = tpu.matmul %50, %52, %cst_52 {dimension_numbers = #tpu.dot_dimension_numbers<[1], [0], [0], [1], [0, 0, 1, 1], [], []>} : vector<160x8xbf16>, vector<8x8xbf16>, vector<160x8xf32> -> vector<160x8xf32>
    %54 = vector.shape_cast %53 : vector<160x8xf32> to vector<2x8x10x8xf32>
    %55 = vector.extract_strided_slice %54 {offsets = [0, 0, 0, 0], sizes = [2, 8, 8, 8], strides = [1, 1, 1, 1]} : vector<2x8x10x8xf32> to vector<2x8x8x8xf32>
    %56 = arith.addf %48, %55 : vector<2x8x8x8xf32>
    %c1_53 = arith.constant 1 : index
    %c1_54 = arith.constant 1 : index
    %c0_55 = arith.constant 0 : index
    %c0_56 = arith.constant 0 : index
    %57 = vector.load %arg7[%c1_53, %c1_54, %c0_55, %c0_56] : memref<3x3x8x8xbf16, #tpu.memory_space<vmem>>, vector<1x1x8x8xbf16>
    %58 = vector.shape_cast %57 : vector<1x1x8x8xbf16> to vector<8x8xbf16>
    %cst_57 = arith.constant dense<0.000000e+00> : vector<160x8xf32>
    %59 = tpu.matmul %50, %58, %cst_57 {dimension_numbers = #tpu.dot_dimension_numbers<[1], [0], [0], [1], [0, 0, 1, 1], [], []>} : vector<160x8xbf16>, vector<8x8xbf16>, vector<160x8xf32> -> vector<160x8xf32>
    %60 = vector.shape_cast %59 : vector<160x8xf32> to vector<2x8x10x8xf32>
    %61 = vector.extract_strided_slice %60 {offsets = [0, 0, 1, 0], sizes = [2, 8, 8, 8], strides = [1, 1, 1, 1]} : vector<2x8x10x8xf32> to vector<2x8x8x8xf32>
    %62 = arith.addf %56, %61 : vector<2x8x8x8xf32>
    %c1_58 = arith.constant 1 : index
    %c2_59 = arith.constant 2 : index
    %c0_60 = arith.constant 0 : index
    %c0_61 = arith.constant 0 : index
    %63 = vector.load %arg7[%c1_58, %c2_59, %c0_60, %c0_61] : memref<3x3x8x8xbf16, #tpu.memory_space<vmem>>, vector<1x1x8x8xbf16>
    %64 = vector.shape_cast %63 : vector<1x1x8x8xbf16> to vector<8x8xbf16>
    %cst_62 = arith.constant dense<0.000000e+00> : vector<160x8xf32>
    %65 = tpu.matmul %50, %64, %cst_62 {dimension_numbers = #tpu.dot_dimension_numbers<[1], [0], [0], [1], [0, 0, 1, 1], [], []>} : vector<160x8xbf16>, vector<8x8xbf16>, vector<160x8xf32> -> vector<160x8xf32>
    %66 = vector.shape_cast %65 : vector<160x8xf32> to vector<2x8x10x8xf32>
    %67 = vector.extract_strided_slice %66 {offsets = [0, 0, 2, 0], sizes = [2, 8, 8, 8], strides = [1, 1, 1, 1]} : vector<2x8x10x8xf32> to vector<2x8x8x8xf32>
    %68 = arith.addf %62, %67 : vector<2x8x8x8xf32>
    %c0_63 = arith.constant 0 : index
    %c2_64 = arith.constant 2 : index
    %c0_65 = arith.constant 0 : index
    %c0_66 = arith.constant 0 : index
    %69 = vector.load %arg13[%c0_63, %c2_64, %c0_65, %c0_66] : memref<2x10x10x8xbf16, #tpu.memory_space<vmem>>, vector<2x8x10x8xbf16>
    %70 = vector.shape_cast %69 : vector<2x8x10x8xbf16> to vector<160x8xbf16>
    %c2_67 = arith.constant 2 : index
    %c0_68 = arith.constant 0 : index
    %c0_69 = arith.constant 0 : index
    %c0_70 = arith.constant 0 : index
    %71 = vector.load %arg7[%c2_67, %c0_68, %c0_69, %c0_70] : memref<3x3x8x8xbf16, #tpu.memory_space<vmem>>, vector<1x1x8x8xbf16>
    %72 = vector.shape_cast %71 : vector<1x1x8x8xbf16> to vector<8x8xbf16>
    %cst_71 = arith.constant dense<0.000000e+00> : vector<160x8xf32>
    %73 = tpu.matmul %70, %72, %cst_71 {dimension_numbers = #tpu.dot_dimension_numbers<[1], [0], [0], [1], [0, 0, 1, 1], [], []>} : vector<160x8xbf16>, vector<8x8xbf16>, vector<160x8xf32> -> vector<160x8xf32>
    %74 = vector.shape_cast %73 : vector<160x8xf32> to vector<2x8x10x8xf32>
    %75 = vector.extract_strided_slice %74 {offsets = [0, 0, 0, 0], sizes = [2, 8, 8, 8], strides = [1, 1, 1, 1]} : vector<2x8x10x8xf32> to vector<2x8x8x8xf32>
    %76 = arith.addf %68, %75 : vector<2x8x8x8xf32>
    %c2_72 = arith.constant 2 : index
    %c1_73 = arith.constant 1 : index
    %c0_74 = arith.constant 0 : index
    %c0_75 = arith.constant 0 : index
    %77 = vector.load %arg7[%c2_72, %c1_73, %c0_74, %c0_75] : memref<3x3x8x8xbf16, #tpu.memory_space<vmem>>, vector<1x1x8x8xbf16>
    %78 = vector.shape_cast %77 : vector<1x1x8x8xbf16> to vector<8x8xbf16>
    %cst_76 = arith.constant dense<0.000000e+00> : vector<160x8xf32>
    %79 = tpu.matmul %70, %78, %cst_76 {dimension_numbers = #tpu.dot_dimension_numbers<[1], [0], [0], [1], [0, 0, 1, 1], [], []>} : vector<160x8xbf16>, vector<8x8xbf16>, vector<160x8xf32> -> vector<160x8xf32>
    %80 = vector.shape_cast %79 : vector<160x8xf32> to vector<2x8x10x8xf32>
    %81 = vector.extract_strided_slice %80 {offsets = [0, 0, 1, 0], sizes = [2, 8, 8, 8], strides = [1, 1, 1, 1]} : vector<2x8x10x8xf32> to vector<2x8x8x8xf32>
    %82 = arith.addf %76, %81 : vector<2x8x8x8xf32>
    %c2_77 = arith.constant 2 : index
    %c2_78 = arith.constant 2 : index
    %c0_79 = arith.constant 0 : index
    %c0_80 = arith.constant 0 : index
    %83 = vector.load %arg7[%c2_77, %c2_78, %c0_79, %c0_80] : memref<3x3x8x8xbf16, #tpu.memory_space<vmem>>, vector<1x1x8x8xbf16>
    %84 = vector.shape_cast %83 : vector<1x1x8x8xbf16> to vector<8x8xbf16>
    %cst_81 = arith.constant dense<0.000000e+00> : vector<160x8xf32>
    %85 = tpu.matmul %70, %84, %cst_81 {dimension_numbers = #tpu.dot_dimension_numbers<[1], [0], [0], [1], [0, 0, 1, 1], [], []>} : vector<160x8xbf16>, vector<8x8xbf16>, vector<160x8xf32> -> vector<160x8xf32>
    %86 = vector.shape_cast %85 : vector<160x8xf32> to vector<2x8x10x8xf32>
    %87 = vector.extract_strided_slice %86 {offsets = [0, 0, 2, 0], sizes = [2, 8, 8, 8], strides = [1, 1, 1, 1]} : vector<2x8x10x8xf32> to vector<2x8x8x8xf32>
    %88 = arith.addf %82, %87 : vector<2x8x8x8xf32>
    %89 = vector.shape_cast %88 : vector<2x8x8x8xf32> to vector<128x8xf32>
    %c0_82 = arith.constant 0 : index
    %c0_83 = arith.constant 0 : index
    %90 = vector.load %arg8[%c0_82, %c0_83] : memref<1x8xf32, #tpu.memory_space<vmem>>, vector<1x8xf32>
    %91 = vector.broadcast %90 : vector<1x8xf32> to vector<128x8xf32>
    %92 = arith.mulf %89, %91 : vector<128x8xf32>
    %c0_84 = arith.constant 0 : index
    %c0_85 = arith.constant 0 : index
    %93 = vector.load %arg9[%c0_84, %c0_85] : memref<1x8xf32, #tpu.memory_space<vmem>>, vector<1x8xf32>
    %94 = vector.broadcast %93 : vector<1x8xf32> to vector<128x8xf32>
    %95 = arith.addf %92, %94 : vector<128x8xf32>
    %cst_86 = arith.constant 0.000000e+00 : f32
    %96 = vector.broadcast %cst_86 : f32 to vector<128x8xf32>
    %97 = arith.maximumf %95, %96 : vector<128x8xf32>
    %98 = arith.truncf %97 : vector<128x8xf32> to vector<128x8xbf16>
    %c0_87 = arith.constant 0 : index
    %c0_88 = arith.constant 0 : index
    %99 = vector.load %arg10[%c0_87, %c0_88] : memref<8x32xbf16, #tpu.memory_space<vmem>>, vector<8x32xbf16>
    %cst_89 = arith.constant dense<0.000000e+00> : vector<128x32xf32>
    %100 = tpu.matmul %98, %99, %cst_89 {dimension_numbers = #tpu.dot_dimension_numbers<[1], [0], [0], [1], [0, 0, 1, 1], [], []>} : vector<128x8xbf16>, vector<8x32xbf16>, vector<128x32xf32> -> vector<128x32xf32>
    %c0_90 = arith.constant 0 : index
    %c0_91 = arith.constant 0 : index
    %c0_92 = arith.constant 0 : index
    %101 = vector.load %arg1[%c0_90, %c0_91, %c0_92] : memref<2x64x16xbf16, #tpu.memory_space<vmem>>, vector<2x64x16xbf16>
    %102 = vector.shape_cast %101 : vector<2x64x16xbf16> to vector<128x16xbf16>
    %103 = arith.extf %102 : vector<128x16xbf16> to vector<128x16xf32>
    %c0_93 = arith.constant 0 : index
    %c0_94 = arith.constant 0 : index
    %104 = vector.load %arg2[%c0_93, %c0_94] : memref<1x16xf32, #tpu.memory_space<vmem>>, vector<1x16xf32>
    %105 = vector.broadcast %104 : vector<1x16xf32> to vector<128x16xf32>
    %106 = arith.mulf %103, %105 : vector<128x16xf32>
    %c0_95 = arith.constant 0 : index
    %c0_96 = arith.constant 0 : index
    %107 = vector.load %arg3[%c0_95, %c0_96] : memref<1x16xf32, #tpu.memory_space<vmem>>, vector<1x16xf32>
    %108 = vector.broadcast %107 : vector<1x16xf32> to vector<128x16xf32>
    %109 = arith.addf %106, %108 : vector<128x16xf32>
    %cst_97 = arith.constant 0.000000e+00 : f32
    %110 = vector.broadcast %cst_97 : f32 to vector<128x16xf32>
    %111 = arith.maximumf %109, %110 : vector<128x16xf32>
    %112 = arith.truncf %111 : vector<128x16xf32> to vector<128x16xbf16>
    %c0_98 = arith.constant 0 : index
    %c0_99 = arith.constant 0 : index
    %113 = vector.load %arg11[%c0_98, %c0_99] : memref<16x32xbf16, #tpu.memory_space<vmem>>, vector<16x32xbf16>
    %cst_100 = arith.constant dense<0.000000e+00> : vector<128x32xf32>
    %114 = tpu.matmul %112, %113, %cst_100 {dimension_numbers = #tpu.dot_dimension_numbers<[1], [0], [0], [1], [0, 0, 1, 1], [], []>} : vector<128x16xbf16>, vector<16x32xbf16>, vector<128x32xf32> -> vector<128x32xf32>
    %115 = arith.addf %100, %114 : vector<128x32xf32>
    %116 = vector.shape_cast %115 : vector<128x32xf32> to vector<2x64x32xf32>
    %117 = arith.truncf %116 : vector<2x64x32xf32> to vector<2x64x32xbf16>
    %c0_101 = arith.constant 0 : index
    %c0_102 = arith.constant 0 : index
    %c0_103 = arith.constant 0 : index
    %118 = vector.load %arg12[%c0_101, %c0_102, %c0_103] : memref<2x64x32xbf16, #tpu.memory_space<vmem>>, vector<2x64x32xbf16>
    tpu.vector_store %arg12[%c0_101, %c0_102, %c0_103], %117 {strides = array<i32>} : memref<2x64x32xbf16, #tpu.memory_space<vmem>>, vector<2x64x32xbf16>,
    return
  }
  func.func @transform_0(%arg0: i32) -> (i32, i32, i32) {
    %c0_i32 = arith.constant 0 : i32
    %c0_i32_0 = arith.constant 0 : i32
    %c0_i32_1 = arith.constant 0 : i32
    return %arg0, %c0_i32, %c0_i32_0 : i32, i32, i32
  }
  func.func @transform_1(%arg0: i32) -> (i32, i32) {
    %c0_i32 = arith.constant 0 : i32
    %c0_i32_0 = arith.constant 0 : i32
    %c0_i32_1 = arith.constant 0 : i32
    return %c0_i32, %c0_i32_0 : i32, i32
  }
  func.func @transform_2(%arg0: i32) -> (i32, i32) {
    %c0_i32 = arith.constant 0 : i32
    %c0_i32_0 = arith.constant 0 : i32
    %c0_i32_1 = arith.constant 0 : i32
    return %c0_i32, %c0_i32_0 : i32, i32
  }
  func.func @transform_3(%arg0: i32) -> (i32, i32) {
    %c0_i32 = arith.constant 0 : i32
    %c0_i32_0 = arith.constant 0 : i32
    %c0_i32_1 = arith.constant 0 : i32
    return %c0_i32, %c0_i32_0 : i32, i32
  }
  func.func @transform_4(%arg0: i32) -> (i32, i32) {
    %c0_i32 = arith.constant 0 : i32
    %c0_i32_0 = arith.constant 0 : i32
    %c0_i32_1 = arith.constant 0 : i32
    return %c0_i32, %c0_i32_0 : i32, i32
  }
  func.func @transform_5(%arg0: i32) -> (i32, i32) {
    %c0_i32 = arith.constant 0 : i32
    %c0_i32_0 = arith.constant 0 : i32
    %c0_i32_1 = arith.constant 0 : i32
    return %c0_i32, %c0_i32_0 : i32, i32
  }
  func.func @transform_6(%arg0: i32) -> (i32, i32, i32, i32) {
    %c0_i32 = arith.constant 0 : i32
    %c0_i32_0 = arith.constant 0 : i32
    %c0_i32_1 = arith.constant 0 : i32
    %c0_i32_2 = arith.constant 0 : i32
    %c0_i32_3 = arith.constant 0 : i32
    return %c0_i32, %c0_i32_0, %c0_i32_1, %c0_i32_2 : i32, i32, i32, i32
  }
  func.func @transform_7(%arg0: i32) -> (i32, i32) {
    %c0_i32 = arith.constant 0 : i32
    %c0_i32_0 = arith.constant 0 : i32
    %c0_i32_1 = arith.constant 0 : i32
    return %c0_i32, %c0_i32_0 : i32, i32
  }
  func.func @transform_8(%arg0: i32) -> (i32, i32) {
    %c0_i32 = arith.constant 0 : i32
    %c0_i32_0 = arith.constant 0 : i32
    %c0_i32_1 = arith.constant 0 : i32
    return %c0_i32, %c0_i32_0 : i32, i32
  }
  func.func @transform_9(%arg0: i32) -> (i32, i32) {
    %c0_i32 = arith.constant 0 : i32
    %c0_i32_0 = arith.constant 0 : i32
    %c0_i32_1 = arith.constant 0 : i32
    return %c0_i32, %c0_i32_0 : i32, i32
  }
  func.func @transform_10(%arg0: i32) -> (i32, i32) {
    %c0_i32 = arith.constant 0 : i32
    %c0_i32_0 = arith.constant 0 : i32
    %c0_i32_1 = arith.constant 0 : i32
    return %c0_i32, %c0_i32_0 : i32, i32
  }
  func.func @transform_11(%arg0: i32) -> (i32, i32, i32) {
    %c0_i32 = arith.constant 0 : i32
    %c0_i32_0 = arith.constant 0 : i32
    %c0_i32_1 = arith.constant 0 : i32
    return %arg0, %c0_i32, %c0_i32_0 : i32, i32, i32
  }
}

</mosaic_0001>

<llo_original>
// kernel: tpu_custom_call.1
$region0: #{tpu_custom_call.1}
  #allocation0 [shape = 'u32[]', space=smem, size = 0x4, offset = 0x4, fixed_abs, tag = 'smem constant byte address 0x4 - core index']
  #allocation1 [shape = 'u32[144,128]{1,0:T(1,128)}', space=vmem, size = 0x12000, scoped, tag = 'internal scratch']
  #allocation2 [shape = 'bf16[2,10,10,8]{3,2,1,0:T(8,128)(2,1)}', space=vmem, size = 0x14000, scoped, tag = 'scratch operand']
  %s0 = inlined_call_operand.vmem [shape: bf16[2,64,16], index: 0, kind: input, shape index: {}]
  %s1 = inlined_call_operand.vmem [shape: f32[1,16], index: 1, kind: input, shape index: {}]
  %s2 = inlined_call_operand.vmem [shape: f32[1,16], index: 2, kind: input, shape index: {}]
  %s3 = inlined_call_operand.vmem [shape: bf16[16,8], index: 3, kind: input, shape index: {}]
  %s4 = inlined_call_operand.vmem [shape: f32[1,8], index: 4, kind: input, shape index: {}]
  %s5 = inlined_call_operand.vmem [shape: f32[1,8], index: 5, kind: input, shape index: {}]
  %s6 = inlined_call_operand.vmem [shape: bf16[3,3,8,8], index: 6, kind: input, shape index: {}]
  %s7 = inlined_call_operand.vmem [shape: f32[1,8], index: 7, kind: input, shape index: {}]
  %s8 = inlined_call_operand.vmem [shape: f32[1,8], index: 8, kind: input, shape index: {}]
  %s9 = inlined_call_operand.vmem [shape: bf16[8,32], index: 9, kind: input, shape index: {}]
  %s10 = inlined_call_operand.vmem [shape: bf16[16,32], index: 10, kind: input, shape index: {}]
  %s11 = inlined_call_operand.vmem [shape: bf16[2,64,32], index: 11, kind: output, shape index: {}]
  %s12 = sld [smem:[#allocation0]]
  $region54: #{tpu_custom_call.1} parent=0
    _
  %s14 = ssub.s32 1, %s12
  %s15 = scalar_select 0, %s14, %s12
  // Predicated region
  $region2: #{tpu_custom_call.1} parent=0 // pred_check
    _
  $region3: #{tpu_custom_call.1} parent=0 // pred_check_branch
    %17 = sbr.rel (0) target = $region5
  $region4: #{tpu_custom_call.1} parent=0 // pred_region
    _
  $region5: #{tpu_custom_call.1} parent=0 // pred_fallthru
    _
  // Predicated region
  $region6: #{tpu_custom_call.1} parent=0 // pred_check
    _
  $region7: #{tpu_custom_call.1} parent=0 // pred_check_branch
    %19 = sbr.rel (0) target = $region9
  $region8: #{tpu_custom_call.1} parent=0 // pred_region
    _
  $region9: #{tpu_custom_call.1} parent=0 // pred_fallthru
    _
  // Predicated region
  $region10: #{tpu_custom_call.1} parent=0 // pred_check
    _
  $region11: #{tpu_custom_call.1} parent=0 // pred_check_branch
    %21 = sbr.rel (0) target = $region13
  $region12: #{tpu_custom_call.1} parent=0 // pred_region
    _
  $region13: #{tpu_custom_call.1} parent=0 // pred_fallthru
    _
  // Predicated region
  $region14: #{tpu_custom_call.1} parent=0 // pred_check
    _
  $region15: #{tpu_custom_call.1} parent=0 // pred_check_branch
    %23 = sbr.rel (0) target = $region17
  $region16: #{tpu_custom_call.1} parent=0 // pred_region
    _
  $region17: #{tpu_custom_call.1} parent=0 // pred_fallthru
    _
  // Predicated region
  $region18: #{tpu_custom_call.1} parent=0 // pred_check
    _
  $region19: #{tpu_custom_call.1} parent=0 // pred_check_branch
    %25 = sbr.rel (0) target = $region21
  $region20: #{tpu_custom_call.1} parent=0 // pred_region
    _
  $region21: #{tpu_custom_call.1} parent=0 // pred_fallthru
    _
  // Predicated region
  $region22: #{tpu_custom_call.1} parent=0 // pred_check
    _
  $region23: #{tpu_custom_call.1} parent=0 // pred_check_branch
    %27 = sbr.rel (0) target = $region25
  $region24: #{tpu_custom_call.1} parent=0 // pred_region
    _
  $region25: #{tpu_custom_call.1} parent=0 // pred_fallthru
    _
  // Predicated region
  $region26: #{tpu_custom_call.1} parent=0 // pred_check
    _
  $region27: #{tpu_custom_call.1} parent=0 // pred_check_branch
    %29 = sbr.rel (0) target = $region29
  $region28: #{tpu_custom_call.1} parent=0 // pred_region
    _
  $region29: #{tpu_custom_call.1} parent=0 // pred_fallthru
    _
  // Predicated region
  $region30: #{tpu_custom_call.1} parent=0 // pred_check
    _
  $region31: #{tpu_custom_call.1} parent=0 // pred_check_branch
    %31 = sbr.rel (0) target = $region33
  $region32: #{tpu_custom_call.1} parent=0 // pred_region
    _
  $region33: #{tpu_custom_call.1} parent=0 // pred_fallthru
    _
  // Predicated region
  $region34: #{tpu_custom_call.1} parent=0 // pred_check
    _
  $region35: #{tpu_custom_call.1} parent=0 // pred_check_branch
    %33 = sbr.rel (0) target = $region37
  $region36: #{tpu_custom_call.1} parent=0 // pred_region
    _
  $region37: #{tpu_custom_call.1} parent=0 // pred_fallthru
    _
  // Predicated region
  $region38: #{tpu_custom_call.1} parent=0 // pred_check
    _
  $region39: #{tpu_custom_call.1} parent=0 // pred_check_branch
    %35 = sbr.rel (0) target = $region41
  $region40: #{tpu_custom_call.1} parent=0 // pred_region
    _
  $region41: #{tpu_custom_call.1} parent=0 // pred_fallthru
    _
  // Predicated region
  $region42: #{tpu_custom_call.1} parent=0 // pred_check
    _
  $region43: #{tpu_custom_call.1} parent=0 // pred_check_branch
    %37 = sbr.rel (0) target = $region45
  $region44: #{tpu_custom_call.1} parent=0 // pred_region
    _
  $region45: #{tpu_custom_call.1} parent=0 // pred_fallthru
    _
  %v39 = vld [vmem:[%s0] sm:$0xf]
  %v40 = vld [vmem:[%s0 + $0x4] sm:$0xf]
  %v41 = vld [vmem:[%s0 + $0x8] sm:$0xf]
  %v42 = vld [vmem:[%s0 + $0xc] sm:$0xf]
  %v43 = vld [vmem:[%s0 + $0x10] sm:$0xf]
  %v44 = vld [vmem:[%s0 + $0x14] sm:$0xf]
  %v45 = vld [vmem:[%s0 + $0x18] sm:$0xf]
  %v46 = vld [vmem:[%s0 + $0x1c] sm:$0xf]
  %v47 = vld [vmem:[%s0 + $0x20] sm:$0xf]
  %v48 = vld [vmem:[%s0 + $0x24] sm:$0xf]
  %v49 = vld [vmem:[%s0 + $0x28] sm:$0xf]
  %v50 = vld [vmem:[%s0 + $0x2c] sm:$0xf]
  %v51 = vld [vmem:[%s0 + $0x30] sm:$0xf]
  %v52 = vld [vmem:[%s0 + $0x34] sm:$0xf]
  %v53 = vld [vmem:[%s0 + $0x38] sm:$0xf]
  %v54 = vld [vmem:[%s0 + $0x3c] sm:$0xf]
  %v55 = vunpack.c.l.bf16 %v39
  %v56 = vunpack.c.l.bf16 %v40
  %v57 = vunpack.c.l.bf16 %v41
  %v58 = vunpack.c.l.bf16 %v42
  %v59 = vunpack.c.l.bf16 %v43
  %v60 = vunpack.c.l.bf16 %v44
  %v61 = vunpack.c.l.bf16 %v45
  %v62 = vunpack.c.l.bf16 %v46
  %v63 = vunpack.c.l.bf16 %v47
  %v64 = vunpack.c.l.bf16 %v48
  %v65 = vunpack.c.l.bf16 %v49
  %v66 = vunpack.c.l.bf16 %v50
  %v67 = vunpack.c.l.bf16 %v51
  %v68 = vunpack.c.l.bf16 %v52
  %v69 = vunpack.c.l.bf16 %v53
  %v70 = vunpack.c.l.bf16 %v54
  %v71 = vld [vmem:[%s1] sm:$0x1]
  %v73 = vlaneseq
  %v74 = vshrl.u32 %v73, 7
  %v75 = vsub.s32 0, %v74
  %v76 = vrot.slane %v71, %v75
  %v78 = vmul.f32 %v55, %v76
  %v79 = vmul.f32 %v56, %v76
  %v80 = vmul.f32 %v57, %v76
  %v81 = vmul.f32 %v58, %v76
  %v82 = vmul.f32 %v59, %v76
  %v83 = vmul.f32 %v60, %v76
  %v84 = vmul.f32 %v61, %v76
  %v85 = vmul.f32 %v62, %v76
  %v86 = vmul.f32 %v63, %v76
  %v87 = vmul.f32 %v64, %v76
  %v88 = vmul.f32 %v65, %v76
  %v89 = vmul.f32 %v66, %v76
  %v90 = vmul.f32 %v67, %v76
  %v91 = vmul.f32 %v68, %v76
  %v92 = vmul.f32 %v69, %v76
  %v93 = vmul.f32 %v70, %v76
  %v94 = vld [vmem:[%s2] sm:$0x1]
  %v96 = vlaneseq
  %v97 = vshrl.u32 %v96, 7
  %v98 = vsub.s32 0, %v97
  %v99 = vrot.slane %v94, %v98
  %v101 = vadd.f32 %v78, %v99
  %v102 = vadd.f32 %v79, %v99
  %v103 = vadd.f32 %v80, %v99
  %v104 = vadd.f32 %v81, %v99
  %v105 = vadd.f32 %v82, %v99
  %v106 = vadd.f32 %v83, %v99
  %v107 = vadd.f32 %v84, %v99
  %v108 = vadd.f32 %v85, %v99
  %v109 = vadd.f32 %v86, %v99
  %v110 = vadd.f32 %v87, %v99
  %v111 = vadd.f32 %v88, %v99
  %v112 = vadd.f32 %v89, %v99
  %v113 = vadd.f32 %v90, %v99
  %v114 = vadd.f32 %v91, %v99
  %v115 = vadd.f32 %v92, %v99
  %v116 = vadd.f32 %v93, %v99
  %v117 = vmax.f32 %v101, 0.0
  %v118 = vmax.f32 %v102, 0.0
  %v119 = vmax.f32 %v103, 0.0
  %v120 = vmax.f32 %v104, 0.0
  %v121 = vmax.f32 %v105, 0.0
  %v122 = vmax.f32 %v106, 0.0
  %v123 = vmax.f32 %v107, 0.0
  %v124 = vmax.f32 %v108, 0.0
  %v125 = vmax.f32 %v109, 0.0
  %v126 = vmax.f32 %v110, 0.0
  %v127 = vmax.f32 %v111, 0.0
  %v128 = vmax.f32 %v112, 0.0
  %v129 = vmax.f32 %v113, 0.0
  %v130 = vmax.f32 %v114, 0.0
  %v131 = vmax.f32 %v115, 0.0
  %v132 = vmax.f32 %v116, 0.0
  %v133 = vpack.c.bf16 %v118, %v117
  %v134 = vpack.c.bf16 %v120, %v119
  %v135 = vpack.c.bf16 %v122, %v121
  %v136 = vpack.c.bf16 %v124, %v123
  %v137 = vpack.c.bf16 %v126, %v125
  %v138 = vpack.c.bf16 %v128, %v127
  %v139 = vpack.c.bf16 %v130, %v129
  %v140 = vpack.c.bf16 %v132, %v131
  %v141 = vld [vmem:[%s3] sm:$0xf]
  %v142 = vld [vmem:[%s3 + $0x4] sm:$0xf]
  %v145 = vunpack.c.l.b16 %v141
  %v146 = vunpack.c.l.b16 %v142
  %v147 = vpack.c.b16 %v146, %v145
  %vm149 = vcmask 130048
  %v151 = vsel %vm149, %v133, 0
  %v154 = vsel %vm149, %v134, 0
  %v157 = vsel %vm149, %v135, 0
  %v160 = vsel %vm149, %v136, 0
  %v163 = vsel %vm149, %v137, 0
  %v166 = vsel %vm149, %v138, 0
  %v169 = vsel %vm149, %v139, 0
  %v172 = vsel %vm149, %v140, 0
  %174 = vmatprep.subr.bf16.mxu0 0
  %175 = vmatpush1.bf16.msra.mxu0 %v147
  %176 = vmatprep.subr.bf16.mxu0 0
  %177 = vmatpush1.bf16.msra.mxu0 0
  %178 = vmatprep.subr.bf16.mxu0 0
  %179 = vmatpush1.bf16.msra.mxu0 0
  %180 = vmatprep.subr.bf16.mxu0 0
  %181 = vmatpush1.bf16.msra.mxu0 0
  %182 = vmatprep.subr.bf16.mxu0 0
  %183 = vmatpush1.bf16.msra.mxu0 0
  %184 = vmatprep.subr.bf16.mxu0 0
  %185 = vmatpush1.bf16.msra.mxu0 0
  %186 = vmatprep.subr.bf16.mxu0 0
  %187 = vmatpush1.bf16.msra.mxu0 0
  %188 = vmatprep.subr.bf16.mxu0 0
  %189 = vmatpush1.bf16.msra.mxu0 0
  %190 = vmatprep.subr.bf16.mxu0 0
  %191 = vmatpush1.bf16.msra.mxu0 0
  %192 = vmatprep.subr.bf16.mxu0 0
  %193 = vmatpush1.bf16.msra.mxu0 0
  %194 = vmatprep.subr.bf16.mxu0 0
  %195 = vmatpush1.bf16.msra.mxu0 0
  %196 = vmatprep.subr.bf16.mxu0 0
  %197 = vmatpush1.bf16.msra.mxu0 0
  %198 = vmatprep.subr.bf16.mxu0 0
  %199 = vmatpush1.bf16.msra.mxu0 0
  %200 = vmatprep.subr.bf16.mxu0 0
  %201 = vmatpush1.bf16.msra.mxu0 0
  %202 = vmatprep.subr.bf16.mxu0 0
  %203 = vmatpush1.bf16.msra.mxu0 0
  %204 = vmatprep.subr.bf16.mxu0 0
  %205 = vmatpush1.bf16.msra.mxu0 0
  %206 = vmatprep.mubr.bf16.mxu0 0
  %207 = vmatmul.mubr.bf16.gmra.mrb[0].mxu0 %v151
  %v208 = vpop.f32.mrb[0].mxu0
  %v209 = vadd.f32 0.0, %v208
  %v210 = vpop.f32.mrb[0].mxu0
  %v211 = vpop.f32.mrb[0].mxu0
  %v212 = vadd.f32 0.0, %v211
  %v213 = vpop.f32.mrb[0].mxu0
  %214 = vmatprep.mubr.bf16.mxu0 0
  %215 = vmatmul.mubr.bf16.gmra.mrb[0].mxu0 %v154
  %v216 = vpop.f32.mrb[0].mxu0
  %v217 = vadd.f32 0.0, %v216
  %v218 = vpop.f32.mrb[0].mxu0
  %v219 = vpop.f32.mrb[0].mxu0
  %v220 = vadd.f32 0.0, %v219
  %v221 = vpop.f32.mrb[0].mxu0
  %222 = vmatprep.mubr.bf16.mxu0 0
  %223 = vmatmul.mubr.bf16.gmra.mrb[0].mxu0 %v157
  %v224 = vpop.f32.mrb[0].mxu0
  %v225 = vadd.f32 0.0, %v224
  %v226 = vpop.f32.mrb[0].mxu0
  %v227 = vpop.f32.mrb[0].mxu0
  %v228 = vadd.f32 0.0, %v227
  %v229 = vpop.f32.mrb[0].mxu0
  %230 = vmatprep.mubr.bf16.mxu0 0
  %231 = vmatmul.mubr.bf16.gmra.mrb[0].mxu0 %v160
  %v232 = vpop.f32.mrb[0].mxu0
  %v233 = vadd.f32 0.0, %v232
  %v234 = vpop.f32.mrb[0].mxu0
  %v235 = vpop.f32.mrb[0].mxu0
  %v236 = vadd.f32 0.0, %v235
  %v237 = vpop.f32.mrb[0].mxu0
  %238 = vmatprep.mubr.bf16.mxu0 0
  %239 = vmatmul.mubr.bf16.gmra.mrb[0].mxu0 %v163
  %v240 = vpop.f32.mrb[0].mxu0
  %v241 = vadd.f32 0.0, %v240
  %v242 = vpop.f32.mrb[0].mxu0
  %v243 = vpop.f32.mrb[0].mxu0
  %v244 = vadd.f32 0.0, %v243
  %v245 = vpop.f32.mrb[0].mxu0
  %246 = vmatprep.mubr.bf16.mxu0 0
  %247 = vmatmul.mubr.bf16.gmra.mrb[0].mxu0 %v166
  %v248 = vpop.f32.mrb[0].mxu0
  %v249 = vadd.f32 0.0, %v248
  %v250 = vpop.f32.mrb[0].mxu0
  %v251 = vpop.f32.mrb[0].mxu0
  %v252 = vadd.f32 0.0, %v251
  %v253 = vpop.f32.mrb[0].mxu0
  %254 = vmatprep.mubr.bf16.mxu0 0
  %255 = vmatmul.mubr.bf16.gmra.mrb[0].mxu0 %v169
  %v256 = vpop.f32.mrb[0].mxu0
  %v257 = vadd.f32 0.0, %v256
  %v258 = vpop.f32.mrb[0].mxu0
  %v259 = vpop.f32.mrb[0].mxu0
  %v260 = vadd.f32 0.0, %v259
  %v261 = vpop.f32.mrb[0].mxu0
  %262 = vmatprep.mubr.bf16.mxu0 0
  %263 = vmatmul.mubr.bf16.gmra.mrb[0].mxu0 %v172
  %v264 = vpop.f32.mrb[0].mxu0
  %v265 = vadd.f32 0.0, %v264
  %v266 = vpop.f32.mrb[0].mxu0
  %v267 = vpop.f32.mrb[0].mxu0
  %v268 = vadd.f32 0.0, %v267
  %v269 = vpop.f32.mrb[0].mxu0
  %270 = vdwg.mxu0
  %v271 = vld [vmem:[%s4] sm:$0x1]
  %v273 = vlaneseq
  %v274 = vshrl.u32 %v273, 7
  %v275 = vsub.s32 0, %v274
  %v276 = vrot.slane %v271, %v275
  %v278 = vmul.f32 %v209, %v276
  %v279 = vmul.f32 %v212, %v276
  %v280 = vmul.f32 %v217, %v276
  %v281 = vmul.f32 %v220, %v276
  %v282 = vmul.f32 %v225, %v276
  %v283 = vmul.f32 %v228, %v276
  %v284 = vmul.f32 %v233, %v276
  %v285 = vmul.f32 %v236, %v276
  %v286 = vmul.f32 %v241, %v276
  %v287 = vmul.f32 %v244, %v276
  %v288 = vmul.f32 %v249, %v276
  %v289 = vmul.f32 %v252, %v276
  %v290 = vmul.f32 %v257, %v276
  %v291 = vmul.f32 %v260, %v276
  %v292 = vmul.f32 %v265, %v276
  %v293 = vmul.f32 %v268, %v276
  %v294 = vld [vmem:[%s5] sm:$0x1]
  %v296 = vlaneseq
  %v297 = vshrl.u32 %v296, 7
  %v298 = vsub.s32 0, %v297
  %v299 = vrot.slane %v294, %v298
  %v301 = vadd.f32 %v278, %v299
  %v302 = vadd.f32 %v279, %v299
  %v303 = vadd.f32 %v280, %v299
  %v304 = vadd.f32 %v281, %v299
  %v305 = vadd.f32 %v282, %v299
  %v306 = vadd.f32 %v283, %v299
  %v307 = vadd.f32 %v284, %v299
  %v308 = vadd.f32 %v285, %v299
  %v309 = vadd.f32 %v286, %v299
  %v310 = vadd.f32 %v287, %v299
  %v311 = vadd.f32 %v288, %v299
  %v312 = vadd.f32 %v289, %v299
  %v313 = vadd.f32 %v290, %v299
  %v314 = vadd.f32 %v291, %v299
  %v315 = vadd.f32 %v292, %v299
  %v316 = vadd.f32 %v293, %v299
  %v317 = vmax.f32 %v301, 0.0
  %v318 = vmax.f32 %v302, 0.0
  %v319 = vmax.f32 %v303, 0.0
  %v320 = vmax.f32 %v304, 0.0
  %v321 = vmax.f32 %v305, 0.0
  %v322 = vmax.f32 %v306, 0.0
  %v323 = vmax.f32 %v307, 0.0
  %v324 = vmax.f32 %v308, 0.0
  %v325 = vmax.f32 %v309, 0.0
  %v326 = vmax.f32 %v310, 0.0
  %v327 = vmax.f32 %v311, 0.0
  %v328 = vmax.f32 %v312, 0.0
  %v329 = vmax.f32 %v313, 0.0
  %v330 = vmax.f32 %v314, 0.0
  %v331 = vmax.f32 %v315, 0.0
  %v332 = vmax.f32 %v316, 0.0
  %vm333 = vcmask 60416
  %334 = vst.msk [vmem:[#allocation2] sm:$0xf] %vm333, 0
  %vm335 = vcmask 57344
  %336 = vst.msk [vmem:[#allocation2 + $0x4] sm:$0x1] %vm335, 0
  %337 = vst.msk [vmem:[#allocation2 + $0x50] sm:$0xf] %vm333, 0
  %338 = vst.msk [vmem:[#allocation2 + $0x54] sm:$0x1] %vm335, 0
  %s339 = scalar_lea.vmem [#allocation2], 72
  %340 = vst.msk [vmem:[%s339] sm:$0xf] %vm333, 0
  %341 = vst.msk [vmem:[%s339 + $0x4] sm:$0x1] %vm335, 0
  %342 = vst.msk [vmem:[%s339 + $0x50] sm:$0xf] %vm333, 0
  %343 = vst.msk [vmem:[%s339 + $0x54] sm:$0x1] %vm335, 0
  %v360 = vrot.slane %v317, 7
  %v361 = vrot.slane %v318, 7
  %v362 = vrot.slane %v319, 7
  %v363 = vrot.slane %v320, 7
  %v364 = vrot.slane %v321, 7
  %v365 = vrot.slane %v322, 7
  %v366 = vrot.slane %v323, 7
  %v367 = vrot.slane %v324, 7
  %v368 = vrot.slane %v325, 7
  %v369 = vrot.slane %v326, 7
  %v370 = vrot.slane %v327, 7
  %v371 = vrot.slane %v328, 7
  %v372 = vrot.slane %v329, 7
  %v373 = vrot.slane %v330, 7
  %v374 = vrot.slane %v331, 7
  %v375 = vrot.slane %v332, 7
  %vm392 = vcmask 1040384
  %v393 = vsel %vm392, 0.0, %v360
  %v394 = vsel %vm392, 0.0, %v361
  %v395 = vsel %vm392, 0.0, %v362
  %v396 = vsel %vm392, 0.0, %v363
  %v397 = vsel %vm392, 0.0, %v364
  %v398 = vsel %vm392, 0.0, %v365
  %v399 = vsel %vm392, 0.0, %v366
  %v400 = vsel %vm392, 0.0, %v367
  %v401 = vsel %vm392, 0.0, %v368
  %v402 = vsel %vm392, 0.0, %v369
  %v403 = vsel %vm392, 0.0, %v370
  %v404 = vsel %vm392, 0.0, %v371
  %v405 = vsel %vm392, 0.0, %v372
  %v406 = vsel %vm392, 0.0, %v373
  %v407 = vsel %vm392, 0.0, %v374
  %v408 = vsel %vm392, 0.0, %v375
  %v409 = vsel %vm392, %v360, 0.0
  %v410 = vsel %vm392, %v361, 0.0
  %v411 = vsel %vm392, %v362, 0.0
  %v412 = vsel %vm392, %v363, 0.0
  %v413 = vsel %vm392, %v364, 0.0
  %v414 = vsel %vm392, %v365, 0.0
  %v415 = vsel %vm392, %v366, 0.0
  %v416 = vsel %vm392, %v367, 0.0
  %v417 = vsel %vm392, %v368, 0.0
  %v418 = vsel %vm392, %v369, 0.0
  %v419 = vsel %vm392, %v370, 0.0
  %v420 = vsel %vm392, %v371, 0.0
  %v421 = vsel %vm392, %v372, 0.0
  %v422 = vsel %vm392, %v373, 0.0
  %v423 = vsel %vm392, %v374, 0.0
  %v424 = vsel %vm392, %v375, 0.0
  %v425 = vpack.c.bf16 %v409, %v393
  %v426 = vpack.c.bf16 %v410, %v394
  %v427 = vpack.c.bf16 %v411, %v395
  %v428 = vpack.c.bf16 %v412, %v396
  %v429 = vpack.c.bf16 %v413, %v397
  %v430 = vpack.c.bf16 %v414, %v398
  %v431 = vpack.c.bf16 %v415, %v399
  %v432 = vpack.c.bf16 %v416, %v400
  %v433 = vpack.c.bf16 %v417, %v401
  %v434 = vpack.c.bf16 %v418, %v402
  %v435 = vpack.c.bf16 %v419, %v403
  %v436 = vpack.c.bf16 %v420, %v404
  %v437 = vpack.c.bf16 %v421, %v405
  %v438 = vpack.c.bf16 %v422, %v406
  %v439 = vpack.c.bf16 %v423, %v407
  %v440 = vpack.c.bf16 %v424, %v408
  %v457 = vunpack.c.l.b16 %v425
  %v458 = vunpack.c.h.b16 %v425
  %v459 = vunpack.c.l.b16 %v426
  %v460 = vunpack.c.h.b16 %v426
  %v461 = vunpack.c.l.b16 %v427
  %v462 = vunpack.c.h.b16 %v427
  %v463 = vunpack.c.l.b16 %v428
  %v464 = vunpack.c.h.b16 %v428
  %v465 = vunpack.c.l.b16 %v429
  %v466 = vunpack.c.h.b16 %v429
  %v467 = vunpack.c.l.b16 %v430
  %v468 = vunpack.c.h.b16 %v430
  %v469 = vunpack.c.l.b16 %v431
  %v470 = vunpack.c.h.b16 %v431
  %v471 = vunpack.c.l.b16 %v432
  %v472 = vunpack.c.h.b16 %v432
  %v473 = vunpack.c.l.b16 %v433
  %v474 = vunpack.c.h.b16 %v433
  %v475 = vunpack.c.l.b16 %v434
  %v476 = vunpack.c.h.b16 %v434
  %v477 = vunpack.c.l.b16 %v435
  %v478 = vunpack.c.h.b16 %v435
  %v479 = vunpack.c.l.b16 %v436
  %v480 = vunpack.c.h.b16 %v436
  %v481 = vunpack.c.l.b16 %v437
  %v482 = vunpack.c.h.b16 %v437
  %v483 = vunpack.c.l.b16 %v438
  %v484 = vunpack.c.h.b16 %v438
  %v485 = vunpack.c.l.b16 %v439
  %v486 = vunpack.c.h.b16 %v439
  %v487 = vunpack.c.l.b16 %v440
  %v488 = vunpack.c.h.b16 %v440
  %v489 = vpack.c.b16 %v457, %v457
  %v490 = vpack.c.b16 %v458, %v458
  %v491 = vpack.c.b16 %v459, %v459
  %v492 = vpack.c.b16 %v460, %v460
  %v493 = vpack.c.b16 %v461, %v461
  %v494 = vpack.c.b16 %v462, %v462
  %v495 = vpack.c.b16 %v463, %v463
  %v496 = vpack.c.b16 %v464, %v464
  %v497 = vpack.c.b16 %v465, %v465
  %v498 = vpack.c.b16 %v466, %v466
  %v499 = vpack.c.b16 %v467, %v467
  %v500 = vpack.c.b16 %v468, %v468
  %v501 = vpack.c.b16 %v469, %v469
  %v502 = vpack.c.b16 %v470, %v470
  %v503 = vpack.c.b16 %v471, %v471
  %v504 = vpack.c.b16 %v472, %v472
  %v505 = vpack.c.b16 %v473, %v473
  %v506 = vpack.c.b16 %v474, %v474
  %v507 = vpack.c.b16 %v475, %v475
  %v508 = vpack.c.b16 %v476, %v476
  %v509 = vpack.c.b16 %v477, %v477
  %v510 = vpack.c.b16 %v478, %v478
  %v511 = vpack.c.b16 %v479, %v479
  %v512 = vpack.c.b16 %v480, %v480
  %v513 = vpack.c.b16 %v481, %v481
  %v514 = vpack.c.b16 %v482, %v482
  %v515 = vpack.c.b16 %v483, %v483
  %v516 = vpack.c.b16 %v484, %v484
  %v517 = vpack.c.b16 %v485, %v485
  %v518 = vpack.c.b16 %v486, %v486
  %v519 = vpack.c.b16 %v487, %v487
  %v520 = vpack.c.b16 %v488, %v488
  %s553 = scalar_lea.vmem [#allocation2], 8
  %554 = vst.msk [vmem:[%s553] sm:$0xf] %vm333, %v489
  %555 = vst.msk [vmem:[%s553 + $0x4] sm:$0x1] %vm335, %v490
  %556 = vst.msk [vmem:[%s553 + $0x8] sm:$0xf] %vm333, %v491
  %557 = vst.msk [vmem:[%s553 + $0xc] sm:$0x1] %vm335, %v492
  %558 = vst.msk [vmem:[%s553 + $0x10] sm:$0xf] %vm333, %v493
  %559 = vst.msk [vmem:[%s553 + $0x14] sm:$0x1] %vm335, %v494
  %560 = vst.msk [vmem:[%s553 + $0x18] sm:$0xf] %vm333, %v495
  %561 = vst.msk [vmem:[%s553 + $0x1c] sm:$0x1] %vm335, %v496
  %562 = vst.msk [vmem:[%s553 + $0x20] sm:$0xf] %vm333, %v497
  %563 = vst.msk [vmem:[%s553 + $0x24] sm:$0x1] %vm335, %v498
  %564 = vst.msk [vmem:[%s553 + $0x28] sm:$0xf] %vm333, %v499
  %565 = vst.msk [vmem:[%s553 + $0x2c] sm:$0x1] %vm335, %v500
  %566 = vst.msk [vmem:[%s553 + $0x30] sm:$0xf] %vm333, %v501
  %567 = vst.msk [vmem:[%s553 + $0x34] sm:$0x1] %vm335, %v502
  %568 = vst.msk [vmem:[%s553 + $0x38] sm:$0xf] %vm333, %v503
  %569 = vst.msk [vmem:[%s553 + $0x3c] sm:$0x1] %vm335, %v504
  %570 = vst.msk [vmem:[%s553 + $0x50] sm:$0xf] %vm333, %v505
  %571 = vst.msk [vmem:[%s553 + $0x54] sm:$0x1] %vm335, %v506
  %572 = vst.msk [vmem:[%s553 + $0x58] sm:$0xf] %vm333, %v507
  %573 = vst.msk [vmem:[%s553 + $0x5c] sm:$0x1] %vm335, %v508
  %574 = vst.msk [vmem:[%s553 + $0x60] sm:$0xf] %vm333, %v509
  %575 = vst.msk [vmem:[%s553 + $0x64] sm:$0x1] %vm335, %v510
  %576 = vst.msk [vmem:[%s553 + $0x68] sm:$0xf] %vm333, %v511
  %577 = vst.msk [vmem:[%s553 + $0x6c] sm:$0x1] %vm335, %v512
  %578 = vst.msk [vmem:[%s553 + $0x70] sm:$0xf] %vm333, %v513
  %579 = vst.msk [vmem:[%s553 + $0x74] sm:$0x1] %vm335, %v514
  %580 = vst.msk [vmem:[%s553 + $0x78] sm:$0xf] %vm333, %v515
  %581 = vst.msk [vmem:[%s553 + $0x7c] sm:$0x1] %vm335, %v516
  %582 = vst.msk [vmem:[%s553 + $0x80] sm:$0xf] %vm333, %v517
  %583 = vst.msk [vmem:[%s553 + $0x84] sm:$0x1] %vm335, %v518
  %584 = vst.msk [vmem:[%s553 + $0x88] sm:$0xf] %vm333, %v519
  %585 = vst.msk [vmem:[%s553 + $0x8c] sm:$0x1] %vm335, %v520
  %v586 = vld [vmem:[#allocation2] sm:$0xf]
  %v587 = vld [vmem:[#allocation2 + $0x4] sm:$0x1]
  %v588 = vld [vmem:[#allocation2 + $0x8] sm:$0xf]
  %v589 = vld [vmem:[#allocation2 + $0xc] sm:$0x1]
  %v590 = vld [vmem:[#allocation2 + $0x10] sm:$0xf]
  %v591 = vld [vmem:[#allocation2 + $0x14] sm:$0x1]
  %v592 = vld [vmem:[#allocation2 + $0x18] sm:$0xf]
  %v593 = vld [vmem:[#allocation2 + $0x1c] sm:$0x1]
  %v594 = vld [vmem:[#allocation2 + $0x20] sm:$0xf]
  %v595 = vld [vmem:[#allocation2 + $0x24] sm:$0x1]
  %v596 = vld [vmem:[#allocation2 + $0x28] sm:$0xf]
  %v597 = vld [vmem:[#allocation2 + $0x2c] sm:$0x1]
  %v598 = vld [vmem:[#allocation2 + $0x30] sm:$0xf]
  %v599 = vld [vmem:[#allocation2 + $0x34] sm:$0x1]
  %v600 = vld [vmem:[#allocation2 + $0x38] sm:$0xf]
  %v601 = vld [vmem:[#allocation2 + $0x3c] sm:$0x1]
  %v602 = vld [vmem:[#allocation2 + $0x50] sm:$0xf]
  %v603 = vld [vmem:[#allocation2 + $0x54] sm:$0x1]
  %v604 = vld [vmem:[#allocation2 + $0x58] sm:$0xf]
  %v605 = vld [vmem:[#allocation2 + $0x5c] sm:$0x1]
  %v606 = vld [vmem:[#allocation2 + $0x60] sm:$0xf]
  %v607 = vld [vmem:[#allocation2 + $0x64] sm:$0x1]
  %v608 = vld [vmem:[#allocation2 + $0x68] sm:$0xf]
  %v609 = vld [vmem:[#allocation2 + $0x6c] sm:$0x1]
  %v610 = vld [vmem:[#allocation2 + $0x70] sm:$0xf]
  %v611 = vld [vmem:[#allocation2 + $0x74] sm:$0x1]
  %v612 = vld [vmem:[#allocation2 + $0x78] sm:$0xf]
  %v613 = vld [vmem:[#allocation2 + $0x7c] sm:$0x1]
  %v614 = vld [vmem:[#allocation2 + $0x80] sm:$0xf]
  %v615 = vld [vmem:[#allocation2 + $0x84] sm:$0x1]
  %v616 = vld [vmem:[#allocation2 + $0x88] sm:$0xf]
  %v617 = vld [vmem:[#allocation2 + $0x8c] sm:$0x1]
  %v651 = vunpack.c.l.s4 1966171168
  %v652 = vunpack.c.0.s8 %v651
  %v653 = vlaneseq
  %v654 = vshrl.u32 %v653, 7
  %v655 = vsub.s32 %v652, %v654
  %v656 = vrot.slane %v586, %v655
  %v657 = vcombine.high %v656, %v656
  %v659 = vunpack.c.l.s4 1966171168
  %v660 = vunpack.c.0.s8 %v659
  %v661 = vlaneseq
  %v662 = vshrl.u32 %v661, 7
  %v663 = vsub.s32 %v660, %v662
  %v664 = vrot.slane %v656, %v663
  %v666 = vunpack.c.l.s4 1966171168
  %v667 = vunpack.c.0.s8 %v666
  %v668 = vlaneseq
  %v669 = vshrl.u32 %v668, 7
  %v670 = vsub.s32 %v667, %v669
  %v671 = vrot.slane %v657, %v670
  %v672 = vcombine.high %v664, %v664
  %v673 = vcombine.high %v671, %v671
  %v675 = vunpack.c.l.s4 1966171168
  %v676 = vunpack.c.0.s8 %v675
  %v677 = vlaneseq
  %v678 = vshrl.u32 %v677, 7
  %v679 = vsub.s32 %v676, %v678
  %v680 = vrot.slane %v587, %v679
  %v682 = vunpack.c.l.s4 1966171168
  %v683 = vunpack.c.0.s8 %v682
  %v684 = vlaneseq
  %v685 = vshrl.u32 %v684, 7
  %v686 = vsub.s32 %v683, %v685
  %v687 = vrot.slane %v680, %v686
  %v689 = vunpack.c.l.s4 1966171168
  %v690 = vunpack.c.0.s8 %v689
  %v691 = vlaneseq
  %v692 = vshrl.u32 %v691, 7
  %v693 = vsub.s32 %v690, %v692
  %v694 = vrot.slane %v588, %v693
  %v695 = vcombine.high %v694, %v694
  %v697 = vunpack.c.l.s4 1966171168
  %v698 = vunpack.c.0.s8 %v697
  %v699 = vlaneseq
  %v700 = vshrl.u32 %v699, 7
  %v701 = vsub.s32 %v698, %v700
  %v702 = vrot.slane %v694, %v701
  %v704 = vunpack.c.l.s4 1966171168
  %v705 = vunpack.c.0.s8 %v704
  %v706 = vlaneseq
  %v707 = vshrl.u32 %v706, 7
  %v708 = vsub.s32 %v705, %v707
  %v709 = vrot.slane %v695, %v708
  %v710 = vcombine.high %v702, %v702
  %v711 = vcombine.high %v709, %v709
  %v713 = vunpack.c.l.s4 1966171168
  %v714 = vunpack.c.0.s8 %v713
  %v715 = vlaneseq
  %v716 = vshrl.u32 %v715, 7
  %v717 = vsub.s32 %v714, %v716
  %v718 = vrot.slane %v589, %v717
  %v720 = vunpack.c.l.s4 1966171168
  %v721 = vunpack.c.0.s8 %v720
  %v722 = vlaneseq
  %v723 = vshrl.u32 %v722, 7
  %v724 = vsub.s32 %v721, %v723
  %v725 = vrot.slane %v718, %v724
  %v727 = vunpack.c.l.s4 1966171168
  %v728 = vunpack.c.0.s8 %v727
  %v729 = vlaneseq
  %v730 = vshrl.u32 %v729, 7
  %v731 = vsub.s32 %v728, %v730
  %v732 = vrot.slane %v590, %v731
  %v733 = vcombine.high %v732, %v732
  %v735 = vunpack.c.l.s4 1966171168
  %v736 = vunpack.c.0.s8 %v735
  %v737 = vlaneseq
  %v738 = vshrl.u32 %v737, 7
  %v739 = vsub.s32 %v736, %v738
  %v740 = vrot.slane %v732, %v739
  %v742 = vunpack.c.l.s4 1966171168
  %v743 = vunpack.c.0.s8 %v742
  %v744 = vlaneseq
  %v745 = vshrl.u32 %v744, 7
  %v746 = vsub.s32 %v743, %v745
  %v747 = vrot.slane %v733, %v746
  %v748 = vcombine.high %v740, %v740
  %v749 = vcombine.high %v747, %v747
  %v751 = vunpack.c.l.s4 1966171168
  %v752 = vunpack.c.0.s8 %v751
  %v753 = vlaneseq
  %v754 = vshrl.u32 %v753, 7
  %v755 = vsub.s32 %v752, %v754
  %v756 = vrot.slane %v591, %v755
  %v758 = vunpack.c.l.s4 1966171168
  %v759 = vunpack.c.0.s8 %v758
  %v760 = vlaneseq
  %v761 = vshrl.u32 %v760, 7
  %v762 = vsub.s32 %v759, %v761
  %v763 = vrot.slane %v756, %v762
  %v765 = vunpack.c.l.s4 1966171168
  %v766 = vunpack.c.0.s8 %v765
  %v767 = vlaneseq
  %v768 = vshrl.u32 %v767, 7
  %v769 = vsub.s32 %v766, %v768
  %v770 = vrot.slane %v592, %v769
  %v771 = vcombine.high %v770, %v770
  %v773 = vunpack.c.l.s4 1966171168
  %v774 = vunpack.c.0.s8 %v773
  %v775 = vlaneseq
  %v776 = vshrl.u32 %v775, 7
  %v777 = vsub.s32 %v774, %v776
  %v778 = vrot.slane %v770, %v777
  %v780 = vunpack.c.l.s4 1966171168
  %v781 = vunpack.c.0.s8 %v780
  %v782 = vlaneseq
  %v783 = vshrl.u32 %v782, 7
  %v784 = vsub.s32 %v781, %v783
  %v785 = vrot.slane %v771, %v784
  %v786 = vcombine.high %v778, %v778
  %v787 = vcombine.high %v785, %v785
  %v789 = vunpack.c.l.s4 1966171168
  %v790 = vunpack.c.0.s8 %v789
  %v791 = vlaneseq
  %v792 = vshrl.u32 %v791, 7
  %v793 = vsub.s32 %v790, %v792
  %v794 = vrot.slane %v593, %v793
  %v796 = vunpack.c.l.s4 1966171168
  %v797 = vunpack.c.0.s8 %v796
  %v798 = vlaneseq
  %v799 = vshrl.u32 %v798, 7
  %v800 = vsub.s32 %v797, %v799
  %v801 = vrot.slane %v794, %v800
  %v803 = vunpack.c.l.s4 1966171168
  %v804 = vunpack.c.0.s8 %v803
  %v805 = vlaneseq
  %v806 = vshrl.u32 %v805, 7
  %v807 = vsub.s32 %v804, %v806
  %v808 = vrot.slane %v594, %v807
  %v809 = vcombine.high %v808, %v808
  %v811 = vunpack.c.l.s4 1966171168
  %v812 = vunpack.c.0.s8 %v811
  %v813 = vlaneseq
  %v814 = vshrl.u32 %v813, 7
  %v815 = vsub.s32 %v812, %v814
  %v816 = vrot.slane %v808, %v815
  %v818 = vunpack.c.l.s4 1966171168
  %v819 = vunpack.c.0.s8 %v818
  %v820 = vlaneseq
  %v821 = vshrl.u32 %v820, 7
  %v822 = vsub.s32 %v819, %v821
  %v823 = vrot.slane %v809, %v822
  %v824 = vcombine.high %v816, %v816
  %v825 = vcombine.high %v823, %v823
  %v827 = vunpack.c.l.s4 1966171168
  %v828 = vunpack.c.0.s8 %v827
  %v829 = vlaneseq
  %v830 = vshrl.u32 %v829, 7
  %v831 = vsub.s32 %v828, %v830
  %v832 = vrot.slane %v595, %v831
  %v834 = vunpack.c.l.s4 1966171168
  %v835 = vunpack.c.0.s8 %v834
  %v836 = vlaneseq
  %v837 = vshrl.u32 %v836, 7
  %v838 = vsub.s32 %v835, %v837
  %v839 = vrot.slane %v832, %v838
  %v841 = vunpack.c.l.s4 1966171168
  %v842 = vunpack.c.0.s8 %v841
  %v843 = vlaneseq
  %v844 = vshrl.u32 %v843, 7
  %v845 = vsub.s32 %v842, %v844
  %v846 = vrot.slane %v596, %v845
  %v847 = vcombine.high %v846, %v846
  %v849 = vunpack.c.l.s4 1966171168
  %v850 = vunpack.c.0.s8 %v849
  %v851 = vlaneseq
  %v852 = vshrl.u32 %v851, 7
  %v853 = vsub.s32 %v850, %v852
  %v854 = vrot.slane %v846, %v853
  %v856 = vunpack.c.l.s4 1966171168
  %v857 = vunpack.c.0.s8 %v856
  %v858 = vlaneseq
  %v859 = vshrl.u32 %v858, 7
  %v860 = vsub.s32 %v857, %v859
  %v861 = vrot.slane %v847, %v860
  %v862 = vcombine.high %v854, %v854
  %v863 = vcombine.high %v861, %v861
  %v865 = vunpack.c.l.s4 1966171168
  %v866 = vunpack.c.0.s8 %v865
  %v867 = vlaneseq
  %v868 = vshrl.u32 %v867, 7
  %v869 = vsub.s32 %v866, %v868
  %v870 = vrot.slane %v597, %v869
  %v872 = vunpack.c.l.s4 1966171168
  %v873 = vunpack.c.0.s8 %v872
  %v874 = vlaneseq
  %v875 = vshrl.u32 %v874, 7
  %v876 = vsub.s32 %v873, %v875
  %v877 = vrot.slane %v870, %v876
  %v879 = vunpack.c.l.s4 1966171168
  %v880 = vunpack.c.0.s8 %v879
  %v881 = vlaneseq
  %v882 = vshrl.u32 %v881, 7
  %v883 = vsub.s32 %v880, %v882
  %v884 = vrot.slane %v598, %v883
  %v885 = vcombine.high %v884, %v884
  %v887 = vunpack.c.l.s4 1966171168
  %v888 = vunpack.c.0.s8 %v887
  %v889 = vlaneseq
  %v890 = vshrl.u32 %v889, 7
  %v891 = vsub.s32 %v888, %v890
  %v892 = vrot.slane %v884, %v891
  %v894 = vunpack.c.l.s4 1966171168
  %v895 = vunpack.c.0.s8 %v894
  %v896 = vlaneseq
  %v897 = vshrl.u32 %v896, 7
  %v898 = vsub.s32 %v895, %v897
  %v899 = vrot.slane %v885, %v898
  %v900 = vcombine.high %v892, %v892
  %v901 = vcombine.high %v899, %v899
  %v903 = vunpack.c.l.s4 1966171168
  %v904 = vunpack.c.0.s8 %v903
  %v905 = vlaneseq
  %v906 = vshrl.u32 %v905, 7
  %v907 = vsub.s32 %v904, %v906
  %v908 = vrot.slane %v599, %v907
  %v910 = vunpack.c.l.s4 1966171168
  %v911 = vunpack.c.0.s8 %v910
  %v912 = vlaneseq
  %v913 = vshrl.u32 %v912, 7
  %v914 = vsub.s32 %v911, %v913
  %v915 = vrot.slane %v908, %v914
  %v917 = vunpack.c.l.s4 1966171168
  %v918 = vunpack.c.0.s8 %v917
  %v919 = vlaneseq
  %v920 = vshrl.u32 %v919, 7
  %v921 = vsub.s32 %v918, %v920
  %v922 = vrot.slane %v600, %v921
  %v923 = vcombine.high %v922, %v922
  %v925 = vunpack.c.l.s4 1966171168
  %v926 = vunpack.c.0.s8 %v925
  %v927 = vlaneseq
  %v928 = vshrl.u32 %v927, 7
  %v929 = vsub.s32 %v926, %v928
  %v930 = vrot.slane %v922, %v929
  %v932 = vunpack.c.l.s4 1966171168
  %v933 = vunpack.c.0.s8 %v932
  %v934 = vlaneseq
  %v935 = vshrl.u32 %v934, 7
  %v936 = vsub.s32 %v933, %v935
  %v937 = vrot.slane %v923, %v936
  %v938 = vcombine.high %v930, %v930
  %v939 = vcombine.high %v937, %v937
  %v941 = vunpack.c.l.s4 1966171168
  %v942 = vunpack.c.0.s8 %v941
  %v943 = vlaneseq
  %v944 = vshrl.u32 %v943, 7
  %v945 = vsub.s32 %v942, %v944
  %v946 = vrot.slane %v601, %v945
  %v948 = vunpack.c.l.s4 1966171168
  %v949 = vunpack.c.0.s8 %v948
  %v950 = vlaneseq
  %v951 = vshrl.u32 %v950, 7
  %v952 = vsub.s32 %v949, %v951
  %v953 = vrot.slane %v946, %v952
  %v955 = vunpack.c.l.s4 1966171168
  %v956 = vunpack.c.0.s8 %v955
  %v957 = vlaneseq
  %v958 = vshrl.u32 %v957, 7
  %v959 = vsub.s32 %v956, %v958
  %v960 = vrot.slane %v602, %v959
  %v961 = vcombine.high %v960, %v960
  %v963 = vunpack.c.l.s4 1966171168
  %v964 = vunpack.c.0.s8 %v963
  %v965 = vlaneseq
  %v966 = vshrl.u32 %v965, 7
  %v967 = vsub.s32 %v964, %v966
  %v968 = vrot.slane %v960, %v967
  %v970 = vunpack.c.l.s4 1966171168
  %v971 = vunpack.c.0.s8 %v970
  %v972 = vlaneseq
  %v973 = vshrl.u32 %v972, 7
  %v974 = vsub.s32 %v971, %v973
  %v975 = vrot.slane %v961, %v974
  %v976 = vcombine.high %v968, %v968
  %v977 = vcombine.high %v975, %v975
  %v979 = vunpack.c.l.s4 1966171168
  %v980 = vunpack.c.0.s8 %v979
  %v981 = vlaneseq
  %v982 = vshrl.u32 %v981, 7
  %v983 = vsub.s32 %v980, %v982
  %v984 = vrot.slane %v603, %v983
  %v986 = vunpack.c.l.s4 1966171168
  %v987 = vunpack.c.0.s8 %v986
  %v988 = vlaneseq
  %v989 = vshrl.u32 %v988, 7
  %v990 = vsub.s32 %v987, %v989
  %v991 = vrot.slane %v984, %v990
  %v993 = vunpack.c.l.s4 1966171168
  %v994 = vunpack.c.0.s8 %v993
  %v995 = vlaneseq
  %v996 = vshrl.u32 %v995, 7
  %v997 = vsub.s32 %v994, %v996
  %v998 = vrot.slane %v604, %v997
  %v999 = vcombine.high %v998, %v998
  %v1001 = vunpack.c.l.s4 1966171168
  %v1002 = vunpack.c.0.s8 %v1001
  %v1003 = vlaneseq
  %v1004 = vshrl.u32 %v1003, 7
  %v1005 = vsub.s32 %v1002, %v1004
  %v1006 = vrot.slane %v998, %v1005
  %v1008 = vunpack.c.l.s4 1966171168
  %v1009 = vunpack.c.0.s8 %v1008
  %v1010 = vlaneseq
  %v1011 = vshrl.u32 %v1010, 7
  %v1012 = vsub.s32 %v1009, %v1011
  %v1013 = vrot.slane %v999, %v1012
  %v1014 = vcombine.high %v1006, %v1006
  %v1015 = vcombine.high %v1013, %v1013
  %v1017 = vunpack.c.l.s4 1966171168
  %v1018 = vunpack.c.0.s8 %v1017
  %v1019 = vlaneseq
  %v1020 = vshrl.u32 %v1019, 7
  %v1021 = vsub.s32 %v1018, %v1020
  %v1022 = vrot.slane %v605, %v1021
  %v1024 = vunpack.c.l.s4 1966171168
  %v1025 = vunpack.c.0.s8 %v1024
  %v1026 = vlaneseq
  %v1027 = vshrl.u32 %v1026, 7
  %v1028 = vsub.s32 %v1025, %v1027
  %v1029 = vrot.slane %v1022, %v1028
  %v1031 = vunpack.c.l.s4 1966171168
  %v1032 = vunpack.c.0.s8 %v1031
  %v1033 = vlaneseq
  %v1034 = vshrl.u32 %v1033, 7
  %v1035 = vsub.s32 %v1032, %v1034
  %v1036 = vrot.slane %v606, %v1035
  %v1037 = vcombine.high %v1036, %v1036
  %v1039 = vunpack.c.l.s4 1966171168
  %v1040 = vunpack.c.0.s8 %v1039
  %v1041 = vlaneseq
  %v1042 = vshrl.u32 %v1041, 7
  %v1043 = vsub.s32 %v1040, %v1042
  %v1044 = vrot.slane %v1036, %v1043
  %v1046 = vunpack.c.l.s4 1966171168
  %v1047 = vunpack.c.0.s8 %v1046
  %v1048 = vlaneseq
  %v1049 = vshrl.u32 %v1048, 7
  %v1050 = vsub.s32 %v1047, %v1049
  %v1051 = vrot.slane %v1037, %v1050
  %v1052 = vcombine.high %v1044, %v1044
  %v1053 = vcombine.high %v1051, %v1051
  %v1055 = vunpack.c.l.s4 1966171168
  %v1056 = vunpack.c.0.s8 %v1055
  %v1057 = vlaneseq
  %v1058 = vshrl.u32 %v1057, 7
  %v1059 = vsub.s32 %v1056, %v1058
  %v1060 = vrot.slane %v607, %v1059
  %v1062 = vunpack.c.l.s4 1966171168
  %v1063 = vunpack.c.0.s8 %v1062
  %v1064 = vlaneseq
  %v1065 = vshrl.u32 %v1064, 7
  %v1066 = vsub.s32 %v1063, %v1065
  %v1067 = vrot.slane %v1060, %v1066
  %v1069 = vunpack.c.l.s4 1966171168
  %v1070 = vunpack.c.0.s8 %v1069
  %v1071 = vlaneseq
  %v1072 = vshrl.u32 %v1071, 7
  %v1073 = vsub.s32 %v1070, %v1072
  %v1074 = vrot.slane %v608, %v1073
  %v1075 = vcombine.high %v1074, %v1074
  %v1077 = vunpack.c.l.s4 1966171168
  %v1078 = vunpack.c.0.s8 %v1077
  %v1079 = vlaneseq
  %v1080 = vshrl.u32 %v1079, 7
  %v1081 = vsub.s32 %v1078, %v1080
  %v1082 = vrot.slane %v1074, %v1081
  %v1084 = vunpack.c.l.s4 1966171168
  %v1085 = vunpack.c.0.s8 %v1084
  %v1086 = vlaneseq
  %v1087 = vshrl.u32 %v1086, 7
  %v1088 = vsub.s32 %v1085, %v1087
  %v1089 = vrot.slane %v1075, %v1088
  %v1090 = vcombine.high %v1082, %v1082
  %v1091 = vcombine.high %v1089, %v1089
  %v1093 = vunpack.c.l.s4 1966171168
  %v1094 = vunpack.c.0.s8 %v1093
  %v1095 = vlaneseq
  %v1096 = vshrl.u32 %v1095, 7
  %v1097 = vsub.s32 %v1094, %v1096
  %v1098 = vrot.slane %v609, %v1097
  %v1100 = vunpack.c.l.s4 1966171168
  %v1101 = vunpack.c.0.s8 %v1100
  %v1102 = vlaneseq
  %v1103 = vshrl.u32 %v1102, 7
  %v1104 = vsub.s32 %v1101, %v1103
  %v1105 = vrot.slane %v1098, %v1104
  %v1107 = vunpack.c.l.s4 1966171168
  %v1108 = vunpack.c.0.s8 %v1107
  %v1109 = vlaneseq
  %v1110 = vshrl.u32 %v1109, 7
  %v1111 = vsub.s32 %v1108, %v1110
  %v1112 = vrot.slane %v610, %v1111
  %v1113 = vcombine.high %v1112, %v1112
  %v1115 = vunpack.c.l.s4 1966171168
  %v1116 = vunpack.c.0.s8 %v1115
  %v1117 = vlaneseq
  %v1118 = vshrl.u32 %v1117, 7
  %v1119 = vsub.s32 %v1116, %v1118
  %v1120 = vrot.slane %v1112, %v1119
  %v1122 = vunpack.c.l.s4 1966171168
  %v1123 = vunpack.c.0.s8 %v1122
  %v1124 = vlaneseq
  %v1125 = vshrl.u32 %v1124, 7
  %v1126 = vsub.s32 %v1123, %v1125
  %v1127 = vrot.slane %v1113, %v1126
  %v1128 = vcombine.high %v1120, %v1120
  %v1129 = vcombine.high %v1127, %v1127
  %v1131 = vunpack.c.l.s4 1966171168
  %v1132 = vunpack.c.0.s8 %v1131
  %v1133 = vlaneseq
  %v1134 = vshrl.u32 %v1133, 7
  %v1135 = vsub.s32 %v1132, %v1134
  %v1136 = vrot.slane %v611, %v1135
  %v1138 = vunpack.c.l.s4 1966171168
  %v1139 = vunpack.c.0.s8 %v1138
  %v1140 = vlaneseq
  %v1141 = vshrl.u32 %v1140, 7
  %v1142 = vsub.s32 %v1139, %v1141
  %v1143 = vrot.slane %v1136, %v1142
  %v1145 = vunpack.c.l.s4 1966171168
  %v1146 = vunpack.c.0.s8 %v1145
  %v1147 = vlaneseq
  %v1148 = vshrl.u32 %v1147, 7
  %v1149 = vsub.s32 %v1146, %v1148
  %v1150 = vrot.slane %v612, %v1149
  %v1151 = vcombine.high %v1150, %v1150
  %v1153 = vunpack.c.l.s4 1966171168
  %v1154 = vunpack.c.0.s8 %v1153
  %v1155 = vlaneseq
  %v1156 = vshrl.u32 %v1155, 7
  %v1157 = vsub.s32 %v1154, %v1156
  %v1158 = vrot.slane %v1150, %v1157
  %v1160 = vunpack.c.l.s4 1966171168
  %v1161 = vunpack.c.0.s8 %v1160
  %v1162 = vlaneseq
  %v1163 = vshrl.u32 %v1162, 7
  %v1164 = vsub.s32 %v1161, %v1163
  %v1165 = vrot.slane %v1151, %v1164
  %v1166 = vcombine.high %v1158, %v1158
  %v1167 = vcombine.high %v1165, %v1165
  %v1169 = vunpack.c.l.s4 1966171168
  %v1170 = vunpack.c.0.s8 %v1169
  %v1171 = vlaneseq
  %v1172 = vshrl.u32 %v1171, 7
  %v1173 = vsub.s32 %v1170, %v1172
  %v1174 = vrot.slane %v613, %v1173
  %v1176 = vunpack.c.l.s4 1966171168
  %v1177 = vunpack.c.0.s8 %v1176
  %v1178 = vlaneseq
  %v1179 = vshrl.u32 %v1178, 7
  %v1180 = vsub.s32 %v1177, %v1179
  %v1181 = vrot.slane %v1174, %v1180
  %v1183 = vunpack.c.l.s4 1966171168
  %v1184 = vunpack.c.0.s8 %v1183
  %v1185 = vlaneseq
  %v1186 = vshrl.u32 %v1185, 7
  %v1187 = vsub.s32 %v1184, %v1186
  %v1188 = vrot.slane %v614, %v1187
  %v1189 = vcombine.high %v1188, %v1188
  %v1191 = vunpack.c.l.s4 1966171168
  %v1192 = vunpack.c.0.s8 %v1191
  %v1193 = vlaneseq
  %v1194 = vshrl.u32 %v1193, 7
  %v1195 = vsub.s32 %v1192, %v1194
  %v1196 = vrot.slane %v1188, %v1195
  %v1198 = vunpack.c.l.s4 1966171168
  %v1199 = vunpack.c.0.s8 %v1198
  %v1200 = vlaneseq
  %v1201 = vshrl.u32 %v1200, 7
  %v1202 = vsub.s32 %v1199, %v1201
  %v1203 = vrot.slane %v1189, %v1202
  %v1204 = vcombine.high %v1196, %v1196
  %v1205 = vcombine.high %v1203, %v1203
  %v1207 = vunpack.c.l.s4 1966171168
  %v1208 = vunpack.c.0.s8 %v1207
  %v1209 = vlaneseq
  %v1210 = vshrl.u32 %v1209, 7
  %v1211 = vsub.s32 %v1208, %v1210
  %v1212 = vrot.slane %v615, %v1211
  %v1214 = vunpack.c.l.s4 1966171168
  %v1215 = vunpack.c.0.s8 %v1214
  %v1216 = vlaneseq
  %v1217 = vshrl.u32 %v1216, 7
  %v1218 = vsub.s32 %v1215, %v1217
  %v1219 = vrot.slane %v1212, %v1218
  %v1221 = vunpack.c.l.s4 1966171168
  %v1222 = vunpack.c.0.s8 %v1221
  %v1223 = vlaneseq
  %v1224 = vshrl.u32 %v1223, 7
  %v1225 = vsub.s32 %v1222, %v1224
  %v1226 = vrot.slane %v616, %v1225
  %v1227 = vcombine.high %v1226, %v1226
  %v1229 = vunpack.c.l.s4 1966171168
  %v1230 = vunpack.c.0.s8 %v1229
  %v1231 = vlaneseq
  %v1232 = vshrl.u32 %v1231, 7
  %v1233 = vsub.s32 %v1230, %v1232
  %v1234 = vrot.slane %v1226, %v1233
  %v1236 = vunpack.c.l.s4 1966171168
  %v1237 = vunpack.c.0.s8 %v1236
  %v1238 = vlaneseq
  %v1239 = vshrl.u32 %v1238, 7
  %v1240 = vsub.s32 %v1237, %v1239
  %v1241 = vrot.slane %v1227, %v1240
  %v1242 = vcombine.high %v1234, %v1234
  %v1243 = vcombine.high %v1241, %v1241
  %v1245 = vunpack.c.l.s4 1966171168
  %v1246 = vunpack.c.0.s8 %v1245
  %v1247 = vlaneseq
  %v1248 = vshrl.u32 %v1247, 7
  %v1249 = vsub.s32 %v1246, %v1248
  %v1250 = vrot.slane %v617, %v1249
  %v1252 = vunpack.c.l.s4 1966171168
  %v1253 = vunpack.c.0.s8 %v1252
  %v1254 = vlaneseq
  %v1255 = vshrl.u32 %v1254, 7
  %v1256 = vsub.s32 %v1253, %v1255
  %v1257 = vrot.slane %v1250, %v1256
  %v1258 = vld [vmem:[%s6] sm:$0xf]
  %v1259 = vcombine.low %v664, %v671
  %v1260 = vcombine.low %v672, %v673
  %v1261 = vcombine.low %v687, %v702
  %v1262 = vcombine.low %v709, %v710
  %v1264 = vunpack.c.l.s4 1966171168
  %v1265 = vunpack.c.0.s8 %v1264
  %v1266 = vlaneseq
  %v1267 = vshrl.u32 %v1266, 7
  %v1268 = vsub.s32 %v1265, %v1267
  %v1269 = vrot.slane %v1259, %v1268
  %v1271 = vunpack.c.l.s4 1966171168
  %v1272 = vunpack.c.0.s8 %v1271
  %v1273 = vlaneseq
  %v1274 = vshrl.u32 %v1273, 7
  %v1275 = vsub.s32 %v1272, %v1274
  %v1276 = vrot.slane %v1260, %v1275
  %v1278 = vunpack.c.l.s4 1966171168
  %v1279 = vunpack.c.0.s8 %v1278
  %v1280 = vlaneseq
  %v1281 = vshrl.u32 %v1280, 7
  %v1282 = vsub.s32 %v1279, %v1281
  %v1283 = vrot.slane %v1261, %v1282
  %v1285 = vunpack.c.l.s4 1966171168
  %v1286 = vunpack.c.0.s8 %v1285
  %v1287 = vlaneseq
  %v1288 = vshrl.u32 %v1287, 7
  %v1289 = vsub.s32 %v1286, %v1288
  %v1290 = vrot.slane %v1262, %v1289
  %v1291 = vcombine.low %v1269, %v1276
  %v1292 = vcombine.low %v1283, %v1290
  %v1294 = vunpack.c.l.s4 1966171168
  %v1295 = vunpack.c.0.s8 %v1294
  %v1296 = vlaneseq
  %v1297 = vshrl.u32 %v1296, 7
  %v1298 = vsub.s32 %v1295, %v1297
  %v1299 = vrot.slane %v1291, %v1298
  %v1301 = vunpack.c.l.s4 1966171168
  %v1302 = vunpack.c.0.s8 %v1301
  %v1303 = vlaneseq
  %v1304 = vshrl.u32 %v1303, 7
  %v1305 = vsub.s32 %v1302, %v1304
  %v1306 = vrot.slane %v1292, %v1305
  %v1307 = vcombine.low %v1299, %v1306
  %v1308 = vcombine.low %v711, %v725
  %v1309 = vcombine.low %v740, %v747
  %v1310 = vcombine.low %v748, %v749
  %v1311 = vcombine.low %v763, %v778
  %v1313 = vunpack.c.l.s4 1966171168
  %v1314 = vunpack.c.0.s8 %v1313
  %v1315 = vlaneseq
  %v1316 = vshrl.u32 %v1315, 7
  %v1317 = vsub.s32 %v1314, %v1316
  %v1318 = vrot.slane %v1308, %v1317
  %v1320 = vunpack.c.l.s4 1966171168
  %v1321 = vunpack.c.0.s8 %v1320
  %v1322 = vlaneseq
  %v1323 = vshrl.u32 %v1322, 7
  %v1324 = vsub.s32 %v1321, %v1323
  %v1325 = vrot.slane %v1309, %v1324
  %v1327 = vunpack.c.l.s4 1966171168
  %v1328 = vunpack.c.0.s8 %v1327
  %v1329 = vlaneseq
  %v1330 = vshrl.u32 %v1329, 7
  %v1331 = vsub.s32 %v1328, %v1330
  %v1332 = vrot.slane %v1310, %v1331
  %v1334 = vunpack.c.l.s4 1966171168
  %v1335 = vunpack.c.0.s8 %v1334
  %v1336 = vlaneseq
  %v1337 = vshrl.u32 %v1336, 7
  %v1338 = vsub.s32 %v1335, %v1337
  %v1339 = vrot.slane %v1311, %v1338
  %v1340 = vcombine.low %v1318, %v1325
  %v1341 = vcombine.low %v1332, %v1339
  %v1343 = vunpack.c.l.s4 1966171168
  %v1344 = vunpack.c.0.s8 %v1343
  %v1345 = vlaneseq
  %v1346 = vshrl.u32 %v1345, 7
  %v1347 = vsub.s32 %v1344, %v1346
  %v1348 = vrot.slane %v1340, %v1347
  %v1350 = vunpack.c.l.s4 1966171168
  %v1351 = vunpack.c.0.s8 %v1350
  %v1352 = vlaneseq
  %v1353 = vshrl.u32 %v1352, 7
  %v1354 = vsub.s32 %v1351, %v1353
  %v1355 = vrot.slane %v1341, %v1354
  %v1356 = vcombine.low %v1348, %v1355
  %v1357 = vcombine.low %v785, %v786
  %v1358 = vcombine.low %v787, %v801
  %v1359 = vcombine.low %v816, %v823
  %v1360 = vcombine.low %v824, %v825
  %v1362 = vunpack.c.l.s4 1966171168
  %v1363 = vunpack.c.0.s8 %v1362
  %v1364 = vlaneseq
  %v1365 = vshrl.u32 %v1364, 7
  %v1366 = vsub.s32 %v1363, %v1365
  %v1367 = vrot.slane %v1357, %v1366
  %v1369 = vunpack.c.l.s4 1966171168
  %v1370 = vunpack.c.0.s8 %v1369
  %v1371 = vlaneseq
  %v1372 = vshrl.u32 %v1371, 7
  %v1373 = vsub.s32 %v1370, %v1372
  %v1374 = vrot.slane %v1358, %v1373
  %v1376 = vunpack.c.l.s4 1966171168
  %v1377 = vunpack.c.0.s8 %v1376
  %v1378 = vlaneseq
  %v1379 = vshrl.u32 %v1378, 7
  %v1380 = vsub.s32 %v1377, %v1379
  %v1381 = vrot.slane %v1359, %v1380
  %v1383 = vunpack.c.l.s4 1966171168
  %v1384 = vunpack.c.0.s8 %v1383
  %v1385 = vlaneseq
  %v1386 = vshrl.u32 %v1385, 7
  %v1387 = vsub.s32 %v1384, %v1386
  %v1388 = vrot.slane %v1360, %v1387
  %v1389 = vcombine.low %v1367, %v1374
  %v1390 = vcombine.low %v1381, %v1388
  %v1392 = vunpack.c.l.s4 1966171168
  %v1393 = vunpack.c.0.s8 %v1392
  %v1394 = vlaneseq
  %v1395 = vshrl.u32 %v1394, 7
  %v1396 = vsub.s32 %v1393, %v1395
  %v1397 = vrot.slane %v1389, %v1396
  %v1399 = vunpack.c.l.s4 1966171168
  %v1400 = vunpack.c.0.s8 %v1399
  %v1401 = vlaneseq
  %v1402 = vshrl.u32 %v1401, 7
  %v1403 = vsub.s32 %v1400, %v1402
  %v1404 = vrot.slane %v1390, %v1403
  %v1405 = vcombine.low %v1397, %v1404
  %v1406 = vcombine.low %v839, %v854
  %v1407 = vcombine.low %v861, %v862
  %v1408 = vcombine.low %v863, %v877
  %v1409 = vcombine.low %v892, %v899
  %v1411 = vunpack.c.l.s4 1966171168
  %v1412 = vunpack.c.0.s8 %v1411
  %v1413 = vlaneseq
  %v1414 = vshrl.u32 %v1413, 7
  %v1415 = vsub.s32 %v1412, %v1414
  %v1416 = vrot.slane %v1406, %v1415
  %v1418 = vunpack.c.l.s4 1966171168
  %v1419 = vunpack.c.0.s8 %v1418
  %v1420 = vlaneseq
  %v1421 = vshrl.u32 %v1420, 7
  %v1422 = vsub.s32 %v1419, %v1421
  %v1423 = vrot.slane %v1407, %v1422
  %v1425 = vunpack.c.l.s4 1966171168
  %v1426 = vunpack.c.0.s8 %v1425
  %v1427 = vlaneseq
  %v1428 = vshrl.u32 %v1427, 7
  %v1429 = vsub.s32 %v1426, %v1428
  %v1430 = vrot.slane %v1408, %v1429
  %v1432 = vunpack.c.l.s4 1966171168
  %v1433 = vunpack.c.0.s8 %v1432
  %v1434 = vlaneseq
  %v1435 = vshrl.u32 %v1434, 7
  %v1436 = vsub.s32 %v1433, %v1435
  %v1437 = vrot.slane %v1409, %v1436
  %v1438 = vcombine.low %v1416, %v1423
  %v1439 = vcombine.low %v1430, %v1437
  %v1441 = vunpack.c.l.s4 1966171168
  %v1442 = vunpack.c.0.s8 %v1441
  %v1443 = vlaneseq
  %v1444 = vshrl.u32 %v1443, 7
  %v1445 = vsub.s32 %v1442, %v1444
  %v1446 = vrot.slane %v1438, %v1445
  %v1448 = vunpack.c.l.s4 1966171168
  %v1449 = vunpack.c.0.s8 %v1448
  %v1450 = vlaneseq
  %v1451 = vshrl.u32 %v1450, 7
  %v1452 = vsub.s32 %v1449, %v1451
  %v1453 = vrot.slane %v1439, %v1452
  %v1454 = vcombine.low %v1446, %v1453
  %v1455 = vcombine.low %v900, %v901
  %v1456 = vcombine.low %v915, %v930
  %v1457 = vcombine.low %v937, %v938
  %v1458 = vcombine.low %v939, %v953
  %v1460 = vunpack.c.l.s4 1966171168
  %v1461 = vunpack.c.0.s8 %v1460
  %v1462 = vlaneseq
  %v1463 = vshrl.u32 %v1462, 7
  %v1464 = vsub.s32 %v1461, %v1463
  %v1465 = vrot.slane %v1455, %v1464
  %v1467 = vunpack.c.l.s4 1966171168
  %v1468 = vunpack.c.0.s8 %v1467
  %v1469 = vlaneseq
  %v1470 = vshrl.u32 %v1469, 7
  %v1471 = vsub.s32 %v1468, %v1470
  %v1472 = vrot.slane %v1456, %v1471
  %v1474 = vunpack.c.l.s4 1966171168
  %v1475 = vunpack.c.0.s8 %v1474
  %v1476 = vlaneseq
  %v1477 = vshrl.u32 %v1476, 7
  %v1478 = vsub.s32 %v1475, %v1477
  %v1479 = vrot.slane %v1457, %v1478
  %v1481 = vunpack.c.l.s4 1966171168
  %v1482 = vunpack.c.0.s8 %v1481
  %v1483 = vlaneseq
  %v1484 = vshrl.u32 %v1483, 7
  %v1485 = vsub.s32 %v1482, %v1484
  %v1486 = vrot.slane %v1458, %v1485
  %v1487 = vcombine.low %v1465, %v1472
  %v1488 = vcombine.low %v1479, %v1486
  %v1490 = vunpack.c.l.s4 1966171168
  %v1491 = vunpack.c.0.s8 %v1490
  %v1492 = vlaneseq
  %v1493 = vshrl.u32 %v1492, 7
  %v1494 = vsub.s32 %v1491, %v1493
  %v1495 = vrot.slane %v1487, %v1494
  %v1497 = vunpack.c.l.s4 1966171168
  %v1498 = vunpack.c.0.s8 %v1497
  %v1499 = vlaneseq
  %v1500 = vshrl.u32 %v1499, 7
  %v1501 = vsub.s32 %v1498, %v1500
  %v1502 = vrot.slane %v1488, %v1501
  %v1503 = vcombine.low %v1495, %v1502
  %v1504 = vcombine.low %v968, %v975
  %v1505 = vcombine.low %v976, %v977
  %v1506 = vcombine.low %v991, %v1006
  %v1507 = vcombine.low %v1013, %v1014
  %v1509 = vunpack.c.l.s4 1966171168
  %v1510 = vunpack.c.0.s8 %v1509
  %v1511 = vlaneseq
  %v1512 = vshrl.u32 %v1511, 7
  %v1513 = vsub.s32 %v1510, %v1512
  %v1514 = vrot.slane %v1504, %v1513
  %v1516 = vunpack.c.l.s4 1966171168
  %v1517 = vunpack.c.0.s8 %v1516
  %v1518 = vlaneseq
  %v1519 = vshrl.u32 %v1518, 7
  %v1520 = vsub.s32 %v1517, %v1519
  %v1521 = vrot.slane %v1505, %v1520
  %v1523 = vunpack.c.l.s4 1966171168
  %v1524 = vunpack.c.0.s8 %v1523
  %v1525 = vlaneseq
  %v1526 = vshrl.u32 %v1525, 7
  %v1527 = vsub.s32 %v1524, %v1526
  %v1528 = vrot.slane %v1506, %v1527
  %v1530 = vunpack.c.l.s4 1966171168
  %v1531 = vunpack.c.0.s8 %v1530
  %v1532 = vlaneseq
  %v1533 = vshrl.u32 %v1532, 7
  %v1534 = vsub.s32 %v1531, %v1533
  %v1535 = vrot.slane %v1507, %v1534
  %v1536 = vcombine.low %v1514, %v1521
  %v1537 = vcombine.low %v1528, %v1535
  %v1539 = vunpack.c.l.s4 1966171168
  %v1540 = vunpack.c.0.s8 %v1539
  %v1541 = vlaneseq
  %v1542 = vshrl.u32 %v1541, 7
  %v1543 = vsub.s32 %v1540, %v1542
  %v1544 = vrot.slane %v1536, %v1543
  %v1546 = vunpack.c.l.s4 1966171168
  %v1547 = vunpack.c.0.s8 %v1546
  %v1548 = vlaneseq
  %v1549 = vshrl.u32 %v1548, 7
  %v1550 = vsub.s32 %v1547, %v1549
  %v1551 = vrot.slane %v1537, %v1550
  %v1552 = vcombine.low %v1544, %v1551
  %v1553 = vcombine.low %v1015, %v1029
  %v1554 = vcombine.low %v1044, %v1051
  %v1555 = vcombine.low %v1052, %v1053
  %v1556 = vcombine.low %v1067, %v1082
  %v1558 = vunpack.c.l.s4 1966171168
  %v1559 = vunpack.c.0.s8 %v1558
  %v1560 = vlaneseq
  %v1561 = vshrl.u32 %v1560, 7
  %v1562 = vsub.s32 %v1559, %v1561
  %v1563 = vrot.slane %v1553, %v1562
  %v1565 = vunpack.c.l.s4 1966171168
  %v1566 = vunpack.c.0.s8 %v1565
  %v1567 = vlaneseq
  %v1568 = vshrl.u32 %v1567, 7
  %v1569 = vsub.s32 %v1566, %v1568
  %v1570 = vrot.slane %v1554, %v1569
  %v1572 = vunpack.c.l.s4 1966171168
  %v1573 = vunpack.c.0.s8 %v1572
  %v1574 = vlaneseq
  %v1575 = vshrl.u32 %v1574, 7
  %v1576 = vsub.s32 %v1573, %v1575
  %v1577 = vrot.slane %v1555, %v1576
  %v1579 = vunpack.c.l.s4 1966171168
  %v1580 = vunpack.c.0.s8 %v1579
  %v1581 = vlaneseq
  %v1582 = vshrl.u32 %v1581, 7
  %v1583 = vsub.s32 %v1580, %v1582
  %v1584 = vrot.slane %v1556, %v1583
  %v1585 = vcombine.low %v1563, %v1570
  %v1586 = vcombine.low %v1577, %v1584
  %v1588 = vunpack.c.l.s4 1966171168
  %v1589 = vunpack.c.0.s8 %v1588
  %v1590 = vlaneseq
  %v1591 = vshrl.u32 %v1590, 7
  %v1592 = vsub.s32 %v1589, %v1591
  %v1593 = vrot.slane %v1585, %v1592
  %v1595 = vunpack.c.l.s4 1966171168
  %v1596 = vunpack.c.0.s8 %v1595
  %v1597 = vlaneseq
  %v1598 = vshrl.u32 %v1597, 7
  %v1599 = vsub.s32 %v1596, %v1598
  %v1600 = vrot.slane %v1586, %v1599
  %v1601 = vcombine.low %v1593, %v1600
  %v1602 = vcombine.low %v1089, %v1090
  %v1603 = vcombine.low %v1091, %v1105
  %v1604 = vcombine.low %v1120, %v1127
  %v1605 = vcombine.low %v1128, %v1129
  %v1607 = vunpack.c.l.s4 1966171168
  %v1608 = vunpack.c.0.s8 %v1607
  %v1609 = vlaneseq
  %v1610 = vshrl.u32 %v1609, 7
  %v1611 = vsub.s32 %v1608, %v1610
  %v1612 = vrot.slane %v1602, %v1611
  %v1614 = vunpack.c.l.s4 1966171168
  %v1615 = vunpack.c.0.s8 %v1614
  %v1616 = vlaneseq
  %v1617 = vshrl.u32 %v1616, 7
  %v1618 = vsub.s32 %v1615, %v1617
  %v1619 = vrot.slane %v1603, %v1618
  %v1621 = vunpack.c.l.s4 1966171168
  %v1622 = vunpack.c.0.s8 %v1621
  %v1623 = vlaneseq
  %v1624 = vshrl.u32 %v1623, 7
  %v1625 = vsub.s32 %v1622, %v1624
  %v1626 = vrot.slane %v1604, %v1625
  %v1628 = vunpack.c.l.s4 1966171168
  %v1629 = vunpack.c.0.s8 %v1628
  %v1630 = vlaneseq
  %v1631 = vshrl.u32 %v1630, 7
  %v1632 = vsub.s32 %v1629, %v1631
  %v1633 = vrot.slane %v1605, %v1632
  %v1634 = vcombine.low %v1612, %v1619
  %v1635 = vcombine.low %v1626, %v1633
  %v1637 = vunpack.c.l.s4 1966171168
  %v1638 = vunpack.c.0.s8 %v1637
  %v1639 = vlaneseq
  %v1640 = vshrl.u32 %v1639, 7
  %v1641 = vsub.s32 %v1638, %v1640
  %v1642 = vrot.slane %v1634, %v1641
  %v1644 = vunpack.c.l.s4 1966171168
  %v1645 = vunpack.c.0.s8 %v1644
  %v1646 = vlaneseq
  %v1647 = vshrl.u32 %v1646, 7
  %v1648 = vsub.s32 %v1645, %v1647
  %v1649 = vrot.slane %v1635, %v1648
  %v1650 = vcombine.low %v1642, %v1649
  %v1651 = vcombine.low %v1143, %v1158
  %v1652 = vcombine.low %v1165, %v1166
  %v1653 = vcombine.low %v1167, %v1181
  %v1654 = vcombine.low %v1196, %v1203
  %v1656 = vunpack.c.l.s4 1966171168
  %v1657 = vunpack.c.0.s8 %v1656
  %v1658 = vlaneseq
  %v1659 = vshrl.u32 %v1658, 7
  %v1660 = vsub.s32 %v1657, %v1659
  %v1661 = vrot.slane %v1651, %v1660
  %v1663 = vunpack.c.l.s4 1966171168
  %v1664 = vunpack.c.0.s8 %v1663
  %v1665 = vlaneseq
  %v1666 = vshrl.u32 %v1665, 7
  %v1667 = vsub.s32 %v1664, %v1666
  %v1668 = vrot.slane %v1652, %v1667
  %v1670 = vunpack.c.l.s4 1966171168
  %v1671 = vunpack.c.0.s8 %v1670
  %v1672 = vlaneseq
  %v1673 = vshrl.u32 %v1672, 7
  %v1674 = vsub.s32 %v1671, %v1673
  %v1675 = vrot.slane %v1653, %v1674
  %v1677 = vunpack.c.l.s4 1966171168
  %v1678 = vunpack.c.0.s8 %v1677
  %v1679 = vlaneseq
  %v1680 = vshrl.u32 %v1679, 7
  %v1681 = vsub.s32 %v1678, %v1680
  %v1682 = vrot.slane %v1654, %v1681
  %v1683 = vcombine.low %v1661, %v1668
  %v1684 = vcombine.low %v1675, %v1682
  %v1686 = vunpack.c.l.s4 1966171168
  %v1687 = vunpack.c.0.s8 %v1686
  %v1688 = vlaneseq
  %v1689 = vshrl.u32 %v1688, 7
  %v1690 = vsub.s32 %v1687, %v1689
  %v1691 = vrot.slane %v1683, %v1690
  %v1693 = vunpack.c.l.s4 1966171168
  %v1694 = vunpack.c.0.s8 %v1693
  %v1695 = vlaneseq
  %v1696 = vshrl.u32 %v1695, 7
  %v1697 = vsub.s32 %v1694, %v1696
  %v1698 = vrot.slane %v1684, %v1697
  %v1699 = vcombine.low %v1691, %v1698
  %v1700 = vcombine.low %v1204, %v1205
  %v1701 = vcombine.low %v1219, %v1234
  %v1702 = vcombine.low %v1241, %v1242
  %v1703 = vcombine.low %v1243, %v1257
  %v1705 = vunpack.c.l.s4 1966171168
  %v1706 = vunpack.c.0.s8 %v1705
  %v1707 = vlaneseq
  %v1708 = vshrl.u32 %v1707, 7
  %v1709 = vsub.s32 %v1706, %v1708
  %v1710 = vrot.slane %v1700, %v1709
  %v1712 = vunpack.c.l.s4 1966171168
  %v1713 = vunpack.c.0.s8 %v1712
  %v1714 = vlaneseq
  %v1715 = vshrl.u32 %v1714, 7
  %v1716 = vsub.s32 %v1713, %v1715
  %v1717 = vrot.slane %v1701, %v1716
  %v1719 = vunpack.c.l.s4 1966171168
  %v1720 = vunpack.c.0.s8 %v1719
  %v1721 = vlaneseq
  %v1722 = vshrl.u32 %v1721, 7
  %v1723 = vsub.s32 %v1720, %v1722
  %v1724 = vrot.slane %v1702, %v1723
  %v1726 = vunpack.c.l.s4 1966171168
  %v1727 = vunpack.c.0.s8 %v1726
  %v1728 = vlaneseq
  %v1729 = vshrl.u32 %v1728, 7
  %v1730 = vsub.s32 %v1727, %v1729
  %v1731 = vrot.slane %v1703, %v1730
  %v1732 = vcombine.low %v1710, %v1717
  %v1733 = vcombine.low %v1724, %v1731
  %v1735 = vunpack.c.l.s4 1966171168
  %v1736 = vunpack.c.0.s8 %v1735
  %v1737 = vlaneseq
  %v1738 = vshrl.u32 %v1737, 7
  %v1739 = vsub.s32 %v1736, %v1738
  %v1740 = vrot.slane %v1732, %v1739
  %v1742 = vunpack.c.l.s4 1966171168
  %v1743 = vunpack.c.0.s8 %v1742
  %v1744 = vlaneseq
  %v1745 = vshrl.u32 %v1744, 7
  %v1746 = vsub.s32 %v1743, %v1745
  %v1747 = vrot.slane %v1733, %v1746
  %v1748 = vcombine.low %v1740, %v1747
  %vm1749 = vcmask 64512
  %v1751 = vsel %vm1749, %v1307, 0
  %v1754 = vsel %vm1749, %v1356, 0
  %v1757 = vsel %vm1749, %v1405, 0
  %v1760 = vsel %vm1749, %v1454, 0
  %v1763 = vsel %vm1749, %v1503, 0
  %v1766 = vsel %vm1749, %v1552, 0
  %v1769 = vsel %vm1749, %v1601, 0
  %v1772 = vsel %vm1749, %v1650, 0
  %v1775 = vsel %vm1749, %v1699, 0
  %v1778 = vsel %vm1749, %v1748, 0
  %vm1780 = vcmask 1043456
  %v1782 = vsel %vm1780, %v1258, 0
  %1784 = vmatprep.subr.bf16.mxu0 0
  %1785 = vmatpush1.bf16.msra.mxu0 %v1782
  %1786 = vmatprep.subr.bf16.mxu0 0
  %1787 = vmatpush1.bf16.msra.mxu0 0
  %1788 = vmatprep.subr.bf16.mxu0 0
  %1789 = vmatpush1.bf16.msra.mxu0 0
  %1790 = vmatprep.subr.bf16.mxu0 0
  %1791 = vmatpush1.bf16.msra.mxu0 0
  %1792 = vmatprep.subr.bf16.mxu0 0
  %1793 = vmatpush1.bf16.msra.mxu0 0
  %1794 = vmatprep.subr.bf16.mxu0 0
  %1795 = vmatpush1.bf16.msra.mxu0 0
  %1796 = vmatprep.subr.bf16.mxu0 0
  %1797 = vmatpush1.bf16.msra.mxu0 0
  %1798 = vmatprep.subr.bf16.mxu0 0
  %1799 = vmatpush1.bf16.msra.mxu0 0
  %1800 = vmatprep.subr.bf16.mxu0 0
  %1801 = vmatpush1.bf16.msra.mxu0 0
  %1802 = vmatprep.subr.bf16.mxu0 0
  %1803 = vmatpush1.bf16.msra.mxu0 0
  %1804 = vmatprep.subr.bf16.mxu0 0
  %1805 = vmatpush1.bf16.msra.mxu0 0
  %1806 = vmatprep.subr.bf16.mxu0 0
  %1807 = vmatpush1.bf16.msra.mxu0 0
  %1808 = vmatprep.subr.bf16.mxu0 0
  %1809 = vmatpush1.bf16.msra.mxu0 0
  %1810 = vmatprep.subr.bf16.mxu0 0
  %1811 = vmatpush1.bf16.msra.mxu0 0
  %1812 = vmatprep.subr.bf16.mxu0 0
  %1813 = vmatpush1.bf16.msra.mxu0 0
  %1814 = vmatprep.subr.bf16.mxu0 0
  %1815 = vmatpush1.bf16.msra.mxu0 0
  %1816 = vmatprep.mubr.bf16.mxu0 0
  %1817 = vmatmul.mubr.bf16.gmra.mrb[0].mxu0 %v1751
  %v1818 = vpop.f32.mrb[0].mxu0
  %v1819 = vadd.f32 0.0, %v1818
  %v1820 = vpop.f32.mrb[0].mxu0
  %v1821 = vpop.f32.mrb[0].mxu0
  %v1822 = vadd.f32 0.0, %v1821
  %v1823 = vpop.f32.mrb[0].mxu0
  %1824 = vmatprep.mubr.bf16.mxu0 0
  %1825 = vmatmul.mubr.bf16.gmra.mrb[0].mxu0 %v1754
  %v1826 = vpop.f32.mrb[0].mxu0
  %v1827 = vadd.f32 0.0, %v1826
  %v1828 = vpop.f32.mrb[0].mxu0
  %v1829 = vpop.f32.mrb[0].mxu0
  %v1830 = vadd.f32 0.0, %v1829
  %v1831 = vpop.f32.mrb[0].mxu0
  %1832 = vmatprep.mubr.bf16.mxu0 0
  %1833 = vmatmul.mubr.bf16.gmra.mrb[0].mxu0 %v1757
  %v1834 = vpop.f32.mrb[0].mxu0
  %v1835 = vadd.f32 0.0, %v1834
  %v1836 = vpop.f32.mrb[0].mxu0
  %v1837 = vpop.f32.mrb[0].mxu0
  %v1838 = vadd.f32 0.0, %v1837
  %v1839 = vpop.f32.mrb[0].mxu0
  %1840 = vmatprep.mubr.bf16.mxu0 0
  %1841 = vmatmul.mubr.bf16.gmra.mrb[0].mxu0 %v1760
  %v1842 = vpop.f32.mrb[0].mxu0
  %v1843 = vadd.f32 0.0, %v1842
  %v1844 = vpop.f32.mrb[0].mxu0
  %v1845 = vpop.f32.mrb[0].mxu0
  %v1846 = vadd.f32 0.0, %v1845
  %v1847 = vpop.f32.mrb[0].mxu0
  %1848 = vmatprep.mubr.bf16.mxu0 0
  %1849 = vmatmul.mubr.bf16.gmra.mrb[0].mxu0 %v1763
  %v1850 = vpop.f32.mrb[0].mxu0
  %v1851 = vadd.f32 0.0, %v1850
  %v1852 = vpop.f32.mrb[0].mxu0
  %v1853 = vpop.f32.mrb[0].mxu0
  %v1854 = vadd.f32 0.0, %v1853
  %v1855 = vpop.f32.mrb[0].mxu0
  %1856 = vmatprep.mubr.bf16.mxu0 0
  %1857 = vmatmul.mubr.bf16.gmra.mrb[0].mxu0 %v1766
  %v1858 = vpop.f32.mrb[0].mxu0
  %v1859 = vadd.f32 0.0, %v1858
  %v1860 = vpop.f32.mrb[0].mxu0
  %v1861 = vpop.f32.mrb[0].mxu0
  %v1862 = vadd.f32 0.0, %v1861
  %v1863 = vpop.f32.mrb[0].mxu0
  %1864 = vmatprep.mubr.bf16.mxu0 0
  %1865 = vmatmul.mubr.bf16.gmra.mrb[0].mxu0 %v1769
  %v1866 = vpop.f32.mrb[0].mxu0
  %v1867 = vadd.f32 0.0, %v1866
  %v1868 = vpop.f32.mrb[0].mxu0
  %v1869 = vpop.f32.mrb[0].mxu0
  %v1870 = vadd.f32 0.0, %v1869
  %v1871 = vpop.f32.mrb[0].mxu0
  %1872 = vmatprep.mubr.bf16.mxu0 0
  %1873 = vmatmul.mubr.bf16.gmra.mrb[0].mxu0 %v1772
  %v1874 = vpop.f32.mrb[0].mxu0
  %v1875 = vadd.f32 0.0, %v1874
  %v1876 = vpop.f32.mrb[0].mxu0
  %v1877 = vpop.f32.mrb[0].mxu0
  %v1878 = vadd.f32 0.0, %v1877
  %v1879 = vpop.f32.mrb[0].mxu0
  %1880 = vmatprep.mubr.bf16.mxu0 0
  %1881 = vmatmul.mubr.bf16.gmra.mrb[0].mxu0 %v1775
  %v1882 = vpop.f32.mrb[0].mxu0
  %v1883 = vadd.f32 0.0, %v1882
  %v1884 = vpop.f32.mrb[0].mxu0
  %v1885 = vpop.f32.mrb[0].mxu0
  %v1886 = vadd.f32 0.0, %v1885
  %v1887 = vpop.f32.mrb[0].mxu0
  %1888 = vmatprep.mubr.bf16.mxu0 0
  %1889 = vmatmul.mubr.bf16.gmra.mrb[0].mxu0 %v1778
  %v1890 = vpop.f32.mrb[0].mxu0
  %v1891 = vadd.f32 0.0, %v1890
  %v1892 = vpop.f32.mrb[0].mxu0
  %v1893 = vpop.f32.mrb[0].mxu0
  %v1894 = vadd.f32 0.0, %v1893
  %v1895 = vpop.f32.mrb[0].mxu0
  %1896 = vdwg.mxu0
  %v1917 = vcombine.high %v1819, %v1819
  %v1919 = vunpack.c.l.s4 1983009808
  %v1920 = vunpack.c.0.s8 %v1919
  %v1921 = vlaneseq
  %v1922 = vshrl.u32 %v1921, 7
  %v1923 = vsub.s32 %v1920, %v1922
  %v1924 = vrot.slane %v1819, %v1923
  %v1926 = vunpack.c.l.s4 1983009808
  %v1927 = vunpack.c.0.s8 %v1926
  %v1928 = vlaneseq
  %v1929 = vshrl.u32 %v1928, 7
  %v1930 = vsub.s32 %v1927, %v1929
  %v1931 = vrot.slane %v1917, %v1930
  %v1932 = vcombine.high %v1924, %v1924
  %v1933 = vcombine.high %v1931, %v1931
  %v1934 = vcombine.high %v1822, %v1822
  %v1936 = vunpack.c.l.s4 1983009808
  %v1937 = vunpack.c.0.s8 %v1936
  %v1938 = vlaneseq
  %v1939 = vshrl.u32 %v1938, 7
  %v1940 = vsub.s32 %v1937, %v1939
  %v1941 = vrot.slane %v1822, %v1940
  %v1943 = vunpack.c.l.s4 1983009808
  %v1944 = vunpack.c.0.s8 %v1943
  %v1945 = vlaneseq
  %v1946 = vshrl.u32 %v1945, 7
  %v1947 = vsub.s32 %v1944, %v1946
  %v1948 = vrot.slane %v1934, %v1947
  %v1949 = vcombine.high %v1941, %v1941
  %v1950 = vcombine.high %v1948, %v1948
  %v1951 = vcombine.high %v1827, %v1827
  %v1953 = vunpack.c.l.s4 1983009808
  %v1954 = vunpack.c.0.s8 %v1953
  %v1955 = vlaneseq
  %v1956 = vshrl.u32 %v1955, 7
  %v1957 = vsub.s32 %v1954, %v1956
  %v1958 = vrot.slane %v1827, %v1957
  %v1960 = vunpack.c.l.s4 1983009808
  %v1961 = vunpack.c.0.s8 %v1960
  %v1962 = vlaneseq
  %v1963 = vshrl.u32 %v1962, 7
  %v1964 = vsub.s32 %v1961, %v1963
  %v1965 = vrot.slane %v1951, %v1964
  %v1966 = vcombine.high %v1965, %v1965
  %v1967 = vcombine.high %v1830, %v1830
  %v1969 = vunpack.c.l.s4 1983009808
  %v1970 = vunpack.c.0.s8 %v1969
  %v1971 = vlaneseq
  %v1972 = vshrl.u32 %v1971, 7
  %v1973 = vsub.s32 %v1970, %v1972
  %v1974 = vrot.slane %v1830, %v1973
  %v1976 = vunpack.c.l.s4 1983009808
  %v1977 = vunpack.c.0.s8 %v1976
  %v1978 = vlaneseq
  %v1979 = vshrl.u32 %v1978, 7
  %v1980 = vsub.s32 %v1977, %v1979
  %v1981 = vrot.slane %v1967, %v1980
  %v1982 = vcombine.high %v1974, %v1974
  %v1983 = vcombine.high %v1981, %v1981
  %v1984 = vcombine.high %v1835, %v1835
  %v1986 = vunpack.c.l.s4 1983009808
  %v1987 = vunpack.c.0.s8 %v1986
  %v1988 = vlaneseq
  %v1989 = vshrl.u32 %v1988, 7
  %v1990 = vsub.s32 %v1987, %v1989
  %v1991 = vrot.slane %v1835, %v1990
  %v1993 = vunpack.c.l.s4 1983009808
  %v1994 = vunpack.c.0.s8 %v1993
  %v1995 = vlaneseq
  %v1996 = vshrl.u32 %v1995, 7
  %v1997 = vsub.s32 %v1994, %v1996
  %v1998 = vrot.slane %v1984, %v1997
  %v1999 = vcombine.high %v1991, %v1991
  %v2000 = vcombine.high %v1838, %v1838
  %v2002 = vunpack.c.l.s4 1983009808
  %v2003 = vunpack.c.0.s8 %v2002
  %v2004 = vlaneseq
  %v2005 = vshrl.u32 %v2004, 7
  %v2006 = vsub.s32 %v2003, %v2005
  %v2007 = vrot.slane %v1838, %v2006
  %v2009 = vunpack.c.l.s4 1983009808
  %v2010 = vunpack.c.0.s8 %v2009
  %v2011 = vlaneseq
  %v2012 = vshrl.u32 %v2011, 7
  %v2013 = vsub.s32 %v2010, %v2012
  %v2014 = vrot.slane %v2000, %v2013
  %v2015 = vcombine.high %v2007, %v2007
  %v2016 = vcombine.high %v2014, %v2014
  %v2017 = vcombine.high %v1843, %v1843
  %v2019 = vunpack.c.l.s4 1983009808
  %v2020 = vunpack.c.0.s8 %v2019
  %v2021 = vlaneseq
  %v2022 = vshrl.u32 %v2021, 7
  %v2023 = vsub.s32 %v2020, %v2022
  %v2024 = vrot.slane %v1843, %v2023
  %v2026 = vunpack.c.l.s4 1983009808
  %v2027 = vunpack.c.0.s8 %v2026
  %v2028 = vlaneseq
  %v2029 = vshrl.u32 %v2028, 7
  %v2030 = vsub.s32 %v2027, %v2029
  %v2031 = vrot.slane %v2017, %v2030
  %v2032 = vcombine.high %v2024, %v2024
  %v2033 = vcombine.high %v2031, %v2031
  %v2034 = vcombine.high %v1846, %v1846
  %v2036 = vunpack.c.l.s4 1983009808
  %v2037 = vunpack.c.0.s8 %v2036
  %v2038 = vlaneseq
  %v2039 = vshrl.u32 %v2038, 7
  %v2040 = vsub.s32 %v2037, %v2039
  %v2041 = vrot.slane %v1846, %v2040
  %v2043 = vunpack.c.l.s4 1983009808
  %v2044 = vunpack.c.0.s8 %v2043
  %v2045 = vlaneseq
  %v2046 = vshrl.u32 %v2045, 7
  %v2047 = vsub.s32 %v2044, %v2046
  %v2048 = vrot.slane %v2034, %v2047
  %v2049 = vcombine.high %v2048, %v2048
  %v2050 = vcombine.high %v1851, %v1851
  %v2052 = vunpack.c.l.s4 1983009808
  %v2053 = vunpack.c.0.s8 %v2052
  %v2054 = vlaneseq
  %v2055 = vshrl.u32 %v2054, 7
  %v2056 = vsub.s32 %v2053, %v2055
  %v2057 = vrot.slane %v1851, %v2056
  %v2059 = vunpack.c.l.s4 1983009808
  %v2060 = vunpack.c.0.s8 %v2059
  %v2061 = vlaneseq
  %v2062 = vshrl.u32 %v2061, 7
  %v2063 = vsub.s32 %v2060, %v2062
  %v2064 = vrot.slane %v2050, %v2063
  %v2065 = vcombine.high %v2057, %v2057
  %v2066 = vcombine.high %v2064, %v2064
  %v2067 = vcombine.high %v1854, %v1854
  %v2069 = vunpack.c.l.s4 1983009808
  %v2070 = vunpack.c.0.s8 %v2069
  %v2071 = vlaneseq
  %v2072 = vshrl.u32 %v2071, 7
  %v2073 = vsub.s32 %v2070, %v2072
  %v2074 = vrot.slane %v1854, %v2073
  %v2076 = vunpack.c.l.s4 1983009808
  %v2077 = vunpack.c.0.s8 %v2076
  %v2078 = vlaneseq
  %v2079 = vshrl.u32 %v2078, 7
  %v2080 = vsub.s32 %v2077, %v2079
  %v2081 = vrot.slane %v2067, %v2080
  %v2082 = vcombine.high %v2074, %v2074
  %v2083 = vcombine.high %v1859, %v1859
  %v2085 = vunpack.c.l.s4 1983009808
  %v2086 = vunpack.c.0.s8 %v2085
  %v2087 = vlaneseq
  %v2088 = vshrl.u32 %v2087, 7
  %v2089 = vsub.s32 %v2086, %v2088
  %v2090 = vrot.slane %v1859, %v2089
  %v2092 = vunpack.c.l.s4 1983009808
  %v2093 = vunpack.c.0.s8 %v2092
  %v2094 = vlaneseq
  %v2095 = vshrl.u32 %v2094, 7
  %v2096 = vsub.s32 %v2093, %v2095
  %v2097 = vrot.slane %v2083, %v2096
  %v2098 = vcombine.high %v2090, %v2090
  %v2099 = vcombine.high %v2097, %v2097
  %v2100 = vcombine.high %v1862, %v1862
  %v2102 = vunpack.c.l.s4 1983009808
  %v2103 = vunpack.c.0.s8 %v2102
  %v2104 = vlaneseq
  %v2105 = vshrl.u32 %v2104, 7
  %v2106 = vsub.s32 %v2103, %v2105
  %v2107 = vrot.slane %v1862, %v2106
  %v2109 = vunpack.c.l.s4 1983009808
  %v2110 = vunpack.c.0.s8 %v2109
  %v2111 = vlaneseq
  %v2112 = vshrl.u32 %v2111, 7
  %v2113 = vsub.s32 %v2110, %v2112
  %v2114 = vrot.slane %v2100, %v2113
  %v2115 = vcombine.high %v2107, %v2107
  %v2116 = vcombine.high %v2114, %v2114
  %v2117 = vcombine.high %v1867, %v1867
  %v2119 = vunpack.c.l.s4 1983009808
  %v2120 = vunpack.c.0.s8 %v2119
  %v2121 = vlaneseq
  %v2122 = vshrl.u32 %v2121, 7
  %v2123 = vsub.s32 %v2120, %v2122
  %v2124 = vrot.slane %v1867, %v2123
  %v2126 = vunpack.c.l.s4 1983009808
  %v2127 = vunpack.c.0.s8 %v2126
  %v2128 = vlaneseq
  %v2129 = vshrl.u32 %v2128, 7
  %v2130 = vsub.s32 %v2127, %v2129
  %v2131 = vrot.slane %v2117, %v2130
  %v2132 = vcombine.high %v2131, %v2131
  %v2133 = vcombine.high %v1870, %v1870
  %v2135 = vunpack.c.l.s4 1983009808
  %v2136 = vunpack.c.0.s8 %v2135
  %v2137 = vlaneseq
  %v2138 = vshrl.u32 %v2137, 7
  %v2139 = vsub.s32 %v2136, %v2138
  %v2140 = vrot.slane %v1870, %v2139
  %v2142 = vunpack.c.l.s4 1983009808
  %v2143 = vunpack.c.0.s8 %v2142
  %v2144 = vlaneseq
  %v2145 = vshrl.u32 %v2144, 7
  %v2146 = vsub.s32 %v2143, %v2145
  %v2147 = vrot.slane %v2133, %v2146
  %v2148 = vcombine.high %v2140, %v2140
  %v2149 = vcombine.high %v2147, %v2147
  %v2150 = vcombine.high %v1875, %v1875
  %v2152 = vunpack.c.l.s4 1983009808
  %v2153 = vunpack.c.0.s8 %v2152
  %v2154 = vlaneseq
  %v2155 = vshrl.u32 %v2154, 7
  %v2156 = vsub.s32 %v2153, %v2155
  %v2157 = vrot.slane %v1875, %v2156
  %v2159 = vunpack.c.l.s4 1983009808
  %v2160 = vunpack.c.0.s8 %v2159
  %v2161 = vlaneseq
  %v2162 = vshrl.u32 %v2161, 7
  %v2163 = vsub.s32 %v2160, %v2162
  %v2164 = vrot.slane %v2150, %v2163
  %v2165 = vcombine.high %v2157, %v2157
  %v2166 = vcombine.high %v1878, %v1878
  %v2168 = vunpack.c.l.s4 1983009808
  %v2169 = vunpack.c.0.s8 %v2168
  %v2170 = vlaneseq
  %v2171 = vshrl.u32 %v2170, 7
  %v2172 = vsub.s32 %v2169, %v2171
  %v2173 = vrot.slane %v1878, %v2172
  %v2175 = vunpack.c.l.s4 1983009808
  %v2176 = vunpack.c.0.s8 %v2175
  %v2177 = vlaneseq
  %v2178 = vshrl.u32 %v2177, 7
  %v2179 = vsub.s32 %v2176, %v2178
  %v2180 = vrot.slane %v2166, %v2179
  %v2181 = vcombine.high %v2173, %v2173
  %v2182 = vcombine.high %v2180, %v2180
  %v2183 = vcombine.high %v1883, %v1883
  %v2185 = vunpack.c.l.s4 1983009808
  %v2186 = vunpack.c.0.s8 %v2185
  %v2187 = vlaneseq
  %v2188 = vshrl.u32 %v2187, 7
  %v2189 = vsub.s32 %v2186, %v2188
  %v2190 = vrot.slane %v1883, %v2189
  %v2192 = vunpack.c.l.s4 1983009808
  %v2193 = vunpack.c.0.s8 %v2192
  %v2194 = vlaneseq
  %v2195 = vshrl.u32 %v2194, 7
  %v2196 = vsub.s32 %v2193, %v2195
  %v2197 = vrot.slane %v2183, %v2196
  %v2198 = vcombine.high %v2190, %v2190
  %v2199 = vcombine.high %v2197, %v2197
  %v2200 = vcombine.high %v1886, %v1886
  %v2202 = vunpack.c.l.s4 1983009808
  %v2203 = vunpack.c.0.s8 %v2202
  %v2204 = vlaneseq
  %v2205 = vshrl.u32 %v2204, 7
  %v2206 = vsub.s32 %v2203, %v2205
  %v2207 = vrot.slane %v1886, %v2206
  %v2209 = vunpack.c.l.s4 1983009808
  %v2210 = vunpack.c.0.s8 %v2209
  %v2211 = vlaneseq
  %v2212 = vshrl.u32 %v2211, 7
  %v2213 = vsub.s32 %v2210, %v2212
  %v2214 = vrot.slane %v2200, %v2213
  %v2215 = vcombine.high %v2214, %v2214
  %v2216 = vcombine.high %v1891, %v1891
  %v2218 = vunpack.c.l.s4 1983009808
  %v2219 = vunpack.c.0.s8 %v2218
  %v2220 = vlaneseq
  %v2221 = vshrl.u32 %v2220, 7
  %v2222 = vsub.s32 %v2219, %v2221
  %v2223 = vrot.slane %v1891, %v2222
  %v2225 = vunpack.c.l.s4 1983009808
  %v2226 = vunpack.c.0.s8 %v2225
  %v2227 = vlaneseq
  %v2228 = vshrl.u32 %v2227, 7
  %v2229 = vsub.s32 %v2226, %v2228
  %v2230 = vrot.slane %v2216, %v2229
  %v2231 = vcombine.high %v2223, %v2223
  %v2232 = vcombine.high %v2230, %v2230
  %v2233 = vcombine.high %v1894, %v1894
  %v2235 = vunpack.c.l.s4 1983009808
  %v2236 = vunpack.c.0.s8 %v2235
  %v2237 = vlaneseq
  %v2238 = vshrl.u32 %v2237, 7
  %v2239 = vsub.s32 %v2236, %v2238
  %v2240 = vrot.slane %v1894, %v2239
  %v2242 = vunpack.c.l.s4 1983009808
  %v2243 = vunpack.c.0.s8 %v2242
  %v2244 = vlaneseq
  %v2245 = vshrl.u32 %v2244, 7
  %v2246 = vsub.s32 %v2243, %v2245
  %v2247 = vrot.slane %v2233, %v2246
  %v2248 = vcombine.high %v2240, %v2240
  %s2313 = scalar_lea.vmem %s6, 4
  %v2314 = vld [vmem:[%s2313] sm:$0xf]
  %v2316 = vsel %vm1780, %v2314, 0
  %2318 = vmatprep.subr.bf16.mxu0 0
  %2319 = vmatpush1.bf16.msra.mxu0 %v2316
  %2320 = vmatprep.subr.bf16.mxu0 0
  %2321 = vmatpush1.bf16.msra.mxu0 0
  %2322 = vmatprep.subr.bf16.mxu0 0
  %2323 = vmatpush1.bf16.msra.mxu0 0
  %2324 = vmatprep.subr.bf16.mxu0 0
  %2325 = vmatpush1.bf16.msra.mxu0 0
  %2326 = vmatprep.subr.bf16.mxu0 0
  %2327 = vmatpush1.bf16.msra.mxu0 0
  %2328 = vmatprep.subr.bf16.mxu0 0
  %2329 = vmatpush1.bf16.msra.mxu0 0
  %2330 = vmatprep.subr.bf16.mxu0 0
  %2331 = vmatpush1.bf16.msra.mxu0 0
  %2332 = vmatprep.subr.bf16.mxu0 0
  %2333 = vmatpush1.bf16.msra.mxu0 0
  %2334 = vmatprep.subr.bf16.mxu0 0
  %2335 = vmatpush1.bf16.msra.mxu0 0
  %2336 = vmatprep.subr.bf16.mxu0 0
  %2337 = vmatpush1.bf16.msra.mxu0 0
  %2338 = vmatprep.subr.bf16.mxu0 0
  %2339 = vmatpush1.bf16.msra.mxu0 0
  %2340 = vmatprep.subr.bf16.mxu0 0
  %2341 = vmatpush1.bf16.msra.mxu0 0
  %2342 = vmatprep.subr.bf16.mxu0 0
  %2343 = vmatpush1.bf16.msra.mxu0 0
  %2344 = vmatprep.subr.bf16.mxu0 0
  %2345 = vmatpush1.bf16.msra.mxu0 0
  %2346 = vmatprep.subr.bf16.mxu0 0
  %2347 = vmatpush1.bf16.msra.mxu0 0
  %2348 = vmatprep.subr.bf16.mxu0 0
  %2349 = vmatpush1.bf16.msra.mxu0 0
  %2350 = vmatprep.mubr.bf16.mxu0 0
  %2351 = vmatmul.mubr.bf16.gmra.mrb[0].mxu0 %v1751
  %v2352 = vpop.f32.mrb[0].mxu0
  %v2353 = vadd.f32 0.0, %v2352
  %v2354 = vpop.f32.mrb[0].mxu0
  %v2355 = vpop.f32.mrb[0].mxu0
  %v2356 = vadd.f32 0.0, %v2355
  %v2357 = vpop.f32.mrb[0].mxu0
  %2358 = vmatprep.mubr.bf16.mxu0 0
  %2359 = vmatmul.mubr.bf16.gmra.mrb[0].mxu0 %v1754
  %v2360 = vpop.f32.mrb[0].mxu0
  %v2361 = vadd.f32 0.0, %v2360
  %v2362 = vpop.f32.mrb[0].mxu0
  %v2363 = vpop.f32.mrb[0].mxu0
  %v2364 = vadd.f32 0.0, %v2363
  %v2365 = vpop.f32.mrb[0].mxu0
  %2366 = vmatprep.mubr.bf16.mxu0 0
  %2367 = vmatmul.mubr.bf16.gmra.mrb[0].mxu0 %v1757
  %v2368 = vpop.f32.mrb[0].mxu0
  %v2369 = vadd.f32 0.0, %v2368
  %v2370 = vpop.f32.mrb[0].mxu0
  %v2371 = vpop.f32.mrb[0].mxu0
  %v2372 = vadd.f32 0.0, %v2371
  %v2373 = vpop.f32.mrb[0].mxu0
  %2374 = vmatprep.mubr.bf16.mxu0 0
  %2375 = vmatmul.mubr.bf16.gmra.mrb[0].mxu0 %v1760
  %v2376 = vpop.f32.mrb[0].mxu0
  %v2377 = vadd.f32 0.0, %v2376
  %v2378 = vpop.f32.mrb[0].mxu0
  %v2379 = vpop.f32.mrb[0].mxu0
  %v2380 = vadd.f32 0.0, %v2379
  %v2381 = vpop.f32.mrb[0].mxu0
  %2382 = vmatprep.mubr.bf16.mxu0 0
  %2383 = vmatmul.mubr.bf16.gmra.mrb[0].mxu0 %v1763
  %v2384 = vpop.f32.mrb[0].mxu0
  %v2385 = vadd.f32 0.0, %v2384
  %v2386 = vpop.f32.mrb[0].mxu0
  %v2387 = vpop.f32.mrb[0].mxu0
  %v2388 = vadd.f32 0.0, %v2387
  %v2389 = vpop.f32.mrb[0].mxu0
  %2390 = vmatprep.mubr.bf16.mxu0 0
  %2391 = vmatmul.mubr.bf16.gmra.mrb[0].mxu0 %v1766
  %v2392 = vpop.f32.mrb[0].mxu0
  %v2393 = vadd.f32 0.0, %v2392
  %v2394 = vpop.f32.mrb[0].mxu0
  %v2395 = vpop.f32.mrb[0].mxu0
  %v2396 = vadd.f32 0.0, %v2395
  %v2397 = vpop.f32.mrb[0].mxu0
  %2398 = vmatprep.mubr.bf16.mxu0 0
  %2399 = vmatmul.mubr.bf16.gmra.mrb[0].mxu0 %v1769
  %v2400 = vpop.f32.mrb[0].mxu0
  %v2401 = vadd.f32 0.0, %v2400
  %v2402 = vpop.f32.mrb[0].mxu0
  %v2403 = vpop.f32.mrb[0].mxu0
  %v2404 = vadd.f32 0.0, %v2403
  %v2405 = vpop.f32.mrb[0].mxu0
  %2406 = vmatprep.mubr.bf16.mxu0 0
  %2407 = vmatmul.mubr.bf16.gmra.mrb[0].mxu0 %v1772
  %v2408 = vpop.f32.mrb[0].mxu0
  %v2409 = vadd.f32 0.0, %v2408
  %v2410 = vpop.f32.mrb[0].mxu0
  %v2411 = vpop.f32.mrb[0].mxu0
  %v2412 = vadd.f32 0.0, %v2411
  %v2413 = vpop.f32.mrb[0].mxu0
  %2414 = vmatprep.mubr.bf16.mxu0 0
  %2415 = vmatmul.mubr.bf16.gmra.mrb[0].mxu0 %v1775
  %v2416 = vpop.f32.mrb[0].mxu0
  %v2417 = vadd.f32 0.0, %v2416
  %v2418 = vpop.f32.mrb[0].mxu0
  %v2419 = vpop.f32.mrb[0].mxu0
  %v2420 = vadd.f32 0.0, %v2419
  %v2421 = vpop.f32.mrb[0].mxu0
  %2422 = vmatprep.mubr.bf16.mxu0 0
  %2423 = vmatmul.mubr.bf16.gmra.mrb[0].mxu0 %v1778
  %v2424 = vpop.f32.mrb[0].mxu0
  %v2425 = vadd.f32 0.0, %v2424
  %v2426 = vpop.f32.mrb[0].mxu0
  %v2427 = vpop.f32.mrb[0].mxu0
  %v2428 = vadd.f32 0.0, %v2427
  %v2429 = vpop.f32.mrb[0].mxu0
  %2430 = vdwg.mxu0
  %v2451 = vcombine.high %v2353, %v2353
  %v2453 = vunpack.c.l.s4 1983009808
  %v2454 = vunpack.c.0.s8 %v2453
  %v2455 = vlaneseq
  %v2456 = vshrl.u32 %v2455, 7
  %v2457 = vsub.s32 %v2454, %v2456
  %v2458 = vrot.slane %v2353, %v2457
  %v2460 = vunpack.c.l.s4 1983009808
  %v2461 = vunpack.c.0.s8 %v2460
  %v2462 = vlaneseq
  %v2463 = vshrl.u32 %v2462, 7
  %v2464 = vsub.s32 %v2461, %v2463
  %v2465 = vrot.slane %v2451, %v2464
  %v2466 = vcombine.high %v2458, %v2458
  %v2467 = vcombine.high %v2465, %v2465
  %v2468 = vcombine.high %v2356, %v2356
  %v2470 = vunpack.c.l.s4 1983009808
  %v2471 = vunpack.c.0.s8 %v2470
  %v2472 = vlaneseq
  %v2473 = vshrl.u32 %v2472, 7
  %v2474 = vsub.s32 %v2471, %v2473
  %v2475 = vrot.slane %v2356, %v2474
  %v2477 = vunpack.c.l.s4 1983009808
  %v2478 = vunpack.c.0.s8 %v2477
  %v2479 = vlaneseq
  %v2480 = vshrl.u32 %v2479, 7
  %v2481 = vsub.s32 %v2478, %v2480
  %v2482 = vrot.slane %v2468, %v2481
  %v2483 = vcombine.high %v2475, %v2475
  %v2484 = vcombine.high %v2482, %v2482
  %v2485 = vcombine.high %v2361, %v2361
  %v2487 = vunpack.c.l.s4 1983009808
  %v2488 = vunpack.c.0.s8 %v2487
  %v2489 = vlaneseq
  %v2490 = vshrl.u32 %v2489, 7
  %v2491 = vsub.s32 %v2488, %v2490
  %v2492 = vrot.slane %v2361, %v2491
  %v2494 = vunpack.c.l.s4 1983009808
  %v2495 = vunpack.c.0.s8 %v2494
  %v2496 = vlaneseq
  %v2497 = vshrl.u32 %v2496, 7
  %v2498 = vsub.s32 %v2495, %v2497
  %v2499 = vrot.slane %v2485, %v2498
  %v2500 = vcombine.high %v2492, %v2492
  %v2501 = vcombine.high %v2499, %v2499
  %v2502 = vcombine.high %v2364, %v2364
  %v2504 = vunpack.c.l.s4 1983009808
  %v2505 = vunpack.c.0.s8 %v2504
  %v2506 = vlaneseq
  %v2507 = vshrl.u32 %v2506, 7
  %v2508 = vsub.s32 %v2505, %v2507
  %v2509 = vrot.slane %v2364, %v2508
  %v2511 = vunpack.c.l.s4 1983009808
  %v2512 = vunpack.c.0.s8 %v2511
  %v2513 = vlaneseq
  %v2514 = vshrl.u32 %v2513, 7
  %v2515 = vsub.s32 %v2512, %v2514
  %v2516 = vrot.slane %v2502, %v2515
  %v2517 = vcombine.high %v2509, %v2509
  %v2518 = vcombine.high %v2516, %v2516
  %v2519 = vcombine.high %v2369, %v2369
  %v2521 = vunpack.c.l.s4 1983009808
  %v2522 = vunpack.c.0.s8 %v2521
  %v2523 = vlaneseq
  %v2524 = vshrl.u32 %v2523, 7
  %v2525 = vsub.s32 %v2522, %v2524
  %v2526 = vrot.slane %v2369, %v2525
  %v2528 = vunpack.c.l.s4 1983009808
  %v2529 = vunpack.c.0.s8 %v2528
  %v2530 = vlaneseq
  %v2531 = vshrl.u32 %v2530, 7
  %v2532 = vsub.s32 %v2529, %v2531
  %v2533 = vrot.slane %v2519, %v2532
  %v2534 = vcombine.high %v2526, %v2526
  %v2535 = vcombine.high %v2533, %v2533
  %v2536 = vcombine.high %v2372, %v2372
  %v2538 = vunpack.c.l.s4 1983009808
  %v2539 = vunpack.c.0.s8 %v2538
  %v2540 = vlaneseq
  %v2541 = vshrl.u32 %v2540, 7
  %v2542 = vsub.s32 %v2539, %v2541
  %v2543 = vrot.slane %v2372, %v2542
  %v2545 = vunpack.c.l.s4 1983009808
  %v2546 = vunpack.c.0.s8 %v2545
  %v2547 = vlaneseq
  %v2548 = vshrl.u32 %v2547, 7
  %v2549 = vsub.s32 %v2546, %v2548
  %v2550 = vrot.slane %v2536, %v2549
  %v2551 = vcombine.high %v2543, %v2543
  %v2552 = vcombine.high %v2550, %v2550
  %v2553 = vcombine.high %v2377, %v2377
  %v2555 = vunpack.c.l.s4 1983009808
  %v2556 = vunpack.c.0.s8 %v2555
  %v2557 = vlaneseq
  %v2558 = vshrl.u32 %v2557, 7
  %v2559 = vsub.s32 %v2556, %v2558
  %v2560 = vrot.slane %v2377, %v2559
  %v2562 = vunpack.c.l.s4 1983009808
  %v2563 = vunpack.c.0.s8 %v2562
  %v2564 = vlaneseq
  %v2565 = vshrl.u32 %v2564, 7
  %v2566 = vsub.s32 %v2563, %v2565
  %v2567 = vrot.slane %v2553, %v2566
  %v2568 = vcombine.high %v2560, %v2560
  %v2569 = vcombine.high %v2567, %v2567
  %v2570 = vcombine.high %v2380, %v2380
  %v2572 = vunpack.c.l.s4 1983009808
  %v2573 = vunpack.c.0.s8 %v2572
  %v2574 = vlaneseq
  %v2575 = vshrl.u32 %v2574, 7
  %v2576 = vsub.s32 %v2573, %v2575
  %v2577 = vrot.slane %v2380, %v2576
  %v2579 = vunpack.c.l.s4 1983009808
  %v2580 = vunpack.c.0.s8 %v2579
  %v2581 = vlaneseq
  %v2582 = vshrl.u32 %v2581, 7
  %v2583 = vsub.s32 %v2580, %v2582
  %v2584 = vrot.slane %v2570, %v2583
  %v2585 = vcombine.high %v2577, %v2577
  %v2586 = vcombine.high %v2584, %v2584
  %v2587 = vcombine.high %v2385, %v2385
  %v2589 = vunpack.c.l.s4 1983009808
  %v2590 = vunpack.c.0.s8 %v2589
  %v2591 = vlaneseq
  %v2592 = vshrl.u32 %v2591, 7
  %v2593 = vsub.s32 %v2590, %v2592
  %v2594 = vrot.slane %v2385, %v2593
  %v2596 = vunpack.c.l.s4 1983009808
  %v2597 = vunpack.c.0.s8 %v2596
  %v2598 = vlaneseq
  %v2599 = vshrl.u32 %v2598, 7
  %v2600 = vsub.s32 %v2597, %v2599
  %v2601 = vrot.slane %v2587, %v2600
  %v2602 = vcombine.high %v2594, %v2594
  %v2603 = vcombine.high %v2601, %v2601
  %v2604 = vcombine.high %v2388, %v2388
  %v2606 = vunpack.c.l.s4 1983009808
  %v2607 = vunpack.c.0.s8 %v2606
  %v2608 = vlaneseq
  %v2609 = vshrl.u32 %v2608, 7
  %v2610 = vsub.s32 %v2607, %v2609
  %v2611 = vrot.slane %v2388, %v2610
  %v2613 = vunpack.c.l.s4 1983009808
  %v2614 = vunpack.c.0.s8 %v2613
  %v2615 = vlaneseq
  %v2616 = vshrl.u32 %v2615, 7
  %v2617 = vsub.s32 %v2614, %v2616
  %v2618 = vrot.slane %v2604, %v2617
  %v2619 = vcombine.high %v2611, %v2611
  %v2620 = vcombine.high %v2618, %v2618
  %v2621 = vcombine.high %v2393, %v2393
  %v2623 = vunpack.c.l.s4 1983009808
  %v2624 = vunpack.c.0.s8 %v2623
  %v2625 = vlaneseq
  %v2626 = vshrl.u32 %v2625, 7
  %v2627 = vsub.s32 %v2624, %v2626
  %v2628 = vrot.slane %v2393, %v2627
  %v2630 = vunpack.c.l.s4 1983009808
  %v2631 = vunpack.c.0.s8 %v2630
  %v2632 = vlaneseq
  %v2633 = vshrl.u32 %v2632, 7
  %v2634 = vsub.s32 %v2631, %v2633
  %v2635 = vrot.slane %v2621, %v2634
  %v2636 = vcombine.high %v2628, %v2628
  %v2637 = vcombine.high %v2635, %v2635
  %v2638 = vcombine.high %v2396, %v2396
  %v2640 = vunpack.c.l.s4 1983009808
  %v2641 = vunpack.c.0.s8 %v2640
  %v2642 = vlaneseq
  %v2643 = vshrl.u32 %v2642, 7
  %v2644 = vsub.s32 %v2641, %v2643
  %v2645 = vrot.slane %v2396, %v2644
  %v2647 = vunpack.c.l.s4 1983009808
  %v2648 = vunpack.c.0.s8 %v2647
  %v2649 = vlaneseq
  %v2650 = vshrl.u32 %v2649, 7
  %v2651 = vsub.s32 %v2648, %v2650
  %v2652 = vrot.slane %v2638, %v2651
  %v2653 = vcombine.high %v2645, %v2645
  %v2654 = vcombine.high %v2652, %v2652
  %v2655 = vcombine.high %v2401, %v2401
  %v2657 = vunpack.c.l.s4 1983009808
  %v2658 = vunpack.c.0.s8 %v2657
  %v2659 = vlaneseq
  %v2660 = vshrl.u32 %v2659, 7
  %v2661 = vsub.s32 %v2658, %v2660
  %v2662 = vrot.slane %v2401, %v2661
  %v2664 = vunpack.c.l.s4 1983009808
  %v2665 = vunpack.c.0.s8 %v2664
  %v2666 = vlaneseq
  %v2667 = vshrl.u32 %v2666, 7
  %v2668 = vsub.s32 %v2665, %v2667
  %v2669 = vrot.slane %v2655, %v2668
  %v2670 = vcombine.high %v2662, %v2662
  %v2671 = vcombine.high %v2669, %v2669
  %v2672 = vcombine.high %v2404, %v2404
  %v2674 = vunpack.c.l.s4 1983009808
  %v2675 = vunpack.c.0.s8 %v2674
  %v2676 = vlaneseq
  %v2677 = vshrl.u32 %v2676, 7
  %v2678 = vsub.s32 %v2675, %v2677
  %v2679 = vrot.slane %v2404, %v2678
  %v2681 = vunpack.c.l.s4 1983009808
  %v2682 = vunpack.c.0.s8 %v2681
  %v2683 = vlaneseq
  %v2684 = vshrl.u32 %v2683, 7
  %v2685 = vsub.s32 %v2682, %v2684
  %v2686 = vrot.slane %v2672, %v2685
  %v2687 = vcombine.high %v2679, %v2679
  %v2688 = vcombine.high %v2686, %v2686
  %v2689 = vcombine.high %v2409, %v2409
  %v2691 = vunpack.c.l.s4 1983009808
  %v2692 = vunpack.c.0.s8 %v2691
  %v2693 = vlaneseq
  %v2694 = vshrl.u32 %v2693, 7
  %v2695 = vsub.s32 %v2692, %v2694
  %v2696 = vrot.slane %v2409, %v2695
  %v2698 = vunpack.c.l.s4 1983009808
  %v2699 = vunpack.c.0.s8 %v2698
  %v2700 = vlaneseq
  %v2701 = vshrl.u32 %v2700, 7
  %v2702 = vsub.s32 %v2699, %v2701
  %v2703 = vrot.slane %v2689, %v2702
  %v2704 = vcombine.high %v2696, %v2696
  %v2705 = vcombine.high %v2703, %v2703
  %v2706 = vcombine.high %v2412, %v2412
  %v2708 = vunpack.c.l.s4 1983009808
  %v2709 = vunpack.c.0.s8 %v2708
  %v2710 = vlaneseq
  %v2711 = vshrl.u32 %v2710, 7
  %v2712 = vsub.s32 %v2709, %v2711
  %v2713 = vrot.slane %v2412, %v2712
  %v2715 = vunpack.c.l.s4 1983009808
  %v2716 = vunpack.c.0.s8 %v2715
  %v2717 = vlaneseq
  %v2718 = vshrl.u32 %v2717, 7
  %v2719 = vsub.s32 %v2716, %v2718
  %v2720 = vrot.slane %v2706, %v2719
  %v2721 = vcombine.high %v2713, %v2713
  %v2722 = vcombine.high %v2720, %v2720
  %v2723 = vcombine.high %v2417, %v2417
  %v2725 = vunpack.c.l.s4 1983009808
  %v2726 = vunpack.c.0.s8 %v2725
  %v2727 = vlaneseq
  %v2728 = vshrl.u32 %v2727, 7
  %v2729 = vsub.s32 %v2726, %v2728
  %v2730 = vrot.slane %v2417, %v2729
  %v2732 = vunpack.c.l.s4 1983009808
  %v2733 = vunpack.c.0.s8 %v2732
  %v2734 = vlaneseq
  %v2735 = vshrl.u32 %v2734, 7
  %v2736 = vsub.s32 %v2733, %v2735
  %v2737 = vrot.slane %v2723, %v2736
  %v2738 = vcombine.high %v2730, %v2730
  %v2739 = vcombine.high %v2737, %v2737
  %v2740 = vcombine.high %v2420, %v2420
  %v2742 = vunpack.c.l.s4 1983009808
  %v2743 = vunpack.c.0.s8 %v2742
  %v2744 = vlaneseq
  %v2745 = vshrl.u32 %v2744, 7
  %v2746 = vsub.s32 %v2743, %v2745
  %v2747 = vrot.slane %v2420, %v2746
  %v2749 = vunpack.c.l.s4 1983009808
  %v2750 = vunpack.c.0.s8 %v2749
  %v2751 = vlaneseq
  %v2752 = vshrl.u32 %v2751, 7
  %v2753 = vsub.s32 %v2750, %v2752
  %v2754 = vrot.slane %v2740, %v2753
  %v2755 = vcombine.high %v2747, %v2747
  %v2756 = vcombine.high %v2754, %v2754
  %v2757 = vcombine.high %v2425, %v2425
  %v2759 = vunpack.c.l.s4 1983009808
  %v2760 = vunpack.c.0.s8 %v2759
  %v2761 = vlaneseq
  %v2762 = vshrl.u32 %v2761, 7
  %v2763 = vsub.s32 %v2760, %v2762
  %v2764 = vrot.slane %v2425, %v2763
  %v2766 = vunpack.c.l.s4 1983009808
  %v2767 = vunpack.c.0.s8 %v2766
  %v2768 = vlaneseq
  %v2769 = vshrl.u32 %v2768, 7
  %v2770 = vsub.s32 %v2767, %v2769
  %v2771 = vrot.slane %v2757, %v2770
  %v2772 = vcombine.high %v2764, %v2764
  %v2773 = vcombine.high %v2771, %v2771
  %v2774 = vcombine.high %v2428, %v2428
  %v2776 = vunpack.c.l.s4 1983009808
  %v2777 = vunpack.c.0.s8 %v2776
  %v2778 = vlaneseq
  %v2779 = vshrl.u32 %v2778, 7
  %v2780 = vsub.s32 %v2777, %v2779
  %v2781 = vrot.slane %v2428, %v2780
  %v2783 = vunpack.c.l.s4 1983009808
  %v2784 = vunpack.c.0.s8 %v2783
  %v2785 = vlaneseq
  %v2786 = vshrl.u32 %v2785, 7
  %v2787 = vsub.s32 %v2784, %v2786
  %v2788 = vrot.slane %v2774, %v2787
  %v2789 = vcombine.high %v2781, %v2781
  %v2790 = vcombine.high %v2788, %v2788
  %vm2791 = vcmask 1042434
  %vm2792 = vmor %vm392, %vm2791
  %vm2793 = vcmask 1044484
  %vm2794 = vmor %vm2792, %vm2793
  %vm2795 = vcmask 1046534
  %vm2796 = vmor %vm2794, %vm2795
  %v2797 = vrot.slane %v2458, 7
  %v2798 = vrot.slane %v2797, 2
  %v2799 = vrot.slane %v2466, 7
  %v2800 = vsel %vm2796, %v2798, %v2799
  %v2801 = vrot.slane %v2799, 2
  %v2802 = vrot.slane %v2465, 7
  %v2803 = vsel %vm2796, %v2801, %v2802
  %v2804 = vrot.slane %v2802, 2
  %v2805 = vrot.slane %v2467, 7
  %v2806 = vsel %vm2796, %v2804, %v2805
  %v2807 = vrot.slane %v2805, 2
  %v2808 = vrot.slane %v2475, 7
  %v2809 = vsel %vm2796, %v2807, %v2808
  %v2810 = vrot.slane %v2483, 7
  %v2811 = vrot.slane %v2810, 2
  %v2812 = vrot.slane %v2482, 7
  %v2813 = vsel %vm2796, %v2811, %v2812
  %v2814 = vrot.slane %v2812, 2
  %v2815 = vrot.slane %v2484, 7
  %v2816 = vsel %vm2796, %v2814, %v2815
  %v2817 = vrot.slane %v2815, 2
  %v2818 = vrot.slane %v2492, 7
  %v2819 = vsel %vm2796, %v2817, %v2818
  %v2820 = vrot.slane %v2818, 2
  %v2821 = vrot.slane %v2500, 7
  %v2822 = vsel %vm2796, %v2820, %v2821
  %v2823 = vrot.slane %v2499, 7
  %v2824 = vrot.slane %v2823, 2
  %v2825 = vrot.slane %v2501, 7
  %v2826 = vsel %vm2796, %v2824, %v2825
  %v2827 = vrot.slane %v2825, 2
  %v2828 = vrot.slane %v2509, 7
  %v2829 = vsel %vm2796, %v2827, %v2828
  %v2830 = vrot.slane %v2828, 2
  %v2831 = vrot.slane %v2517, 7
  %v2832 = vsel %vm2796, %v2830, %v2831
  %v2833 = vrot.slane %v2831, 2
  %v2834 = vrot.slane %v2516, 7
  %v2835 = vsel %vm2796, %v2833, %v2834
  %v2836 = vrot.slane %v2518, 7
  %v2837 = vrot.slane %v2836, 2
  %v2838 = vrot.slane %v2526, 7
  %v2839 = vsel %vm2796, %v2837, %v2838
  %v2840 = vrot.slane %v2838, 2
  %v2841 = vrot.slane %v2534, 7
  %v2842 = vsel %vm2796, %v2840, %v2841
  %v2843 = vrot.slane %v2841, 2
  %v2844 = vrot.slane %v2533, 7
  %v2845 = vsel %vm2796, %v2843, %v2844
  %v2846 = vrot.slane %v2844, 2
  %v2847 = vrot.slane %v2535, 7
  %v2848 = vsel %vm2796, %v2846, %v2847
  %v2849 = vrot.slane %v2543, 7
  %v2850 = vrot.slane %v2849, 2
  %v2851 = vrot.slane %v2551, 7
  %v2852 = vsel %vm2796, %v2850, %v2851
  %v2853 = vrot.slane %v2851, 2
  %v2854 = vrot.slane %v2550, 7
  %v2855 = vsel %vm2796, %v2853, %v2854
  %v2856 = vrot.slane %v2854, 2
  %v2857 = vrot.slane %v2552, 7
  %v2858 = vsel %vm2796, %v2856, %v2857
  %v2859 = vrot.slane %v2857, 2
  %v2860 = vrot.slane %v2560, 7
  %v2861 = vsel %vm2796, %v2859, %v2860
  %v2862 = vrot.slane %v2568, 7
  %v2863 = vrot.slane %v2862, 2
  %v2864 = vrot.slane %v2567, 7
  %v2865 = vsel %vm2796, %v2863, %v2864
  %v2866 = vrot.slane %v2864, 2
  %v2867 = vrot.slane %v2569, 7
  %v2868 = vsel %vm2796, %v2866, %v2867
  %v2869 = vrot.slane %v2867, 2
  %v2870 = vrot.slane %v2577, 7
  %v2871 = vsel %vm2796, %v2869, %v2870
  %v2872 = vrot.slane %v2870, 2
  %v2873 = vrot.slane %v2585, 7
  %v2874 = vsel %vm2796, %v2872, %v2873
  %v2875 = vrot.slane %v2584, 7
  %v2876 = vrot.slane %v2875, 2
  %v2877 = vrot.slane %v2586, 7
  %v2878 = vsel %vm2796, %v2876, %v2877
  %v2879 = vrot.slane %v2877, 2
  %v2880 = vrot.slane %v2594, 7
  %v2881 = vsel %vm2796, %v2879, %v2880
  %v2882 = vrot.slane %v2880, 2
  %v2883 = vrot.slane %v2602, 7
  %v2884 = vsel %vm2796, %v2882, %v2883
  %v2885 = vrot.slane %v2883, 2
  %v2886 = vrot.slane %v2601, 7
  %v2887 = vsel %vm2796, %v2885, %v2886
  %v2888 = vrot.slane %v2603, 7
  %v2889 = vrot.slane %v2888, 2
  %v2890 = vrot.slane %v2611, 7
  %v2891 = vsel %vm2796, %v2889, %v2890
  %v2892 = vrot.slane %v2890, 2
  %v2893 = vrot.slane %v2619, 7
  %v2894 = vsel %vm2796, %v2892, %v2893
  %v2895 = vrot.slane %v2893, 2
  %v2896 = vrot.slane %v2618, 7
  %v2897 = vsel %vm2796, %v2895, %v2896
  %v2898 = vrot.slane %v2896, 2
  %v2899 = vrot.slane %v2620, 7
  %v2900 = vsel %vm2796, %v2898, %v2899
  %v2901 = vrot.slane %v2628, 7
  %v2902 = vrot.slane %v2901, 2
  %v2903 = vrot.slane %v2636, 7
  %v2904 = vsel %vm2796, %v2902, %v2903
  %v2905 = vrot.slane %v2903, 2
  %v2906 = vrot.slane %v2635, 7
  %v2907 = vsel %vm2796, %v2905, %v2906
  %v2908 = vrot.slane %v2906, 2
  %v2909 = vrot.slane %v2637, 7
  %v2910 = vsel %vm2796, %v2908, %v2909
  %v2911 = vrot.slane %v2909, 2
  %v2912 = vrot.slane %v2645, 7
  %v2913 = vsel %vm2796, %v2911, %v2912
  %v2914 = vrot.slane %v2653, 7
  %v2915 = vrot.slane %v2914, 2
  %v2916 = vrot.slane %v2652, 7
  %v2917 = vsel %vm2796, %v2915, %v2916
  %v2918 = vrot.slane %v2916, 2
  %v2919 = vrot.slane %v2654, 7
  %v2920 = vsel %vm2796, %v2918, %v2919
  %v2921 = vrot.slane %v2919, 2
  %v2922 = vrot.slane %v2662, 7
  %v2923 = vsel %vm2796, %v2921, %v2922
  %v2924 = vrot.slane %v2922, 2
  %v2925 = vrot.slane %v2670, 7
  %v2926 = vsel %vm2796, %v2924, %v2925
  %v2927 = vrot.slane %v2669, 7
  %v2928 = vrot.slane %v2927, 2
  %v2929 = vrot.slane %v2671, 7
  %v2930 = vsel %vm2796, %v2928, %v2929
  %v2931 = vrot.slane %v2929, 2
  %v2932 = vrot.slane %v2679, 7
  %v2933 = vsel %vm2796, %v2931, %v2932
  %v2934 = vrot.slane %v2932, 2
  %v2935 = vrot.slane %v2687, 7
  %v2936 = vsel %vm2796, %v2934, %v2935
  %v2937 = vrot.slane %v2935, 2
  %v2938 = vrot.slane %v2686, 7
  %v2939 = vsel %vm2796, %v2937, %v2938
  %v2940 = vrot.slane %v2688, 7
  %v2941 = vrot.slane %v2940, 2
  %v2942 = vrot.slane %v2696, 7
  %v2943 = vsel %vm2796, %v2941, %v2942
  %v2944 = vrot.slane %v2942, 2
  %v2945 = vrot.slane %v2704, 7
  %v2946 = vsel %vm2796, %v2944, %v2945
  %v2947 = vrot.slane %v2945, 2
  %v2948 = vrot.slane %v2703, 7
  %v2949 = vsel %vm2796, %v2947, %v2948
  %v2950 = vrot.slane %v2948, 2
  %v2951 = vrot.slane %v2705, 7
  %v2952 = vsel %vm2796, %v2950, %v2951
  %v2953 = vrot.slane %v2713, 7
  %v2954 = vrot.slane %v2953, 2
  %v2955 = vrot.slane %v2721, 7
  %v2956 = vsel %vm2796, %v2954, %v2955
  %v2957 = vrot.slane %v2955, 2
  %v2958 = vrot.slane %v2720, 7
  %v2959 = vsel %vm2796, %v2957, %v2958
  %v2960 = vrot.slane %v2958, 2
  %v2961 = vrot.slane %v2722, 7
  %v2962 = vsel %vm2796, %v2960, %v2961
  %v2963 = vrot.slane %v2961, 2
  %v2964 = vrot.slane %v2730, 7
  %v2965 = vsel %vm2796, %v2963, %v2964
  %v2966 = vrot.slane %v2738, 7
  %v2967 = vrot.slane %v2966, 2
  %v2968 = vrot.slane %v2737, 7
  %v2969 = vsel %vm2796, %v2967, %v2968
  %v2970 = vrot.slane %v2968, 2
  %v2971 = vrot.slane %v2739, 7
  %v2972 = vsel %vm2796, %v2970, %v2971
  %v2973 = vrot.slane %v2971, 2
  %v2974 = vrot.slane %v2747, 7
  %v2975 = vsel %vm2796, %v2973, %v2974
  %v2976 = vrot.slane %v2974, 2
  %v2977 = vrot.slane %v2755, 7
  %v2978 = vsel %vm2796, %v2976, %v2977
  %v2979 = vrot.slane %v2754, 7
  %v2980 = vrot.slane %v2979, 2
  %v2981 = vrot.slane %v2756, 7
  %v2982 = vsel %vm2796, %v2980, %v2981
  %v2983 = vrot.slane %v2981, 2
  %v2984 = vrot.slane %v2764, 7
  %v2985 = vsel %vm2796, %v2983, %v2984
  %v2986 = vrot.slane %v2984, 2
  %v2987 = vrot.slane %v2772, 7
  %v2988 = vsel %vm2796, %v2986, %v2987
  %v2989 = vrot.slane %v2987, 2
  %v2990 = vrot.slane %v2771, 7
  %v2991 = vsel %vm2796, %v2989, %v2990
  %v2992 = vrot.slane %v2773, 7
  %v2993 = vrot.slane %v2992, 2
  %v2994 = vrot.slane %v2781, 7
  %v2995 = vsel %vm2796, %v2993, %v2994
  %v2996 = vrot.slane %v2994, 2
  %v2997 = vrot.slane %v2789, 7
  %v2998 = vsel %vm2796, %v2996, %v2997
  %v2999 = vrot.slane %v2997, 2
  %v3000 = vrot.slane %v2788, 7
  %v3001 = vsel %vm2796, %v2999, %v3000
  %v3002 = vrot.slane %v3000, 2
  %v3003 = vrot.slane %v2790, 7
  %v3004 = vsel %vm2796, %v3002, %v3003
  %v3069 = vadd.f32 %v1924, %v2800
  %v3070 = vadd.f32 %v1932, %v2803
  %v3071 = vadd.f32 %v1931, %v2806
  %v3072 = vadd.f32 %v1933, %v2809
  %v3073 = vadd.f32 %v1949, %v2813
  %v3074 = vadd.f32 %v1948, %v2816
  %v3075 = vadd.f32 %v1950, %v2819
  %v3076 = vadd.f32 %v1958, %v2822
  %v3077 = vadd.f32 %v1965, %v2826
  %v3078 = vadd.f32 %v1966, %v2829
  %v3079 = vadd.f32 %v1974, %v2832
  %v3080 = vadd.f32 %v1982, %v2835
  %v3081 = vadd.f32 %v1983, %v2839
  %v3082 = vadd.f32 %v1991, %v2842
  %v3083 = vadd.f32 %v1999, %v2845
  %v3084 = vadd.f32 %v1998, %v2848
  %v3085 = vadd.f32 %v2007, %v2852
  %v3086 = vadd.f32 %v2015, %v2855
  %v3087 = vadd.f32 %v2014, %v2858
  %v3088 = vadd.f32 %v2016, %v2861
  %v3089 = vadd.f32 %v2032, %v2865
  %v3090 = vadd.f32 %v2031, %v2868
  %v3091 = vadd.f32 %v2033, %v2871
  %v3092 = vadd.f32 %v2041, %v2874
  %v3093 = vadd.f32 %v2048, %v2878
  %v3094 = vadd.f32 %v2049, %v2881
  %v3095 = vadd.f32 %v2057, %v2884
  %v3096 = vadd.f32 %v2065, %v2887
  %v3097 = vadd.f32 %v2066, %v2891
  %v3098 = vadd.f32 %v2074, %v2894
  %v3099 = vadd.f32 %v2082, %v2897
  %v3100 = vadd.f32 %v2081, %v2900
  %v3101 = vadd.f32 %v2090, %v2904
  %v3102 = vadd.f32 %v2098, %v2907
  %v3103 = vadd.f32 %v2097, %v2910
  %v3104 = vadd.f32 %v2099, %v2913
  %v3105 = vadd.f32 %v2115, %v2917
  %v3106 = vadd.f32 %v2114, %v2920
  %v3107 = vadd.f32 %v2116, %v2923
  %v3108 = vadd.f32 %v2124, %v2926
  %v3109 = vadd.f32 %v2131, %v2930
  %v3110 = vadd.f32 %v2132, %v2933
  %v3111 = vadd.f32 %v2140, %v2936
  %v3112 = vadd.f32 %v2148, %v2939
  %v3113 = vadd.f32 %v2149, %v2943
  %v3114 = vadd.f32 %v2157, %v2946
  %v3115 = vadd.f32 %v2165, %v2949
  %v3116 = vadd.f32 %v2164, %v2952
  %v3117 = vadd.f32 %v2173, %v2956
  %v3118 = vadd.f32 %v2181, %v2959
  %v3119 = vadd.f32 %v2180, %v2962
  %v3120 = vadd.f32 %v2182, %v2965
  %v3121 = vadd.f32 %v2198, %v2969
  %v3122 = vadd.f32 %v2197, %v2972
  %v3123 = vadd.f32 %v2199, %v2975
  %v3124 = vadd.f32 %v2207, %v2978
  %v3125 = vadd.f32 %v2214, %v2982
  %v3126 = vadd.f32 %v2215, %v2985
  %v3127 = vadd.f32 %v2223, %v2988
  %v3128 = vadd.f32 %v2231, %v2991
  %v3129 = vadd.f32 %v2232, %v2995
  %v3130 = vadd.f32 %v2240, %v2998
  %v3131 = vadd.f32 %v2248, %v3001
  %v3132 = vadd.f32 %v2247, %v3004
  %s3133 = scalar_lea.vmem %s6, 8
  %v3134 = vld [vmem:[%s3133] sm:$0xf]
  %v3136 = vsel %vm1780, %v3134, 0
  %3138 = vmatprep.subr.bf16.mxu0 0
  %3139 = vmatpush1.bf16.msra.mxu0 %v3136
  %3140 = vmatprep.subr.bf16.mxu0 0
  %3141 = vmatpush1.bf16.msra.mxu0 0
  %3142 = vmatprep.subr.bf16.mxu0 0
  %3143 = vmatpush1.bf16.msra.mxu0 0
  %3144 = vmatprep.subr.bf16.mxu0 0
  %3145 = vmatpush1.bf16.msra.mxu0 0
  %3146 = vmatprep.subr.bf16.mxu0 0
  %3147 = vmatpush1.bf16.msra.mxu0 0
  %3148 = vmatprep.subr.bf16.mxu0 0
  %3149 = vmatpush1.bf16.msra.mxu0 0
  %3150 = vmatprep.subr.bf16.mxu0 0
  %3151 = vmatpush1.bf16.msra.mxu0 0
  %3152 = vmatprep.subr.bf16.mxu0 0
  %3153 = vmatpush1.bf16.msra.mxu0 0
  %3154 = vmatprep.subr.bf16.mxu0 0
  %3155 = vmatpush1.bf16.msra.mxu0 0
  %3156 = vmatprep.subr.bf16.mxu0 0
  %3157 = vmatpush1.bf16.msra.mxu0 0
  %3158 = vmatprep.subr.bf16.mxu0 0
  %3159 = vmatpush1.bf16.msra.mxu0 0
  %3160 = vmatprep.subr.bf16.mxu0 0
  %3161 = vmatpush1.bf16.msra.mxu0 0
  %3162 = vmatprep.subr.bf16.mxu0 0
  %3163 = vmatpush1.bf16.msra.mxu0 0
  %3164 = vmatprep.subr.bf16.mxu0 0
  %3165 = vmatpush1.bf16.msra.mxu0 0
  %3166 = vmatprep.subr.bf16.mxu0 0
  %3167 = vmatpush1.bf16.msra.mxu0 0
  %3168 = vmatprep.subr.bf16.mxu0 0
  %3169 = vmatpush1.bf16.msra.mxu0 0
  %3170 = vmatprep.mubr.bf16.mxu0 0
  %3171 = vmatmul.mubr.bf16.gmra.mrb[0].mxu0 %v1751
  %v3172 = vpop.f32.mrb[0].mxu0
  %v3173 = vadd.f32 0.0, %v3172
  %v3174 = vpop.f32.mrb[0].mxu0
  %v3175 = vpop.f32.mrb[0].mxu0
  %v3176 = vadd.f32 0.0, %v3175
  %v3177 = vpop.f32.mrb[0].mxu0
  %3178 = vmatprep.mubr.bf16.mxu0 0
  %3179 = vmatmul.mubr.bf16.gmra.mrb[0].mxu0 %v1754
  %v3180 = vpop.f32.mrb[0].mxu0
  %v3181 = vadd.f32 0.0, %v3180
  %v3182 = vpop.f32.mrb[0].mxu0
  %v3183 = vpop.f32.mrb[0].mxu0
  %v3184 = vadd.f32 0.0, %v3183
  %v3185 = vpop.f32.mrb[0].mxu0
  %3186 = vmatprep.mubr.bf16.mxu0 0
  %3187 = vmatmul.mubr.bf16.gmra.mrb[0].mxu0 %v1757
  %v3188 = vpop.f32.mrb[0].mxu0
  %v3189 = vadd.f32 0.0, %v3188
  %v3190 = vpop.f32.mrb[0].mxu0
  %v3191 = vpop.f32.mrb[0].mxu0
  %v3192 = vadd.f32 0.0, %v3191
  %v3193 = vpop.f32.mrb[0].mxu0
  %3194 = vmatprep.mubr.bf16.mxu0 0
  %3195 = vmatmul.mubr.bf16.gmra.mrb[0].mxu0 %v1760
  %v3196 = vpop.f32.mrb[0].mxu0
  %v3197 = vadd.f32 0.0, %v3196
  %v3198 = vpop.f32.mrb[0].mxu0
  %v3199 = vpop.f32.mrb[0].mxu0
  %v3200 = vadd.f32 0.0, %v3199
  %v3201 = vpop.f32.mrb[0].mxu0
  %3202 = vmatprep.mubr.bf16.mxu0 0
  %3203 = vmatmul.mubr.bf16.gmra.mrb[0].mxu0 %v1763
  %v3204 = vpop.f32.mrb[0].mxu0
  %v3205 = vadd.f32 0.0, %v3204
  %v3206 = vpop.f32.mrb[0].mxu0
  %v3207 = vpop.f32.mrb[0].mxu0
  %v3208 = vadd.f32 0.0, %v3207
  %v3209 = vpop.f32.mrb[0].mxu0
  %3210 = vmatprep.mubr.bf16.mxu0 0
  %3211 = vmatmul.mubr.bf16.gmra.mrb[0].mxu0 %v1766
  %v3212 = vpop.f32.mrb[0].mxu0
  %v3213 = vadd.f32 0.0, %v3212
  %v3214 = vpop.f32.mrb[0].mxu0
  %v3215 = vpop.f32.mrb[0].mxu0
  %v3216 = vadd.f32 0.0, %v3215
  %v3217 = vpop.f32.mrb[0].mxu0
  %3218 = vmatprep.mubr.bf16.mxu0 0
  %3219 = vmatmul.mubr.bf16.gmra.mrb[0].mxu0 %v1769
  %v3220 = vpop.f32.mrb[0].mxu0
  %v3221 = vadd.f32 0.0, %v3220
  %v3222 = vpop.f32.mrb[0].mxu0
  %v3223 = vpop.f32.mrb[0].mxu0
  %v3224 = vadd.f32 0.0, %v3223
  %v3225 = vpop.f32.mrb[0].mxu0
  %3226 = vmatprep.mubr.bf16.mxu0 0
  %3227 = vmatmul.mubr.bf16.gmra.mrb[0].mxu0 %v1772
  %v3228 = vpop.f32.mrb[0].mxu0
  %v3229 = vadd.f32 0.0, %v3228
  %v3230 = vpop.f32.mrb[0].mxu0
  %v3231 = vpop.f32.mrb[0].mxu0
  %v3232 = vadd.f32 0.0, %v3231
  %v3233 = vpop.f32.mrb[0].mxu0
  %3234 = vmatprep.mubr.bf16.mxu0 0
  %3235 = vmatmul.mubr.bf16.gmra.mrb[0].mxu0 %v1775
  %v3236 = vpop.f32.mrb[0].mxu0
  %v3237 = vadd.f32 0.0, %v3236
  %v3238 = vpop.f32.mrb[0].mxu0
  %v3239 = vpop.f32.mrb[0].mxu0
  %v3240 = vadd.f32 0.0, %v3239
  %v3241 = vpop.f32.mrb[0].mxu0
  %3242 = vmatprep.mubr.bf16.mxu0 0
  %3243 = vmatmul.mubr.bf16.gmra.mrb[0].mxu0 %v1778
  %v3244 = vpop.f32.mrb[0].mxu0
  %v3245 = vadd.f32 0.0, %v3244
  %v3246 = vpop.f32.mrb[0].mxu0
  %v3247 = vpop.f32.mrb[0].mxu0
  %v3248 = vadd.f32 0.0, %v3247
  %v3249 = vpop.f32.mrb[0].mxu0
  %3250 = vdwg.mxu0
  %v3271 = vcombine.high %v3173, %v3173
  %v3273 = vunpack.c.l.s4 1983009808
  %v3274 = vunpack.c.0.s8 %v3273
  %v3275 = vlaneseq
  %v3276 = vshrl.u32 %v3275, 7
  %v3277 = vsub.s32 %v3274, %v3276
  %v3278 = vrot.slane %v3173, %v3277
  %v3280 = vunpack.c.l.s4 1983009808
  %v3281 = vunpack.c.0.s8 %v3280
  %v3282 = vlaneseq
  %v3283 = vshrl.u32 %v3282, 7
  %v3284 = vsub.s32 %v3281, %v3283
  %v3285 = vrot.slane %v3271, %v3284
  %v3286 = vcombine.high %v3278, %v3278
  %v3287 = vcombine.high %v3285, %v3285
  %v3288 = vcombine.high %v3176, %v3176
  %v3290 = vunpack.c.l.s4 1983009808
  %v3291 = vunpack.c.0.s8 %v3290
  %v3292 = vlaneseq
  %v3293 = vshrl.u32 %v3292, 7
  %v3294 = vsub.s32 %v3291, %v3293
  %v3295 = vrot.slane %v3176, %v3294
  %v3297 = vunpack.c.l.s4 1983009808
  %v3298 = vunpack.c.0.s8 %v3297
  %v3299 = vlaneseq
  %v3300 = vshrl.u32 %v3299, 7
  %v3301 = vsub.s32 %v3298, %v3300
  %v3302 = vrot.slane %v3288, %v3301
  %v3303 = vcombine.high %v3302, %v3302
  %v3304 = vcombine.high %v3181, %v3181
  %v3306 = vunpack.c.l.s4 1983009808
  %v3307 = vunpack.c.0.s8 %v3306
  %v3308 = vlaneseq
  %v3309 = vshrl.u32 %v3308, 7
  %v3310 = vsub.s32 %v3307, %v3309
  %v3311 = vrot.slane %v3181, %v3310
  %v3313 = vunpack.c.l.s4 1983009808
  %v3314 = vunpack.c.0.s8 %v3313
  %v3315 = vlaneseq
  %v3316 = vshrl.u32 %v3315, 7
  %v3317 = vsub.s32 %v3314, %v3316
  %v3318 = vrot.slane %v3304, %v3317
  %v3319 = vcombine.high %v3311, %v3311
  %v3320 = vcombine.high %v3318, %v3318
  %v3321 = vcombine.high %v3184, %v3184
  %v3323 = vunpack.c.l.s4 1983009808
  %v3324 = vunpack.c.0.s8 %v3323
  %v3325 = vlaneseq
  %v3326 = vshrl.u32 %v3325, 7
  %v3327 = vsub.s32 %v3324, %v3326
  %v3328 = vrot.slane %v3184, %v3327
  %v3330 = vunpack.c.l.s4 1983009808
  %v3331 = vunpack.c.0.s8 %v3330
  %v3332 = vlaneseq
  %v3333 = vshrl.u32 %v3332, 7
  %v3334 = vsub.s32 %v3331, %v3333
  %v3335 = vrot.slane %v3321, %v3334
  %v3336 = vcombine.high %v3328, %v3328
  %v3337 = vcombine.high %v3189, %v3189
  %v3339 = vunpack.c.l.s4 1983009808
  %v3340 = vunpack.c.0.s8 %v3339
  %v3341 = vlaneseq
  %v3342 = vshrl.u32 %v3341, 7
  %v3343 = vsub.s32 %v3340, %v3342
  %v3344 = vrot.slane %v3189, %v3343
  %v3346 = vunpack.c.l.s4 1983009808
  %v3347 = vunpack.c.0.s8 %v3346
  %v3348 = vlaneseq
  %v3349 = vshrl.u32 %v3348, 7
  %v3350 = vsub.s32 %v3347, %v3349
  %v3351 = vrot.slane %v3337, %v3350
  %v3352 = vcombine.high %v3344, %v3344
  %v3353 = vcombine.high %v3351, %v3351
  %v3354 = vcombine.high %v3192, %v3192
  %v3356 = vunpack.c.l.s4 1983009808
  %v3357 = vunpack.c.0.s8 %v3356
  %v3358 = vlaneseq
  %v3359 = vshrl.u32 %v3358, 7
  %v3360 = vsub.s32 %v3357, %v3359
  %v3361 = vrot.slane %v3192, %v3360
  %v3363 = vunpack.c.l.s4 1983009808
  %v3364 = vunpack.c.0.s8 %v3363
  %v3365 = vlaneseq
  %v3366 = vshrl.u32 %v3365, 7
  %v3367 = vsub.s32 %v3364, %v3366
  %v3368 = vrot.slane %v3354, %v3367
  %v3369 = vcombine.high %v3361, %v3361
  %v3370 = vcombine.high %v3368, %v3368
  %v3371 = vcombine.high %v3197, %v3197
  %v3373 = vunpack.c.l.s4 1983009808
  %v3374 = vunpack.c.0.s8 %v3373
  %v3375 = vlaneseq
  %v3376 = vshrl.u32 %v3375, 7
  %v3377 = vsub.s32 %v3374, %v3376
  %v3378 = vrot.slane %v3197, %v3377
  %v3380 = vunpack.c.l.s4 1983009808
  %v3381 = vunpack.c.0.s8 %v3380
  %v3382 = vlaneseq
  %v3383 = vshrl.u32 %v3382, 7
  %v3384 = vsub.s32 %v3381, %v3383
  %v3385 = vrot.slane %v3371, %v3384
  %v3386 = vcombine.high %v3385, %v3385
  %v3387 = vcombine.high %v3200, %v3200
  %v3389 = vunpack.c.l.s4 1983009808
  %v3390 = vunpack.c.0.s8 %v3389
  %v3391 = vlaneseq
  %v3392 = vshrl.u32 %v3391, 7
  %v3393 = vsub.s32 %v3390, %v3392
  %v3394 = vrot.slane %v3200, %v3393
  %v3396 = vunpack.c.l.s4 1983009808
  %v3397 = vunpack.c.0.s8 %v3396
  %v3398 = vlaneseq
  %v3399 = vshrl.u32 %v3398, 7
  %v3400 = vsub.s32 %v3397, %v3399
  %v3401 = vrot.slane %v3387, %v3400
  %v3402 = vcombine.high %v3394, %v3394
  %v3403 = vcombine.high %v3401, %v3401
  %v3404 = vcombine.high %v3205, %v3205
  %v3406 = vunpack.c.l.s4 1983009808
  %v3407 = vunpack.c.0.s8 %v3406
  %v3408 = vlaneseq
  %v3409 = vshrl.u32 %v3408, 7
  %v3410 = vsub.s32 %v3407, %v3409
  %v3411 = vrot.slane %v3205, %v3410
  %v3413 = vunpack.c.l.s4 1983009808
  %v3414 = vunpack.c.0.s8 %v3413
  %v3415 = vlaneseq
  %v3416 = vshrl.u32 %v3415, 7
  %v3417 = vsub.s32 %v3414, %v3416
  %v3418 = vrot.slane %v3404, %v3417
  %v3419 = vcombine.high %v3411, %v3411
  %v3420 = vcombine.high %v3208, %v3208
  %v3422 = vunpack.c.l.s4 1983009808
  %v3423 = vunpack.c.0.s8 %v3422
  %v3424 = vlaneseq
  %v3425 = vshrl.u32 %v3424, 7
  %v3426 = vsub.s32 %v3423, %v3425
  %v3427 = vrot.slane %v3208, %v3426
  %v3429 = vunpack.c.l.s4 1983009808
  %v3430 = vunpack.c.0.s8 %v3429
  %v3431 = vlaneseq
  %v3432 = vshrl.u32 %v3431, 7
  %v3433 = vsub.s32 %v3430, %v3432
  %v3434 = vrot.slane %v3420, %v3433
  %v3435 = vcombine.high %v3427, %v3427
  %v3436 = vcombine.high %v3434, %v3434
  %v3437 = vcombine.high %v3213, %v3213
  %v3439 = vunpack.c.l.s4 1983009808
  %v3440 = vunpack.c.0.s8 %v3439
  %v3441 = vlaneseq
  %v3442 = vshrl.u32 %v3441, 7
  %v3443 = vsub.s32 %v3440, %v3442
  %v3444 = vrot.slane %v3213, %v3443
  %v3446 = vunpack.c.l.s4 1983009808
  %v3447 = vunpack.c.0.s8 %v3446
  %v3448 = vlaneseq
  %v3449 = vshrl.u32 %v3448, 7
  %v3450 = vsub.s32 %v3447, %v3449
  %v3451 = vrot.slane %v3437, %v3450
  %v3452 = vcombine.high %v3444, %v3444
  %v3453 = vcombine.high %v3451, %v3451
  %v3454 = vcombine.high %v3216, %v3216
  %v3456 = vunpack.c.l.s4 1983009808
  %v3457 = vunpack.c.0.s8 %v3456
  %v3458 = vlaneseq
  %v3459 = vshrl.u32 %v3458, 7
  %v3460 = vsub.s32 %v3457, %v3459
  %v3461 = vrot.slane %v3216, %v3460
  %v3463 = vunpack.c.l.s4 1983009808
  %v3464 = vunpack.c.0.s8 %v3463
  %v3465 = vlaneseq
  %v3466 = vshrl.u32 %v3465, 7
  %v3467 = vsub.s32 %v3464, %v3466
  %v3468 = vrot.slane %v3454, %v3467
  %v3469 = vcombine.high %v3468, %v3468
  %v3470 = vcombine.high %v3221, %v3221
  %v3472 = vunpack.c.l.s4 1983009808
  %v3473 = vunpack.c.0.s8 %v3472
  %v3474 = vlaneseq
  %v3475 = vshrl.u32 %v3474, 7
  %v3476 = vsub.s32 %v3473, %v3475
  %v3477 = vrot.slane %v3221, %v3476
  %v3479 = vunpack.c.l.s4 1983009808
  %v3480 = vunpack.c.0.s8 %v3479
  %v3481 = vlaneseq
  %v3482 = vshrl.u32 %v3481, 7
  %v3483 = vsub.s32 %v3480, %v3482
  %v3484 = vrot.slane %v3470, %v3483
  %v3485 = vcombine.high %v3477, %v3477
  %v3486 = vcombine.high %v3484, %v3484
  %v3487 = vcombine.high %v3224, %v3224
  %v3489 = vunpack.c.l.s4 1983009808
  %v3490 = vunpack.c.0.s8 %v3489
  %v3491 = vlaneseq
  %v3492 = vshrl.u32 %v3491, 7
  %v3493 = vsub.s32 %v3490, %v3492
  %v3494 = vrot.slane %v3224, %v3493
  %v3496 = vunpack.c.l.s4 1983009808
  %v3497 = vunpack.c.0.s8 %v3496
  %v3498 = vlaneseq
  %v3499 = vshrl.u32 %v3498, 7
  %v3500 = vsub.s32 %v3497, %v3499
  %v3501 = vrot.slane %v3487, %v3500
  %v3502 = vcombine.high %v3494, %v3494
  %v3503 = vcombine.high %v3229, %v3229
  %v3505 = vunpack.c.l.s4 1983009808
  %v3506 = vunpack.c.0.s8 %v3505
  %v3507 = vlaneseq
  %v3508 = vshrl.u32 %v3507, 7
  %v3509 = vsub.s32 %v3506, %v3508
  %v3510 = vrot.slane %v3229, %v3509
  %v3512 = vunpack.c.l.s4 1983009808
  %v3513 = vunpack.c.0.s8 %v3512
  %v3514 = vlaneseq
  %v3515 = vshrl.u32 %v3514, 7
  %v3516 = vsub.s32 %v3513, %v3515
  %v3517 = vrot.slane %v3503, %v3516
  %v3518 = vcombine.high %v3510, %v3510
  %v3519 = vcombine.high %v3517, %v3517
  %v3520 = vcombine.high %v3232, %v3232
  %v3522 = vunpack.c.l.s4 1983009808
  %v3523 = vunpack.c.0.s8 %v3522
  %v3524 = vlaneseq
  %v3525 = vshrl.u32 %v3524, 7
  %v3526 = vsub.s32 %v3523, %v3525
  %v3527 = vrot.slane %v3232, %v3526
  %v3529 = vunpack.c.l.s4 1983009808
  %v3530 = vunpack.c.0.s8 %v3529
  %v3531 = vlaneseq
  %v3532 = vshrl.u32 %v3531, 7
  %v3533 = vsub.s32 %v3530, %v3532
  %v3534 = vrot.slane %v3520, %v3533
  %v3535 = vcombine.high %v3527, %v3527
  %v3536 = vcombine.high %v3534, %v3534
  %v3537 = vcombine.high %v3237, %v3237
  %v3539 = vunpack.c.l.s4 1983009808
  %v3540 = vunpack.c.0.s8 %v3539
  %v3541 = vlaneseq
  %v3542 = vshrl.u32 %v3541, 7
  %v3543 = vsub.s32 %v3540, %v3542
  %v3544 = vrot.slane %v3237, %v3543
  %v3546 = vunpack.c.l.s4 1983009808
  %v3547 = vunpack.c.0.s8 %v3546
  %v3548 = vlaneseq
  %v3549 = vshrl.u32 %v3548, 7
  %v3550 = vsub.s32 %v3547, %v3549
  %v3551 = vrot.slane %v3537, %v3550
  %v3552 = vcombine.high %v3551, %v3551
  %v3553 = vcombine.high %v3240, %v3240
  %v3555 = vunpack.c.l.s4 1983009808
  %v3556 = vunpack.c.0.s8 %v3555
  %v3557 = vlaneseq
  %v3558 = vshrl.u32 %v3557, 7
  %v3559 = vsub.s32 %v3556, %v3558
  %v3560 = vrot.slane %v3240, %v3559
  %v3562 = vunpack.c.l.s4 1983009808
  %v3563 = vunpack.c.0.s8 %v3562
  %v3564 = vlaneseq
  %v3565 = vshrl.u32 %v3564, 7
  %v3566 = vsub.s32 %v3563, %v3565
  %v3567 = vrot.slane %v3553, %v3566
  %v3568 = vcombine.high %v3560, %v3560
  %v3569 = vcombine.high %v3567, %v3567
  %v3570 = vcombine.high %v3245, %v3245
  %v3572 = vunpack.c.l.s4 1983009808
  %v3573 = vunpack.c.0.s8 %v3572
  %v3574 = vlaneseq
  %v3575 = vshrl.u32 %v3574, 7
  %v3576 = vsub.s32 %v3573, %v3575
  %v3577 = vrot.slane %v3245, %v3576
  %v3579 = vunpack.c.l.s4 1983009808
  %v3580 = vunpack.c.0.s8 %v3579
  %v3581 = vlaneseq
  %v3582 = vshrl.u32 %v3581, 7
  %v3583 = vsub.s32 %v3580, %v3582
  %v3584 = vrot.slane %v3570, %v3583
  %v3585 = vcombine.high %v3577, %v3577
  %v3586 = vcombine.high %v3248, %v3248
  %v3588 = vunpack.c.l.s4 1983009808
  %v3589 = vunpack.c.0.s8 %v3588
  %v3590 = vlaneseq
  %v3591 = vshrl.u32 %v3590, 7
  %v3592 = vsub.s32 %v3589, %v3591
  %v3593 = vrot.slane %v3248, %v3592
  %v3595 = vunpack.c.l.s4 1983009808
  %v3596 = vunpack.c.0.s8 %v3595
  %v3597 = vlaneseq
  %v3598 = vshrl.u32 %v3597, 7
  %v3599 = vsub.s32 %v3596, %v3598
  %v3600 = vrot.slane %v3586, %v3599
  %v3601 = vcombine.high %v3593, %v3593
  %v3602 = vcombine.high %v3600, %v3600
  %v3667 = vadd.f32 %v3069, %v3286
  %v3668 = vadd.f32 %v3070, %v3285
  %v3669 = vadd.f32 %v3071, %v3287
  %v3670 = vadd.f32 %v3072, %v3295
  %v3671 = vadd.f32 %v3073, %v3302
  %v3672 = vadd.f32 %v3074, %v3303
  %v3673 = vadd.f32 %v3075, %v3311
  %v3674 = vadd.f32 %v3076, %v3319
  %v3675 = vadd.f32 %v3077, %v3320
  %v3676 = vadd.f32 %v3078, %v3328
  %v3677 = vadd.f32 %v3079, %v3336
  %v3678 = vadd.f32 %v3080, %v3335
  %v3679 = vadd.f32 %v3081, %v3344
  %v3680 = vadd.f32 %v3082, %v3352
  %v3681 = vadd.f32 %v3083, %v3351
  %v3682 = vadd.f32 %v3084, %v3353
  %v3683 = vadd.f32 %v3085, %v3369
  %v3684 = vadd.f32 %v3086, %v3368
  %v3685 = vadd.f32 %v3087, %v3370
  %v3686 = vadd.f32 %v3088, %v3378
  %v3687 = vadd.f32 %v3089, %v3385
  %v3688 = vadd.f32 %v3090, %v3386
  %v3689 = vadd.f32 %v3091, %v3394
  %v3690 = vadd.f32 %v3092, %v3402
  %v3691 = vadd.f32 %v3093, %v3403
  %v3692 = vadd.f32 %v3094, %v3411
  %v3693 = vadd.f32 %v3095, %v3419
  %v3694 = vadd.f32 %v3096, %v3418
  %v3695 = vadd.f32 %v3097, %v3427
  %v3696 = vadd.f32 %v3098, %v3435
  %v3697 = vadd.f32 %v3099, %v3434
  %v3698 = vadd.f32 %v3100, %v3436
  %v3699 = vadd.f32 %v3101, %v3452
  %v3700 = vadd.f32 %v3102, %v3451
  %v3701 = vadd.f32 %v3103, %v3453
  %v3702 = vadd.f32 %v3104, %v3461
  %v3703 = vadd.f32 %v3105, %v3468
  %v3704 = vadd.f32 %v3106, %v3469
  %v3705 = vadd.f32 %v3107, %v3477
  %v3706 = vadd.f32 %v3108, %v3485
  %v3707 = vadd.f32 %v3109, %v3486
  %v3708 = vadd.f32 %v3110, %v3494
  %v3709 = vadd.f32 %v3111, %v3502
  %v3710 = vadd.f32 %v3112, %v3501
  %v3711 = vadd.f32 %v3113, %v3510
  %v3712 = vadd.f32 %v3114, %v3518
  %v3713 = vadd.f32 %v3115, %v3517
  %v3714 = vadd.f32 %v3116, %v3519
  %v3715 = vadd.f32 %v3117, %v3535
  %v3716 = vadd.f32 %v3118, %v3534
  %v3717 = vadd.f32 %v3119, %v3536
  %v3718 = vadd.f32 %v3120, %v3544
  %v3719 = vadd.f32 %v3121, %v3551
  %v3720 = vadd.f32 %v3122, %v3552
  %v3721 = vadd.f32 %v3123, %v3560
  %v3722 = vadd.f32 %v3124, %v3568
  %v3723 = vadd.f32 %v3125, %v3569
  %v3724 = vadd.f32 %v3126, %v3577
  %v3725 = vadd.f32 %v3127, %v3585
  %v3726 = vadd.f32 %v3128, %v3584
  %v3727 = vadd.f32 %v3129, %v3593
  %v3728 = vadd.f32 %v3130, %v3601
  %v3729 = vadd.f32 %v3131, %v3600
  %v3730 = vadd.f32 %v3132, %v3602
  %v3731 = vld [vmem:[%s553] sm:$0xf]
  %v3732 = vld [vmem:[%s553 + $0x4] sm:$0x1]
  %v3733 = vld [vmem:[%s553 + $0x8] sm:$0xf]
  %v3734 = vld [vmem:[%s553 + $0xc] sm:$0x1]
  %v3735 = vld [vmem:[%s553 + $0x10] sm:$0xf]
  %v3736 = vld [vmem:[%s553 + $0x14] sm:$0x1]
  %v3737 = vld [vmem:[%s553 + $0x18] sm:$0xf]
  %v3738 = vld [vmem:[%s553 + $0x1c] sm:$0x1]
  %v3739 = vld [vmem:[%s553 + $0x20] sm:$0xf]
  %v3740 = vld [vmem:[%s553 + $0x24] sm:$0x1]
  %v3741 = vld [vmem:[%s553 + $0x28] sm:$0xf]
  %v3742 = vld [vmem:[%s553 + $0x2c] sm:$0x1]
  %v3743 = vld [vmem:[%s553 + $0x30] sm:$0xf]
  %v3744 = vld [vmem:[%s553 + $0x34] sm:$0x1]
  %v3745 = vld [vmem:[%s553 + $0x38] sm:$0xf]
  %v3746 = vld [vmem:[%s553 + $0x3c] sm:$0x1]
  %v3747 = vld [vmem:[%s553 + $0x50] sm:$0xf]
  %v3748 = vld [vmem:[%s553 + $0x54] sm:$0x1]
  %v3749 = vld [vmem:[%s553 + $0x58] sm:$0xf]
  %v3750 = vld [vmem:[%s553 + $0x5c] sm:$0x1]
  %v3751 = vld [vmem:[%s553 + $0x60] sm:$0xf]
  %v3752 = vld [vmem:[%s553 + $0x64] sm:$0x1]
  %v3753 = vld [vmem:[%s553 + $0x68] sm:$0xf]
  %v3754 = vld [vmem:[%s553 + $0x6c] sm:$0x1]
  %v3755 = vld [vmem:[%s553 + $0x70] sm:$0xf]
  %v3756 = vld [vmem:[%s553 + $0x74] sm:$0x1]
  %v3757 = vld [vmem:[%s553 + $0x78] sm:$0xf]
  %v3758 = vld [vmem:[%s553 + $0x7c] sm:$0x1]
  %v3759 = vld [vmem:[%s553 + $0x80] sm:$0xf]
  %v3760 = vld [vmem:[%s553 + $0x84] sm:$0x1]
  %v3761 = vld [vmem:[%s553 + $0x88] sm:$0xf]
  %v3762 = vld [vmem:[%s553 + $0x8c] sm:$0x1]
  %v3796 = vunpack.c.l.s4 1966171168
  %v3797 = vunpack.c.0.s8 %v3796
  %v3798 = vlaneseq
  %v3799 = vshrl.u32 %v3798, 7
  %v3800 = vsub.s32 %v3797, %v3799
  %v3801 = vrot.slane %v3731, %v3800
  %v3802 = vcombine.high %v3801, %v3801
  %v3804 = vunpack.c.l.s4 1966171168
  %v3805 = vunpack.c.0.s8 %v3804
  %v3806 = vlaneseq
  %v3807 = vshrl.u32 %v3806, 7
  %v3808 = vsub.s32 %v3805, %v3807
  %v3809 = vrot.slane %v3801, %v3808
  %v3811 = vunpack.c.l.s4 1966171168
  %v3812 = vunpack.c.0.s8 %v3811
  %v3813 = vlaneseq
  %v3814 = vshrl.u32 %v3813, 7
  %v3815 = vsub.s32 %v3812, %v3814
  %v3816 = vrot.slane %v3802, %v3815
  %v3817 = vcombine.high %v3809, %v3809
  %v3818 = vcombine.high %v3816, %v3816
  %v3820 = vunpack.c.l.s4 1966171168
  %v3821 = vunpack.c.0.s8 %v3820
  %v3822 = vlaneseq
  %v3823 = vshrl.u32 %v3822, 7
  %v3824 = vsub.s32 %v3821, %v3823
  %v3825 = vrot.slane %v3732, %v3824
  %v3827 = vunpack.c.l.s4 1966171168
  %v3828 = vunpack.c.0.s8 %v3827
  %v3829 = vlaneseq
  %v3830 = vshrl.u32 %v3829, 7
  %v3831 = vsub.s32 %v3828, %v3830
  %v3832 = vrot.slane %v3825, %v3831
  %v3834 = vunpack.c.l.s4 1966171168
  %v3835 = vunpack.c.0.s8 %v3834
  %v3836 = vlaneseq
  %v3837 = vshrl.u32 %v3836, 7
  %v3838 = vsub.s32 %v3835, %v3837
  %v3839 = vrot.slane %v3733, %v3838
  %v3840 = vcombine.high %v3839, %v3839
  %v3842 = vunpack.c.l.s4 1966171168
  %v3843 = vunpack.c.0.s8 %v3842
  %v3844 = vlaneseq
  %v3845 = vshrl.u32 %v3844, 7
  %v3846 = vsub.s32 %v3843, %v3845
  %v3847 = vrot.slane %v3839, %v3846
  %v3849 = vunpack.c.l.s4 1966171168
  %v3850 = vunpack.c.0.s8 %v3849
  %v3851 = vlaneseq
  %v3852 = vshrl.u32 %v3851, 7
  %v3853 = vsub.s32 %v3850, %v3852
  %v3854 = vrot.slane %v3840, %v3853
  %v3855 = vcombine.high %v3847, %v3847
  %v3856 = vcombine.high %v3854, %v3854
  %v3858 = vunpack.c.l.s4 1966171168
  %v3859 = vunpack.c.0.s8 %v3858
  %v3860 = vlaneseq
  %v3861 = vshrl.u32 %v3860, 7
  %v3862 = vsub.s32 %v3859, %v3861
  %v3863 = vrot.slane %v3734, %v3862
  %v3865 = vunpack.c.l.s4 1966171168
  %v3866 = vunpack.c.0.s8 %v3865
  %v3867 = vlaneseq
  %v3868 = vshrl.u32 %v3867, 7
  %v3869 = vsub.s32 %v3866, %v3868
  %v3870 = vrot.slane %v3863, %v3869
  %v3872 = vunpack.c.l.s4 1966171168
  %v3873 = vunpack.c.0.s8 %v3872
  %v3874 = vlaneseq
  %v3875 = vshrl.u32 %v3874, 7
  %v3876 = vsub.s32 %v3873, %v3875
  %v3877 = vrot.slane %v3735, %v3876
  %v3878 = vcombine.high %v3877, %v3877
  %v3880 = vunpack.c.l.s4 1966171168
  %v3881 = vunpack.c.0.s8 %v3880
  %v3882 = vlaneseq
  %v3883 = vshrl.u32 %v3882, 7
  %v3884 = vsub.s32 %v3881, %v3883
  %v3885 = vrot.slane %v3877, %v3884
  %v3887 = vunpack.c.l.s4 1966171168
  %v3888 = vunpack.c.0.s8 %v3887
  %v3889 = vlaneseq
  %v3890 = vshrl.u32 %v3889, 7
  %v3891 = vsub.s32 %v3888, %v3890
  %v3892 = vrot.slane %v3878, %v3891
  %v3893 = vcombine.high %v3885, %v3885
  %v3894 = vcombine.high %v3892, %v3892
  %v3896 = vunpack.c.l.s4 1966171168
  %v3897 = vunpack.c.0.s8 %v3896
  %v3898 = vlaneseq
  %v3899 = vshrl.u32 %v3898, 7
  %v3900 = vsub.s32 %v3897, %v3899
  %v3901 = vrot.slane %v3736, %v3900
  %v3903 = vunpack.c.l.s4 1966171168
  %v3904 = vunpack.c.0.s8 %v3903
  %v3905 = vlaneseq
  %v3906 = vshrl.u32 %v3905, 7
  %v3907 = vsub.s32 %v3904, %v3906
  %v3908 = vrot.slane %v3901, %v3907
  %v3910 = vunpack.c.l.s4 1966171168
  %v3911 = vunpack.c.0.s8 %v3910
  %v3912 = vlaneseq
  %v3913 = vshrl.u32 %v3912, 7
  %v3914 = vsub.s32 %v3911, %v3913
  %v3915 = vrot.slane %v3737, %v3914
  %v3916 = vcombine.high %v3915, %v3915
  %v3918 = vunpack.c.l.s4 1966171168
  %v3919 = vunpack.c.0.s8 %v3918
  %v3920 = vlaneseq
  %v3921 = vshrl.u32 %v3920, 7
  %v3922 = vsub.s32 %v3919, %v3921
  %v3923 = vrot.slane %v3915, %v3922
  %v3925 = vunpack.c.l.s4 1966171168
  %v3926 = vunpack.c.0.s8 %v3925
  %v3927 = vlaneseq
  %v3928 = vshrl.u32 %v3927, 7
  %v3929 = vsub.s32 %v3926, %v3928
  %v3930 = vrot.slane %v3916, %v3929
  %v3931 = vcombine.high %v3923, %v3923
  %v3932 = vcombine.high %v3930, %v3930
  %v3934 = vunpack.c.l.s4 1966171168
  %v3935 = vunpack.c.0.s8 %v3934
  %v3936 = vlaneseq
  %v3937 = vshrl.u32 %v3936, 7
  %v3938 = vsub.s32 %v3935, %v3937
  %v3939 = vrot.slane %v3738, %v3938
  %v3941 = vunpack.c.l.s4 1966171168
  %v3942 = vunpack.c.0.s8 %v3941
  %v3943 = vlaneseq
  %v3944 = vshrl.u32 %v3943, 7
  %v3945 = vsub.s32 %v3942, %v3944
  %v3946 = vrot.slane %v3939, %v3945
  %v3948 = vunpack.c.l.s4 1966171168
  %v3949 = vunpack.c.0.s8 %v3948
  %v3950 = vlaneseq
  %v3951 = vshrl.u32 %v3950, 7
  %v3952 = vsub.s32 %v3949, %v3951
  %v3953 = vrot.slane %v3739, %v3952
  %v3954 = vcombine.high %v3953, %v3953
  %v3956 = vunpack.c.l.s4 1966171168
  %v3957 = vunpack.c.0.s8 %v3956
  %v3958 = vlaneseq
  %v3959 = vshrl.u32 %v3958, 7
  %v3960 = vsub.s32 %v3957, %v3959
  %v3961 = vrot.slane %v3953, %v3960
  %v3963 = vunpack.c.l.s4 1966171168
  %v3964 = vunpack.c.0.s8 %v3963
  %v3965 = vlaneseq
  %v3966 = vshrl.u32 %v3965, 7
  %v3967 = vsub.s32 %v3964, %v3966
  %v3968 = vrot.slane %v3954, %v3967
  %v3969 = vcombine.high %v3961, %v3961
  %v3970 = vcombine.high %v3968, %v3968
  %v3972 = vunpack.c.l.s4 1966171168
  %v3973 = vunpack.c.0.s8 %v3972
  %v3974 = vlaneseq
  %v3975 = vshrl.u32 %v3974, 7
  %v3976 = vsub.s32 %v3973, %v3975
  %v3977 = vrot.slane %v3740, %v3976
  %v3979 = vunpack.c.l.s4 1966171168
  %v3980 = vunpack.c.0.s8 %v3979
  %v3981 = vlaneseq
  %v3982 = vshrl.u32 %v3981, 7
  %v3983 = vsub.s32 %v3980, %v3982
  %v3984 = vrot.slane %v3977, %v3983
  %v3986 = vunpack.c.l.s4 1966171168
  %v3987 = vunpack.c.0.s8 %v3986
  %v3988 = vlaneseq
  %v3989 = vshrl.u32 %v3988, 7
  %v3990 = vsub.s32 %v3987, %v3989
  %v3991 = vrot.slane %v3741, %v3990
  %v3992 = vcombine.high %v3991, %v3991
  %v3994 = vunpack.c.l.s4 1966171168
  %v3995 = vunpack.c.0.s8 %v3994
  %v3996 = vlaneseq
  %v3997 = vshrl.u32 %v3996, 7
  %v3998 = vsub.s32 %v3995, %v3997
  %v3999 = vrot.slane %v3991, %v3998
  %v4001 = vunpack.c.l.s4 1966171168
  %v4002 = vunpack.c.0.s8 %v4001
  %v4003 = vlaneseq
  %v4004 = vshrl.u32 %v4003, 7
  %v4005 = vsub.s32 %v4002, %v4004
  %v4006 = vrot.slane %v3992, %v4005
  %v4007 = vcombine.high %v3999, %v3999
  %v4008 = vcombine.high %v4006, %v4006
  %v4010 = vunpack.c.l.s4 1966171168
  %v4011 = vunpack.c.0.s8 %v4010
  %v4012 = vlaneseq
  %v4013 = vshrl.u32 %v4012, 7
  %v4014 = vsub.s32 %v4011, %v4013
  %v4015 = vrot.slane %v3742, %v4014
  %v4017 = vunpack.c.l.s4 1966171168
  %v4018 = vunpack.c.0.s8 %v4017
  %v4019 = vlaneseq
  %v4020 = vshrl.u32 %v4019, 7
  %v4021 = vsub.s32 %v4018, %v4020
  %v4022 = vrot.slane %v4015, %v4021
  %v4024 = vunpack.c.l.s4 1966171168
  %v4025 = vunpack.c.0.s8 %v4024
  %v4026 = vlaneseq
  %v4027 = vshrl.u32 %v4026, 7
  %v4028 = vsub.s32 %v4025, %v4027
  %v4029 = vrot.slane %v3743, %v4028
  %v4030 = vcombine.high %v4029, %v4029
  %v4032 = vunpack.c.l.s4 1966171168
  %v4033 = vunpack.c.0.s8 %v4032
  %v4034 = vlaneseq
  %v4035 = vshrl.u32 %v4034, 7
  %v4036 = vsub.s32 %v4033, %v4035
  %v4037 = vrot.slane %v4029, %v4036
  %v4039 = vunpack.c.l.s4 1966171168
  %v4040 = vunpack.c.0.s8 %v4039
  %v4041 = vlaneseq
  %v4042 = vshrl.u32 %v4041, 7
  %v4043 = vsub.s32 %v4040, %v4042
  %v4044 = vrot.slane %v4030, %v4043
  %v4045 = vcombine.high %v4037, %v4037
  %v4046 = vcombine.high %v4044, %v4044
  %v4048 = vunpack.c.l.s4 1966171168
  %v4049 = vunpack.c.0.s8 %v4048
  %v4050 = vlaneseq
  %v4051 = vshrl.u32 %v4050, 7
  %v4052 = vsub.s32 %v4049, %v4051
  %v4053 = vrot.slane %v3744, %v4052
  %v4055 = vunpack.c.l.s4 1966171168
  %v4056 = vunpack.c.0.s8 %v4055
  %v4057 = vlaneseq
  %v4058 = vshrl.u32 %v4057, 7
  %v4059 = vsub.s32 %v4056, %v4058
  %v4060 = vrot.slane %v4053, %v4059
  %v4062 = vunpack.c.l.s4 1966171168
  %v4063 = vunpack.c.0.s8 %v4062
  %v4064 = vlaneseq
  %v4065 = vshrl.u32 %v4064, 7
  %v4066 = vsub.s32 %v4063, %v4065
  %v4067 = vrot.slane %v3745, %v4066
  %v4068 = vcombine.high %v4067, %v4067
  %v4070 = vunpack.c.l.s4 1966171168
  %v4071 = vunpack.c.0.s8 %v4070
  %v4072 = vlaneseq
  %v4073 = vshrl.u32 %v4072, 7
  %v4074 = vsub.s32 %v4071, %v4073
  %v4075 = vrot.slane %v4067, %v4074
  %v4077 = vunpack.c.l.s4 1966171168
  %v4078 = vunpack.c.0.s8 %v4077
  %v4079 = vlaneseq
  %v4080 = vshrl.u32 %v4079, 7
  %v4081 = vsub.s32 %v4078, %v4080
  %v4082 = vrot.slane %v4068, %v4081
  %v4083 = vcombine.high %v4075, %v4075
  %v4084 = vcombine.high %v4082, %v4082
  %v4086 = vunpack.c.l.s4 1966171168
  %v4087 = vunpack.c.0.s8 %v4086
  %v4088 = vlaneseq
  %v4089 = vshrl.u32 %v4088, 7
  %v4090 = vsub.s32 %v4087, %v4089
  %v4091 = vrot.slane %v3746, %v4090
  %v4093 = vunpack.c.l.s4 1966171168
  %v4094 = vunpack.c.0.s8 %v4093
  %v4095 = vlaneseq
  %v4096 = vshrl.u32 %v4095, 7
  %v4097 = vsub.s32 %v4094, %v4096
  %v4098 = vrot.slane %v4091, %v4097
  %v4100 = vunpack.c.l.s4 1966171168
  %v4101 = vunpack.c.0.s8 %v4100
  %v4102 = vlaneseq
  %v4103 = vshrl.u32 %v4102, 7
  %v4104 = vsub.s32 %v4101, %v4103
  %v4105 = vrot.slane %v3747, %v4104
  %v4106 = vcombine.high %v4105, %v4105
  %v4108 = vunpack.c.l.s4 1966171168
  %v4109 = vunpack.c.0.s8 %v4108
  %v4110 = vlaneseq
  %v4111 = vshrl.u32 %v4110, 7
  %v4112 = vsub.s32 %v4109, %v4111
  %v4113 = vrot.slane %v4105, %v4112
  %v4115 = vunpack.c.l.s4 1966171168
  %v4116 = vunpack.c.0.s8 %v4115
  %v4117 = vlaneseq
  %v4118 = vshrl.u32 %v4117, 7
  %v4119 = vsub.s32 %v4116, %v4118
  %v4120 = vrot.slane %v4106, %v4119
  %v4121 = vcombine.high %v4113, %v4113
  %v4122 = vcombine.high %v4120, %v4120
  %v4124 = vunpack.c.l.s4 1966171168
  %v4125 = vunpack.c.0.s8 %v4124
  %v4126 = vlaneseq
  %v4127 = vshrl.u32 %v4126, 7
  %v4128 = vsub.s32 %v4125, %v4127
  %v4129 = vrot.slane %v3748, %v4128
  %v4131 = vunpack.c.l.s4 1966171168
  %v4132 = vunpack.c.0.s8 %v4131
  %v4133 = vlaneseq
  %v4134 = vshrl.u32 %v4133, 7
  %v4135 = vsub.s32 %v4132, %v4134
  %v4136 = vrot.slane %v4129, %v4135
  %v4138 = vunpack.c.l.s4 1966171168
  %v4139 = vunpack.c.0.s8 %v4138
  %v4140 = vlaneseq
  %v4141 = vshrl.u32 %v4140, 7
  %v4142 = vsub.s32 %v4139, %v4141
  %v4143 = vrot.slane %v3749, %v4142
  %v4144 = vcombine.high %v4143, %v4143
  %v4146 = vunpack.c.l.s4 1966171168
  %v4147 = vunpack.c.0.s8 %v4146
  %v4148 = vlaneseq
  %v4149 = vshrl.u32 %v4148, 7
  %v4150 = vsub.s32 %v4147, %v4149
  %v4151 = vrot.slane %v4143, %v4150
  %v4153 = vunpack.c.l.s4 1966171168
  %v4154 = vunpack.c.0.s8 %v4153
  %v4155 = vlaneseq
  %v4156 = vshrl.u32 %v4155, 7
  %v4157 = vsub.s32 %v4154, %v4156
  %v4158 = vrot.slane %v4144, %v4157
  %v4159 = vcombine.high %v4151, %v4151
  %v4160 = vcombine.high %v4158, %v4158
  %v4162 = vunpack.c.l.s4 1966171168
  %v4163 = vunpack.c.0.s8 %v4162
  %v4164 = vlaneseq
  %v4165 = vshrl.u32 %v4164, 7
  %v4166 = vsub.s32 %v4163, %v4165
  %v4167 = vrot.slane %v3750, %v4166
  %v4169 = vunpack.c.l.s4 1966171168
  %v4170 = vunpack.c.0.s8 %v4169
  %v4171 = vlaneseq
  %v4172 = vshrl.u32 %v4171, 7
  %v4173 = vsub.s32 %v4170, %v4172
  %v4174 = vrot.slane %v4167, %v4173
  %v4176 = vunpack.c.l.s4 1966171168
  %v4177 = vunpack.c.0.s8 %v4176
  %v4178 = vlaneseq
  %v4179 = vshrl.u32 %v4178, 7
  %v4180 = vsub.s32 %v4177, %v4179
  %v4181 = vrot.slane %v3751, %v4180
  %v4182 = vcombine.high %v4181, %v4181
  %v4184 = vunpack.c.l.s4 1966171168
  %v4185 = vunpack.c.0.s8 %v4184
  %v4186 = vlaneseq
  %v4187 = vshrl.u32 %v4186, 7
  %v4188 = vsub.s32 %v4185, %v4187
  %v4189 = vrot.slane %v4181, %v4188
  %v4191 = vunpack.c.l.s4 1966171168
  %v4192 = vunpack.c.0.s8 %v4191
  %v4193 = vlaneseq
  %v4194 = vshrl.u32 %v4193, 7
  %v4195 = vsub.s32 %v4192, %v4194
  %v4196 = vrot.slane %v4182, %v4195
  %v4197 = vcombine.high %v4189, %v4189
  %v4198 = vcombine.high %v4196, %v4196
  %v4200 = vunpack.c.l.s4 1966171168
  %v4201 = vunpack.c.0.s8 %v4200
  %v4202 = vlaneseq
  %v4203 = vshrl.u32 %v4202, 7
  %v4204 = vsub.s32 %v4201, %v4203
  %v4205 = vrot.slane %v3752, %v4204
  %v4207 = vunpack.c.l.s4 1966171168
  %v4208 = vunpack.c.0.s8 %v4207
  %v4209 = vlaneseq
  %v4210 = vshrl.u32 %v4209, 7
  %v4211 = vsub.s32 %v4208, %v4210
  %v4212 = vrot.slane %v4205, %v4211
  %v4214 = vunpack.c.l.s4 1966171168
  %v4215 = vunpack.c.0.s8 %v4214
  %v4216 = vlaneseq
  %v4217 = vshrl.u32 %v4216, 7
  %v4218 = vsub.s32 %v4215, %v4217
  %v4219 = vrot.slane %v3753, %v4218
  %v4220 = vcombine.high %v4219, %v4219
  %v4222 = vunpack.c.l.s4 1966171168
  %v4223 = vunpack.c.0.s8 %v4222
  %v4224 = vlaneseq
  %v4225 = vshrl.u32 %v4224, 7
  %v4226 = vsub.s32 %v4223, %v4225
  %v4227 = vrot.slane %v4219, %v4226
  %v4229 = vunpack.c.l.s4 1966171168
  %v4230 = vunpack.c.0.s8 %v4229
  %v4231 = vlaneseq
  %v4232 = vshrl.u32 %v4231, 7
  %v4233 = vsub.s32 %v4230, %v4232
  %v4234 = vrot.slane %v4220, %v4233
  %v4235 = vcombine.high %v4227, %v4227
  %v4236 = vcombine.high %v4234, %v4234
  %v4238 = vunpack.c.l.s4 1966171168
  %v4239 = vunpack.c.0.s8 %v4238
  %v4240 = vlaneseq
  %v4241 = vshrl.u32 %v4240, 7
  %v4242 = vsub.s32 %v4239, %v4241
  %v4243 = vrot.slane %v3754, %v4242
  %v4245 = vunpack.c.l.s4 1966171168
  %v4246 = vunpack.c.0.s8 %v4245
  %v4247 = vlaneseq
  %v4248 = vshrl.u32 %v4247, 7
  %v4249 = vsub.s32 %v4246, %v4248
  %v4250 = vrot.slane %v4243, %v4249
  %v4252 = vunpack.c.l.s4 1966171168
  %v4253 = vunpack.c.0.s8 %v4252
  %v4254 = vlaneseq
  %v4255 = vshrl.u32 %v4254, 7
  %v4256 = vsub.s32 %v4253, %v4255
  %v4257 = vrot.slane %v3755, %v4256
  %v4258 = vcombine.high %v4257, %v4257
  %v4260 = vunpack.c.l.s4 1966171168
  %v4261 = vunpack.c.0.s8 %v4260
  %v4262 = vlaneseq
  %v4263 = vshrl.u32 %v4262, 7
  %v4264 = vsub.s32 %v4261, %v4263
  %v4265 = vrot.slane %v4257, %v4264
  %v4267 = vunpack.c.l.s4 1966171168
  %v4268 = vunpack.c.0.s8 %v4267
  %v4269 = vlaneseq
  %v4270 = vshrl.u32 %v4269, 7
  %v4271 = vsub.s32 %v4268, %v4270
  %v4272 = vrot.slane %v4258, %v4271
  %v4273 = vcombine.high %v4265, %v4265
  %v4274 = vcombine.high %v4272, %v4272
  %v4276 = vunpack.c.l.s4 1966171168
  %v4277 = vunpack.c.0.s8 %v4276
  %v4278 = vlaneseq
  %v4279 = vshrl.u32 %v4278, 7
  %v4280 = vsub.s32 %v4277, %v4279
  %v4281 = vrot.slane %v3756, %v4280
  %v4283 = vunpack.c.l.s4 1966171168
  %v4284 = vunpack.c.0.s8 %v4283
  %v4285 = vlaneseq
  %v4286 = vshrl.u32 %v4285, 7
  %v4287 = vsub.s32 %v4284, %v4286
  %v4288 = vrot.slane %v4281, %v4287
  %v4290 = vunpack.c.l.s4 1966171168
  %v4291 = vunpack.c.0.s8 %v4290
  %v4292 = vlaneseq
  %v4293 = vshrl.u32 %v4292, 7
  %v4294 = vsub.s32 %v4291, %v4293
  %v4295 = vrot.slane %v3757, %v4294
  %v4296 = vcombine.high %v4295, %v4295
  %v4298 = vunpack.c.l.s4 1966171168
  %v4299 = vunpack.c.0.s8 %v4298
  %v4300 = vlaneseq
  %v4301 = vshrl.u32 %v4300, 7
  %v4302 = vsub.s32 %v4299, %v4301
  %v4303 = vrot.slane %v4295, %v4302
  %v4305 = vunpack.c.l.s4 1966171168
  %v4306 = vunpack.c.0.s8 %v4305
  %v4307 = vlaneseq
  %v4308 = vshrl.u32 %v4307, 7
  %v4309 = vsub.s32 %v4306, %v4308
  %v4310 = vrot.slane %v4296, %v4309
  %v4311 = vcombine.high %v4303, %v4303
  %v4312 = vcombine.high %v4310, %v4310
  %v4314 = vunpack.c.l.s4 1966171168
  %v4315 = vunpack.c.0.s8 %v4314
  %v4316 = vlaneseq
  %v4317 = vshrl.u32 %v4316, 7
  %v4318 = vsub.s32 %v4315, %v4317
  %v4319 = vrot.slane %v3758, %v4318
  %v4321 = vunpack.c.l.s4 1966171168
  %v4322 = vunpack.c.0.s8 %v4321
  %v4323 = vlaneseq
  %v4324 = vshrl.u32 %v4323, 7
  %v4325 = vsub.s32 %v4322, %v4324
  %v4326 = vrot.slane %v4319, %v4325
  %v4328 = vunpack.c.l.s4 1966171168
  %v4329 = vunpack.c.0.s8 %v4328
  %v4330 = vlaneseq
  %v4331 = vshrl.u32 %v4330, 7
  %v4332 = vsub.s32 %v4329, %v4331
  %v4333 = vrot.slane %v3759, %v4332
  %v4334 = vcombine.high %v4333, %v4333
  %v4336 = vunpack.c.l.s4 1966171168
  %v4337 = vunpack.c.0.s8 %v4336
  %v4338 = vlaneseq
  %v4339 = vshrl.u32 %v4338, 7
  %v4340 = vsub.s32 %v4337, %v4339
  %v4341 = vrot.slane %v4333, %v4340
  %v4343 = vunpack.c.l.s4 1966171168
  %v4344 = vunpack.c.0.s8 %v4343
  %v4345 = vlaneseq
  %v4346 = vshrl.u32 %v4345, 7
  %v4347 = vsub.s32 %v4344, %v4346
  %v4348 = vrot.slane %v4334, %v4347
  %v4349 = vcombine.high %v4341, %v4341
  %v4350 = vcombine.high %v4348, %v4348
  %v4352 = vunpack.c.l.s4 1966171168
  %v4353 = vunpack.c.0.s8 %v4352
  %v4354 = vlaneseq
  %v4355 = vshrl.u32 %v4354, 7
  %v4356 = vsub.s32 %v4353, %v4355
  %v4357 = vrot.slane %v3760, %v4356
  %v4359 = vunpack.c.l.s4 1966171168
  %v4360 = vunpack.c.0.s8 %v4359
  %v4361 = vlaneseq
  %v4362 = vshrl.u32 %v4361, 7
  %v4363 = vsub.s32 %v4360, %v4362
  %v4364 = vrot.slane %v4357, %v4363
  %v4366 = vunpack.c.l.s4 1966171168
  %v4367 = vunpack.c.0.s8 %v4366
  %v4368 = vlaneseq
  %v4369 = vshrl.u32 %v4368, 7
  %v4370 = vsub.s32 %v4367, %v4369
  %v4371 = vrot.slane %v3761, %v4370
  %v4372 = vcombine.high %v4371, %v4371
  %v4374 = vunpack.c.l.s4 1966171168
  %v4375 = vunpack.c.0.s8 %v4374
  %v4376 = vlaneseq
  %v4377 = vshrl.u32 %v4376, 7
  %v4378 = vsub.s32 %v4375, %v4377
  %v4379 = vrot.slane %v4371, %v4378
  %v4381 = vunpack.c.l.s4 1966171168
  %v4382 = vunpack.c.0.s8 %v4381
  %v4383 = vlaneseq
  %v4384 = vshrl.u32 %v4383, 7
  %v4385 = vsub.s32 %v4382, %v4384
  %v4386 = vrot.slane %v4372, %v4385
  %v4387 = vcombine.high %v4379, %v4379
  %v4388 = vcombine.high %v4386, %v4386
  %v4390 = vunpack.c.l.s4 1966171168
  %v4391 = vunpack.c.0.s8 %v4390
  %v4392 = vlaneseq
  %v4393 = vshrl.u32 %v4392, 7
  %v4394 = vsub.s32 %v4391, %v4393
  %v4395 = vrot.slane %v3762, %v4394
  %v4397 = vunpack.c.l.s4 1966171168
  %v4398 = vunpack.c.0.s8 %v4397
  %v4399 = vlaneseq
  %v4400 = vshrl.u32 %v4399, 7
  %v4401 = vsub.s32 %v4398, %v4400
  %v4402 = vrot.slane %v4395, %v4401
  %s4403 = scalar_lea.vmem %s6, 12
  %v4404 = vld [vmem:[%s4403] sm:$0xf]
  %v4405 = vcombine.low %v3809, %v3816
  %v4406 = vcombine.low %v3817, %v3818
  %v4407 = vcombine.low %v3832, %v3847
  %v4408 = vcombine.low %v3854, %v3855
  %v4410 = vunpack.c.l.s4 1966171168
  %v4411 = vunpack.c.0.s8 %v4410
  %v4412 = vlaneseq
  %v4413 = vshrl.u32 %v4412, 7
  %v4414 = vsub.s32 %v4411, %v4413
  %v4415 = vrot.slane %v4405, %v4414
  %v4417 = vunpack.c.l.s4 1966171168
  %v4418 = vunpack.c.0.s8 %v4417
  %v4419 = vlaneseq
  %v4420 = vshrl.u32 %v4419, 7
  %v4421 = vsub.s32 %v4418, %v4420
  %v4422 = vrot.slane %v4406, %v4421
  %v4424 = vunpack.c.l.s4 1966171168
  %v4425 = vunpack.c.0.s8 %v4424
  %v4426 = vlaneseq
  %v4427 = vshrl.u32 %v4426, 7
  %v4428 = vsub.s32 %v4425, %v4427
  %v4429 = vrot.slane %v4407, %v4428
  %v4431 = vunpack.c.l.s4 1966171168
  %v4432 = vunpack.c.0.s8 %v4431
  %v4433 = vlaneseq
  %v4434 = vshrl.u32 %v4433, 7
  %v4435 = vsub.s32 %v4432, %v4434
  %v4436 = vrot.slane %v4408, %v4435
  %v4437 = vcombine.low %v4415, %v4422
  %v4438 = vcombine.low %v4429, %v4436
  %v4440 = vunpack.c.l.s4 1966171168
  %v4441 = vunpack.c.0.s8 %v4440
  %v4442 = vlaneseq
  %v4443 = vshrl.u32 %v4442, 7
  %v4444 = vsub.s32 %v4441, %v4443
  %v4445 = vrot.slane %v4437, %v4444
  %v4447 = vunpack.c.l.s4 1966171168
  %v4448 = vunpack.c.0.s8 %v4447
  %v4449 = vlaneseq
  %v4450 = vshrl.u32 %v4449, 7
  %v4451 = vsub.s32 %v4448, %v4450
  %v4452 = vrot.slane %v4438, %v4451
  %v4453 = vcombine.low %v4445, %v4452
  %v4454 = vcombine.low %v3856, %v3870
  %v4455 = vcombine.low %v3885, %v3892
  %v4456 = vcombine.low %v3893, %v3894
  %v4457 = vcombine.low %v3908, %v3923
  %v4459 = vunpack.c.l.s4 1966171168
  %v4460 = vunpack.c.0.s8 %v4459
  %v4461 = vlaneseq
  %v4462 = vshrl.u32 %v4461, 7
  %v4463 = vsub.s32 %v4460, %v4462
  %v4464 = vrot.slane %v4454, %v4463
  %v4466 = vunpack.c.l.s4 1966171168
  %v4467 = vunpack.c.0.s8 %v4466
  %v4468 = vlaneseq
  %v4469 = vshrl.u32 %v4468, 7
  %v4470 = vsub.s32 %v4467, %v4469
  %v4471 = vrot.slane %v4455, %v4470
  %v4473 = vunpack.c.l.s4 1966171168
  %v4474 = vunpack.c.0.s8 %v4473
  %v4475 = vlaneseq
  %v4476 = vshrl.u32 %v4475, 7
  %v4477 = vsub.s32 %v4474, %v4476
  %v4478 = vrot.slane %v4456, %v4477
  %v4480 = vunpack.c.l.s4 1966171168
  %v4481 = vunpack.c.0.s8 %v4480
  %v4482 = vlaneseq
  %v4483 = vshrl.u32 %v4482, 7
  %v4484 = vsub.s32 %v4481, %v4483
  %v4485 = vrot.slane %v4457, %v4484
  %v4486 = vcombine.low %v4464, %v4471
  %v4487 = vcombine.low %v4478, %v4485
  %v4489 = vunpack.c.l.s4 1966171168
  %v4490 = vunpack.c.0.s8 %v4489
  %v4491 = vlaneseq
  %v4492 = vshrl.u32 %v4491, 7
  %v4493 = vsub.s32 %v4490, %v4492
  %v4494 = vrot.slane %v4486, %v4493
  %v4496 = vunpack.c.l.s4 1966171168
  %v4497 = vunpack.c.0.s8 %v4496
  %v4498 = vlaneseq
  %v4499 = vshrl.u32 %v4498, 7
  %v4500 = vsub.s32 %v4497, %v4499
  %v4501 = vrot.slane %v4487, %v4500
  %v4502 = vcombine.low %v4494, %v4501
  %v4503 = vcombine.low %v3930, %v3931
  %v4504 = vcombine.low %v3932, %v3946
  %v4505 = vcombine.low %v3961, %v3968
  %v4506 = vcombine.low %v3969, %v3970
  %v4508 = vunpack.c.l.s4 1966171168
  %v4509 = vunpack.c.0.s8 %v4508
  %v4510 = vlaneseq
  %v4511 = vshrl.u32 %v4510, 7
  %v4512 = vsub.s32 %v4509, %v4511
  %v4513 = vrot.slane %v4503, %v4512
  %v4515 = vunpack.c.l.s4 1966171168
  %v4516 = vunpack.c.0.s8 %v4515
  %v4517 = vlaneseq
  %v4518 = vshrl.u32 %v4517, 7
  %v4519 = vsub.s32 %v4516, %v4518
  %v4520 = vrot.slane %v4504, %v4519
  %v4522 = vunpack.c.l.s4 1966171168
  %v4523 = vunpack.c.0.s8 %v4522
  %v4524 = vlaneseq
  %v4525 = vshrl.u32 %v4524, 7
  %v4526 = vsub.s32 %v4523, %v4525
  %v4527 = vrot.slane %v4505, %v4526
  %v4529 = vunpack.c.l.s4 1966171168
  %v4530 = vunpack.c.0.s8 %v4529
  %v4531 = vlaneseq
  %v4532 = vshrl.u32 %v4531, 7
  %v4533 = vsub.s32 %v4530, %v4532
  %v4534 = vrot.slane %v4506, %v4533
  %v4535 = vcombine.low %v4513, %v4520
  %v4536 = vcombine.low %v4527, %v4534
  %v4538 = vunpack.c.l.s4 1966171168
  %v4539 = vunpack.c.0.s8 %v4538
  %v4540 = vlaneseq
  %v4541 = vshrl.u32 %v4540, 7
  %v4542 = vsub.s32 %v4539, %v4541
  %v4543 = vrot.slane %v4535, %v4542
  %v4545 = vunpack.c.l.s4 1966171168
  %v4546 = vunpack.c.0.s8 %v4545
  %v4547 = vlaneseq
  %v4548 = vshrl.u32 %v4547, 7
  %v4549 = vsub.s32 %v4546, %v4548
  %v4550 = vrot.slane %v4536, %v4549
  %v4551 = vcombine.low %v4543, %v4550
  %v4552 = vcombine.low %v3984, %v3999
  %v4553 = vcombine.low %v4006, %v4007
  %v4554 = vcombine.low %v4008, %v4022
  %v4555 = vcombine.low %v4037, %v4044
  %v4557 = vunpack.c.l.s4 1966171168
  %v4558 = vunpack.c.0.s8 %v4557
  %v4559 = vlaneseq
  %v4560 = vshrl.u32 %v4559, 7
  %v4561 = vsub.s32 %v4558, %v4560
  %v4562 = vrot.slane %v4552, %v4561
  %v4564 = vunpack.c.l.s4 1966171168
  %v4565 = vunpack.c.0.s8 %v4564
  %v4566 = vlaneseq
  %v4567 = vshrl.u32 %v4566, 7
  %v4568 = vsub.s32 %v4565, %v4567
  %v4569 = vrot.slane %v4553, %v4568
  %v4571 = vunpack.c.l.s4 1966171168
  %v4572 = vunpack.c.0.s8 %v4571
  %v4573 = vlaneseq
  %v4574 = vshrl.u32 %v4573, 7
  %v4575 = vsub.s32 %v4572, %v4574
  %v4576 = vrot.slane %v4554, %v4575
  %v4578 = vunpack.c.l.s4 1966171168
  %v4579 = vunpack.c.0.s8 %v4578
  %v4580 = vlaneseq
  %v4581 = vshrl.u32 %v4580, 7
  %v4582 = vsub.s32 %v4579, %v4581
  %v4583 = vrot.slane %v4555, %v4582
  %v4584 = vcombine.low %v4562, %v4569
  %v4585 = vcombine.low %v4576, %v4583
  %v4587 = vunpack.c.l.s4 1966171168
  %v4588 = vunpack.c.0.s8 %v4587
  %v4589 = vlaneseq
  %v4590 = vshrl.u32 %v4589, 7
  %v4591 = vsub.s32 %v4588, %v4590
  %v4592 = vrot.slane %v4584, %v4591
  %v4594 = vunpack.c.l.s4 1966171168
  %v4595 = vunpack.c.0.s8 %v4594
  %v4596 = vlaneseq
  %v4597 = vshrl.u32 %v4596, 7
  %v4598 = vsub.s32 %v4595, %v4597
  %v4599 = vrot.slane %v4585, %v4598
  %v4600 = vcombine.low %v4592, %v4599
  %v4601 = vcombine.low %v4045, %v4046
  %v4602 = vcombine.low %v4060, %v4075
  %v4603 = vcombine.low %v4082, %v4083
  %v4604 = vcombine.low %v4084, %v4098
  %v4606 = vunpack.c.l.s4 1966171168
  %v4607 = vunpack.c.0.s8 %v4606
  %v4608 = vlaneseq
  %v4609 = vshrl.u32 %v4608, 7
  %v4610 = vsub.s32 %v4607, %v4609
  %v4611 = vrot.slane %v4601, %v4610
  %v4613 = vunpack.c.l.s4 1966171168
  %v4614 = vunpack.c.0.s8 %v4613
  %v4615 = vlaneseq
  %v4616 = vshrl.u32 %v4615, 7
  %v4617 = vsub.s32 %v4614, %v4616
  %v4618 = vrot.slane %v4602, %v4617
  %v4620 = vunpack.c.l.s4 1966171168
  %v4621 = vunpack.c.0.s8 %v4620
  %v4622 = vlaneseq
  %v4623 = vshrl.u32 %v4622, 7
  %v4624 = vsub.s32 %v4621, %v4623
  %v4625 = vrot.slane %v4603, %v4624
  %v4627 = vunpack.c.l.s4 1966171168
  %v4628 = vunpack.c.0.s8 %v4627
  %v4629 = vlaneseq
  %v4630 = vshrl.u32 %v4629, 7
  %v4631 = vsub.s32 %v4628, %v4630
  %v4632 = vrot.slane %v4604, %v4631
  %v4633 = vcombine.low %v4611, %v4618
  %v4634 = vcombine.low %v4625, %v4632
  %v4636 = vunpack.c.l.s4 1966171168
  %v4637 = vunpack.c.0.s8 %v4636
  %v4638 = vlaneseq
  %v4639 = vshrl.u32 %v4638, 7
  %v4640 = vsub.s32 %v4637, %v4639
  %v4641 = vrot.slane %v4633, %v4640
  %v4643 = vunpack.c.l.s4 1966171168
  %v4644 = vunpack.c.0.s8 %v4643
  %v4645 = vlaneseq
  %v4646 = vshrl.u32 %v4645, 7
  %v4647 = vsub.s32 %v4644, %v4646
  %v4648 = vrot.slane %v4634, %v4647
  %v4649 = vcombine.low %v4641, %v4648
  %v4650 = vcombine.low %v4113, %v4120
  %v4651 = vcombine.low %v4121, %v4122
  %v4652 = vcombine.low %v4136, %v4151
  %v4653 = vcombine.low %v4158, %v4159
  %v4655 = vunpack.c.l.s4 1966171168
  %v4656 = vunpack.c.0.s8 %v4655
  %v4657 = vlaneseq
  %v4658 = vshrl.u32 %v4657, 7
  %v4659 = vsub.s32 %v4656, %v4658
  %v4660 = vrot.slane %v4650, %v4659
  %v4662 = vunpack.c.l.s4 1966171168
  %v4663 = vunpack.c.0.s8 %v4662
  %v4664 = vlaneseq
  %v4665 = vshrl.u32 %v4664, 7
  %v4666 = vsub.s32 %v4663, %v4665
  %v4667 = vrot.slane %v4651, %v4666
  %v4669 = vunpack.c.l.s4 1966171168
  %v4670 = vunpack.c.0.s8 %v4669
  %v4671 = vlaneseq
  %v4672 = vshrl.u32 %v4671, 7
  %v4673 = vsub.s32 %v4670, %v4672
  %v4674 = vrot.slane %v4652, %v4673
  %v4676 = vunpack.c.l.s4 1966171168
  %v4677 = vunpack.c.0.s8 %v4676
  %v4678 = vlaneseq
  %v4679 = vshrl.u32 %v4678, 7
  %v4680 = vsub.s32 %v4677, %v4679
  %v4681 = vrot.slane %v4653, %v4680
  %v4682 = vcombine.low %v4660, %v4667
  %v4683 = vcombine.low %v4674, %v4681
  %v4685 = vunpack.c.l.s4 1966171168
  %v4686 = vunpack.c.0.s8 %v4685
  %v4687 = vlaneseq
  %v4688 = vshrl.u32 %v4687, 7
  %v4689 = vsub.s32 %v4686, %v4688
  %v4690 = vrot.slane %v4682, %v4689
  %v4692 = vunpack.c.l.s4 1966171168
  %v4693 = vunpack.c.0.s8 %v4692
  %v4694 = vlaneseq
  %v4695 = vshrl.u32 %v4694, 7
  %v4696 = vsub.s32 %v4693, %v4695
  %v4697 = vrot.slane %v4683, %v4696
  %v4698 = vcombine.low %v4690, %v4697
  %v4699 = vcombine.low %v4160, %v4174
  %v4700 = vcombine.low %v4189, %v4196
  %v4701 = vcombine.low %v4197, %v4198
  %v4702 = vcombine.low %v4212, %v4227
  %v4704 = vunpack.c.l.s4 1966171168
  %v4705 = vunpack.c.0.s8 %v4704
  %v4706 = vlaneseq
  %v4707 = vshrl.u32 %v4706, 7
  %v4708 = vsub.s32 %v4705, %v4707
  %v4709 = vrot.slane %v4699, %v4708
  %v4711 = vunpack.c.l.s4 1966171168
  %v4712 = vunpack.c.0.s8 %v4711
  %v4713 = vlaneseq
  %v4714 = vshrl.u32 %v4713, 7
  %v4715 = vsub.s32 %v4712, %v4714
  %v4716 = vrot.slane %v4700, %v4715
  %v4718 = vunpack.c.l.s4 1966171168
  %v4719 = vunpack.c.0.s8 %v4718
  %v4720 = vlaneseq
  %v4721 = vshrl.u32 %v4720, 7
  %v4722 = vsub.s32 %v4719, %v4721
  %v4723 = vrot.slane %v4701, %v4722
  %v4725 = vunpack.c.l.s4 1966171168
  %v4726 = vunpack.c.0.s8 %v4725
  %v4727 = vlaneseq
  %v4728 = vshrl.u32 %v4727, 7
  %v4729 = vsub.s32 %v4726, %v4728
  %v4730 = vrot.slane %v4702, %v4729
  %v4731 = vcombine.low %v4709, %v4716
  %v4732 = vcombine.low %v4723, %v4730
  %v4734 = vunpack.c.l.s4 1966171168
  %v4735 = vunpack.c.0.s8 %v4734
  %v4736 = vlaneseq
  %v4737 = vshrl.u32 %v4736, 7
  %v4738 = vsub.s32 %v4735, %v4737
  %v4739 = vrot.slane %v4731, %v4738
  %v4741 = vunpack.c.l.s4 1966171168
  %v4742 = vunpack.c.0.s8 %v4741
  %v4743 = vlaneseq
  %v4744 = vshrl.u32 %v4743, 7
  %v4745 = vsub.s32 %v4742, %v4744
  %v4746 = vrot.slane %v4732, %v4745
  %v4747 = vcombine.low %v4739, %v4746
  %v4748 = vcombine.low %v4234, %v4235
  %v4749 = vcombine.low %v4236, %v4250
  %v4750 = vcombine.low %v4265, %v4272
  %v4751 = vcombine.low %v4273, %v4274
  %v4753 = vunpack.c.l.s4 1966171168
  %v4754 = vunpack.c.0.s8 %v4753
  %v4755 = vlaneseq
  %v4756 = vshrl.u32 %v4755, 7
  %v4757 = vsub.s32 %v4754, %v4756
  %v4758 = vrot.slane %v4748, %v4757
  %v4760 = vunpack.c.l.s4 1966171168
  %v4761 = vunpack.c.0.s8 %v4760
  %v4762 = vlaneseq
  %v4763 = vshrl.u32 %v4762, 7
  %v4764 = vsub.s32 %v4761, %v4763
  %v4765 = vrot.slane %v4749, %v4764
  %v4767 = vunpack.c.l.s4 1966171168
  %v4768 = vunpack.c.0.s8 %v4767
  %v4769 = vlaneseq
  %v4770 = vshrl.u32 %v4769, 7
  %v4771 = vsub.s32 %v4768, %v4770
  %v4772 = vrot.slane %v4750, %v4771
  %v4774 = vunpack.c.l.s4 1966171168
  %v4775 = vunpack.c.0.s8 %v4774
  %v4776 = vlaneseq
  %v4777 = vshrl.u32 %v4776, 7
  %v4778 = vsub.s32 %v4775, %v4777
  %v4779 = vrot.slane %v4751, %v4778
  %v4780 = vcombine.low %v4758, %v4765
  %v4781 = vcombine.low %v4772, %v4779
  %v4783 = vunpack.c.l.s4 1966171168
  %v4784 = vunpack.c.0.s8 %v4783
  %v4785 = vlaneseq
  %v4786 = vshrl.u32 %v4785, 7
  %v4787 = vsub.s32 %v4784, %v4786
  %v4788 = vrot.slane %v4780, %v4787
  %v4790 = vunpack.c.l.s4 1966171168
  %v4791 = vunpack.c.0.s8 %v4790
  %v4792 = vlaneseq
  %v4793 = vshrl.u32 %v4792, 7
  %v4794 = vsub.s32 %v4791, %v4793
  %v4795 = vrot.slane %v4781, %v4794
  %v4796 = vcombine.low %v4788, %v4795
  %v4797 = vcombine.low %v4288, %v4303
  %v4798 = vcombine.low %v4310, %v4311
  %v4799 = vcombine.low %v4312, %v4326
  %v4800 = vcombine.low %v4341, %v4348
  %v4802 = vunpack.c.l.s4 1966171168
  %v4803 = vunpack.c.0.s8 %v4802
  %v4804 = vlaneseq
  %v4805 = vshrl.u32 %v4804, 7
  %v4806 = vsub.s32 %v4803, %v4805
  %v4807 = vrot.slane %v4797, %v4806
  %v4809 = vunpack.c.l.s4 1966171168
  %v4810 = vunpack.c.0.s8 %v4809
  %v4811 = vlaneseq
  %v4812 = vshrl.u32 %v4811, 7
  %v4813 = vsub.s32 %v4810, %v4812
  %v4814 = vrot.slane %v4798, %v4813
  %v4816 = vunpack.c.l.s4 1966171168
  %v4817 = vunpack.c.0.s8 %v4816
  %v4818 = vlaneseq
  %v4819 = vshrl.u32 %v4818, 7
  %v4820 = vsub.s32 %v4817, %v4819
  %v4821 = vrot.slane %v4799, %v4820
  %v4823 = vunpack.c.l.s4 1966171168
  %v4824 = vunpack.c.0.s8 %v4823
  %v4825 = vlaneseq
  %v4826 = vshrl.u32 %v4825, 7
  %v4827 = vsub.s32 %v4824, %v4826
  %v4828 = vrot.slane %v4800, %v4827
  %v4829 = vcombine.low %v4807, %v4814
  %v4830 = vcombine.low %v4821, %v4828
  %v4832 = vunpack.c.l.s4 1966171168
  %v4833 = vunpack.c.0.s8 %v4832
  %v4834 = vlaneseq
  %v4835 = vshrl.u32 %v4834, 7
  %v4836 = vsub.s32 %v4833, %v4835
  %v4837 = vrot.slane %v4829, %v4836
  %v4839 = vunpack.c.l.s4 1966171168
  %v4840 = vunpack.c.0.s8 %v4839
  %v4841 = vlaneseq
  %v4842 = vshrl.u32 %v4841, 7
  %v4843 = vsub.s32 %v4840, %v4842
  %v4844 = vrot.slane %v4830, %v4843
  %v4845 = vcombine.low %v4837, %v4844
  %v4846 = vcombine.low %v4349, %v4350
  %v4847 = vcombine.low %v4364, %v4379
  %v4848 = vcombine.low %v4386, %v4387
  %v4849 = vcombine.low %v4388, %v4402
  %v4851 = vunpack.c.l.s4 1966171168
  %v4852 = vunpack.c.0.s8 %v4851
  %v4853 = vlaneseq
  %v4854 = vshrl.u32 %v4853, 7
  %v4855 = vsub.s32 %v4852, %v4854
  %v4856 = vrot.slane %v4846, %v4855
  %v4858 = vunpack.c.l.s4 1966171168
  %v4859 = vunpack.c.0.s8 %v4858
  %v4860 = vlaneseq
  %v4861 = vshrl.u32 %v4860, 7
  %v4862 = vsub.s32 %v4859, %v4861
  %v4863 = vrot.slane %v4847, %v4862
  %v4865 = vunpack.c.l.s4 1966171168
  %v4866 = vunpack.c.0.s8 %v4865
  %v4867 = vlaneseq
  %v4868 = vshrl.u32 %v4867, 7
  %v4869 = vsub.s32 %v4866, %v4868
  %v4870 = vrot.slane %v4848, %v4869
  %v4872 = vunpack.c.l.s4 1966171168
  %v4873 = vunpack.c.0.s8 %v4872
  %v4874 = vlaneseq
  %v4875 = vshrl.u32 %v4874, 7
  %v4876 = vsub.s32 %v4873, %v4875
  %v4877 = vrot.slane %v4849, %v4876
  %v4878 = vcombine.low %v4856, %v4863
  %v4879 = vcombine.low %v4870, %v4877
  %v4881 = vunpack.c.l.s4 1966171168
  %v4882 = vunpack.c.0.s8 %v4881
  %v4883 = vlaneseq
  %v4884 = vshrl.u32 %v4883, 7
  %v4885 = vsub.s32 %v4882, %v4884
  %v4886 = vrot.slane %v4878, %v4885
  %v4888 = vunpack.c.l.s4 1966171168
  %v4889 = vunpack.c.0.s8 %v4888
  %v4890 = vlaneseq
  %v4891 = vshrl.u32 %v4890, 7
  %v4892 = vsub.s32 %v4889, %v4891
  %v4893 = vrot.slane %v4879, %v4892
  %v4894 = vcombine.low %v4886, %v4893
  %v4896 = vsel %vm1749, %v4453, 0
  %v4899 = vsel %vm1749, %v4502, 0
  %v4902 = vsel %vm1749, %v4551, 0
  %v4905 = vsel %vm1749, %v4600, 0
  %v4908 = vsel %vm1749, %v4649, 0
  %v4911 = vsel %vm1749, %v4698, 0
  %v4914 = vsel %vm1749, %v4747, 0
  %v4917 = vsel %vm1749, %v4796, 0
  %v4920 = vsel %vm1749, %v4845, 0
  %v4923 = vsel %vm1749, %v4894, 0
  %v4926 = vsel %vm1780, %v4404, 0
  %4928 = vmatprep.subr.bf16.mxu0 0
  %4929 = vmatpush1.bf16.msra.mxu0 %v4926
  %4930 = vmatprep.subr.bf16.mxu0 0
  %4931 = vmatpush1.bf16.msra.mxu0 0
  %4932 = vmatprep.subr.bf16.mxu0 0
  %4933 = vmatpush1.bf16.msra.mxu0 0
  %4934 = vmatprep.subr.bf16.mxu0 0
  %4935 = vmatpush1.bf16.msra.mxu0 0
  %4936 = vmatprep.subr.bf16.mxu0 0
  %4937 = vmatpush1.bf16.msra.mxu0 0
  %4938 = vmatprep.subr.bf16.mxu0 0
  %4939 = vmatpush1.bf16.msra.mxu0 0
  %4940 = vmatprep.subr.bf16.mxu0 0
  %4941 = vmatpush1.bf16.msra.mxu0 0
  %4942 = vmatprep.subr.bf16.mxu0 0
  %4943 = vmatpush1.bf16.msra.mxu0 0
  %4944 = vmatprep.subr.bf16.mxu0 0
  %4945 = vmatpush1.bf16.msra.mxu0 0
  %4946 = vmatprep.subr.bf16.mxu0 0
  %4947 = vmatpush1.bf16.msra.mxu0 0
  %4948 = vmatprep.subr.bf16.mxu0 0
  %4949 = vmatpush1.bf16.msra.mxu0 0
  %4950 = vmatprep.subr.bf16.mxu0 0
  %4951 = vmatpush1.bf16.msra.mxu0 0
  %4952 = vmatprep.subr.bf16.mxu0 0
  %4953 = vmatpush1.bf16.msra.mxu0 0
  %4954 = vmatprep.subr.bf16.mxu0 0
  %4955 = vmatpush1.bf16.msra.mxu0 0
  %4956 = vmatprep.subr.bf16.mxu0 0
  %4957 = vmatpush1.bf16.msra.mxu0 0
  %4958 = vmatprep.subr.bf16.mxu0 0
  %4959 = vmatpush1.bf16.msra.mxu0 0
  %4960 = vmatprep.mubr.bf16.mxu0 0
  %4961 = vmatmul.mubr.bf16.gmra.mrb[0].mxu0 %v4896
  %v4962 = vpop.f32.mrb[0].mxu0
  %v4963 = vadd.f32 0.0, %v4962
  %v4964 = vpop.f32.mrb[0].mxu0
  %v4965 = vpop.f32.mrb[0].mxu0
  %v4966 = vadd.f32 0.0, %v4965
  %v4967 = vpop.f32.mrb[0].mxu0
  %4968 = vmatprep.mubr.bf16.mxu0 0
  %4969 = vmatmul.mubr.bf16.gmra.mrb[0].mxu0 %v4899
  %v4970 = vpop.f32.mrb[0].mxu0
  %v4971 = vadd.f32 0.0, %v4970
  %v4972 = vpop.f32.mrb[0].mxu0
  %v4973 = vpop.f32.mrb[0].mxu0
  %v4974 = vadd.f32 0.0, %v4973
  %v4975 = vpop.f32.mrb[0].mxu0
  %4976 = vmatprep.mubr.bf16.mxu0 0
  %4977 = vmatmul.mubr.bf16.gmra.mrb[0].mxu0 %v4902
  %v4978 = vpop.f32.mrb[0].mxu0
  %v4979 = vadd.f32 0.0, %v4978
  %v4980 = vpop.f32.mrb[0].mxu0
  %v4981 = vpop.f32.mrb[0].mxu0
  %v4982 = vadd.f32 0.0, %v4981
  %v4983 = vpop.f32.mrb[0].mxu0
  %4984 = vmatprep.mubr.bf16.mxu0 0
  %4985 = vmatmul.mubr.bf16.gmra.mrb[0].mxu0 %v4905
  %v4986 = vpop.f32.mrb[0].mxu0
  %v4987 = vadd.f32 0.0, %v4986
  %v4988 = vpop.f32.mrb[0].mxu0
  %v4989 = vpop.f32.mrb[0].mxu0
  %v4990 = vadd.f32 0.0, %v4989
  %v4991 = vpop.f32.mrb[0].mxu0
  %4992 = vmatprep.mubr.bf16.mxu0 0
  %4993 = vmatmul.mubr.bf16.gmra.mrb[0].mxu0 %v4908
  %v4994 = vpop.f32.mrb[0].mxu0
  %v4995 = vadd.f32 0.0, %v4994
  %v4996 = vpop.f32.mrb[0].mxu0
  %v4997 = vpop.f32.mrb[0].mxu0
  %v4998 = vadd.f32 0.0, %v4997
  %v4999 = vpop.f32.mrb[0].mxu0
  %5000 = vmatprep.mubr.bf16.mxu0 0
  %5001 = vmatmul.mubr.bf16.gmra.mrb[0].mxu0 %v4911
  %v5002 = vpop.f32.mrb[0].mxu0
  %v5003 = vadd.f32 0.0, %v5002
  %v5004 = vpop.f32.mrb[0].mxu0
  %v5005 = vpop.f32.mrb[0].mxu0
  %v5006 = vadd.f32 0.0, %v5005
  %v5007 = vpop.f32.mrb[0].mxu0
  %5008 = vmatprep.mubr.bf16.mxu0 0
  %5009 = vmatmul.mubr.bf16.gmra.mrb[0].mxu0 %v4914
  %v5010 = vpop.f32.mrb[0].mxu0
  %v5011 = vadd.f32 0.0, %v5010
  %v5012 = vpop.f32.mrb[0].mxu0
  %v5013 = vpop.f32.mrb[0].mxu0
  %v5014 = vadd.f32 0.0, %v5013
  %v5015 = vpop.f32.mrb[0].mxu0
  %5016 = vmatprep.mubr.bf16.mxu0 0
  %5017 = vmatmul.mubr.bf16.gmra.mrb[0].mxu0 %v4917
  %v5018 = vpop.f32.mrb[0].mxu0
  %v5019 = vadd.f32 0.0, %v5018
  %v5020 = vpop.f32.mrb[0].mxu0
  %v5021 = vpop.f32.mrb[0].mxu0
  %v5022 = vadd.f32 0.0, %v5021
  %v5023 = vpop.f32.mrb[0].mxu0
  %5024 = vmatprep.mubr.bf16.mxu0 0
  %5025 = vmatmul.mubr.bf16.gmra.mrb[0].mxu0 %v4920
  %v5026 = vpop.f32.mrb[0].mxu0
  %v5027 = vadd.f32 0.0, %v5026
  %v5028 = vpop.f32.mrb[0].mxu0
  %v5029 = vpop.f32.mrb[0].mxu0
  %v5030 = vadd.f32 0.0, %v5029
  %v5031 = vpop.f32.mrb[0].mxu0
  %5032 = vmatprep.mubr.bf16.mxu0 0
  %5033 = vmatmul.mubr.bf16.gmra.mrb[0].mxu0 %v4923
  %v5034 = vpop.f32.mrb[0].mxu0
  %v5035 = vadd.f32 0.0, %v5034
  %v5036 = vpop.f32.mrb[0].mxu0
  %v5037 = vpop.f32.mrb[0].mxu0
  %v5038 = vadd.f32 0.0, %v5037
  %v5039 = vpop.f32.mrb[0].mxu0
  %5040 = vdwg.mxu0
  %v5061 = vcombine.high %v4963, %v4963
  %v5063 = vunpack.c.l.s4 1983009808
  %v5064 = vunpack.c.0.s8 %v5063
  %v5065 = vlaneseq
  %v5066 = vshrl.u32 %v5065, 7
  %v5067 = vsub.s32 %v5064, %v5066
  %v5068 = vrot.slane %v4963, %v5067
  %v5070 = vunpack.c.l.s4 1983009808
  %v5071 = vunpack.c.0.s8 %v5070
  %v5072 = vlaneseq
  %v5073 = vshrl.u32 %v5072, 7
  %v5074 = vsub.s32 %v5071, %v5073
  %v5075 = vrot.slane %v5061, %v5074
  %v5076 = vcombine.high %v5068, %v5068
  %v5077 = vcombine.high %v5075, %v5075
  %v5078 = vcombine.high %v4966, %v4966
  %v5080 = vunpack.c.l.s4 1983009808
  %v5081 = vunpack.c.0.s8 %v5080
  %v5082 = vlaneseq
  %v5083 = vshrl.u32 %v5082, 7
  %v5084 = vsub.s32 %v5081, %v5083
  %v5085 = vrot.slane %v4966, %v5084
  %v5087 = vunpack.c.l.s4 1983009808
  %v5088 = vunpack.c.0.s8 %v5087
  %v5089 = vlaneseq
  %v5090 = vshrl.u32 %v5089, 7
  %v5091 = vsub.s32 %v5088, %v5090
  %v5092 = vrot.slane %v5078, %v5091
  %v5093 = vcombine.high %v5085, %v5085
  %v5094 = vcombine.high %v5092, %v5092
  %v5095 = vcombine.high %v4971, %v4971
  %v5097 = vunpack.c.l.s4 1983009808
  %v5098 = vunpack.c.0.s8 %v5097
  %v5099 = vlaneseq
  %v5100 = vshrl.u32 %v5099, 7
  %v5101 = vsub.s32 %v5098, %v5100
  %v5102 = vrot.slane %v4971, %v5101
  %v5104 = vunpack.c.l.s4 1983009808
  %v5105 = vunpack.c.0.s8 %v5104
  %v5106 = vlaneseq
  %v5107 = vshrl.u32 %v5106, 7
  %v5108 = vsub.s32 %v5105, %v5107
  %v5109 = vrot.slane %v5095, %v5108
  %v5110 = vcombine.high %v5109, %v5109
  %v5111 = vcombine.high %v4974, %v4974
  %v5113 = vunpack.c.l.s4 1983009808
  %v5114 = vunpack.c.0.s8 %v5113
  %v5115 = vlaneseq
  %v5116 = vshrl.u32 %v5115, 7
  %v5117 = vsub.s32 %v5114, %v5116
  %v5118 = vrot.slane %v4974, %v5117
  %v5120 = vunpack.c.l.s4 1983009808
  %v5121 = vunpack.c.0.s8 %v5120
  %v5122 = vlaneseq
  %v5123 = vshrl.u32 %v5122, 7
  %v5124 = vsub.s32 %v5121, %v5123
  %v5125 = vrot.slane %v5111, %v5124
  %v5126 = vcombine.high %v5118, %v5118
  %v5127 = vcombine.high %v5125, %v5125
  %v5128 = vcombine.high %v4979, %v4979
  %v5130 = vunpack.c.l.s4 1983009808
  %v5131 = vunpack.c.0.s8 %v5130
  %v5132 = vlaneseq
  %v5133 = vshrl.u32 %v5132, 7
  %v5134 = vsub.s32 %v5131, %v5133
  %v5135 = vrot.slane %v4979, %v5134
  %v5137 = vunpack.c.l.s4 1983009808
  %v5138 = vunpack.c.0.s8 %v5137
  %v5139 = vlaneseq
  %v5140 = vshrl.u32 %v5139, 7
  %v5141 = vsub.s32 %v5138, %v5140
  %v5142 = vrot.slane %v5128, %v5141
  %v5143 = vcombine.high %v5135, %v5135
  %v5144 = vcombine.high %v4982, %v4982
  %v5146 = vunpack.c.l.s4 1983009808
  %v5147 = vunpack.c.0.s8 %v5146
  %v5148 = vlaneseq
  %v5149 = vshrl.u32 %v5148, 7
  %v5150 = vsub.s32 %v5147, %v5149
  %v5151 = vrot.slane %v4982, %v5150
  %v5153 = vunpack.c.l.s4 1983009808
  %v5154 = vunpack.c.0.s8 %v5153
  %v5155 = vlaneseq
  %v5156 = vshrl.u32 %v5155, 7
  %v5157 = vsub.s32 %v5154, %v5156
  %v5158 = vrot.slane %v5144, %v5157
  %v5159 = vcombine.high %v5151, %v5151
  %v5160 = vcombine.high %v5158, %v5158
  %v5161 = vcombine.high %v4987, %v4987
  %v5163 = vunpack.c.l.s4 1983009808
  %v5164 = vunpack.c.0.s8 %v5163
  %v5165 = vlaneseq
  %v5166 = vshrl.u32 %v5165, 7
  %v5167 = vsub.s32 %v5164, %v5166
  %v5168 = vrot.slane %v4987, %v5167
  %v5170 = vunpack.c.l.s4 1983009808
  %v5171 = vunpack.c.0.s8 %v5170
  %v5172 = vlaneseq
  %v5173 = vshrl.u32 %v5172, 7
  %v5174 = vsub.s32 %v5171, %v5173
  %v5175 = vrot.slane %v5161, %v5174
  %v5176 = vcombine.high %v5168, %v5168
  %v5177 = vcombine.high %v5175, %v5175
  %v5178 = vcombine.high %v4990, %v4990
  %v5180 = vunpack.c.l.s4 1983009808
  %v5181 = vunpack.c.0.s8 %v5180
  %v5182 = vlaneseq
  %v5183 = vshrl.u32 %v5182, 7
  %v5184 = vsub.s32 %v5181, %v5183
  %v5185 = vrot.slane %v4990, %v5184
  %v5187 = vunpack.c.l.s4 1983009808
  %v5188 = vunpack.c.0.s8 %v5187
  %v5189 = vlaneseq
  %v5190 = vshrl.u32 %v5189, 7
  %v5191 = vsub.s32 %v5188, %v5190
  %v5192 = vrot.slane %v5178, %v5191
  %v5193 = vcombine.high %v5192, %v5192
  %v5194 = vcombine.high %v4995, %v4995
  %v5196 = vunpack.c.l.s4 1983009808
  %v5197 = vunpack.c.0.s8 %v5196
  %v5198 = vlaneseq
  %v5199 = vshrl.u32 %v5198, 7
  %v5200 = vsub.s32 %v5197, %v5199
  %v5201 = vrot.slane %v4995, %v5200
  %v5203 = vunpack.c.l.s4 1983009808
  %v5204 = vunpack.c.0.s8 %v5203
  %v5205 = vlaneseq
  %v5206 = vshrl.u32 %v5205, 7
  %v5207 = vsub.s32 %v5204, %v5206
  %v5208 = vrot.slane %v5194, %v5207
  %v5209 = vcombine.high %v5201, %v5201
  %v5210 = vcombine.high %v5208, %v5208
  %v5211 = vcombine.high %v4998, %v4998
  %v5213 = vunpack.c.l.s4 1983009808
  %v5214 = vunpack.c.0.s8 %v5213
  %v5215 = vlaneseq
  %v5216 = vshrl.u32 %v5215, 7
  %v5217 = vsub.s32 %v5214, %v5216
  %v5218 = vrot.slane %v4998, %v5217
  %v5220 = vunpack.c.l.s4 1983009808
  %v5221 = vunpack.c.0.s8 %v5220
  %v5222 = vlaneseq
  %v5223 = vshrl.u32 %v5222, 7
  %v5224 = vsub.s32 %v5221, %v5223
  %v5225 = vrot.slane %v5211, %v5224
  %v5226 = vcombine.high %v5218, %v5218
  %v5227 = vcombine.high %v5003, %v5003
  %v5229 = vunpack.c.l.s4 1983009808
  %v5230 = vunpack.c.0.s8 %v5229
  %v5231 = vlaneseq
  %v5232 = vshrl.u32 %v5231, 7
  %v5233 = vsub.s32 %v5230, %v5232
  %v5234 = vrot.slane %v5003, %v5233
  %v5236 = vunpack.c.l.s4 1983009808
  %v5237 = vunpack.c.0.s8 %v5236
  %v5238 = vlaneseq
  %v5239 = vshrl.u32 %v5238, 7
  %v5240 = vsub.s32 %v5237, %v5239
  %v5241 = vrot.slane %v5227, %v5240
  %v5242 = vcombine.high %v5234, %v5234
  %v5243 = vcombine.high %v5241, %v5241
  %v5244 = vcombine.high %v5006, %v5006
  %v5246 = vunpack.c.l.s4 1983009808
  %v5247 = vunpack.c.0.s8 %v5246
  %v5248 = vlaneseq
  %v5249 = vshrl.u32 %v5248, 7
  %v5250 = vsub.s32 %v5247, %v5249
  %v5251 = vrot.slane %v5006, %v5250
  %v5253 = vunpack.c.l.s4 1983009808
  %v5254 = vunpack.c.0.s8 %v5253
  %v5255 = vlaneseq
  %v5256 = vshrl.u32 %v5255, 7
  %v5257 = vsub.s32 %v5254, %v5256
  %v5258 = vrot.slane %v5244, %v5257
  %v5259 = vcombine.high %v5251, %v5251
  %v5260 = vcombine.high %v5258, %v5258
  %v5261 = vcombine.high %v5011, %v5011
  %v5263 = vunpack.c.l.s4 1983009808
  %v5264 = vunpack.c.0.s8 %v5263
  %v5265 = vlaneseq
  %v5266 = vshrl.u32 %v5265, 7
  %v5267 = vsub.s32 %v5264, %v5266
  %v5268 = vrot.slane %v5011, %v5267
  %v5270 = vunpack.c.l.s4 1983009808
  %v5271 = vunpack.c.0.s8 %v5270
  %v5272 = vlaneseq
  %v5273 = vshrl.u32 %v5272, 7
  %v5274 = vsub.s32 %v5271, %v5273
  %v5275 = vrot.slane %v5261, %v5274
  %v5276 = vcombine.high %v5275, %v5275
  %v5277 = vcombine.high %v5014, %v5014
  %v5279 = vunpack.c.l.s4 1983009808
  %v5280 = vunpack.c.0.s8 %v5279
  %v5281 = vlaneseq
  %v5282 = vshrl.u32 %v5281, 7
  %v5283 = vsub.s32 %v5280, %v5282
  %v5284 = vrot.slane %v5014, %v5283
  %v5286 = vunpack.c.l.s4 1983009808
  %v5287 = vunpack.c.0.s8 %v5286
  %v5288 = vlaneseq
  %v5289 = vshrl.u32 %v5288, 7
  %v5290 = vsub.s32 %v5287, %v5289
  %v5291 = vrot.slane %v5277, %v5290
  %v5292 = vcombine.high %v5284, %v5284
  %v5293 = vcombine.high %v5291, %v5291
  %v5294 = vcombine.high %v5019, %v5019
  %v5296 = vunpack.c.l.s4 1983009808
  %v5297 = vunpack.c.0.s8 %v5296
  %v5298 = vlaneseq
  %v5299 = vshrl.u32 %v5298, 7
  %v5300 = vsub.s32 %v5297, %v5299
  %v5301 = vrot.slane %v5019, %v5300
  %v5303 = vunpack.c.l.s4 1983009808
  %v5304 = vunpack.c.0.s8 %v5303
  %v5305 = vlaneseq
  %v5306 = vshrl.u32 %v5305, 7
  %v5307 = vsub.s32 %v5304, %v5306
  %v5308 = vrot.slane %v5294, %v5307
  %v5309 = vcombine.high %v5301, %v5301
  %v5310 = vcombine.high %v5022, %v5022
  %v5312 = vunpack.c.l.s4 1983009808
  %v5313 = vunpack.c.0.s8 %v5312
  %v5314 = vlaneseq
  %v5315 = vshrl.u32 %v5314, 7
  %v5316 = vsub.s32 %v5313, %v5315
  %v5317 = vrot.slane %v5022, %v5316
  %v5319 = vunpack.c.l.s4 1983009808
  %v5320 = vunpack.c.0.s8 %v5319
  %v5321 = vlaneseq
  %v5322 = vshrl.u32 %v5321, 7
  %v5323 = vsub.s32 %v5320, %v5322
  %v5324 = vrot.slane %v5310, %v5323
  %v5325 = vcombine.high %v5317, %v5317
  %v5326 = vcombine.high %v5324, %v5324
  %v5327 = vcombine.high %v5027, %v5027
  %v5329 = vunpack.c.l.s4 1983009808
  %v5330 = vunpack.c.0.s8 %v5329
  %v5331 = vlaneseq
  %v5332 = vshrl.u32 %v5331, 7
  %v5333 = vsub.s32 %v5330, %v5332
  %v5334 = vrot.slane %v5027, %v5333
  %v5336 = vunpack.c.l.s4 1983009808
  %v5337 = vunpack.c.0.s8 %v5336
  %v5338 = vlaneseq
  %v5339 = vshrl.u32 %v5338, 7
  %v5340 = vsub.s32 %v5337, %v5339
  %v5341 = vrot.slane %v5327, %v5340
  %v5342 = vcombine.high %v5334, %v5334
  %v5343 = vcombine.high %v5341, %v5341
  %v5344 = vcombine.high %v5030, %v5030
  %v5346 = vunpack.c.l.s4 1983009808
  %v5347 = vunpack.c.0.s8 %v5346
  %v5348 = vlaneseq
  %v5349 = vshrl.u32 %v5348, 7
  %v5350 = vsub.s32 %v5347, %v5349
  %v5351 = vrot.slane %v5030, %v5350
  %v5353 = vunpack.c.l.s4 1983009808
  %v5354 = vunpack.c.0.s8 %v5353
  %v5355 = vlaneseq
  %v5356 = vshrl.u32 %v5355, 7
  %v5357 = vsub.s32 %v5354, %v5356
  %v5358 = vrot.slane %v5344, %v5357
  %v5359 = vcombine.high %v5358, %v5358
  %v5360 = vcombine.high %v5035, %v5035
  %v5362 = vunpack.c.l.s4 1983009808
  %v5363 = vunpack.c.0.s8 %v5362
  %v5364 = vlaneseq
  %v5365 = vshrl.u32 %v5364, 7
  %v5366 = vsub.s32 %v5363, %v5365
  %v5367 = vrot.slane %v5035, %v5366
  %v5369 = vunpack.c.l.s4 1983009808
  %v5370 = vunpack.c.0.s8 %v5369
  %v5371 = vlaneseq
  %v5372 = vshrl.u32 %v5371, 7
  %v5373 = vsub.s32 %v5370, %v5372
  %v5374 = vrot.slane %v5360, %v5373
  %v5375 = vcombine.high %v5367, %v5367
  %v5376 = vcombine.high %v5374, %v5374
  %v5377 = vcombine.high %v5038, %v5038
  %v5379 = vunpack.c.l.s4 1983009808
  %v5380 = vunpack.c.0.s8 %v5379
  %v5381 = vlaneseq
  %v5382 = vshrl.u32 %v5381, 7
  %v5383 = vsub.s32 %v5380, %v5382
  %v5384 = vrot.slane %v5038, %v5383
  %v5386 = vunpack.c.l.s4 1983009808
  %v5387 = vunpack.c.0.s8 %v5386
  %v5388 = vlaneseq
  %v5389 = vshrl.u32 %v5388, 7
  %v5390 = vsub.s32 %v5387, %v5389
  %v5391 = vrot.slane %v5377, %v5390
  %v5392 = vcombine.high %v5384, %v5384
  %v5457 = vadd.f32 %v3667, %v5068
  %v5458 = vadd.f32 %v3668, %v5076
  %v5459 = vadd.f32 %v3669, %v5075
  %v5460 = vadd.f32 %v3670, %v5077
  %v5461 = vadd.f32 %v3671, %v5093
  %v5462 = vadd.f32 %v3672, %v5092
  %v5463 = vadd.f32 %v3673, %v5094
  %v5464 = vadd.f32 %v3674, %v5102
  %v5465 = vadd.f32 %v3675, %v5109
  %v5466 = vadd.f32 %v3676, %v5110
  %v5467 = vadd.f32 %v3677, %v5118
  %v5468 = vadd.f32 %v3678, %v5126
  %v5469 = vadd.f32 %v3679, %v5127
  %v5470 = vadd.f32 %v3680, %v5135
  %v5471 = vadd.f32 %v3681, %v5143
  %v5472 = vadd.f32 %v3682, %v5142
  %v5473 = vadd.f32 %v3683, %v5151
  %v5474 = vadd.f32 %v3684, %v5159
  %v5475 = vadd.f32 %v3685, %v5158
  %v5476 = vadd.f32 %v3686, %v5160
  %v5477 = vadd.f32 %v3687, %v5176
  %v5478 = vadd.f32 %v3688, %v5175
  %v5479 = vadd.f32 %v3689, %v5177
  %v5480 = vadd.f32 %v3690, %v5185
  %v5481 = vadd.f32 %v3691, %v5192
  %v5482 = vadd.f32 %v3692, %v5193
  %v5483 = vadd.f32 %v3693, %v5201
  %v5484 = vadd.f32 %v3694, %v5209
  %v5485 = vadd.f32 %v3695, %v5210
  %v5486 = vadd.f32 %v3696, %v5218
  %v5487 = vadd.f32 %v3697, %v5226
  %v5488 = vadd.f32 %v3698, %v5225
  %v5489 = vadd.f32 %v3699, %v5234
  %v5490 = vadd.f32 %v3700, %v5242
  %v5491 = vadd.f32 %v3701, %v5241
  %v5492 = vadd.f32 %v3702, %v5243
  %v5493 = vadd.f32 %v3703, %v5259
  %v5494 = vadd.f32 %v3704, %v5258
  %v5495 = vadd.f32 %v3705, %v5260
  %v5496 = vadd.f32 %v3706, %v5268
  %v5497 = vadd.f32 %v3707, %v5275
  %v5498 = vadd.f32 %v3708, %v5276
  %v5499 = vadd.f32 %v3709, %v5284
  %v5500 = vadd.f32 %v3710, %v5292
  %v5501 = vadd.f32 %v3711, %v5293
  %v5502 = vadd.f32 %v3712, %v5301
  %v5503 = vadd.f32 %v3713, %v5309
  %v5504 = vadd.f32 %v3714, %v5308
  %v5505 = vadd.f32 %v3715, %v5317
  %v5506 = vadd.f32 %v3716, %v5325
  %v5507 = vadd.f32 %v3717, %v5324
  %v5508 = vadd.f32 %v3718, %v5326
  %v5509 = vadd.f32 %v3719, %v5342
  %v5510 = vadd.f32 %v3720, %v5341
  %v5511 = vadd.f32 %v3721, %v5343
  %v5512 = vadd.f32 %v3722, %v5351
  %v5513 = vadd.f32 %v3723, %v5358
  %v5514 = vadd.f32 %v3724, %v5359
  %v5515 = vadd.f32 %v3725, %v5367
  %v5516 = vadd.f32 %v3726, %v5375
  %v5517 = vadd.f32 %v3727, %v5376
  %v5518 = vadd.f32 %v3728, %v5384
  %v5519 = vadd.f32 %v3729, %v5392
  %v5520 = vadd.f32 %v3730, %v5391
  %s5521 = scalar_lea.vmem %s6, 16
  %v5522 = vld [vmem:[%s5521] sm:$0xf]
  %v5524 = vsel %vm1780, %v5522, 0
  %5526 = vmatprep.subr.bf16.mxu0 0
  %5527 = vmatpush1.bf16.msra.mxu0 %v5524
  %5528 = vmatprep.subr.bf16.mxu0 0
  %5529 = vmatpush1.bf16.msra.mxu0 0
  %5530 = vmatprep.subr.bf16.mxu0 0
  %5531 = vmatpush1.bf16.msra.mxu0 0
  %5532 = vmatprep.subr.bf16.mxu0 0
  %5533 = vmatpush1.bf16.msra.mxu0 0
  %5534 = vmatprep.subr.bf16.mxu0 0
  %5535 = vmatpush1.bf16.msra.mxu0 0
  %5536 = vmatprep.subr.bf16.mxu0 0
  %5537 = vmatpush1.bf16.msra.mxu0 0
  %5538 = vmatprep.subr.bf16.mxu0 0
  %5539 = vmatpush1.bf16.msra.mxu0 0
  %5540 = vmatprep.subr.bf16.mxu0 0
  %5541 = vmatpush1.bf16.msra.mxu0 0
  %5542 = vmatprep.subr.bf16.mxu0 0
  %5543 = vmatpush1.bf16.msra.mxu0 0
  %5544 = vmatprep.subr.bf16.mxu0 0
  %5545 = vmatpush1.bf16.msra.mxu0 0
  %5546 = vmatprep.subr.bf16.mxu0 0
  %5547 = vmatpush1.bf16.msra.mxu0 0
  %5548 = vmatprep.subr.bf16.mxu0 0
  %5549 = vmatpush1.bf16.msra.mxu0 0
  %5550 = vmatprep.subr.bf16.mxu0 0
  %5551 = vmatpush1.bf16.msra.mxu0 0
  %5552 = vmatprep.subr.bf16.mxu0 0
  %5553 = vmatpush1.bf16.msra.mxu0 0
  %5554 = vmatprep.subr.bf16.mxu0 0
  %5555 = vmatpush1.bf16.msra.mxu0 0
  %5556 = vmatprep.subr.bf16.mxu0 0
  %5557 = vmatpush1.bf16.msra.mxu0 0
  %5558 = vmatprep.mubr.bf16.mxu0 0
  %5559 = vmatmul.mubr.bf16.gmra.mrb[0].mxu0 %v4896
  %v5560 = vpop.f32.mrb[0].mxu0
  %v5561 = vadd.f32 0.0, %v5560
  %v5562 = vpop.f32.mrb[0].mxu0
  %v5563 = vpop.f32.mrb[0].mxu0
  %v5564 = vadd.f32 0.0, %v5563
  %v5565 = vpop.f32.mrb[0].mxu0
  %5566 = vmatprep.mubr.bf16.mxu0 0
  %5567 = vmatmul.mubr.bf16.gmra.mrb[0].mxu0 %v4899
  %v5568 = vpop.f32.mrb[0].mxu0
  %v5569 = vadd.f32 0.0, %v5568
  %v5570 = vpop.f32.mrb[0].mxu0
  %v5571 = vpop.f32.mrb[0].mxu0
  %v5572 = vadd.f32 0.0, %v5571
  %v5573 = vpop.f32.mrb[0].mxu0
  %5574 = vmatprep.mubr.bf16.mxu0 0
  %5575 = vmatmul.mubr.bf16.gmra.mrb[0].mxu0 %v4902
  %v5576 = vpop.f32.mrb[0].mxu0
  %v5577 = vadd.f32 0.0, %v5576
  %v5578 = vpop.f32.mrb[0].mxu0
  %v5579 = vpop.f32.mrb[0].mxu0
  %v5580 = vadd.f32 0.0, %v5579
  %v5581 = vpop.f32.mrb[0].mxu0
  %5582 = vmatprep.mubr.bf16.mxu0 0
  %5583 = vmatmul.mubr.bf16.gmra.mrb[0].mxu0 %v4905
  %v5584 = vpop.f32.mrb[0].mxu0
  %v5585 = vadd.f32 0.0, %v5584
  %v5586 = vpop.f32.mrb[0].mxu0
  %v5587 = vpop.f32.mrb[0].mxu0
  %v5588 = vadd.f32 0.0, %v5587
  %v5589 = vpop.f32.mrb[0].mxu0
  %5590 = vmatprep.mubr.bf16.mxu0 0
  %5591 = vmatmul.mubr.bf16.gmra.mrb[0].mxu0 %v4908
  %v5592 = vpop.f32.mrb[0].mxu0
  %v5593 = vadd.f32 0.0, %v5592
  %v5594 = vpop.f32.mrb[0].mxu0
  %v5595 = vpop.f32.mrb[0].mxu0
  %v5596 = vadd.f32 0.0, %v5595
  %v5597 = vpop.f32.mrb[0].mxu0
  %5598 = vmatprep.mubr.bf16.mxu0 0
  %5599 = vmatmul.mubr.bf16.gmra.mrb[0].mxu0 %v4911
  %v5600 = vpop.f32.mrb[0].mxu0
  %v5601 = vadd.f32 0.0, %v5600
  %v5602 = vpop.f32.mrb[0].mxu0
  %v5603 = vpop.f32.mrb[0].mxu0
  %v5604 = vadd.f32 0.0, %v5603
  %v5605 = vpop.f32.mrb[0].mxu0
  %5606 = vmatprep.mubr.bf16.mxu0 0
  %5607 = vmatmul.mubr.bf16.gmra.mrb[0].mxu0 %v4914
  %v5608 = vpop.f32.mrb[0].mxu0
  %v5609 = vadd.f32 0.0, %v5608
  %v5610 = vpop.f32.mrb[0].mxu0
  %v5611 = vpop.f32.mrb[0].mxu0
  %v5612 = vadd.f32 0.0, %v5611
  %v5613 = vpop.f32.mrb[0].mxu0
  %5614 = vmatprep.mubr.bf16.mxu0 0
  %5615 = vmatmul.mubr.bf16.gmra.mrb[0].mxu0 %v4917
  %v5616 = vpop.f32.mrb[0].mxu0
  %v5617 = vadd.f32 0.0, %v5616
  %v5618 = vpop.f32.mrb[0].mxu0
  %v5619 = vpop.f32.mrb[0].mxu0
  %v5620 = vadd.f32 0.0, %v5619
  %v5621 = vpop.f32.mrb[0].mxu0
  %5622 = vmatprep.mubr.bf16.mxu0 0
  %5623 = vmatmul.mubr.bf16.gmra.mrb[0].mxu0 %v4920
  %v5624 = vpop.f32.mrb[0].mxu0
  %v5625 = vadd.f32 0.0, %v5624
  %v5626 = vpop.f32.mrb[0].mxu0
  %v5627 = vpop.f32.mrb[0].mxu0
  %v5628 = vadd.f32 0.0, %v5627
  %v5629 = vpop.f32.mrb[0].mxu0
  %5630 = vmatprep.mubr.bf16.mxu0 0
  %5631 = vmatmul.mubr.bf16.gmra.mrb[0].mxu0 %v4923
  %v5632 = vpop.f32.mrb[0].mxu0
  %v5633 = vadd.f32 0.0, %v5632
  %v5634 = vpop.f32.mrb[0].mxu0
  %v5635 = vpop.f32.mrb[0].mxu0
  %v5636 = vadd.f32 0.0, %v5635
  %v5637 = vpop.f32.mrb[0].mxu0
  %5638 = vdwg.mxu0
  %v5659 = vcombine.high %v5561, %v5561
  %v5661 = vunpack.c.l.s4 1983009808
  %v5662 = vunpack.c.0.s8 %v5661
  %v5663 = vlaneseq
  %v5664 = vshrl.u32 %v5663, 7
  %v5665 = vsub.s32 %v5662, %v5664
  %v5666 = vrot.slane %v5561, %v5665
  %v5668 = vunpack.c.l.s4 1983009808
  %v5669 = vunpack.c.0.s8 %v5668
  %v5670 = vlaneseq
  %v5671 = vshrl.u32 %v5670, 7
  %v5672 = vsub.s32 %v5669, %v5671
  %v5673 = vrot.slane %v5659, %v5672
  %v5674 = vcombine.high %v5666, %v5666
  %v5675 = vcombine.high %v5673, %v5673
  %v5676 = vcombine.high %v5564, %v5564
  %v5678 = vunpack.c.l.s4 1983009808
  %v5679 = vunpack.c.0.s8 %v5678
  %v5680 = vlaneseq
  %v5681 = vshrl.u32 %v5680, 7
  %v5682 = vsub.s32 %v5679, %v5681
  %v5683 = vrot.slane %v5564, %v5682
  %v5685 = vunpack.c.l.s4 1983009808
  %v5686 = vunpack.c.0.s8 %v5685
  %v5687 = vlaneseq
  %v5688 = vshrl.u32 %v5687, 7
  %v5689 = vsub.s32 %v5686, %v5688
  %v5690 = vrot.slane %v5676, %v5689
  %v5691 = vcombine.high %v5683, %v5683
  %v5692 = vcombine.high %v5690, %v5690
  %v5693 = vcombine.high %v5569, %v5569
  %v5695 = vunpack.c.l.s4 1983009808
  %v5696 = vunpack.c.0.s8 %v5695
  %v5697 = vlaneseq
  %v5698 = vshrl.u32 %v5697, 7
  %v5699 = vsub.s32 %v5696, %v5698
  %v5700 = vrot.slane %v5569, %v5699
  %v5702 = vunpack.c.l.s4 1983009808
  %v5703 = vunpack.c.0.s8 %v5702
  %v5704 = vlaneseq
  %v5705 = vshrl.u32 %v5704, 7
  %v5706 = vsub.s32 %v5703, %v5705
  %v5707 = vrot.slane %v5693, %v5706
  %v5708 = vcombine.high %v5700, %v5700
  %v5709 = vcombine.high %v5707, %v5707
  %v5710 = vcombine.high %v5572, %v5572
  %v5712 = vunpack.c.l.s4 1983009808
  %v5713 = vunpack.c.0.s8 %v5712
  %v5714 = vlaneseq
  %v5715 = vshrl.u32 %v5714, 7
  %v5716 = vsub.s32 %v5713, %v5715
  %v5717 = vrot.slane %v5572, %v5716
  %v5719 = vunpack.c.l.s4 1983009808
  %v5720 = vunpack.c.0.s8 %v5719
  %v5721 = vlaneseq
  %v5722 = vshrl.u32 %v5721, 7
  %v5723 = vsub.s32 %v5720, %v5722
  %v5724 = vrot.slane %v5710, %v5723
  %v5725 = vcombine.high %v5717, %v5717
  %v5726 = vcombine.high %v5724, %v5724
  %v5727 = vcombine.high %v5577, %v5577
  %v5729 = vunpack.c.l.s4 1983009808
  %v5730 = vunpack.c.0.s8 %v5729
  %v5731 = vlaneseq
  %v5732 = vshrl.u32 %v5731, 7
  %v5733 = vsub.s32 %v5730, %v5732
  %v5734 = vrot.slane %v5577, %v5733
  %v5736 = vunpack.c.l.s4 1983009808
  %v5737 = vunpack.c.0.s8 %v5736
  %v5738 = vlaneseq
  %v5739 = vshrl.u32 %v5738, 7
  %v5740 = vsub.s32 %v5737, %v5739
  %v5741 = vrot.slane %v5727, %v5740
  %v5742 = vcombine.high %v5734, %v5734
  %v5743 = vcombine.high %v5741, %v5741
  %v5744 = vcombine.high %v5580, %v5580
  %v5746 = vunpack.c.l.s4 1983009808
  %v5747 = vunpack.c.0.s8 %v5746
  %v5748 = vlaneseq
  %v5749 = vshrl.u32 %v5748, 7
  %v5750 = vsub.s32 %v5747, %v5749
  %v5751 = vrot.slane %v5580, %v5750
  %v5753 = vunpack.c.l.s4 1983009808
  %v5754 = vunpack.c.0.s8 %v5753
  %v5755 = vlaneseq
  %v5756 = vshrl.u32 %v5755, 7
  %v5757 = vsub.s32 %v5754, %v5756
  %v5758 = vrot.slane %v5744, %v5757
  %v5759 = vcombine.high %v5751, %v5751
  %v5760 = vcombine.high %v5758, %v5758
  %v5761 = vcombine.high %v5585, %v5585
  %v5763 = vunpack.c.l.s4 1983009808
  %v5764 = vunpack.c.0.s8 %v5763
  %v5765 = vlaneseq
  %v5766 = vshrl.u32 %v5765, 7
  %v5767 = vsub.s32 %v5764, %v5766
  %v5768 = vrot.slane %v5585, %v5767
  %v5770 = vunpack.c.l.s4 1983009808
  %v5771 = vunpack.c.0.s8 %v5770
  %v5772 = vlaneseq
  %v5773 = vshrl.u32 %v5772, 7
  %v5774 = vsub.s32 %v5771, %v5773
  %v5775 = vrot.slane %v5761, %v5774
  %v5776 = vcombine.high %v5768, %v5768
  %v5777 = vcombine.high %v5775, %v5775
  %v5778 = vcombine.high %v5588, %v5588
  %v5780 = vunpack.c.l.s4 1983009808
  %v5781 = vunpack.c.0.s8 %v5780
  %v5782 = vlaneseq
  %v5783 = vshrl.u32 %v5782, 7
  %v5784 = vsub.s32 %v5781, %v5783
  %v5785 = vrot.slane %v5588, %v5784
  %v5787 = vunpack.c.l.s4 1983009808
  %v5788 = vunpack.c.0.s8 %v5787
  %v5789 = vlaneseq
  %v5790 = vshrl.u32 %v5789, 7
  %v5791 = vsub.s32 %v5788, %v5790
  %v5792 = vrot.slane %v5778, %v5791
  %v5793 = vcombine.high %v5785, %v5785
  %v5794 = vcombine.high %v5792, %v5792
  %v5795 = vcombine.high %v5593, %v5593
  %v5797 = vunpack.c.l.s4 1983009808
  %v5798 = vunpack.c.0.s8 %v5797
  %v5799 = vlaneseq
  %v5800 = vshrl.u32 %v5799, 7
  %v5801 = vsub.s32 %v5798, %v5800
  %v5802 = vrot.slane %v5593, %v5801
  %v5804 = vunpack.c.l.s4 1983009808
  %v5805 = vunpack.c.0.s8 %v5804
  %v5806 = vlaneseq
  %v5807 = vshrl.u32 %v5806, 7
  %v5808 = vsub.s32 %v5805, %v5807
  %v5809 = vrot.slane %v5795, %v5808
  %v5810 = vcombine.high %v5802, %v5802
  %v5811 = vcombine.high %v5809, %v5809
  %v5812 = vcombine.high %v5596, %v5596
  %v5814 = vunpack.c.l.s4 1983009808
  %v5815 = vunpack.c.0.s8 %v5814
  %v5816 = vlaneseq
  %v5817 = vshrl.u32 %v5816, 7
  %v5818 = vsub.s32 %v5815, %v5817
  %v5819 = vrot.slane %v5596, %v5818
  %v5821 = vunpack.c.l.s4 1983009808
  %v5822 = vunpack.c.0.s8 %v5821
  %v5823 = vlaneseq
  %v5824 = vshrl.u32 %v5823, 7
  %v5825 = vsub.s32 %v5822, %v5824
  %v5826 = vrot.slane %v5812, %v5825
  %v5827 = vcombine.high %v5819, %v5819
  %v5828 = vcombine.high %v5826, %v5826
  %v5829 = vcombine.high %v5601, %v5601
  %v5831 = vunpack.c.l.s4 1983009808
  %v5832 = vunpack.c.0.s8 %v5831
  %v5833 = vlaneseq
  %v5834 = vshrl.u32 %v5833, 7
  %v5835 = vsub.s32 %v5832, %v5834
  %v5836 = vrot.slane %v5601, %v5835
  %v5838 = vunpack.c.l.s4 1983009808
  %v5839 = vunpack.c.0.s8 %v5838
  %v5840 = vlaneseq
  %v5841 = vshrl.u32 %v5840, 7
  %v5842 = vsub.s32 %v5839, %v5841
  %v5843 = vrot.slane %v5829, %v5842
  %v5844 = vcombine.high %v5836, %v5836
  %v5845 = vcombine.high %v5843, %v5843
  %v5846 = vcombine.high %v5604, %v5604
  %v5848 = vunpack.c.l.s4 1983009808
  %v5849 = vunpack.c.0.s8 %v5848
  %v5850 = vlaneseq
  %v5851 = vshrl.u32 %v5850, 7
  %v5852 = vsub.s32 %v5849, %v5851
  %v5853 = vrot.slane %v5604, %v5852
  %v5855 = vunpack.c.l.s4 1983009808
  %v5856 = vunpack.c.0.s8 %v5855
  %v5857 = vlaneseq
  %v5858 = vshrl.u32 %v5857, 7
  %v5859 = vsub.s32 %v5856, %v5858
  %v5860 = vrot.slane %v5846, %v5859
  %v5861 = vcombine.high %v5853, %v5853
  %v5862 = vcombine.high %v5860, %v5860
  %v5863 = vcombine.high %v5609, %v5609
  %v5865 = vunpack.c.l.s4 1983009808
  %v5866 = vunpack.c.0.s8 %v5865
  %v5867 = vlaneseq
  %v5868 = vshrl.u32 %v5867, 7
  %v5869 = vsub.s32 %v5866, %v5868
  %v5870 = vrot.slane %v5609, %v5869
  %v5872 = vunpack.c.l.s4 1983009808
  %v5873 = vunpack.c.0.s8 %v5872
  %v5874 = vlaneseq
  %v5875 = vshrl.u32 %v5874, 7
  %v5876 = vsub.s32 %v5873, %v5875
  %v5877 = vrot.slane %v5863, %v5876
  %v5878 = vcombine.high %v5870, %v5870
  %v5879 = vcombine.high %v5877, %v5877
  %v5880 = vcombine.high %v5612, %v5612
  %v5882 = vunpack.c.l.s4 1983009808
  %v5883 = vunpack.c.0.s8 %v5882
  %v5884 = vlaneseq
  %v5885 = vshrl.u32 %v5884, 7
  %v5886 = vsub.s32 %v5883, %v5885
  %v5887 = vrot.slane %v5612, %v5886
  %v5889 = vunpack.c.l.s4 1983009808
  %v5890 = vunpack.c.0.s8 %v5889
  %v5891 = vlaneseq
  %v5892 = vshrl.u32 %v5891, 7
  %v5893 = vsub.s32 %v5890, %v5892
  %v5894 = vrot.slane %v5880, %v5893
  %v5895 = vcombine.high %v5887, %v5887
  %v5896 = vcombine.high %v5894, %v5894
  %v5897 = vcombine.high %v5617, %v5617
  %v5899 = vunpack.c.l.s4 1983009808
  %v5900 = vunpack.c.0.s8 %v5899
  %v5901 = vlaneseq
  %v5902 = vshrl.u32 %v5901, 7
  %v5903 = vsub.s32 %v5900, %v5902
  %v5904 = vrot.slane %v5617, %v5903
  %v5906 = vunpack.c.l.s4 1983009808
  %v5907 = vunpack.c.0.s8 %v5906
  %v5908 = vlaneseq
  %v5909 = vshrl.u32 %v5908, 7
  %v5910 = vsub.s32 %v5907, %v5909
  %v5911 = vrot.slane %v5897, %v5910
  %v5912 = vcombine.high %v5904, %v5904
  %v5913 = vcombine.high %v5911, %v5911
  %v5914 = vcombine.high %v5620, %v5620
  %v5916 = vunpack.c.l.s4 1983009808
  %v5917 = vunpack.c.0.s8 %v5916
  %v5918 = vlaneseq
  %v5919 = vshrl.u32 %v5918, 7
  %v5920 = vsub.s32 %v5917, %v5919
  %v5921 = vrot.slane %v5620, %v5920
  %v5923 = vunpack.c.l.s4 1983009808
  %v5924 = vunpack.c.0.s8 %v5923
  %v5925 = vlaneseq
  %v5926 = vshrl.u32 %v5925, 7
  %v5927 = vsub.s32 %v5924, %v5926
  %v5928 = vrot.slane %v5914, %v5927
  %v5929 = vcombine.high %v5921, %v5921
  %v5930 = vcombine.high %v5928, %v5928
  %v5931 = vcombine.high %v5625, %v5625
  %v5933 = vunpack.c.l.s4 1983009808
  %v5934 = vunpack.c.0.s8 %v5933
  %v5935 = vlaneseq
  %v5936 = vshrl.u32 %v5935, 7
  %v5937 = vsub.s32 %v5934, %v5936
  %v5938 = vrot.slane %v5625, %v5937
  %v5940 = vunpack.c.l.s4 1983009808
  %v5941 = vunpack.c.0.s8 %v5940
  %v5942 = vlaneseq
  %v5943 = vshrl.u32 %v5942, 7
  %v5944 = vsub.s32 %v5941, %v5943
  %v5945 = vrot.slane %v5931, %v5944
  %v5946 = vcombine.high %v5938, %v5938
  %v5947 = vcombine.high %v5945, %v5945
  %v5948 = vcombine.high %v5628, %v5628
  %v5950 = vunpack.c.l.s4 1983009808
  %v5951 = vunpack.c.0.s8 %v5950
  %v5952 = vlaneseq
  %v5953 = vshrl.u32 %v5952, 7
  %v5954 = vsub.s32 %v5951, %v5953
  %v5955 = vrot.slane %v5628, %v5954
  %v5957 = vunpack.c.l.s4 1983009808
  %v5958 = vunpack.c.0.s8 %v5957
  %v5959 = vlaneseq
  %v5960 = vshrl.u32 %v5959, 7
  %v5961 = vsub.s32 %v5958, %v5960
  %v5962 = vrot.slane %v5948, %v5961
  %v5963 = vcombine.high %v5955, %v5955
  %v5964 = vcombine.high %v5962, %v5962
  %v5965 = vcombine.high %v5633, %v5633
  %v5967 = vunpack.c.l.s4 1983009808
  %v5968 = vunpack.c.0.s8 %v5967
  %v5969 = vlaneseq
  %v5970 = vshrl.u32 %v5969, 7
  %v5971 = vsub.s32 %v5968, %v5970
  %v5972 = vrot.slane %v5633, %v5971
  %v5974 = vunpack.c.l.s4 1983009808
  %v5975 = vunpack.c.0.s8 %v5974
  %v5976 = vlaneseq
  %v5977 = vshrl.u32 %v5976, 7
  %v5978 = vsub.s32 %v5975, %v5977
  %v5979 = vrot.slane %v5965, %v5978
  %v5980 = vcombine.high %v5972, %v5972
  %v5981 = vcombine.high %v5979, %v5979
  %v5982 = vcombine.high %v5636, %v5636
  %v5984 = vunpack.c.l.s4 1983009808
  %v5985 = vunpack.c.0.s8 %v5984
  %v5986 = vlaneseq
  %v5987 = vshrl.u32 %v5986, 7
  %v5988 = vsub.s32 %v5985, %v5987
  %v5989 = vrot.slane %v5636, %v5988
  %v5991 = vunpack.c.l.s4 1983009808
  %v5992 = vunpack.c.0.s8 %v5991
  %v5993 = vlaneseq
  %v5994 = vshrl.u32 %v5993, 7
  %v5995 = vsub.s32 %v5992, %v5994
  %v5996 = vrot.slane %v5982, %v5995
  %v5997 = vcombine.high %v5989, %v5989
  %v5998 = vcombine.high %v5996, %v5996
  %v5999 = vrot.slane %v5666, 7
  %v6000 = vrot.slane %v5999, 2
  %v6001 = vrot.slane %v5674, 7
  %v6002 = vsel %vm2796, %v6000, %v6001
  %v6003 = vrot.slane %v6001, 2
  %v6004 = vrot.slane %v5673, 7
  %v6005 = vsel %vm2796, %v6003, %v6004
  %v6006 = vrot.slane %v6004, 2
  %v6007 = vrot.slane %v5675, 7
  %v6008 = vsel %vm2796, %v6006, %v6007
  %v6009 = vrot.slane %v6007, 2
  %v6010 = vrot.slane %v5683, 7
  %v6011 = vsel %vm2796, %v6009, %v6010
  %v6012 = vrot.slane %v5691, 7
  %v6013 = vrot.slane %v6012, 2
  %v6014 = vrot.slane %v5690, 7
  %v6015 = vsel %vm2796, %v6013, %v6014
  %v6016 = vrot.slane %v6014, 2
  %v6017 = vrot.slane %v5692, 7
  %v6018 = vsel %vm2796, %v6016, %v6017
  %v6019 = vrot.slane %v6017, 2
  %v6020 = vrot.slane %v5700, 7
  %v6021 = vsel %vm2796, %v6019, %v6020
  %v6022 = vrot.slane %v6020, 2
  %v6023 = vrot.slane %v5708, 7
  %v6024 = vsel %vm2796, %v6022, %v6023
  %v6025 = vrot.slane %v5707, 7
  %v6026 = vrot.slane %v6025, 2
  %v6027 = vrot.slane %v5709, 7
  %v6028 = vsel %vm2796, %v6026, %v6027
  %v6029 = vrot.slane %v6027, 2
  %v6030 = vrot.slane %v5717, 7
  %v6031 = vsel %vm2796, %v6029, %v6030
  %v6032 = vrot.slane %v6030, 2
  %v6033 = vrot.slane %v5725, 7
  %v6034 = vsel %vm2796, %v6032, %v6033
  %v6035 = vrot.slane %v6033, 2
  %v6036 = vrot.slane %v5724, 7
  %v6037 = vsel %vm2796, %v6035, %v6036
  %v6038 = vrot.slane %v5726, 7
  %v6039 = vrot.slane %v6038, 2
  %v6040 = vrot.slane %v5734, 7
  %v6041 = vsel %vm2796, %v6039, %v6040
  %v6042 = vrot.slane %v6040, 2
  %v6043 = vrot.slane %v5742, 7
  %v6044 = vsel %vm2796, %v6042, %v6043
  %v6045 = vrot.slane %v6043, 2
  %v6046 = vrot.slane %v5741, 7
  %v6047 = vsel %vm2796, %v6045, %v6046
  %v6048 = vrot.slane %v6046, 2
  %v6049 = vrot.slane %v5743, 7
  %v6050 = vsel %vm2796, %v6048, %v6049
  %v6051 = vrot.slane %v5751, 7
  %v6052 = vrot.slane %v6051, 2
  %v6053 = vrot.slane %v5759, 7
  %v6054 = vsel %vm2796, %v6052, %v6053
  %v6055 = vrot.slane %v6053, 2
  %v6056 = vrot.slane %v5758, 7
  %v6057 = vsel %vm2796, %v6055, %v6056
  %v6058 = vrot.slane %v6056, 2
  %v6059 = vrot.slane %v5760, 7
  %v6060 = vsel %vm2796, %v6058, %v6059
  %v6061 = vrot.slane %v6059, 2
  %v6062 = vrot.slane %v5768, 7
  %v6063 = vsel %vm2796, %v6061, %v6062
  %v6064 = vrot.slane %v5776, 7
  %v6065 = vrot.slane %v6064, 2
  %v6066 = vrot.slane %v5775, 7
  %v6067 = vsel %vm2796, %v6065, %v6066
  %v6068 = vrot.slane %v6066, 2
  %v6069 = vrot.slane %v5777, 7
  %v6070 = vsel %vm2796, %v6068, %v6069
  %v6071 = vrot.slane %v6069, 2
  %v6072 = vrot.slane %v5785, 7
  %v6073 = vsel %vm2796, %v6071, %v6072
  %v6074 = vrot.slane %v6072, 2
  %v6075 = vrot.slane %v5793, 7
  %v6076 = vsel %vm2796, %v6074, %v6075
  %v6077 = vrot.slane %v5792, 7
  %v6078 = vrot.slane %v6077, 2
  %v6079 = vrot.slane %v5794, 7
  %v6080 = vsel %vm2796, %v6078, %v6079
  %v6081 = vrot.slane %v6079, 2
  %v6082 = vrot.slane %v5802, 7
  %v6083 = vsel %vm2796, %v6081, %v6082
  %v6084 = vrot.slane %v6082, 2
  %v6085 = vrot.slane %v5810, 7
  %v6086 = vsel %vm2796, %v6084, %v6085
  %v6087 = vrot.slane %v6085, 2
  %v6088 = vrot.slane %v5809, 7
  %v6089 = vsel %vm2796, %v6087, %v6088
  %v6090 = vrot.slane %v5811, 7
  %v6091 = vrot.slane %v6090, 2
  %v6092 = vrot.slane %v5819, 7
  %v6093 = vsel %vm2796, %v6091, %v6092
  %v6094 = vrot.slane %v6092, 2
  %v6095 = vrot.slane %v5827, 7
  %v6096 = vsel %vm2796, %v6094, %v6095
  %v6097 = vrot.slane %v6095, 2
  %v6098 = vrot.slane %v5826, 7
  %v6099 = vsel %vm2796, %v6097, %v6098
  %v6100 = vrot.slane %v6098, 2
  %v6101 = vrot.slane %v5828, 7
  %v6102 = vsel %vm2796, %v6100, %v6101
  %v6103 = vrot.slane %v5836, 7
  %v6104 = vrot.slane %v6103, 2
  %v6105 = vrot.slane %v5844, 7
  %v6106 = vsel %vm2796, %v6104, %v6105
  %v6107 = vrot.slane %v6105, 2
  %v6108 = vrot.slane %v5843, 7
  %v6109 = vsel %vm2796, %v6107, %v6108
  %v6110 = vrot.slane %v6108, 2
  %v6111 = vrot.slane %v5845, 7
  %v6112 = vsel %vm2796, %v6110, %v6111
  %v6113 = vrot.slane %v6111, 2
  %v6114 = vrot.slane %v5853, 7
  %v6115 = vsel %vm2796, %v6113, %v6114
  %v6116 = vrot.slane %v5861, 7
  %v6117 = vrot.slane %v6116, 2
  %v6118 = vrot.slane %v5860, 7
  %v6119 = vsel %vm2796, %v6117, %v6118
  %v6120 = vrot.slane %v6118, 2
  %v6121 = vrot.slane %v5862, 7
  %v6122 = vsel %vm2796, %v6120, %v6121
  %v6123 = vrot.slane %v6121, 2
  %v6124 = vrot.slane %v5870, 7
  %v6125 = vsel %vm2796, %v6123, %v6124
  %v6126 = vrot.slane %v6124, 2
  %v6127 = vrot.slane %v5878, 7
  %v6128 = vsel %vm2796, %v6126, %v6127
  %v6129 = vrot.slane %v5877, 7
  %v6130 = vrot.slane %v6129, 2
  %v6131 = vrot.slane %v5879, 7
  %v6132 = vsel %vm2796, %v6130, %v6131
  %v6133 = vrot.slane %v6131, 2
  %v6134 = vrot.slane %v5887, 7
  %v6135 = vsel %vm2796, %v6133, %v6134
  %v6136 = vrot.slane %v6134, 2
  %v6137 = vrot.slane %v5895, 7
  %v6138 = vsel %vm2796, %v6136, %v6137
  %v6139 = vrot.slane %v6137, 2
  %v6140 = vrot.slane %v5894, 7
  %v6141 = vsel %vm2796, %v6139, %v6140
  %v6142 = vrot.slane %v5896, 7
  %v6143 = vrot.slane %v6142, 2
  %v6144 = vrot.slane %v5904, 7
  %v6145 = vsel %vm2796, %v6143, %v6144
  %v6146 = vrot.slane %v6144, 2
  %v6147 = vrot.slane %v5912, 7
  %v6148 = vsel %vm2796, %v6146, %v6147
  %v6149 = vrot.slane %v6147, 2
  %v6150 = vrot.slane %v5911, 7
  %v6151 = vsel %vm2796, %v6149, %v6150
  %v6152 = vrot.slane %v6150, 2
  %v6153 = vrot.slane %v5913, 7
  %v6154 = vsel %vm2796, %v6152, %v6153
  %v6155 = vrot.slane %v5921, 7
  %v6156 = vrot.slane %v6155, 2
  %v6157 = vrot.slane %v5929, 7
  %v6158 = vsel %vm2796, %v6156, %v6157
  %v6159 = vrot.slane %v6157, 2
  %v6160 = vrot.slane %v5928, 7
  %v6161 = vsel %vm2796, %v6159, %v6160
  %v6162 = vrot.slane %v6160, 2
  %v6163 = vrot.slane %v5930, 7
  %v6164 = vsel %vm2796, %v6162, %v6163
  %v6165 = vrot.slane %v6163, 2
  %v6166 = vrot.slane %v5938, 7
  %v6167 = vsel %vm2796, %v6165, %v6166
  %v6168 = vrot.slane %v5946, 7
  %v6169 = vrot.slane %v6168, 2
  %v6170 = vrot.slane %v5945, 7
  %v6171 = vsel %vm2796, %v6169, %v6170
  %v6172 = vrot.slane %v6170, 2
  %v6173 = vrot.slane %v5947, 7
  %v6174 = vsel %vm2796, %v6172, %v6173
  %v6175 = vrot.slane %v6173, 2
  %v6176 = vrot.slane %v5955, 7
  %v6177 = vsel %vm2796, %v6175, %v6176
  %v6178 = vrot.slane %v6176, 2
  %v6179 = vrot.slane %v5963, 7
  %v6180 = vsel %vm2796, %v6178, %v6179
  %v6181 = vrot.slane %v5962, 7
  %v6182 = vrot.slane %v6181, 2
  %v6183 = vrot.slane %v5964, 7
  %v6184 = vsel %vm2796, %v6182, %v6183
  %v6185 = vrot.slane %v6183, 2
  %v6186 = vrot.slane %v5972, 7
  %v6187 = vsel %vm2796, %v6185, %v6186
  %v6188 = vrot.slane %v6186, 2
  %v6189 = vrot.slane %v5980, 7
  %v6190 = vsel %vm2796, %v6188, %v6189
  %v6191 = vrot.slane %v6189, 2
  %v6192 = vrot.slane %v5979, 7
  %v6193 = vsel %vm2796, %v6191, %v6192
  %v6194 = vrot.slane %v5981, 7
  %v6195 = vrot.slane %v6194, 2
  %v6196 = vrot.slane %v5989, 7
  %v6197 = vsel %vm2796, %v6195, %v6196
  %v6198 = vrot.slane %v6196, 2
  %v6199 = vrot.slane %v5997, 7
  %v6200 = vsel %vm2796, %v6198, %v6199
  %v6201 = vrot.slane %v6199, 2
  %v6202 = vrot.slane %v5996, 7
  %v6203 = vsel %vm2796, %v6201, %v6202
  %v6204 = vrot.slane %v6202, 2
  %v6205 = vrot.slane %v5998, 7
  %v6206 = vsel %vm2796, %v6204, %v6205
  %v6271 = vadd.f32 %v5457, %v6002
  %v6272 = vadd.f32 %v5458, %v6005
  %v6273 = vadd.f32 %v5459, %v6008
  %v6274 = vadd.f32 %v5460, %v6011
  %v6275 = vadd.f32 %v5461, %v6015
  %v6276 = vadd.f32 %v5462, %v6018
  %v6277 = vadd.f32 %v5463, %v6021
  %v6278 = vadd.f32 %v5464, %v6024
  %v6279 = vadd.f32 %v5465, %v6028
  %v6280 = vadd.f32 %v5466, %v6031
  %v6281 = vadd.f32 %v5467, %v6034
  %v6282 = vadd.f32 %v5468, %v6037
  %v6283 = vadd.f32 %v5469, %v6041
  %v6284 = vadd.f32 %v5470, %v6044
  %v6285 = vadd.f32 %v5471, %v6047
  %v6286 = vadd.f32 %v5472, %v6050
  %v6287 = vadd.f32 %v5473, %v6054
  %v6288 = vadd.f32 %v5474, %v6057
  %v6289 = vadd.f32 %v5475, %v6060
  %v6290 = vadd.f32 %v5476, %v6063
  %v6291 = vadd.f32 %v5477, %v6067
  %v6292 = vadd.f32 %v5478, %v6070
  %v6293 = vadd.f32 %v5479, %v6073
  %v6294 = vadd.f32 %v5480, %v6076
  %v6295 = vadd.f32 %v5481, %v6080
  %v6296 = vadd.f32 %v5482, %v6083
  %v6297 = vadd.f32 %v5483, %v6086
  %v6298 = vadd.f32 %v5484, %v6089
  %v6299 = vadd.f32 %v5485, %v6093
  %v6300 = vadd.f32 %v5486, %v6096
  %v6301 = vadd.f32 %v5487, %v6099
  %v6302 = vadd.f32 %v5488, %v6102
  %v6303 = vadd.f32 %v5489, %v6106
  %v6304 = vadd.f32 %v5490, %v6109
  %v6305 = vadd.f32 %v5491, %v6112
  %v6306 = vadd.f32 %v5492, %v6115
  %v6307 = vadd.f32 %v5493, %v6119
  %v6308 = vadd.f32 %v5494, %v6122
  %v6309 = vadd.f32 %v5495, %v6125
  %v6310 = vadd.f32 %v5496, %v6128
  %v6311 = vadd.f32 %v5497, %v6132
  %v6312 = vadd.f32 %v5498, %v6135
  %v6313 = vadd.f32 %v5499, %v6138
  %v6314 = vadd.f32 %v5500, %v6141
  %v6315 = vadd.f32 %v5501, %v6145
  %v6316 = vadd.f32 %v5502, %v6148
  %v6317 = vadd.f32 %v5503, %v6151
  %v6318 = vadd.f32 %v5504, %v6154
  %v6319 = vadd.f32 %v5505, %v6158
  %v6320 = vadd.f32 %v5506, %v6161
  %v6321 = vadd.f32 %v5507, %v6164
  %v6322 = vadd.f32 %v5508, %v6167
  %v6323 = vadd.f32 %v5509, %v6171
  %v6324 = vadd.f32 %v5510, %v6174
  %v6325 = vadd.f32 %v5511, %v6177
  %v6326 = vadd.f32 %v5512, %v6180
  %v6327 = vadd.f32 %v5513, %v6184
  %v6328 = vadd.f32 %v5514, %v6187
  %v6329 = vadd.f32 %v5515, %v6190
  %v6330 = vadd.f32 %v5516, %v6193
  %v6331 = vadd.f32 %v5517, %v6197
  %v6332 = vadd.f32 %v5518, %v6200
  %v6333 = vadd.f32 %v5519, %v6203
  %v6334 = vadd.f32 %v5520, %v6206
  %s6335 = scalar_lea.vmem %s6, 20
  %v6336 = vld [vmem:[%s6335] sm:$0xf]
  %v6338 = vsel %vm1780, %v6336, 0
  %6340 = vmatprep.subr.bf16.mxu0 0
  %6341 = vmatpush1.bf16.msra.mxu0 %v6338
  %6342 = vmatprep.subr.bf16.mxu0 0
  %6343 = vmatpush1.bf16.msra.mxu0 0
  %6344 = vmatprep.subr.bf16.mxu0 0
  %6345 = vmatpush1.bf16.msra.mxu0 0
  %6346 = vmatprep.subr.bf16.mxu0 0
  %6347 = vmatpush1.bf16.msra.mxu0 0
  %6348 = vmatprep.subr.bf16.mxu0 0
  %6349 = vmatpush1.bf16.msra.mxu0 0
  %6350 = vmatprep.subr.bf16.mxu0 0
  %6351 = vmatpush1.bf16.msra.mxu0 0
  %6352 = vmatprep.subr.bf16.mxu0 0
  %6353 = vmatpush1.bf16.msra.mxu0 0
  %6354 = vmatprep.subr.bf16.mxu0 0
  %6355 = vmatpush1.bf16.msra.mxu0 0
  %6356 = vmatprep.subr.bf16.mxu0 0
  %6357 = vmatpush1.bf16.msra.mxu0 0
  %6358 = vmatprep.subr.bf16.mxu0 0
  %6359 = vmatpush1.bf16.msra.mxu0 0
  %6360 = vmatprep.subr.bf16.mxu0 0
  %6361 = vmatpush1.bf16.msra.mxu0 0
  %6362 = vmatprep.subr.bf16.mxu0 0
  %6363 = vmatpush1.bf16.msra.mxu0 0
  %6364 = vmatprep.subr.bf16.mxu0 0
  %6365 = vmatpush1.bf16.msra.mxu0 0
  %6366 = vmatprep.subr.bf16.mxu0 0
  %6367 = vmatpush1.bf16.msra.mxu0 0
  %6368 = vmatprep.subr.bf16.mxu0 0
  %6369 = vmatpush1.bf16.msra.mxu0 0
  %6370 = vmatprep.subr.bf16.mxu0 0
  %6371 = vmatpush1.bf16.msra.mxu0 0
  %6372 = vmatprep.mubr.bf16.mxu0 0
  %6373 = vmatmul.mubr.bf16.gmra.mrb[0].mxu0 %v4896
  %v6374 = vpop.f32.mrb[0].mxu0
  %v6375 = vadd.f32 0.0, %v6374
  %v6376 = vpop.f32.mrb[0].mxu0
  %v6377 = vpop.f32.mrb[0].mxu0
  %v6378 = vadd.f32 0.0, %v6377
  %v6379 = vpop.f32.mrb[0].mxu0
  %6380 = vmatprep.mubr.bf16.mxu0 0
  %6381 = vmatmul.mubr.bf16.gmra.mrb[0].mxu0 %v4899
  %v6382 = vpop.f32.mrb[0].mxu0
  %v6383 = vadd.f32 0.0, %v6382
  %v6384 = vpop.f32.mrb[0].mxu0
  %v6385 = vpop.f32.mrb[0].mxu0
  %v6386 = vadd.f32 0.0, %v6385
  %v6387 = vpop.f32.mrb[0].mxu0
  %6388 = vmatprep.mubr.bf16.mxu0 0
  %6389 = vmatmul.mubr.bf16.gmra.mrb[0].mxu0 %v4902
  %v6390 = vpop.f32.mrb[0].mxu0
  %v6391 = vadd.f32 0.0, %v6390
  %v6392 = vpop.f32.mrb[0].mxu0
  %v6393 = vpop.f32.mrb[0].mxu0
  %v6394 = vadd.f32 0.0, %v6393
  %v6395 = vpop.f32.mrb[0].mxu0
  %6396 = vmatprep.mubr.bf16.mxu0 0
  %6397 = vmatmul.mubr.bf16.gmra.mrb[0].mxu0 %v4905
  %v6398 = vpop.f32.mrb[0].mxu0
  %v6399 = vadd.f32 0.0, %v6398
  %v6400 = vpop.f32.mrb[0].mxu0
  %v6401 = vpop.f32.mrb[0].mxu0
  %v6402 = vadd.f32 0.0, %v6401
  %v6403 = vpop.f32.mrb[0].mxu0
  %6404 = vmatprep.mubr.bf16.mxu0 0
  %6405 = vmatmul.mubr.bf16.gmra.mrb[0].mxu0 %v4908
  %v6406 = vpop.f32.mrb[0].mxu0
  %v6407 = vadd.f32 0.0, %v6406
  %v6408 = vpop.f32.mrb[0].mxu0
  %v6409 = vpop.f32.mrb[0].mxu0
  %v6410 = vadd.f32 0.0, %v6409
  %v6411 = vpop.f32.mrb[0].mxu0
  %6412 = vmatprep.mubr.bf16.mxu0 0
  %6413 = vmatmul.mubr.bf16.gmra.mrb[0].mxu0 %v4911
  %v6414 = vpop.f32.mrb[0].mxu0
  %v6415 = vadd.f32 0.0, %v6414
  %v6416 = vpop.f32.mrb[0].mxu0
  %v6417 = vpop.f32.mrb[0].mxu0
  %v6418 = vadd.f32 0.0, %v6417
  %v6419 = vpop.f32.mrb[0].mxu0
  %6420 = vmatprep.mubr.bf16.mxu0 0
  %6421 = vmatmul.mubr.bf16.gmra.mrb[0].mxu0 %v4914
  %v6422 = vpop.f32.mrb[0].mxu0
  %v6423 = vadd.f32 0.0, %v6422
  %v6424 = vpop.f32.mrb[0].mxu0
  %v6425 = vpop.f32.mrb[0].mxu0
  %v6426 = vadd.f32 0.0, %v6425
  %v6427 = vpop.f32.mrb[0].mxu0
  %6428 = vmatprep.mubr.bf16.mxu0 0
  %6429 = vmatmul.mubr.bf16.gmra.mrb[0].mxu0 %v4917
  %v6430 = vpop.f32.mrb[0].mxu0
  %v6431 = vadd.f32 0.0, %v6430
  %v6432 = vpop.f32.mrb[0].mxu0
  %v6433 = vpop.f32.mrb[0].mxu0
  %v6434 = vadd.f32 0.0, %v6433
  %v6435 = vpop.f32.mrb[0].mxu0
  %6436 = vmatprep.mubr.bf16.mxu0 0
  %6437 = vmatmul.mubr.bf16.gmra.mrb[0].mxu0 %v4920
  %v6438 = vpop.f32.mrb[0].mxu0
  %v6439 = vadd.f32 0.0, %v6438
  %v6440 = vpop.f32.mrb[0].mxu0
  %v6441 = vpop.f32.mrb[0].mxu0
  %v6442 = vadd.f32 0.0, %v6441
  %v6443 = vpop.f32.mrb[0].mxu0
  %6444 = vmatprep.mubr.bf16.mxu0 0
  %6445 = vmatmul.mubr.bf16.gmra.mrb[0].mxu0 %v4923
  %v6446 = vpop.f32.mrb[0].mxu0
  %v6447 = vadd.f32 0.0, %v6446
  %v6448 = vpop.f32.mrb[0].mxu0
  %v6449 = vpop.f32.mrb[0].mxu0
  %v6450 = vadd.f32 0.0, %v6449
  %v6451 = vpop.f32.mrb[0].mxu0
  %6452 = vdwg.mxu0
  %v6473 = vcombine.high %v6375, %v6375
  %v6475 = vunpack.c.l.s4 1983009808
  %v6476 = vunpack.c.0.s8 %v6475
  %v6477 = vlaneseq
  %v6478 = vshrl.u32 %v6477, 7
  %v6479 = vsub.s32 %v6476, %v6478
  %v6480 = vrot.slane %v6375, %v6479
  %v6482 = vunpack.c.l.s4 1983009808
  %v6483 = vunpack.c.0.s8 %v6482
  %v6484 = vlaneseq
  %v6485 = vshrl.u32 %v6484, 7
  %v6486 = vsub.s32 %v6483, %v6485
  %v6487 = vrot.slane %v6473, %v6486
  %v6488 = vcombine.high %v6480, %v6480
  %v6489 = vcombine.high %v6487, %v6487
  %v6490 = vcombine.high %v6378, %v6378
  %v6492 = vunpack.c.l.s4 1983009808
  %v6493 = vunpack.c.0.s8 %v6492
  %v6494 = vlaneseq
  %v6495 = vshrl.u32 %v6494, 7
  %v6496 = vsub.s32 %v6493, %v6495
  %v6497 = vrot.slane %v6378, %v6496
  %v6499 = vunpack.c.l.s4 1983009808
  %v6500 = vunpack.c.0.s8 %v6499
  %v6501 = vlaneseq
  %v6502 = vshrl.u32 %v6501, 7
  %v6503 = vsub.s32 %v6500, %v6502
  %v6504 = vrot.slane %v6490, %v6503
  %v6505 = vcombine.high %v6504, %v6504
  %v6506 = vcombine.high %v6383, %v6383
  %v6508 = vunpack.c.l.s4 1983009808
  %v6509 = vunpack.c.0.s8 %v6508
  %v6510 = vlaneseq
  %v6511 = vshrl.u32 %v6510, 7
  %v6512 = vsub.s32 %v6509, %v6511
  %v6513 = vrot.slane %v6383, %v6512
  %v6515 = vunpack.c.l.s4 1983009808
  %v6516 = vunpack.c.0.s8 %v6515
  %v6517 = vlaneseq
  %v6518 = vshrl.u32 %v6517, 7
  %v6519 = vsub.s32 %v6516, %v6518
  %v6520 = vrot.slane %v6506, %v6519
  %v6521 = vcombine.high %v6513, %v6513
  %v6522 = vcombine.high %v6520, %v6520
  %v6523 = vcombine.high %v6386, %v6386
  %v6525 = vunpack.c.l.s4 1983009808
  %v6526 = vunpack.c.0.s8 %v6525
  %v6527 = vlaneseq
  %v6528 = vshrl.u32 %v6527, 7
  %v6529 = vsub.s32 %v6526, %v6528
  %v6530 = vrot.slane %v6386, %v6529
  %v6532 = vunpack.c.l.s4 1983009808
  %v6533 = vunpack.c.0.s8 %v6532
  %v6534 = vlaneseq
  %v6535 = vshrl.u32 %v6534, 7
  %v6536 = vsub.s32 %v6533, %v6535
  %v6537 = vrot.slane %v6523, %v6536
  %v6538 = vcombine.high %v6530, %v6530
  %v6539 = vcombine.high %v6391, %v6391
  %v6541 = vunpack.c.l.s4 1983009808
  %v6542 = vunpack.c.0.s8 %v6541
  %v6543 = vlaneseq
  %v6544 = vshrl.u32 %v6543, 7
  %v6545 = vsub.s32 %v6542, %v6544
  %v6546 = vrot.slane %v6391, %v6545
  %v6548 = vunpack.c.l.s4 1983009808
  %v6549 = vunpack.c.0.s8 %v6548
  %v6550 = vlaneseq
  %v6551 = vshrl.u32 %v6550, 7
  %v6552 = vsub.s32 %v6549, %v6551
  %v6553 = vrot.slane %v6539, %v6552
  %v6554 = vcombine.high %v6546, %v6546
  %v6555 = vcombine.high %v6553, %v6553
  %v6556 = vcombine.high %v6394, %v6394
  %v6558 = vunpack.c.l.s4 1983009808
  %v6559 = vunpack.c.0.s8 %v6558
  %v6560 = vlaneseq
  %v6561 = vshrl.u32 %v6560, 7
  %v6562 = vsub.s32 %v6559, %v6561
  %v6563 = vrot.slane %v6394, %v6562
  %v6565 = vunpack.c.l.s4 1983009808
  %v6566 = vunpack.c.0.s8 %v6565
  %v6567 = vlaneseq
  %v6568 = vshrl.u32 %v6567, 7
  %v6569 = vsub.s32 %v6566, %v6568
  %v6570 = vrot.slane %v6556, %v6569
  %v6571 = vcombine.high %v6563, %v6563
  %v6572 = vcombine.high %v6570, %v6570
  %v6573 = vcombine.high %v6399, %v6399
  %v6575 = vunpack.c.l.s4 1983009808
  %v6576 = vunpack.c.0.s8 %v6575
  %v6577 = vlaneseq
  %v6578 = vshrl.u32 %v6577, 7
  %v6579 = vsub.s32 %v6576, %v6578
  %v6580 = vrot.slane %v6399, %v6579
  %v6582 = vunpack.c.l.s4 1983009808
  %v6583 = vunpack.c.0.s8 %v6582
  %v6584 = vlaneseq
  %v6585 = vshrl.u32 %v6584, 7
  %v6586 = vsub.s32 %v6583, %v6585
  %v6587 = vrot.slane %v6573, %v6586
  %v6588 = vcombine.high %v6587, %v6587
  %v6589 = vcombine.high %v6402, %v6402
  %v6591 = vunpack.c.l.s4 1983009808
  %v6592 = vunpack.c.0.s8 %v6591
  %v6593 = vlaneseq
  %v6594 = vshrl.u32 %v6593, 7
  %v6595 = vsub.s32 %v6592, %v6594
  %v6596 = vrot.slane %v6402, %v6595
  %v6598 = vunpack.c.l.s4 1983009808
  %v6599 = vunpack.c.0.s8 %v6598
  %v6600 = vlaneseq
  %v6601 = vshrl.u32 %v6600, 7
  %v6602 = vsub.s32 %v6599, %v6601
  %v6603 = vrot.slane %v6589, %v6602
  %v6604 = vcombine.high %v6596, %v6596
  %v6605 = vcombine.high %v6603, %v6603
  %v6606 = vcombine.high %v6407, %v6407
  %v6608 = vunpack.c.l.s4 1983009808
  %v6609 = vunpack.c.0.s8 %v6608
  %v6610 = vlaneseq
  %v6611 = vshrl.u32 %v6610, 7
  %v6612 = vsub.s32 %v6609, %v6611
  %v6613 = vrot.slane %v6407, %v6612
  %v6615 = vunpack.c.l.s4 1983009808
  %v6616 = vunpack.c.0.s8 %v6615
  %v6617 = vlaneseq
  %v6618 = vshrl.u32 %v6617, 7
  %v6619 = vsub.s32 %v6616, %v6618
  %v6620 = vrot.slane %v6606, %v6619
  %v6621 = vcombine.high %v6613, %v6613
  %v6622 = vcombine.high %v6410, %v6410
  %v6624 = vunpack.c.l.s4 1983009808
  %v6625 = vunpack.c.0.s8 %v6624
  %v6626 = vlaneseq
  %v6627 = vshrl.u32 %v6626, 7
  %v6628 = vsub.s32 %v6625, %v6627
  %v6629 = vrot.slane %v6410, %v6628
  %v6631 = vunpack.c.l.s4 1983009808
  %v6632 = vunpack.c.0.s8 %v6631
  %v6633 = vlaneseq
  %v6634 = vshrl.u32 %v6633, 7
  %v6635 = vsub.s32 %v6632, %v6634
  %v6636 = vrot.slane %v6622, %v6635
  %v6637 = vcombine.high %v6629, %v6629
  %v6638 = vcombine.high %v6636, %v6636
  %v6639 = vcombine.high %v6415, %v6415
  %v6641 = vunpack.c.l.s4 1983009808
  %v6642 = vunpack.c.0.s8 %v6641
  %v6643 = vlaneseq
  %v6644 = vshrl.u32 %v6643, 7
  %v6645 = vsub.s32 %v6642, %v6644
  %v6646 = vrot.slane %v6415, %v6645
  %v6648 = vunpack.c.l.s4 1983009808
  %v6649 = vunpack.c.0.s8 %v6648
  %v6650 = vlaneseq
  %v6651 = vshrl.u32 %v6650, 7
  %v6652 = vsub.s32 %v6649, %v6651
  %v6653 = vrot.slane %v6639, %v6652
  %v6654 = vcombine.high %v6646, %v6646
  %v6655 = vcombine.high %v6653, %v6653
  %v6656 = vcombine.high %v6418, %v6418
  %v6658 = vunpack.c.l.s4 1983009808
  %v6659 = vunpack.c.0.s8 %v6658
  %v6660 = vlaneseq
  %v6661 = vshrl.u32 %v6660, 7
  %v6662 = vsub.s32 %v6659, %v6661
  %v6663 = vrot.slane %v6418, %v6662
  %v6665 = vunpack.c.l.s4 1983009808
  %v6666 = vunpack.c.0.s8 %v6665
  %v6667 = vlaneseq
  %v6668 = vshrl.u32 %v6667, 7
  %v6669 = vsub.s32 %v6666, %v6668
  %v6670 = vrot.slane %v6656, %v6669
  %v6671 = vcombine.high %v6670, %v6670
  %v6672 = vcombine.high %v6423, %v6423
  %v6674 = vunpack.c.l.s4 1983009808
  %v6675 = vunpack.c.0.s8 %v6674
  %v6676 = vlaneseq
  %v6677 = vshrl.u32 %v6676, 7
  %v6678 = vsub.s32 %v6675, %v6677
  %v6679 = vrot.slane %v6423, %v6678
  %v6681 = vunpack.c.l.s4 1983009808
  %v6682 = vunpack.c.0.s8 %v6681
  %v6683 = vlaneseq
  %v6684 = vshrl.u32 %v6683, 7
  %v6685 = vsub.s32 %v6682, %v6684
  %v6686 = vrot.slane %v6672, %v6685
  %v6687 = vcombine.high %v6679, %v6679
  %v6688 = vcombine.high %v6686, %v6686
  %v6689 = vcombine.high %v6426, %v6426
  %v6691 = vunpack.c.l.s4 1983009808
  %v6692 = vunpack.c.0.s8 %v6691
  %v6693 = vlaneseq
  %v6694 = vshrl.u32 %v6693, 7
  %v6695 = vsub.s32 %v6692, %v6694
  %v6696 = vrot.slane %v6426, %v6695
  %v6698 = vunpack.c.l.s4 1983009808
  %v6699 = vunpack.c.0.s8 %v6698
  %v6700 = vlaneseq
  %v6701 = vshrl.u32 %v6700, 7
  %v6702 = vsub.s32 %v6699, %v6701
  %v6703 = vrot.slane %v6689, %v6702
  %v6704 = vcombine.high %v6696, %v6696
  %v6705 = vcombine.high %v6431, %v6431
  %v6707 = vunpack.c.l.s4 1983009808
  %v6708 = vunpack.c.0.s8 %v6707
  %v6709 = vlaneseq
  %v6710 = vshrl.u32 %v6709, 7
  %v6711 = vsub.s32 %v6708, %v6710
  %v6712 = vrot.slane %v6431, %v6711
  %v6714 = vunpack.c.l.s4 1983009808
  %v6715 = vunpack.c.0.s8 %v6714
  %v6716 = vlaneseq
  %v6717 = vshrl.u32 %v6716, 7
  %v6718 = vsub.s32 %v6715, %v6717
  %v6719 = vrot.slane %v6705, %v6718
  %v6720 = vcombine.high %v6712, %v6712
  %v6721 = vcombine.high %v6719, %v6719
  %v6722 = vcombine.high %v6434, %v6434
  %v6724 = vunpack.c.l.s4 1983009808
  %v6725 = vunpack.c.0.s8 %v6724
  %v6726 = vlaneseq
  %v6727 = vshrl.u32 %v6726, 7
  %v6728 = vsub.s32 %v6725, %v6727
  %v6729 = vrot.slane %v6434, %v6728
  %v6731 = vunpack.c.l.s4 1983009808
  %v6732 = vunpack.c.0.s8 %v6731
  %v6733 = vlaneseq
  %v6734 = vshrl.u32 %v6733, 7
  %v6735 = vsub.s32 %v6732, %v6734
  %v6736 = vrot.slane %v6722, %v6735
  %v6737 = vcombine.high %v6729, %v6729
  %v6738 = vcombine.high %v6736, %v6736
  %v6739 = vcombine.high %v6439, %v6439
  %v6741 = vunpack.c.l.s4 1983009808
  %v6742 = vunpack.c.0.s8 %v6741
  %v6743 = vlaneseq
  %v6744 = vshrl.u32 %v6743, 7
  %v6745 = vsub.s32 %v6742, %v6744
  %v6746 = vrot.slane %v6439, %v6745
  %v6748 = vunpack.c.l.s4 1983009808
  %v6749 = vunpack.c.0.s8 %v6748
  %v6750 = vlaneseq
  %v6751 = vshrl.u32 %v6750, 7
  %v6752 = vsub.s32 %v6749, %v6751
  %v6753 = vrot.slane %v6739, %v6752
  %v6754 = vcombine.high %v6753, %v6753
  %v6755 = vcombine.high %v6442, %v6442
  %v6757 = vunpack.c.l.s4 1983009808
  %v6758 = vunpack.c.0.s8 %v6757
  %v6759 = vlaneseq
  %v6760 = vshrl.u32 %v6759, 7
  %v6761 = vsub.s32 %v6758, %v6760
  %v6762 = vrot.slane %v6442, %v6761
  %v6764 = vunpack.c.l.s4 1983009808
  %v6765 = vunpack.c.0.s8 %v6764
  %v6766 = vlaneseq
  %v6767 = vshrl.u32 %v6766, 7
  %v6768 = vsub.s32 %v6765, %v6767
  %v6769 = vrot.slane %v6755, %v6768
  %v6770 = vcombine.high %v6762, %v6762
  %v6771 = vcombine.high %v6769, %v6769
  %v6772 = vcombine.high %v6447, %v6447
  %v6774 = vunpack.c.l.s4 1983009808
  %v6775 = vunpack.c.0.s8 %v6774
  %v6776 = vlaneseq
  %v6777 = vshrl.u32 %v6776, 7
  %v6778 = vsub.s32 %v6775, %v6777
  %v6779 = vrot.slane %v6447, %v6778
  %v6781 = vunpack.c.l.s4 1983009808
  %v6782 = vunpack.c.0.s8 %v6781
  %v6783 = vlaneseq
  %v6784 = vshrl.u32 %v6783, 7
  %v6785 = vsub.s32 %v6782, %v6784
  %v6786 = vrot.slane %v6772, %v6785
  %v6787 = vcombine.high %v6779, %v6779
  %v6788 = vcombine.high %v6450, %v6450
  %v6790 = vunpack.c.l.s4 1983009808
  %v6791 = vunpack.c.0.s8 %v6790
  %v6792 = vlaneseq
  %v6793 = vshrl.u32 %v6792, 7
  %v6794 = vsub.s32 %v6791, %v6793
  %v6795 = vrot.slane %v6450, %v6794
  %v6797 = vunpack.c.l.s4 1983009808
  %v6798 = vunpack.c.0.s8 %v6797
  %v6799 = vlaneseq
  %v6800 = vshrl.u32 %v6799, 7
  %v6801 = vsub.s32 %v6798, %v6800
  %v6802 = vrot.slane %v6788, %v6801
  %v6803 = vcombine.high %v6795, %v6795
  %v6804 = vcombine.high %v6802, %v6802
  %v6869 = vadd.f32 %v6271, %v6488
  %v6870 = vadd.f32 %v6272, %v6487
  %v6871 = vadd.f32 %v6273, %v6489
  %v6872 = vadd.f32 %v6274, %v6497
  %v6873 = vadd.f32 %v6275, %v6504
  %v6874 = vadd.f32 %v6276, %v6505
  %v6875 = vadd.f32 %v6277, %v6513
  %v6876 = vadd.f32 %v6278, %v6521
  %v6877 = vadd.f32 %v6279, %v6522
  %v6878 = vadd.f32 %v6280, %v6530
  %v6879 = vadd.f32 %v6281, %v6538
  %v6880 = vadd.f32 %v6282, %v6537
  %v6881 = vadd.f32 %v6283, %v6546
  %v6882 = vadd.f32 %v6284, %v6554
  %v6883 = vadd.f32 %v6285, %v6553
  %v6884 = vadd.f32 %v6286, %v6555
  %v6885 = vadd.f32 %v6287, %v6571
  %v6886 = vadd.f32 %v6288, %v6570
  %v6887 = vadd.f32 %v6289, %v6572
  %v6888 = vadd.f32 %v6290, %v6580
  %v6889 = vadd.f32 %v6291, %v6587
  %v6890 = vadd.f32 %v6292, %v6588
  %v6891 = vadd.f32 %v6293, %v6596
  %v6892 = vadd.f32 %v6294, %v6604
  %v6893 = vadd.f32 %v6295, %v6605
  %v6894 = vadd.f32 %v6296, %v6613
  %v6895 = vadd.f32 %v6297, %v6621
  %v6896 = vadd.f32 %v6298, %v6620
  %v6897 = vadd.f32 %v6299, %v6629
  %v6898 = vadd.f32 %v6300, %v6637
  %v6899 = vadd.f32 %v6301, %v6636
  %v6900 = vadd.f32 %v6302, %v6638
  %v6901 = vadd.f32 %v6303, %v6654
  %v6902 = vadd.f32 %v6304, %v6653
  %v6903 = vadd.f32 %v6305, %v6655
  %v6904 = vadd.f32 %v6306, %v6663
  %v6905 = vadd.f32 %v6307, %v6670
  %v6906 = vadd.f32 %v6308, %v6671
  %v6907 = vadd.f32 %v6309, %v6679
  %v6908 = vadd.f32 %v6310, %v6687
  %v6909 = vadd.f32 %v6311, %v6688
  %v6910 = vadd.f32 %v6312, %v6696
  %v6911 = vadd.f32 %v6313, %v6704
  %v6912 = vadd.f32 %v6314, %v6703
  %v6913 = vadd.f32 %v6315, %v6712
  %v6914 = vadd.f32 %v6316, %v6720
  %v6915 = vadd.f32 %v6317, %v6719
  %v6916 = vadd.f32 %v6318, %v6721
  %v6917 = vadd.f32 %v6319, %v6737
  %v6918 = vadd.f32 %v6320, %v6736
  %v6919 = vadd.f32 %v6321, %v6738
  %v6920 = vadd.f32 %v6322, %v6746
  %v6921 = vadd.f32 %v6323, %v6753
  %v6922 = vadd.f32 %v6324, %v6754
  %v6923 = vadd.f32 %v6325, %v6762
  %v6924 = vadd.f32 %v6326, %v6770
  %v6925 = vadd.f32 %v6327, %v6771
  %v6926 = vadd.f32 %v6328, %v6779
  %v6927 = vadd.f32 %v6329, %v6787
  %v6928 = vadd.f32 %v6330, %v6786
  %v6929 = vadd.f32 %v6331, %v6795
  %v6930 = vadd.f32 %v6332, %v6803
  %v6931 = vadd.f32 %v6333, %v6802
  %v6932 = vadd.f32 %v6334, %v6804
  %s6933 = scalar_lea.vmem [#allocation2], 16
  %v6934 = vld [vmem:[%s6933] sm:$0xf]
  %v6935 = vld [vmem:[%s6933 + $0x4] sm:$0x1]
  %v6936 = vld [vmem:[%s6933 + $0x8] sm:$0xf]
  %v6937 = vld [vmem:[%s6933 + $0xc] sm:$0x1]
  %v6938 = vld [vmem:[%s6933 + $0x10] sm:$0xf]
  %v6939 = vld [vmem:[%s6933 + $0x14] sm:$0x1]
  %v6940 = vld [vmem:[%s6933 + $0x18] sm:$0xf]
  %v6941 = vld [vmem:[%s6933 + $0x1c] sm:$0x1]
  %v6942 = vld [vmem:[%s6933 + $0x20] sm:$0xf]
  %v6943 = vld [vmem:[%s6933 + $0x24] sm:$0x1]
  %v6944 = vld [vmem:[%s6933 + $0x28] sm:$0xf]
  %v6945 = vld [vmem:[%s6933 + $0x2c] sm:$0x1]
  %v6946 = vld [vmem:[%s6933 + $0x30] sm:$0xf]
  %v6947 = vld [vmem:[%s6933 + $0x34] sm:$0x1]
  %v6948 = vld [vmem:[%s6933 + $0x38] sm:$0xf]
  %v6949 = vld [vmem:[%s6933 + $0x3c] sm:$0x1]
  %v6950 = vld [vmem:[%s6933 + $0x50] sm:$0xf]
  %v6951 = vld [vmem:[%s6933 + $0x54] sm:$0x1]
  %v6952 = vld [vmem:[%s6933 + $0x58] sm:$0xf]
  %v6953 = vld [vmem:[%s6933 + $0x5c] sm:$0x1]
  %v6954 = vld [vmem:[%s6933 + $0x60] sm:$0xf]
  %v6955 = vld [vmem:[%s6933 + $0x64] sm:$0x1]
  %v6956 = vld [vmem:[%s6933 + $0x68] sm:$0xf]
  %v6957 = vld [vmem:[%s6933 + $0x6c] sm:$0x1]
  %v6958 = vld [vmem:[%s6933 + $0x70] sm:$0xf]
  %v6959 = vld [vmem:[%s6933 + $0x74] sm:$0x1]
  %v6960 = vld [vmem:[%s6933 + $0x78] sm:$0xf]
  %v6961 = vld [vmem:[%s6933 + $0x7c] sm:$0x1]
  %v6962 = vld [vmem:[%s6933 + $0x80] sm:$0xf]
  %v6963 = vld [vmem:[%s6933 + $0x84] sm:$0x1]
  %v6964 = vld [vmem:[%s6933 + $0x88] sm:$0xf]
  %v6965 = vld [vmem:[%s6933 + $0x8c] sm:$0x1]
  %v6999 = vunpack.c.l.s4 1966171168
  %v7000 = vunpack.c.0.s8 %v6999
  %v7001 = vlaneseq
  %v7002 = vshrl.u32 %v7001, 7
  %v7003 = vsub.s32 %v7000, %v7002
  %v7004 = vrot.slane %v6934, %v7003
  %v7005 = vcombine.high %v7004, %v7004
  %v7007 = vunpack.c.l.s4 1966171168
  %v7008 = vunpack.c.0.s8 %v7007
  %v7009 = vlaneseq
  %v7010 = vshrl.u32 %v7009, 7
  %v7011 = vsub.s32 %v7008, %v7010
  %v7012 = vrot.slane %v7004, %v7011
  %v7014 = vunpack.c.l.s4 1966171168
  %v7015 = vunpack.c.0.s8 %v7014
  %v7016 = vlaneseq
  %v7017 = vshrl.u32 %v7016, 7
  %v7018 = vsub.s32 %v7015, %v7017
  %v7019 = vrot.slane %v7005, %v7018
  %v7020 = vcombine.high %v7012, %v7012
  %v7021 = vcombine.high %v7019, %v7019
  %v7023 = vunpack.c.l.s4 1966171168
  %v7024 = vunpack.c.0.s8 %v7023
  %v7025 = vlaneseq
  %v7026 = vshrl.u32 %v7025, 7
  %v7027 = vsub.s32 %v7024, %v7026
  %v7028 = vrot.slane %v6935, %v7027
  %v7030 = vunpack.c.l.s4 1966171168
  %v7031 = vunpack.c.0.s8 %v7030
  %v7032 = vlaneseq
  %v7033 = vshrl.u32 %v7032, 7
  %v7034 = vsub.s32 %v7031, %v7033
  %v7035 = vrot.slane %v7028, %v7034
  %v7037 = vunpack.c.l.s4 1966171168
  %v7038 = vunpack.c.0.s8 %v7037
  %v7039 = vlaneseq
  %v7040 = vshrl.u32 %v7039, 7
  %v7041 = vsub.s32 %v7038, %v7040
  %v7042 = vrot.slane %v6936, %v7041
  %v7043 = vcombine.high %v7042, %v7042
  %v7045 = vunpack.c.l.s4 1966171168
  %v7046 = vunpack.c.0.s8 %v7045
  %v7047 = vlaneseq
  %v7048 = vshrl.u32 %v7047, 7
  %v7049 = vsub.s32 %v7046, %v7048
  %v7050 = vrot.slane %v7042, %v7049
  %v7052 = vunpack.c.l.s4 1966171168
  %v7053 = vunpack.c.0.s8 %v7052
  %v7054 = vlaneseq
  %v7055 = vshrl.u32 %v7054, 7
  %v7056 = vsub.s32 %v7053, %v7055
  %v7057 = vrot.slane %v7043, %v7056
  %v7058 = vcombine.high %v7050, %v7050
  %v7059 = vcombine.high %v7057, %v7057
  %v7061 = vunpack.c.l.s4 1966171168
  %v7062 = vunpack.c.0.s8 %v7061
  %v7063 = vlaneseq
  %v7064 = vshrl.u32 %v7063, 7
  %v7065 = vsub.s32 %v7062, %v7064
  %v7066 = vrot.slane %v6937, %v7065
  %v7068 = vunpack.c.l.s4 1966171168
  %v7069 = vunpack.c.0.s8 %v7068
  %v7070 = vlaneseq
  %v7071 = vshrl.u32 %v7070, 7
  %v7072 = vsub.s32 %v7069, %v7071
  %v7073 = vrot.slane %v7066, %v7072
  %v7075 = vunpack.c.l.s4 1966171168
  %v7076 = vunpack.c.0.s8 %v7075
  %v7077 = vlaneseq
  %v7078 = vshrl.u32 %v7077, 7
  %v7079 = vsub.s32 %v7076, %v7078
  %v7080 = vrot.slane %v6938, %v7079
  %v7081 = vcombine.high %v7080, %v7080
  %v7083 = vunpack.c.l.s4 1966171168
  %v7084 = vunpack.c.0.s8 %v7083
  %v7085 = vlaneseq
  %v7086 = vshrl.u32 %v7085, 7
  %v7087 = vsub.s32 %v7084, %v7086
  %v7088 = vrot.slane %v7080, %v7087
  %v7090 = vunpack.c.l.s4 1966171168
  %v7091 = vunpack.c.0.s8 %v7090
  %v7092 = vlaneseq
  %v7093 = vshrl.u32 %v7092, 7
  %v7094 = vsub.s32 %v7091, %v7093
  %v7095 = vrot.slane %v7081, %v7094
  %v7096 = vcombine.high %v7088, %v7088
  %v7097 = vcombine.high %v7095, %v7095
  %v7099 = vunpack.c.l.s4 1966171168
  %v7100 = vunpack.c.0.s8 %v7099
  %v7101 = vlaneseq
  %v7102 = vshrl.u32 %v7101, 7
  %v7103 = vsub.s32 %v7100, %v7102
  %v7104 = vrot.slane %v6939, %v7103
  %v7106 = vunpack.c.l.s4 1966171168
  %v7107 = vunpack.c.0.s8 %v7106
  %v7108 = vlaneseq
  %v7109 = vshrl.u32 %v7108, 7
  %v7110 = vsub.s32 %v7107, %v7109
  %v7111 = vrot.slane %v7104, %v7110
  %v7113 = vunpack.c.l.s4 1966171168
  %v7114 = vunpack.c.0.s8 %v7113
  %v7115 = vlaneseq
  %v7116 = vshrl.u32 %v7115, 7
  %v7117 = vsub.s32 %v7114, %v7116
  %v7118 = vrot.slane %v6940, %v7117
  %v7119 = vcombine.high %v7118, %v7118
  %v7121 = vunpack.c.l.s4 1966171168
  %v7122 = vunpack.c.0.s8 %v7121
  %v7123 = vlaneseq
  %v7124 = vshrl.u32 %v7123, 7
  %v7125 = vsub.s32 %v7122, %v7124
  %v7126 = vrot.slane %v7118, %v7125
  %v7128 = vunpack.c.l.s4 1966171168
  %v7129 = vunpack.c.0.s8 %v7128
  %v7130 = vlaneseq
  %v7131 = vshrl.u32 %v7130, 7
  %v7132 = vsub.s32 %v7129, %v7131
  %v7133 = vrot.slane %v7119, %v7132
  %v7134 = vcombine.high %v7126, %v7126
  %v7135 = vcombine.high %v7133, %v7133
  %v7137 = vunpack.c.l.s4 1966171168
  %v7138 = vunpack.c.0.s8 %v7137
  %v7139 = vlaneseq
  %v7140 = vshrl.u32 %v7139, 7
  %v7141 = vsub.s32 %v7138, %v7140
  %v7142 = vrot.slane %v6941, %v7141
  %v7144 = vunpack.c.l.s4 1966171168
  %v7145 = vunpack.c.0.s8 %v7144
  %v7146 = vlaneseq
  %v7147 = vshrl.u32 %v7146, 7
  %v7148 = vsub.s32 %v7145, %v7147
  %v7149 = vrot.slane %v7142, %v7148
  %v7151 = vunpack.c.l.s4 1966171168
  %v7152 = vunpack.c.0.s8 %v7151
  %v7153 = vlaneseq
  %v7154 = vshrl.u32 %v7153, 7
  %v7155 = vsub.s32 %v7152, %v7154
  %v7156 = vrot.slane %v6942, %v7155
  %v7157 = vcombine.high %v7156, %v7156
  %v7159 = vunpack.c.l.s4 1966171168
  %v7160 = vunpack.c.0.s8 %v7159
  %v7161 = vlaneseq
  %v7162 = vshrl.u32 %v7161, 7
  %v7163 = vsub.s32 %v7160, %v7162
  %v7164 = vrot.slane %v7156, %v7163
  %v7166 = vunpack.c.l.s4 1966171168
  %v7167 = vunpack.c.0.s8 %v7166
  %v7168 = vlaneseq
  %v7169 = vshrl.u32 %v7168, 7
  %v7170 = vsub.s32 %v7167, %v7169
  %v7171 = vrot.slane %v7157, %v7170
  %v7172 = vcombine.high %v7164, %v7164
  %v7173 = vcombine.high %v7171, %v7171
  %v7175 = vunpack.c.l.s4 1966171168
  %v7176 = vunpack.c.0.s8 %v7175
  %v7177 = vlaneseq
  %v7178 = vshrl.u32 %v7177, 7
  %v7179 = vsub.s32 %v7176, %v7178
  %v7180 = vrot.slane %v6943, %v7179
  %v7182 = vunpack.c.l.s4 1966171168
  %v7183 = vunpack.c.0.s8 %v7182
  %v7184 = vlaneseq
  %v7185 = vshrl.u32 %v7184, 7
  %v7186 = vsub.s32 %v7183, %v7185
  %v7187 = vrot.slane %v7180, %v7186
  %v7189 = vunpack.c.l.s4 1966171168
  %v7190 = vunpack.c.0.s8 %v7189
  %v7191 = vlaneseq
  %v7192 = vshrl.u32 %v7191, 7
  %v7193 = vsub.s32 %v7190, %v7192
  %v7194 = vrot.slane %v6944, %v7193
  %v7195 = vcombine.high %v7194, %v7194
  %v7197 = vunpack.c.l.s4 1966171168
  %v7198 = vunpack.c.0.s8 %v7197
  %v7199 = vlaneseq
  %v7200 = vshrl.u32 %v7199, 7
  %v7201 = vsub.s32 %v7198, %v7200
  %v7202 = vrot.slane %v7194, %v7201
  %v7204 = vunpack.c.l.s4 1966171168
  %v7205 = vunpack.c.0.s8 %v7204
  %v7206 = vlaneseq
  %v7207 = vshrl.u32 %v7206, 7
  %v7208 = vsub.s32 %v7205, %v7207
  %v7209 = vrot.slane %v7195, %v7208
  %v7210 = vcombine.high %v7202, %v7202
  %v7211 = vcombine.high %v7209, %v7209
  %v7213 = vunpack.c.l.s4 1966171168
  %v7214 = vunpack.c.0.s8 %v7213
  %v7215 = vlaneseq
  %v7216 = vshrl.u32 %v7215, 7
  %v7217 = vsub.s32 %v7214, %v7216
  %v7218 = vrot.slane %v6945, %v7217
  %v7220 = vunpack.c.l.s4 1966171168
  %v7221 = vunpack.c.0.s8 %v7220
  %v7222 = vlaneseq
  %v7223 = vshrl.u32 %v7222, 7
  %v7224 = vsub.s32 %v7221, %v7223
  %v7225 = vrot.slane %v7218, %v7224
  %v7227 = vunpack.c.l.s4 1966171168
  %v7228 = vunpack.c.0.s8 %v7227
  %v7229 = vlaneseq
  %v7230 = vshrl.u32 %v7229, 7
  %v7231 = vsub.s32 %v7228, %v7230
  %v7232 = vrot.slane %v6946, %v7231
  %v7233 = vcombine.high %v7232, %v7232
  %v7235 = vunpack.c.l.s4 1966171168
  %v7236 = vunpack.c.0.s8 %v7235
  %v7237 = vlaneseq
  %v7238 = vshrl.u32 %v7237, 7
  %v7239 = vsub.s32 %v7236, %v7238
  %v7240 = vrot.slane %v7232, %v7239
  %v7242 = vunpack.c.l.s4 1966171168
  %v7243 = vunpack.c.0.s8 %v7242
  %v7244 = vlaneseq
  %v7245 = vshrl.u32 %v7244, 7
  %v7246 = vsub.s32 %v7243, %v7245
  %v7247 = vrot.slane %v7233, %v7246
  %v7248 = vcombine.high %v7240, %v7240
  %v7249 = vcombine.high %v7247, %v7247
  %v7251 = vunpack.c.l.s4 1966171168
  %v7252 = vunpack.c.0.s8 %v7251
  %v7253 = vlaneseq
  %v7254 = vshrl.u32 %v7253, 7
  %v7255 = vsub.s32 %v7252, %v7254
  %v7256 = vrot.slane %v6947, %v7255
  %v7258 = vunpack.c.l.s4 1966171168
  %v7259 = vunpack.c.0.s8 %v7258
  %v7260 = vlaneseq
  %v7261 = vshrl.u32 %v7260, 7
  %v7262 = vsub.s32 %v7259, %v7261
  %v7263 = vrot.slane %v7256, %v7262
  %v7265 = vunpack.c.l.s4 1966171168
  %v7266 = vunpack.c.0.s8 %v7265
  %v7267 = vlaneseq
  %v7268 = vshrl.u32 %v7267, 7
  %v7269 = vsub.s32 %v7266, %v7268
  %v7270 = vrot.slane %v6948, %v7269
  %v7271 = vcombine.high %v7270, %v7270
  %v7273 = vunpack.c.l.s4 1966171168
  %v7274 = vunpack.c.0.s8 %v7273
  %v7275 = vlaneseq
  %v7276 = vshrl.u32 %v7275, 7
  %v7277 = vsub.s32 %v7274, %v7276
  %v7278 = vrot.slane %v7270, %v7277
  %v7280 = vunpack.c.l.s4 1966171168
  %v7281 = vunpack.c.0.s8 %v7280
  %v7282 = vlaneseq
  %v7283 = vshrl.u32 %v7282, 7
  %v7284 = vsub.s32 %v7281, %v7283
  %v7285 = vrot.slane %v7271, %v7284
  %v7286 = vcombine.high %v7278, %v7278
  %v7287 = vcombine.high %v7285, %v7285
  %v7289 = vunpack.c.l.s4 1966171168
  %v7290 = vunpack.c.0.s8 %v7289
  %v7291 = vlaneseq
  %v7292 = vshrl.u32 %v7291, 7
  %v7293 = vsub.s32 %v7290, %v7292
  %v7294 = vrot.slane %v6949, %v7293
  %v7296 = vunpack.c.l.s4 1966171168
  %v7297 = vunpack.c.0.s8 %v7296
  %v7298 = vlaneseq
  %v7299 = vshrl.u32 %v7298, 7
  %v7300 = vsub.s32 %v7297, %v7299
  %v7301 = vrot.slane %v7294, %v7300
  %v7303 = vunpack.c.l.s4 1966171168
  %v7304 = vunpack.c.0.s8 %v7303
  %v7305 = vlaneseq
  %v7306 = vshrl.u32 %v7305, 7
  %v7307 = vsub.s32 %v7304, %v7306
  %v7308 = vrot.slane %v6950, %v7307
  %v7309 = vcombine.high %v7308, %v7308
  %v7311 = vunpack.c.l.s4 1966171168
  %v7312 = vunpack.c.0.s8 %v7311
  %v7313 = vlaneseq
  %v7314 = vshrl.u32 %v7313, 7
  %v7315 = vsub.s32 %v7312, %v7314
  %v7316 = vrot.slane %v7308, %v7315
  %v7318 = vunpack.c.l.s4 1966171168
  %v7319 = vunpack.c.0.s8 %v7318
  %v7320 = vlaneseq
  %v7321 = vshrl.u32 %v7320, 7
  %v7322 = vsub.s32 %v7319, %v7321
  %v7323 = vrot.slane %v7309, %v7322
  %v7324 = vcombine.high %v7316, %v7316
  %v7325 = vcombine.high %v7323, %v7323
  %v7327 = vunpack.c.l.s4 1966171168
  %v7328 = vunpack.c.0.s8 %v7327
  %v7329 = vlaneseq
  %v7330 = vshrl.u32 %v7329, 7
  %v7331 = vsub.s32 %v7328, %v7330
  %v7332 = vrot.slane %v6951, %v7331
  %v7334 = vunpack.c.l.s4 1966171168
  %v7335 = vunpack.c.0.s8 %v7334
  %v7336 = vlaneseq
  %v7337 = vshrl.u32 %v7336, 7
  %v7338 = vsub.s32 %v7335, %v7337
  %v7339 = vrot.slane %v7332, %v7338
  %v7341 = vunpack.c.l.s4 1966171168
  %v7342 = vunpack.c.0.s8 %v7341
  %v7343 = vlaneseq
  %v7344 = vshrl.u32 %v7343, 7
  %v7345 = vsub.s32 %v7342, %v7344
  %v7346 = vrot.slane %v6952, %v7345
  %v7347 = vcombine.high %v7346, %v7346
  %v7349 = vunpack.c.l.s4 1966171168
  %v7350 = vunpack.c.0.s8 %v7349
  %v7351 = vlaneseq
  %v7352 = vshrl.u32 %v7351, 7
  %v7353 = vsub.s32 %v7350, %v7352
  %v7354 = vrot.slane %v7346, %v7353
  %v7356 = vunpack.c.l.s4 1966171168
  %v7357 = vunpack.c.0.s8 %v7356
  %v7358 = vlaneseq
  %v7359 = vshrl.u32 %v7358, 7
  %v7360 = vsub.s32 %v7357, %v7359
  %v7361 = vrot.slane %v7347, %v7360
  %v7362 = vcombine.high %v7354, %v7354
  %v7363 = vcombine.high %v7361, %v7361
  %v7365 = vunpack.c.l.s4 1966171168
  %v7366 = vunpack.c.0.s8 %v7365
  %v7367 = vlaneseq
  %v7368 = vshrl.u32 %v7367, 7
  %v7369 = vsub.s32 %v7366, %v7368
  %v7370 = vrot.slane %v6953, %v7369
  %v7372 = vunpack.c.l.s4 1966171168
  %v7373 = vunpack.c.0.s8 %v7372
  %v7374 = vlaneseq
  %v7375 = vshrl.u32 %v7374, 7
  %v7376 = vsub.s32 %v7373, %v7375
  %v7377 = vrot.slane %v7370, %v7376
  %v7379 = vunpack.c.l.s4 1966171168
  %v7380 = vunpack.c.0.s8 %v7379
  %v7381 = vlaneseq
  %v7382 = vshrl.u32 %v7381, 7
  %v7383 = vsub.s32 %v7380, %v7382
  %v7384 = vrot.slane %v6954, %v7383
  %v7385 = vcombine.high %v7384, %v7384
  %v7387 = vunpack.c.l.s4 1966171168
  %v7388 = vunpack.c.0.s8 %v7387
  %v7389 = vlaneseq
  %v7390 = vshrl.u32 %v7389, 7
  %v7391 = vsub.s32 %v7388, %v7390
  %v7392 = vrot.slane %v7384, %v7391
  %v7394 = vunpack.c.l.s4 1966171168
  %v7395 = vunpack.c.0.s8 %v7394
  %v7396 = vlaneseq
  %v7397 = vshrl.u32 %v7396, 7
  %v7398 = vsub.s32 %v7395, %v7397
  %v7399 = vrot.slane %v7385, %v7398
  %v7400 = vcombine.high %v7392, %v7392
  %v7401 = vcombine.high %v7399, %v7399
  %v7403 = vunpack.c.l.s4 1966171168
  %v7404 = vunpack.c.0.s8 %v7403
  %v7405 = vlaneseq
  %v7406 = vshrl.u32 %v7405, 7
  %v7407 = vsub.s32 %v7404, %v7406
  %v7408 = vrot.slane %v6955, %v7407
  %v7410 = vunpack.c.l.s4 1966171168
  %v7411 = vunpack.c.0.s8 %v7410
  %v7412 = vlaneseq
  %v7413 = vshrl.u32 %v7412, 7
  %v7414 = vsub.s32 %v7411, %v7413
  %v7415 = vrot.slane %v7408, %v7414
  %v7417 = vunpack.c.l.s4 1966171168
  %v7418 = vunpack.c.0.s8 %v7417
  %v7419 = vlaneseq
  %v7420 = vshrl.u32 %v7419, 7
  %v7421 = vsub.s32 %v7418, %v7420
  %v7422 = vrot.slane %v6956, %v7421
  %v7423 = vcombine.high %v7422, %v7422
  %v7425 = vunpack.c.l.s4 1966171168
  %v7426 = vunpack.c.0.s8 %v7425
  %v7427 = vlaneseq
  %v7428 = vshrl.u32 %v7427, 7
  %v7429 = vsub.s32 %v7426, %v7428
  %v7430 = vrot.slane %v7422, %v7429
  %v7432 = vunpack.c.l.s4 1966171168
  %v7433 = vunpack.c.0.s8 %v7432
  %v7434 = vlaneseq
  %v7435 = vshrl.u32 %v7434, 7
  %v7436 = vsub.s32 %v7433, %v7435
  %v7437 = vrot.slane %v7423, %v7436
  %v7438 = vcombine.high %v7430, %v7430
  %v7439 = vcombine.high %v7437, %v7437
  %v7441 = vunpack.c.l.s4 1966171168
  %v7442 = vunpack.c.0.s8 %v7441
  %v7443 = vlaneseq
  %v7444 = vshrl.u32 %v7443, 7
  %v7445 = vsub.s32 %v7442, %v7444
  %v7446 = vrot.slane %v6957, %v7445
  %v7448 = vunpack.c.l.s4 1966171168
  %v7449 = vunpack.c.0.s8 %v7448
  %v7450 = vlaneseq
  %v7451 = vshrl.u32 %v7450, 7
  %v7452 = vsub.s32 %v7449, %v7451
  %v7453 = vrot.slane %v7446, %v7452
  %v7455 = vunpack.c.l.s4 1966171168
  %v7456 = vunpack.c.0.s8 %v7455
  %v7457 = vlaneseq
  %v7458 = vshrl.u32 %v7457, 7
  %v7459 = vsub.s32 %v7456, %v7458
  %v7460 = vrot.slane %v6958, %v7459
  %v7461 = vcombine.high %v7460, %v7460
  %v7463 = vunpack.c.l.s4 1966171168
  %v7464 = vunpack.c.0.s8 %v7463
  %v7465 = vlaneseq
  %v7466 = vshrl.u32 %v7465, 7
  %v7467 = vsub.s32 %v7464, %v7466
  %v7468 = vrot.slane %v7460, %v7467
  %v7470 = vunpack.c.l.s4 1966171168
  %v7471 = vunpack.c.0.s8 %v7470
  %v7472 = vlaneseq
  %v7473 = vshrl.u32 %v7472, 7
  %v7474 = vsub.s32 %v7471, %v7473
  %v7475 = vrot.slane %v7461, %v7474
  %v7476 = vcombine.high %v7468, %v7468
  %v7477 = vcombine.high %v7475, %v7475
  %v7479 = vunpack.c.l.s4 1966171168
  %v7480 = vunpack.c.0.s8 %v7479
  %v7481 = vlaneseq
  %v7482 = vshrl.u32 %v7481, 7
  %v7483 = vsub.s32 %v7480, %v7482
  %v7484 = vrot.slane %v6959, %v7483
  %v7486 = vunpack.c.l.s4 1966171168
  %v7487 = vunpack.c.0.s8 %v7486
  %v7488 = vlaneseq
  %v7489 = vshrl.u32 %v7488, 7
  %v7490 = vsub.s32 %v7487, %v7489
  %v7491 = vrot.slane %v7484, %v7490
  %v7493 = vunpack.c.l.s4 1966171168
  %v7494 = vunpack.c.0.s8 %v7493
  %v7495 = vlaneseq
  %v7496 = vshrl.u32 %v7495, 7
  %v7497 = vsub.s32 %v7494, %v7496
  %v7498 = vrot.slane %v6960, %v7497
  %v7499 = vcombine.high %v7498, %v7498
  %v7501 = vunpack.c.l.s4 1966171168
  %v7502 = vunpack.c.0.s8 %v7501
  %v7503 = vlaneseq
  %v7504 = vshrl.u32 %v7503, 7
  %v7505 = vsub.s32 %v7502, %v7504
  %v7506 = vrot.slane %v7498, %v7505
  %v7508 = vunpack.c.l.s4 1966171168
  %v7509 = vunpack.c.0.s8 %v7508
  %v7510 = vlaneseq
  %v7511 = vshrl.u32 %v7510, 7
  %v7512 = vsub.s32 %v7509, %v7511
  %v7513 = vrot.slane %v7499, %v7512
  %v7514 = vcombine.high %v7506, %v7506
  %v7515 = vcombine.high %v7513, %v7513
  %v7517 = vunpack.c.l.s4 1966171168
  %v7518 = vunpack.c.0.s8 %v7517
  %v7519 = vlaneseq
  %v7520 = vshrl.u32 %v7519, 7
  %v7521 = vsub.s32 %v7518, %v7520
  %v7522 = vrot.slane %v6961, %v7521
  %v7524 = vunpack.c.l.s4 1966171168
  %v7525 = vunpack.c.0.s8 %v7524
  %v7526 = vlaneseq
  %v7527 = vshrl.u32 %v7526, 7
  %v7528 = vsub.s32 %v7525, %v7527
  %v7529 = vrot.slane %v7522, %v7528
  %v7531 = vunpack.c.l.s4 1966171168
  %v7532 = vunpack.c.0.s8 %v7531
  %v7533 = vlaneseq
  %v7534 = vshrl.u32 %v7533, 7
  %v7535 = vsub.s32 %v7532, %v7534
  %v7536 = vrot.slane %v6962, %v7535
  %v7537 = vcombine.high %v7536, %v7536
  %v7539 = vunpack.c.l.s4 1966171168
  %v7540 = vunpack.c.0.s8 %v7539
  %v7541 = vlaneseq
  %v7542 = vshrl.u32 %v7541, 7
  %v7543 = vsub.s32 %v7540, %v7542
  %v7544 = vrot.slane %v7536, %v7543
  %v7546 = vunpack.c.l.s4 1966171168
  %v7547 = vunpack.c.0.s8 %v7546
  %v7548 = vlaneseq
  %v7549 = vshrl.u32 %v7548, 7
  %v7550 = vsub.s32 %v7547, %v7549
  %v7551 = vrot.slane %v7537, %v7550
  %v7552 = vcombine.high %v7544, %v7544
  %v7553 = vcombine.high %v7551, %v7551
  %v7555 = vunpack.c.l.s4 1966171168
  %v7556 = vunpack.c.0.s8 %v7555
  %v7557 = vlaneseq
  %v7558 = vshrl.u32 %v7557, 7
  %v7559 = vsub.s32 %v7556, %v7558
  %v7560 = vrot.slane %v6963, %v7559
  %v7562 = vunpack.c.l.s4 1966171168
  %v7563 = vunpack.c.0.s8 %v7562
  %v7564 = vlaneseq
  %v7565 = vshrl.u32 %v7564, 7
  %v7566 = vsub.s32 %v7563, %v7565
  %v7567 = vrot.slane %v7560, %v7566
  %v7569 = vunpack.c.l.s4 1966171168
  %v7570 = vunpack.c.0.s8 %v7569
  %v7571 = vlaneseq
  %v7572 = vshrl.u32 %v7571, 7
  %v7573 = vsub.s32 %v7570, %v7572
  %v7574 = vrot.slane %v6964, %v7573
  %v7575 = vcombine.high %v7574, %v7574
  %v7577 = vunpack.c.l.s4 1966171168
  %v7578 = vunpack.c.0.s8 %v7577
  %v7579 = vlaneseq
  %v7580 = vshrl.u32 %v7579, 7
  %v7581 = vsub.s32 %v7578, %v7580
  %v7582 = vrot.slane %v7574, %v7581
  %v7584 = vunpack.c.l.s4 1966171168
  %v7585 = vunpack.c.0.s8 %v7584
  %v7586 = vlaneseq
  %v7587 = vshrl.u32 %v7586, 7
  %v7588 = vsub.s32 %v7585, %v7587
  %v7589 = vrot.slane %v7575, %v7588
  %v7590 = vcombine.high %v7582, %v7582
  %v7591 = vcombine.high %v7589, %v7589
  %v7593 = vunpack.c.l.s4 1966171168
  %v7594 = vunpack.c.0.s8 %v7593
  %v7595 = vlaneseq
  %v7596 = vshrl.u32 %v7595, 7
  %v7597 = vsub.s32 %v7594, %v7596
  %v7598 = vrot.slane %v6965, %v7597
  %v7600 = vunpack.c.l.s4 1966171168
  %v7601 = vunpack.c.0.s8 %v7600
  %v7602 = vlaneseq
  %v7603 = vshrl.u32 %v7602, 7
  %v7604 = vsub.s32 %v7601, %v7603
  %v7605 = vrot.slane %v7598, %v7604
  %s7606 = scalar_lea.vmem %s6, 24
  %v7607 = vld [vmem:[%s7606] sm:$0xf]
  %v7608 = vcombine.low %v7012, %v7019
  %v7609 = vcombine.low %v7020, %v7021
  %v7610 = vcombine.low %v7035, %v7050
  %v7611 = vcombine.low %v7057, %v7058
  %v7613 = vunpack.c.l.s4 1966171168
  %v7614 = vunpack.c.0.s8 %v7613
  %v7615 = vlaneseq
  %v7616 = vshrl.u32 %v7615, 7
  %v7617 = vsub.s32 %v7614, %v7616
  %v7618 = vrot.slane %v7608, %v7617
  %v7620 = vunpack.c.l.s4 1966171168
  %v7621 = vunpack.c.0.s8 %v7620
  %v7622 = vlaneseq
  %v7623 = vshrl.u32 %v7622, 7
  %v7624 = vsub.s32 %v7621, %v7623
  %v7625 = vrot.slane %v7609, %v7624
  %v7627 = vunpack.c.l.s4 1966171168
  %v7628 = vunpack.c.0.s8 %v7627
  %v7629 = vlaneseq
  %v7630 = vshrl.u32 %v7629, 7
  %v7631 = vsub.s32 %v7628, %v7630
  %v7632 = vrot.slane %v7610, %v7631
  %v7634 = vunpack.c.l.s4 1966171168
  %v7635 = vunpack.c.0.s8 %v7634
  %v7636 = vlaneseq
  %v7637 = vshrl.u32 %v7636, 7
  %v7638 = vsub.s32 %v7635, %v7637
  %v7639 = vrot.slane %v7611, %v7638
  %v7640 = vcombine.low %v7618, %v7625
  %v7641 = vcombine.low %v7632, %v7639
  %v7643 = vunpack.c.l.s4 1966171168
  %v7644 = vunpack.c.0.s8 %v7643
  %v7645 = vlaneseq
  %v7646 = vshrl.u32 %v7645, 7
  %v7647 = vsub.s32 %v7644, %v7646
  %v7648 = vrot.slane %v7640, %v7647
  %v7650 = vunpack.c.l.s4 1966171168
  %v7651 = vunpack.c.0.s8 %v7650
  %v7652 = vlaneseq
  %v7653 = vshrl.u32 %v7652, 7
  %v7654 = vsub.s32 %v7651, %v7653
  %v7655 = vrot.slane %v7641, %v7654
  %v7656 = vcombine.low %v7648, %v7655
  %v7657 = vcombine.low %v7059, %v7073
  %v7658 = vcombine.low %v7088, %v7095
  %v7659 = vcombine.low %v7096, %v7097
  %v7660 = vcombine.low %v7111, %v7126
  %v7662 = vunpack.c.l.s4 1966171168
  %v7663 = vunpack.c.0.s8 %v7662
  %v7664 = vlaneseq
  %v7665 = vshrl.u32 %v7664, 7
  %v7666 = vsub.s32 %v7663, %v7665
  %v7667 = vrot.slane %v7657, %v7666
  %v7669 = vunpack.c.l.s4 1966171168
  %v7670 = vunpack.c.0.s8 %v7669
  %v7671 = vlaneseq
  %v7672 = vshrl.u32 %v7671, 7
  %v7673 = vsub.s32 %v7670, %v7672
  %v7674 = vrot.slane %v7658, %v7673
  %v7676 = vunpack.c.l.s4 1966171168
  %v7677 = vunpack.c.0.s8 %v7676
  %v7678 = vlaneseq
  %v7679 = vshrl.u32 %v7678, 7
  %v7680 = vsub.s32 %v7677, %v7679
  %v7681 = vrot.slane %v7659, %v7680
  %v7683 = vunpack.c.l.s4 1966171168
  %v7684 = vunpack.c.0.s8 %v7683
  %v7685 = vlaneseq
  %v7686 = vshrl.u32 %v7685, 7
  %v7687 = vsub.s32 %v7684, %v7686
  %v7688 = vrot.slane %v7660, %v7687
  %v7689 = vcombine.low %v7667, %v7674
  %v7690 = vcombine.low %v7681, %v7688
  %v7692 = vunpack.c.l.s4 1966171168
  %v7693 = vunpack.c.0.s8 %v7692
  %v7694 = vlaneseq
  %v7695 = vshrl.u32 %v7694, 7
  %v7696 = vsub.s32 %v7693, %v7695
  %v7697 = vrot.slane %v7689, %v7696
  %v7699 = vunpack.c.l.s4 1966171168
  %v7700 = vunpack.c.0.s8 %v7699
  %v7701 = vlaneseq
  %v7702 = vshrl.u32 %v7701, 7
  %v7703 = vsub.s32 %v7700, %v7702
  %v7704 = vrot.slane %v7690, %v7703
  %v7705 = vcombine.low %v7697, %v7704
  %v7706 = vcombine.low %v7133, %v7134
  %v7707 = vcombine.low %v7135, %v7149
  %v7708 = vcombine.low %v7164, %v7171
  %v7709 = vcombine.low %v7172, %v7173
  %v7711 = vunpack.c.l.s4 1966171168
  %v7712 = vunpack.c.0.s8 %v7711
  %v7713 = vlaneseq
  %v7714 = vshrl.u32 %v7713, 7
  %v7715 = vsub.s32 %v7712, %v7714
  %v7716 = vrot.slane %v7706, %v7715
  %v7718 = vunpack.c.l.s4 1966171168
  %v7719 = vunpack.c.0.s8 %v7718
  %v7720 = vlaneseq
  %v7721 = vshrl.u32 %v7720, 7
  %v7722 = vsub.s32 %v7719, %v7721
  %v7723 = vrot.slane %v7707, %v7722
  %v7725 = vunpack.c.l.s4 1966171168
  %v7726 = vunpack.c.0.s8 %v7725
  %v7727 = vlaneseq
  %v7728 = vshrl.u32 %v7727, 7
  %v7729 = vsub.s32 %v7726, %v7728
  %v7730 = vrot.slane %v7708, %v7729
  %v7732 = vunpack.c.l.s4 1966171168
  %v7733 = vunpack.c.0.s8 %v7732
  %v7734 = vlaneseq
  %v7735 = vshrl.u32 %v7734, 7
  %v7736 = vsub.s32 %v7733, %v7735
  %v7737 = vrot.slane %v7709, %v7736
  %v7738 = vcombine.low %v7716, %v7723
  %v7739 = vcombine.low %v7730, %v7737
  %v7741 = vunpack.c.l.s4 1966171168
  %v7742 = vunpack.c.0.s8 %v7741
  %v7743 = vlaneseq
  %v7744 = vshrl.u32 %v7743, 7
  %v7745 = vsub.s32 %v7742, %v7744
  %v7746 = vrot.slane %v7738, %v7745
  %v7748 = vunpack.c.l.s4 1966171168
  %v7749 = vunpack.c.0.s8 %v7748
  %v7750 = vlaneseq
  %v7751 = vshrl.u32 %v7750, 7
  %v7752 = vsub.s32 %v7749, %v7751
  %v7753 = vrot.slane %v7739, %v7752
  %v7754 = vcombine.low %v7746, %v7753
  %v7755 = vcombine.low %v7187, %v7202
  %v7756 = vcombine.low %v7209, %v7210
  %v7757 = vcombine.low %v7211, %v7225
  %v7758 = vcombine.low %v7240, %v7247
  %v7760 = vunpack.c.l.s4 1966171168
  %v7761 = vunpack.c.0.s8 %v7760
  %v7762 = vlaneseq
  %v7763 = vshrl.u32 %v7762, 7
  %v7764 = vsub.s32 %v7761, %v7763
  %v7765 = vrot.slane %v7755, %v7764
  %v7767 = vunpack.c.l.s4 1966171168
  %v7768 = vunpack.c.0.s8 %v7767
  %v7769 = vlaneseq
  %v7770 = vshrl.u32 %v7769, 7
  %v7771 = vsub.s32 %v7768, %v7770
  %v7772 = vrot.slane %v7756, %v7771
  %v7774 = vunpack.c.l.s4 1966171168
  %v7775 = vunpack.c.0.s8 %v7774
  %v7776 = vlaneseq
  %v7777 = vshrl.u32 %v7776, 7
  %v7778 = vsub.s32 %v7775, %v7777
  %v7779 = vrot.slane %v7757, %v7778
  %v7781 = vunpack.c.l.s4 1966171168
  %v7782 = vunpack.c.0.s8 %v7781
  %v7783 = vlaneseq
  %v7784 = vshrl.u32 %v7783, 7
  %v7785 = vsub.s32 %v7782, %v7784
  %v7786 = vrot.slane %v7758, %v7785
  %v7787 = vcombine.low %v7765, %v7772
  %v7788 = vcombine.low %v7779, %v7786
  %v7790 = vunpack.c.l.s4 1966171168
  %v7791 = vunpack.c.0.s8 %v7790
  %v7792 = vlaneseq
  %v7793 = vshrl.u32 %v7792, 7
  %v7794 = vsub.s32 %v7791, %v7793
  %v7795 = vrot.slane %v7787, %v7794
  %v7797 = vunpack.c.l.s4 1966171168
  %v7798 = vunpack.c.0.s8 %v7797
  %v7799 = vlaneseq
  %v7800 = vshrl.u32 %v7799, 7
  %v7801 = vsub.s32 %v7798, %v7800
  %v7802 = vrot.slane %v7788, %v7801
  %v7803 = vcombine.low %v7795, %v7802
  %v7804 = vcombine.low %v7248, %v7249
  %v7805 = vcombine.low %v7263, %v7278
  %v7806 = vcombine.low %v7285, %v7286
  %v7807 = vcombine.low %v7287, %v7301
  %v7809 = vunpack.c.l.s4 1966171168
  %v7810 = vunpack.c.0.s8 %v7809
  %v7811 = vlaneseq
  %v7812 = vshrl.u32 %v7811, 7
  %v7813 = vsub.s32 %v7810, %v7812
  %v7814 = vrot.slane %v7804, %v7813
  %v7816 = vunpack.c.l.s4 1966171168
  %v7817 = vunpack.c.0.s8 %v7816
  %v7818 = vlaneseq
  %v7819 = vshrl.u32 %v7818, 7
  %v7820 = vsub.s32 %v7817, %v7819
  %v7821 = vrot.slane %v7805, %v7820
  %v7823 = vunpack.c.l.s4 1966171168
  %v7824 = vunpack.c.0.s8 %v7823
  %v7825 = vlaneseq
  %v7826 = vshrl.u32 %v7825, 7
  %v7827 = vsub.s32 %v7824, %v7826
  %v7828 = vrot.slane %v7806, %v7827
  %v7830 = vunpack.c.l.s4 1966171168
  %v7831 = vunpack.c.0.s8 %v7830
  %v7832 = vlaneseq
  %v7833 = vshrl.u32 %v7832, 7
  %v7834 = vsub.s32 %v7831, %v7833
  %v7835 = vrot.slane %v7807, %v7834
  %v7836 = vcombine.low %v7814, %v7821
  %v7837 = vcombine.low %v7828, %v7835
  %v7839 = vunpack.c.l.s4 1966171168
  %v7840 = vunpack.c.0.s8 %v7839
  %v7841 = vlaneseq
  %v7842 = vshrl.u32 %v7841, 7
  %v7843 = vsub.s32 %v7840, %v7842
  %v7844 = vrot.slane %v7836, %v7843
  %v7846 = vunpack.c.l.s4 1966171168
  %v7847 = vunpack.c.0.s8 %v7846
  %v7848 = vlaneseq
  %v7849 = vshrl.u32 %v7848, 7
  %v7850 = vsub.s32 %v7847, %v7849
  %v7851 = vrot.slane %v7837, %v7850
  %v7852 = vcombine.low %v7844, %v7851
  %v7853 = vcombine.low %v7316, %v7323
  %v7854 = vcombine.low %v7324, %v7325
  %v7855 = vcombine.low %v7339, %v7354
  %v7856 = vcombine.low %v7361, %v7362
  %v7858 = vunpack.c.l.s4 1966171168
  %v7859 = vunpack.c.0.s8 %v7858
  %v7860 = vlaneseq
  %v7861 = vshrl.u32 %v7860, 7
  %v7862 = vsub.s32 %v7859, %v7861
  %v7863 = vrot.slane %v7853, %v7862
  %v7865 = vunpack.c.l.s4 1966171168
  %v7866 = vunpack.c.0.s8 %v7865
  %v7867 = vlaneseq
  %v7868 = vshrl.u32 %v7867, 7
  %v7869 = vsub.s32 %v7866, %v7868
  %v7870 = vrot.slane %v7854, %v7869
  %v7872 = vunpack.c.l.s4 1966171168
  %v7873 = vunpack.c.0.s8 %v7872
  %v7874 = vlaneseq
  %v7875 = vshrl.u32 %v7874, 7
  %v7876 = vsub.s32 %v7873, %v7875
  %v7877 = vrot.slane %v7855, %v7876
  %v7879 = vunpack.c.l.s4 1966171168
  %v7880 = vunpack.c.0.s8 %v7879
  %v7881 = vlaneseq
  %v7882 = vshrl.u32 %v7881, 7
  %v7883 = vsub.s32 %v7880, %v7882
  %v7884 = vrot.slane %v7856, %v7883
  %v7885 = vcombine.low %v7863, %v7870
  %v7886 = vcombine.low %v7877, %v7884
  %v7888 = vunpack.c.l.s4 1966171168
  %v7889 = vunpack.c.0.s8 %v7888
  %v7890 = vlaneseq
  %v7891 = vshrl.u32 %v7890, 7
  %v7892 = vsub.s32 %v7889, %v7891
  %v7893 = vrot.slane %v7885, %v7892
  %v7895 = vunpack.c.l.s4 1966171168
  %v7896 = vunpack.c.0.s8 %v7895
  %v7897 = vlaneseq
  %v7898 = vshrl.u32 %v7897, 7
  %v7899 = vsub.s32 %v7896, %v7898
  %v7900 = vrot.slane %v7886, %v7899
  %v7901 = vcombine.low %v7893, %v7900
  %v7902 = vcombine.low %v7363, %v7377
  %v7903 = vcombine.low %v7392, %v7399
  %v7904 = vcombine.low %v7400, %v7401
  %v7905 = vcombine.low %v7415, %v7430
  %v7907 = vunpack.c.l.s4 1966171168
  %v7908 = vunpack.c.0.s8 %v7907
  %v7909 = vlaneseq
  %v7910 = vshrl.u32 %v7909, 7
  %v7911 = vsub.s32 %v7908, %v7910
  %v7912 = vrot.slane %v7902, %v7911
  %v7914 = vunpack.c.l.s4 1966171168
  %v7915 = vunpack.c.0.s8 %v7914
  %v7916 = vlaneseq
  %v7917 = vshrl.u32 %v7916, 7
  %v7918 = vsub.s32 %v7915, %v7917
  %v7919 = vrot.slane %v7903, %v7918
  %v7921 = vunpack.c.l.s4 1966171168
  %v7922 = vunpack.c.0.s8 %v7921
  %v7923 = vlaneseq
  %v7924 = vshrl.u32 %v7923, 7
  %v7925 = vsub.s32 %v7922, %v7924
  %v7926 = vrot.slane %v7904, %v7925
  %v7928 = vunpack.c.l.s4 1966171168
  %v7929 = vunpack.c.0.s8 %v7928
  %v7930 = vlaneseq
  %v7931 = vshrl.u32 %v7930, 7
  %v7932 = vsub.s32 %v7929, %v7931
  %v7933 = vrot.slane %v7905, %v7932
  %v7934 = vcombine.low %v7912, %v7919
  %v7935 = vcombine.low %v7926, %v7933
  %v7937 = vunpack.c.l.s4 1966171168
  %v7938 = vunpack.c.0.s8 %v7937
  %v7939 = vlaneseq
  %v7940 = vshrl.u32 %v7939, 7
  %v7941 = vsub.s32 %v7938, %v7940
  %v7942 = vrot.slane %v7934, %v7941
  %v7944 = vunpack.c.l.s4 1966171168
  %v7945 = vunpack.c.0.s8 %v7944
  %v7946 = vlaneseq
  %v7947 = vshrl.u32 %v7946, 7
  %v7948 = vsub.s32 %v7945, %v7947
  %v7949 = vrot.slane %v7935, %v7948
  %v7950 = vcombine.low %v7942, %v7949
  %v7951 = vcombine.low %v7437, %v7438
  %v7952 = vcombine.low %v7439, %v7453
  %v7953 = vcombine.low %v7468, %v7475
  %v7954 = vcombine.low %v7476, %v7477
  %v7956 = vunpack.c.l.s4 1966171168
  %v7957 = vunpack.c.0.s8 %v7956
  %v7958 = vlaneseq
  %v7959 = vshrl.u32 %v7958, 7
  %v7960 = vsub.s32 %v7957, %v7959
  %v7961 = vrot.slane %v7951, %v7960
  %v7963 = vunpack.c.l.s4 1966171168
  %v7964 = vunpack.c.0.s8 %v7963
  %v7965 = vlaneseq
  %v7966 = vshrl.u32 %v7965, 7
  %v7967 = vsub.s32 %v7964, %v7966
  %v7968 = vrot.slane %v7952, %v7967
  %v7970 = vunpack.c.l.s4 1966171168
  %v7971 = vunpack.c.0.s8 %v7970
  %v7972 = vlaneseq
  %v7973 = vshrl.u32 %v7972, 7
  %v7974 = vsub.s32 %v7971, %v7973
  %v7975 = vrot.slane %v7953, %v7974
  %v7977 = vunpack.c.l.s4 1966171168
  %v7978 = vunpack.c.0.s8 %v7977
  %v7979 = vlaneseq
  %v7980 = vshrl.u32 %v7979, 7
  %v7981 = vsub.s32 %v7978, %v7980
  %v7982 = vrot.slane %v7954, %v7981
  %v7983 = vcombine.low %v7961, %v7968
  %v7984 = vcombine.low %v7975, %v7982
  %v7986 = vunpack.c.l.s4 1966171168
  %v7987 = vunpack.c.0.s8 %v7986
  %v7988 = vlaneseq
  %v7989 = vshrl.u32 %v7988, 7
  %v7990 = vsub.s32 %v7987, %v7989
  %v7991 = vrot.slane %v7983, %v7990
  %v7993 = vunpack.c.l.s4 1966171168
  %v7994 = vunpack.c.0.s8 %v7993
  %v7995 = vlaneseq
  %v7996 = vshrl.u32 %v7995, 7
  %v7997 = vsub.s32 %v7994, %v7996
  %v7998 = vrot.slane %v7984, %v7997
  %v7999 = vcombine.low %v7991, %v7998
  %v8000 = vcombine.low %v7491, %v7506
  %v8001 = vcombine.low %v7513, %v7514
  %v8002 = vcombine.low %v7515, %v7529
  %v8003 = vcombine.low %v7544, %v7551
  %v8005 = vunpack.c.l.s4 1966171168
  %v8006 = vunpack.c.0.s8 %v8005
  %v8007 = vlaneseq
  %v8008 = vshrl.u32 %v8007, 7
  %v8009 = vsub.s32 %v8006, %v8008
  %v8010 = vrot.slane %v8000, %v8009
  %v8012 = vunpack.c.l.s4 1966171168
  %v8013 = vunpack.c.0.s8 %v8012
  %v8014 = vlaneseq
  %v8015 = vshrl.u32 %v8014, 7
  %v8016 = vsub.s32 %v8013, %v8015
  %v8017 = vrot.slane %v8001, %v8016
  %v8019 = vunpack.c.l.s4 1966171168
  %v8020 = vunpack.c.0.s8 %v8019
  %v8021 = vlaneseq
  %v8022 = vshrl.u32 %v8021, 7
  %v8023 = vsub.s32 %v8020, %v8022
  %v8024 = vrot.slane %v8002, %v8023
  %v8026 = vunpack.c.l.s4 1966171168
  %v8027 = vunpack.c.0.s8 %v8026
  %v8028 = vlaneseq
  %v8029 = vshrl.u32 %v8028, 7
  %v8030 = vsub.s32 %v8027, %v8029
  %v8031 = vrot.slane %v8003, %v8030
  %v8032 = vcombine.low %v8010, %v8017
  %v8033 = vcombine.low %v8024, %v8031
  %v8035 = vunpack.c.l.s4 1966171168
  %v8036 = vunpack.c.0.s8 %v8035
  %v8037 = vlaneseq
  %v8038 = vshrl.u32 %v8037, 7
  %v8039 = vsub.s32 %v8036, %v8038
  %v8040 = vrot.slane %v8032, %v8039
  %v8042 = vunpack.c.l.s4 1966171168
  %v8043 = vunpack.c.0.s8 %v8042
  %v8044 = vlaneseq
  %v8045 = vshrl.u32 %v8044, 7
  %v8046 = vsub.s32 %v8043, %v8045
  %v8047 = vrot.slane %v8033, %v8046
  %v8048 = vcombine.low %v8040, %v8047
  %v8049 = vcombine.low %v7552, %v7553
  %v8050 = vcombine.low %v7567, %v7582
  %v8051 = vcombine.low %v7589, %v7590
  %v8052 = vcombine.low %v7591, %v7605
  %v8054 = vunpack.c.l.s4 1966171168
  %v8055 = vunpack.c.0.s8 %v8054
  %v8056 = vlaneseq
  %v8057 = vshrl.u32 %v8056, 7
  %v8058 = vsub.s32 %v8055, %v8057
  %v8059 = vrot.slane %v8049, %v8058
  %v8061 = vunpack.c.l.s4 1966171168
  %v8062 = vunpack.c.0.s8 %v8061
  %v8063 = vlaneseq
  %v8064 = vshrl.u32 %v8063, 7
  %v8065 = vsub.s32 %v8062, %v8064
  %v8066 = vrot.slane %v8050, %v8065
  %v8068 = vunpack.c.l.s4 1966171168
  %v8069 = vunpack.c.0.s8 %v8068
  %v8070 = vlaneseq
  %v8071 = vshrl.u32 %v8070, 7
  %v8072 = vsub.s32 %v8069, %v8071
  %v8073 = vrot.slane %v8051, %v8072
  %v8075 = vunpack.c.l.s4 1966171168
  %v8076 = vunpack.c.0.s8 %v8075
  %v8077 = vlaneseq
  %v8078 = vshrl.u32 %v8077, 7
  %v8079 = vsub.s32 %v8076, %v8078
  %v8080 = vrot.slane %v8052, %v8079
  %v8081 = vcombine.low %v8059, %v8066
  %v8082 = vcombine.low %v8073, %v8080
  %v8084 = vunpack.c.l.s4 1966171168
  %v8085 = vunpack.c.0.s8 %v8084
  %v8086 = vlaneseq
  %v8087 = vshrl.u32 %v8086, 7
  %v8088 = vsub.s32 %v8085, %v8087
  %v8089 = vrot.slane %v8081, %v8088
  %v8091 = vunpack.c.l.s4 1966171168
  %v8092 = vunpack.c.0.s8 %v8091
  %v8093 = vlaneseq
  %v8094 = vshrl.u32 %v8093, 7
  %v8095 = vsub.s32 %v8092, %v8094
  %v8096 = vrot.slane %v8082, %v8095
  %v8097 = vcombine.low %v8089, %v8096
  %v8099 = vsel %vm1749, %v7656, 0
  %v8102 = vsel %vm1749, %v7705, 0
  %v8105 = vsel %vm1749, %v7754, 0
  %v8108 = vsel %vm1749, %v7803, 0
  %v8111 = vsel %vm1749, %v7852, 0
  %v8114 = vsel %vm1749, %v7901, 0
  %v8117 = vsel %vm1749, %v7950, 0
  %v8120 = vsel %vm1749, %v7999, 0
  %v8123 = vsel %vm1749, %v8048, 0
  %v8126 = vsel %vm1749, %v8097, 0
  %v8129 = vsel %vm1780, %v7607, 0
  %8131 = vmatprep.subr.bf16.mxu0 0
  %8132 = vmatpush1.bf16.msra.mxu0 %v8129
  %8133 = vmatprep.subr.bf16.mxu0 0
  %8134 = vmatpush1.bf16.msra.mxu0 0
  %8135 = vmatprep.subr.bf16.mxu0 0
  %8136 = vmatpush1.bf16.msra.mxu0 0
  %8137 = vmatprep.subr.bf16.mxu0 0
  %8138 = vmatpush1.bf16.msra.mxu0 0
  %8139 = vmatprep.subr.bf16.mxu0 0
  %8140 = vmatpush1.bf16.msra.mxu0 0
  %8141 = vmatprep.subr.bf16.mxu0 0
  %8142 = vmatpush1.bf16.msra.mxu0 0
  %8143 = vmatprep.subr.bf16.mxu0 0
  %8144 = vmatpush1.bf16.msra.mxu0 0
  %8145 = vmatprep.subr.bf16.mxu0 0
  %8146 = vmatpush1.bf16.msra.mxu0 0
  %8147 = vmatprep.subr.bf16.mxu0 0
  %8148 = vmatpush1.bf16.msra.mxu0 0
  %8149 = vmatprep.subr.bf16.mxu0 0
  %8150 = vmatpush1.bf16.msra.mxu0 0
  %8151 = vmatprep.subr.bf16.mxu0 0
  %8152 = vmatpush1.bf16.msra.mxu0 0
  %8153 = vmatprep.subr.bf16.mxu0 0
  %8154 = vmatpush1.bf16.msra.mxu0 0
  %8155 = vmatprep.subr.bf16.mxu0 0
  %8156 = vmatpush1.bf16.msra.mxu0 0
  %8157 = vmatprep.subr.bf16.mxu0 0
  %8158 = vmatpush1.bf16.msra.mxu0 0
  %8159 = vmatprep.subr.bf16.mxu0 0
  %8160 = vmatpush1.bf16.msra.mxu0 0
  %8161 = vmatprep.subr.bf16.mxu0 0
  %8162 = vmatpush1.bf16.msra.mxu0 0
  %8163 = vmatprep.mubr.bf16.mxu0 0
  %8164 = vmatmul.mubr.bf16.gmra.mrb[0].mxu0 %v8099
  %v8165 = vpop.f32.mrb[0].mxu0
  %v8166 = vadd.f32 0.0, %v8165
  %v8167 = vpop.f32.mrb[0].mxu0
  %v8168 = vpop.f32.mrb[0].mxu0
  %v8169 = vadd.f32 0.0, %v8168
  %v8170 = vpop.f32.mrb[0].mxu0
  %8171 = vmatprep.mubr.bf16.mxu0 0
  %8172 = vmatmul.mubr.bf16.gmra.mrb[0].mxu0 %v8102
  %v8173 = vpop.f32.mrb[0].mxu0
  %v8174 = vadd.f32 0.0, %v8173
  %v8175 = vpop.f32.mrb[0].mxu0
  %v8176 = vpop.f32.mrb[0].mxu0
  %v8177 = vadd.f32 0.0, %v8176
  %v8178 = vpop.f32.mrb[0].mxu0
  %8179 = vmatprep.mubr.bf16.mxu0 0
  %8180 = vmatmul.mubr.bf16.gmra.mrb[0].mxu0 %v8105
  %v8181 = vpop.f32.mrb[0].mxu0
  %v8182 = vadd.f32 0.0, %v8181
  %v8183 = vpop.f32.mrb[0].mxu0
  %v8184 = vpop.f32.mrb[0].mxu0
  %v8185 = vadd.f32 0.0, %v8184
  %v8186 = vpop.f32.mrb[0].mxu0
  %8187 = vmatprep.mubr.bf16.mxu0 0
  %8188 = vmatmul.mubr.bf16.gmra.mrb[0].mxu0 %v8108
  %v8189 = vpop.f32.mrb[0].mxu0
  %v8190 = vadd.f32 0.0, %v8189
  %v8191 = vpop.f32.mrb[0].mxu0
  %v8192 = vpop.f32.mrb[0].mxu0
  %v8193 = vadd.f32 0.0, %v8192
  %v8194 = vpop.f32.mrb[0].mxu0
  %8195 = vmatprep.mubr.bf16.mxu0 0
  %8196 = vmatmul.mubr.bf16.gmra.mrb[0].mxu0 %v8111
  %v8197 = vpop.f32.mrb[0].mxu0
  %v8198 = vadd.f32 0.0, %v8197
  %v8199 = vpop.f32.mrb[0].mxu0
  %v8200 = vpop.f32.mrb[0].mxu0
  %v8201 = vadd.f32 0.0, %v8200
  %v8202 = vpop.f32.mrb[0].mxu0
  %8203 = vmatprep.mubr.bf16.mxu0 0
  %8204 = vmatmul.mubr.bf16.gmra.mrb[0].mxu0 %v8114
  %v8205 = vpop.f32.mrb[0].mxu0
  %v8206 = vadd.f32 0.0, %v8205
  %v8207 = vpop.f32.mrb[0].mxu0
  %v8208 = vpop.f32.mrb[0].mxu0
  %v8209 = vadd.f32 0.0, %v8208
  %v8210 = vpop.f32.mrb[0].mxu0
  %8211 = vmatprep.mubr.bf16.mxu0 0
  %8212 = vmatmul.mubr.bf16.gmra.mrb[0].mxu0 %v8117
  %v8213 = vpop.f32.mrb[0].mxu0
  %v8214 = vadd.f32 0.0, %v8213
  %v8215 = vpop.f32.mrb[0].mxu0
  %v8216 = vpop.f32.mrb[0].mxu0
  %v8217 = vadd.f32 0.0, %v8216
  %v8218 = vpop.f32.mrb[0].mxu0
  %8219 = vmatprep.mubr.bf16.mxu0 0
  %8220 = vmatmul.mubr.bf16.gmra.mrb[0].mxu0 %v8120
  %v8221 = vpop.f32.mrb[0].mxu0
  %v8222 = vadd.f32 0.0, %v8221
  %v8223 = vpop.f32.mrb[0].mxu0
  %v8224 = vpop.f32.mrb[0].mxu0
  %v8225 = vadd.f32 0.0, %v8224
  %v8226 = vpop.f32.mrb[0].mxu0
  %8227 = vmatprep.mubr.bf16.mxu0 0
  %8228 = vmatmul.mubr.bf16.gmra.mrb[0].mxu0 %v8123
  %v8229 = vpop.f32.mrb[0].mxu0
  %v8230 = vadd.f32 0.0, %v8229
  %v8231 = vpop.f32.mrb[0].mxu0
  %v8232 = vpop.f32.mrb[0].mxu0
  %v8233 = vadd.f32 0.0, %v8232
  %v8234 = vpop.f32.mrb[0].mxu0
  %8235 = vmatprep.mubr.bf16.mxu0 0
  %8236 = vmatmul.mubr.bf16.gmra.mrb[0].mxu0 %v8126
  %v8237 = vpop.f32.mrb[0].mxu0
  %v8238 = vadd.f32 0.0, %v8237
  %v8239 = vpop.f32.mrb[0].mxu0
  %v8240 = vpop.f32.mrb[0].mxu0
  %v8241 = vadd.f32 0.0, %v8240
  %v8242 = vpop.f32.mrb[0].mxu0
  %8243 = vdwg.mxu0
  %v8264 = vcombine.high %v8166, %v8166
  %v8266 = vunpack.c.l.s4 1983009808
  %v8267 = vunpack.c.0.s8 %v8266
  %v8268 = vlaneseq
  %v8269 = vshrl.u32 %v8268, 7
  %v8270 = vsub.s32 %v8267, %v8269
  %v8271 = vrot.slane %v8166, %v8270
  %v8273 = vunpack.c.l.s4 1983009808
  %v8274 = vunpack.c.0.s8 %v8273
  %v8275 = vlaneseq
  %v8276 = vshrl.u32 %v8275, 7
  %v8277 = vsub.s32 %v8274, %v8276
  %v8278 = vrot.slane %v8264, %v8277
  %v8279 = vcombine.high %v8271, %v8271
  %v8280 = vcombine.high %v8278, %v8278
  %v8281 = vcombine.high %v8169, %v8169
  %v8283 = vunpack.c.l.s4 1983009808
  %v8284 = vunpack.c.0.s8 %v8283
  %v8285 = vlaneseq
  %v8286 = vshrl.u32 %v8285, 7
  %v8287 = vsub.s32 %v8284, %v8286
  %v8288 = vrot.slane %v8169, %v8287
  %v8290 = vunpack.c.l.s4 1983009808
  %v8291 = vunpack.c.0.s8 %v8290
  %v8292 = vlaneseq
  %v8293 = vshrl.u32 %v8292, 7
  %v8294 = vsub.s32 %v8291, %v8293
  %v8295 = vrot.slane %v8281, %v8294
  %v8296 = vcombine.high %v8288, %v8288
  %v8297 = vcombine.high %v8295, %v8295
  %v8298 = vcombine.high %v8174, %v8174
  %v8300 = vunpack.c.l.s4 1983009808
  %v8301 = vunpack.c.0.s8 %v8300
  %v8302 = vlaneseq
  %v8303 = vshrl.u32 %v8302, 7
  %v8304 = vsub.s32 %v8301, %v8303
  %v8305 = vrot.slane %v8174, %v8304
  %v8307 = vunpack.c.l.s4 1983009808
  %v8308 = vunpack.c.0.s8 %v8307
  %v8309 = vlaneseq
  %v8310 = vshrl.u32 %v8309, 7
  %v8311 = vsub.s32 %v8308, %v8310
  %v8312 = vrot.slane %v8298, %v8311
  %v8313 = vcombine.high %v8312, %v8312
  %v8314 = vcombine.high %v8177, %v8177
  %v8316 = vunpack.c.l.s4 1983009808
  %v8317 = vunpack.c.0.s8 %v8316
  %v8318 = vlaneseq
  %v8319 = vshrl.u32 %v8318, 7
  %v8320 = vsub.s32 %v8317, %v8319
  %v8321 = vrot.slane %v8177, %v8320
  %v8323 = vunpack.c.l.s4 1983009808
  %v8324 = vunpack.c.0.s8 %v8323
  %v8325 = vlaneseq
  %v8326 = vshrl.u32 %v8325, 7
  %v8327 = vsub.s32 %v8324, %v8326
  %v8328 = vrot.slane %v8314, %v8327
  %v8329 = vcombine.high %v8321, %v8321
  %v8330 = vcombine.high %v8328, %v8328
  %v8331 = vcombine.high %v8182, %v8182
  %v8333 = vunpack.c.l.s4 1983009808
  %v8334 = vunpack.c.0.s8 %v8333
  %v8335 = vlaneseq
  %v8336 = vshrl.u32 %v8335, 7
  %v8337 = vsub.s32 %v8334, %v8336
  %v8338 = vrot.slane %v8182, %v8337
  %v8340 = vunpack.c.l.s4 1983009808
  %v8341 = vunpack.c.0.s8 %v8340
  %v8342 = vlaneseq
  %v8343 = vshrl.u32 %v8342, 7
  %v8344 = vsub.s32 %v8341, %v8343
  %v8345 = vrot.slane %v8331, %v8344
  %v8346 = vcombine.high %v8338, %v8338
  %v8347 = vcombine.high %v8185, %v8185
  %v8349 = vunpack.c.l.s4 1983009808
  %v8350 = vunpack.c.0.s8 %v8349
  %v8351 = vlaneseq
  %v8352 = vshrl.u32 %v8351, 7
  %v8353 = vsub.s32 %v8350, %v8352
  %v8354 = vrot.slane %v8185, %v8353
  %v8356 = vunpack.c.l.s4 1983009808
  %v8357 = vunpack.c.0.s8 %v8356
  %v8358 = vlaneseq
  %v8359 = vshrl.u32 %v8358, 7
  %v8360 = vsub.s32 %v8357, %v8359
  %v8361 = vrot.slane %v8347, %v8360
  %v8362 = vcombine.high %v8354, %v8354
  %v8363 = vcombine.high %v8361, %v8361
  %v8364 = vcombine.high %v8190, %v8190
  %v8366 = vunpack.c.l.s4 1983009808
  %v8367 = vunpack.c.0.s8 %v8366
  %v8368 = vlaneseq
  %v8369 = vshrl.u32 %v8368, 7
  %v8370 = vsub.s32 %v8367, %v8369
  %v8371 = vrot.slane %v8190, %v8370
  %v8373 = vunpack.c.l.s4 1983009808
  %v8374 = vunpack.c.0.s8 %v8373
  %v8375 = vlaneseq
  %v8376 = vshrl.u32 %v8375, 7
  %v8377 = vsub.s32 %v8374, %v8376
  %v8378 = vrot.slane %v8364, %v8377
  %v8379 = vcombine.high %v8371, %v8371
  %v8380 = vcombine.high %v8378, %v8378
  %v8381 = vcombine.high %v8193, %v8193
  %v8383 = vunpack.c.l.s4 1983009808
  %v8384 = vunpack.c.0.s8 %v8383
  %v8385 = vlaneseq
  %v8386 = vshrl.u32 %v8385, 7
  %v8387 = vsub.s32 %v8384, %v8386
  %v8388 = vrot.slane %v8193, %v8387
  %v8390 = vunpack.c.l.s4 1983009808
  %v8391 = vunpack.c.0.s8 %v8390
  %v8392 = vlaneseq
  %v8393 = vshrl.u32 %v8392, 7
  %v8394 = vsub.s32 %v8391, %v8393
  %v8395 = vrot.slane %v8381, %v8394
  %v8396 = vcombine.high %v8395, %v8395
  %v8397 = vcombine.high %v8198, %v8198
  %v8399 = vunpack.c.l.s4 1983009808
  %v8400 = vunpack.c.0.s8 %v8399
  %v8401 = vlaneseq
  %v8402 = vshrl.u32 %v8401, 7
  %v8403 = vsub.s32 %v8400, %v8402
  %v8404 = vrot.slane %v8198, %v8403
  %v8406 = vunpack.c.l.s4 1983009808
  %v8407 = vunpack.c.0.s8 %v8406
  %v8408 = vlaneseq
  %v8409 = vshrl.u32 %v8408, 7
  %v8410 = vsub.s32 %v8407, %v8409
  %v8411 = vrot.slane %v8397, %v8410
  %v8412 = vcombine.high %v8404, %v8404
  %v8413 = vcombine.high %v8411, %v8411
  %v8414 = vcombine.high %v8201, %v8201
  %v8416 = vunpack.c.l.s4 1983009808
  %v8417 = vunpack.c.0.s8 %v8416
  %v8418 = vlaneseq
  %v8419 = vshrl.u32 %v8418, 7
  %v8420 = vsub.s32 %v8417, %v8419
  %v8421 = vrot.slane %v8201, %v8420
  %v8423 = vunpack.c.l.s4 1983009808
  %v8424 = vunpack.c.0.s8 %v8423
  %v8425 = vlaneseq
  %v8426 = vshrl.u32 %v8425, 7
  %v8427 = vsub.s32 %v8424, %v8426
  %v8428 = vrot.slane %v8414, %v8427
  %v8429 = vcombine.high %v8421, %v8421
  %v8430 = vcombine.high %v8206, %v8206
  %v8432 = vunpack.c.l.s4 1983009808
  %v8433 = vunpack.c.0.s8 %v8432
  %v8434 = vlaneseq
  %v8435 = vshrl.u32 %v8434, 7
  %v8436 = vsub.s32 %v8433, %v8435
  %v8437 = vrot.slane %v8206, %v8436
  %v8439 = vunpack.c.l.s4 1983009808
  %v8440 = vunpack.c.0.s8 %v8439
  %v8441 = vlaneseq
  %v8442 = vshrl.u32 %v8441, 7
  %v8443 = vsub.s32 %v8440, %v8442
  %v8444 = vrot.slane %v8430, %v8443
  %v8445 = vcombine.high %v8437, %v8437
  %v8446 = vcombine.high %v8444, %v8444
  %v8447 = vcombine.high %v8209, %v8209
  %v8449 = vunpack.c.l.s4 1983009808
  %v8450 = vunpack.c.0.s8 %v8449
  %v8451 = vlaneseq
  %v8452 = vshrl.u32 %v8451, 7
  %v8453 = vsub.s32 %v8450, %v8452
  %v8454 = vrot.slane %v8209, %v8453
  %v8456 = vunpack.c.l.s4 1983009808
  %v8457 = vunpack.c.0.s8 %v8456
  %v8458 = vlaneseq
  %v8459 = vshrl.u32 %v8458, 7
  %v8460 = vsub.s32 %v8457, %v8459
  %v8461 = vrot.slane %v8447, %v8460
  %v8462 = vcombine.high %v8454, %v8454
  %v8463 = vcombine.high %v8461, %v8461
  %v8464 = vcombine.high %v8214, %v8214
  %v8466 = vunpack.c.l.s4 1983009808
  %v8467 = vunpack.c.0.s8 %v8466
  %v8468 = vlaneseq
  %v8469 = vshrl.u32 %v8468, 7
  %v8470 = vsub.s32 %v8467, %v8469
  %v8471 = vrot.slane %v8214, %v8470
  %v8473 = vunpack.c.l.s4 1983009808
  %v8474 = vunpack.c.0.s8 %v8473
  %v8475 = vlaneseq
  %v8476 = vshrl.u32 %v8475, 7
  %v8477 = vsub.s32 %v8474, %v8476
  %v8478 = vrot.slane %v8464, %v8477
  %v8479 = vcombine.high %v8478, %v8478
  %v8480 = vcombine.high %v8217, %v8217
  %v8482 = vunpack.c.l.s4 1983009808
  %v8483 = vunpack.c.0.s8 %v8482
  %v8484 = vlaneseq
  %v8485 = vshrl.u32 %v8484, 7
  %v8486 = vsub.s32 %v8483, %v8485
  %v8487 = vrot.slane %v8217, %v8486
  %v8489 = vunpack.c.l.s4 1983009808
  %v8490 = vunpack.c.0.s8 %v8489
  %v8491 = vlaneseq
  %v8492 = vshrl.u32 %v8491, 7
  %v8493 = vsub.s32 %v8490, %v8492
  %v8494 = vrot.slane %v8480, %v8493
  %v8495 = vcombine.high %v8487, %v8487
  %v8496 = vcombine.high %v8494, %v8494
  %v8497 = vcombine.high %v8222, %v8222
  %v8499 = vunpack.c.l.s4 1983009808
  %v8500 = vunpack.c.0.s8 %v8499
  %v8501 = vlaneseq
  %v8502 = vshrl.u32 %v8501, 7
  %v8503 = vsub.s32 %v8500, %v8502
  %v8504 = vrot.slane %v8222, %v8503
  %v8506 = vunpack.c.l.s4 1983009808
  %v8507 = vunpack.c.0.s8 %v8506
  %v8508 = vlaneseq
  %v8509 = vshrl.u32 %v8508, 7
  %v8510 = vsub.s32 %v8507, %v8509
  %v8511 = vrot.slane %v8497, %v8510
  %v8512 = vcombine.high %v8504, %v8504
  %v8513 = vcombine.high %v8225, %v8225
  %v8515 = vunpack.c.l.s4 1983009808
  %v8516 = vunpack.c.0.s8 %v8515
  %v8517 = vlaneseq
  %v8518 = vshrl.u32 %v8517, 7
  %v8519 = vsub.s32 %v8516, %v8518
  %v8520 = vrot.slane %v8225, %v8519
  %v8522 = vunpack.c.l.s4 1983009808
  %v8523 = vunpack.c.0.s8 %v8522
  %v8524 = vlaneseq
  %v8525 = vshrl.u32 %v8524, 7
  %v8526 = vsub.s32 %v8523, %v8525
  %v8527 = vrot.slane %v8513, %v8526
  %v8528 = vcombine.high %v8520, %v8520
  %v8529 = vcombine.high %v8527, %v8527
  %v8530 = vcombine.high %v8230, %v8230
  %v8532 = vunpack.c.l.s4 1983009808
  %v8533 = vunpack.c.0.s8 %v8532
  %v8534 = vlaneseq
  %v8535 = vshrl.u32 %v8534, 7
  %v8536 = vsub.s32 %v8533, %v8535
  %v8537 = vrot.slane %v8230, %v8536
  %v8539 = vunpack.c.l.s4 1983009808
  %v8540 = vunpack.c.0.s8 %v8539
  %v8541 = vlaneseq
  %v8542 = vshrl.u32 %v8541, 7
  %v8543 = vsub.s32 %v8540, %v8542
  %v8544 = vrot.slane %v8530, %v8543
  %v8545 = vcombine.high %v8537, %v8537
  %v8546 = vcombine.high %v8544, %v8544
  %v8547 = vcombine.high %v8233, %v8233
  %v8549 = vunpack.c.l.s4 1983009808
  %v8550 = vunpack.c.0.s8 %v8549
  %v8551 = vlaneseq
  %v8552 = vshrl.u32 %v8551, 7
  %v8553 = vsub.s32 %v8550, %v8552
  %v8554 = vrot.slane %v8233, %v8553
  %v8556 = vunpack.c.l.s4 1983009808
  %v8557 = vunpack.c.0.s8 %v8556
  %v8558 = vlaneseq
  %v8559 = vshrl.u32 %v8558, 7
  %v8560 = vsub.s32 %v8557, %v8559
  %v8561 = vrot.slane %v8547, %v8560
  %v8562 = vcombine.high %v8561, %v8561
  %v8563 = vcombine.high %v8238, %v8238
  %v8565 = vunpack.c.l.s4 1983009808
  %v8566 = vunpack.c.0.s8 %v8565
  %v8567 = vlaneseq
  %v8568 = vshrl.u32 %v8567, 7
  %v8569 = vsub.s32 %v8566, %v8568
  %v8570 = vrot.slane %v8238, %v8569
  %v8572 = vunpack.c.l.s4 1983009808
  %v8573 = vunpack.c.0.s8 %v8572
  %v8574 = vlaneseq
  %v8575 = vshrl.u32 %v8574, 7
  %v8576 = vsub.s32 %v8573, %v8575
  %v8577 = vrot.slane %v8563, %v8576
  %v8578 = vcombine.high %v8570, %v8570
  %v8579 = vcombine.high %v8577, %v8577
  %v8580 = vcombine.high %v8241, %v8241
  %v8582 = vunpack.c.l.s4 1983009808
  %v8583 = vunpack.c.0.s8 %v8582
  %v8584 = vlaneseq
  %v8585 = vshrl.u32 %v8584, 7
  %v8586 = vsub.s32 %v8583, %v8585
  %v8587 = vrot.slane %v8241, %v8586
  %v8589 = vunpack.c.l.s4 1983009808
  %v8590 = vunpack.c.0.s8 %v8589
  %v8591 = vlaneseq
  %v8592 = vshrl.u32 %v8591, 7
  %v8593 = vsub.s32 %v8590, %v8592
  %v8594 = vrot.slane %v8580, %v8593
  %v8595 = vcombine.high %v8587, %v8587
  %v8660 = vadd.f32 %v6869, %v8271
  %v8661 = vadd.f32 %v6870, %v8279
  %v8662 = vadd.f32 %v6871, %v8278
  %v8663 = vadd.f32 %v6872, %v8280
  %v8664 = vadd.f32 %v6873, %v8296
  %v8665 = vadd.f32 %v6874, %v8295
  %v8666 = vadd.f32 %v6875, %v8297
  %v8667 = vadd.f32 %v6876, %v8305
  %v8668 = vadd.f32 %v6877, %v8312
  %v8669 = vadd.f32 %v6878, %v8313
  %v8670 = vadd.f32 %v6879, %v8321
  %v8671 = vadd.f32 %v6880, %v8329
  %v8672 = vadd.f32 %v6881, %v8330
  %v8673 = vadd.f32 %v6882, %v8338
  %v8674 = vadd.f32 %v6883, %v8346
  %v8675 = vadd.f32 %v6884, %v8345
  %v8676 = vadd.f32 %v6885, %v8354
  %v8677 = vadd.f32 %v6886, %v8362
  %v8678 = vadd.f32 %v6887, %v8361
  %v8679 = vadd.f32 %v6888, %v8363
  %v8680 = vadd.f32 %v6889, %v8379
  %v8681 = vadd.f32 %v6890, %v8378
  %v8682 = vadd.f32 %v6891, %v8380
  %v8683 = vadd.f32 %v6892, %v8388
  %v8684 = vadd.f32 %v6893, %v8395
  %v8685 = vadd.f32 %v6894, %v8396
  %v8686 = vadd.f32 %v6895, %v8404
  %v8687 = vadd.f32 %v6896, %v8412
  %v8688 = vadd.f32 %v6897, %v8413
  %v8689 = vadd.f32 %v6898, %v8421
  %v8690 = vadd.f32 %v6899, %v8429
  %v8691 = vadd.f32 %v6900, %v8428
  %v8692 = vadd.f32 %v6901, %v8437
  %v8693 = vadd.f32 %v6902, %v8445
  %v8694 = vadd.f32 %v6903, %v8444
  %v8695 = vadd.f32 %v6904, %v8446
  %v8696 = vadd.f32 %v6905, %v8462
  %v8697 = vadd.f32 %v6906, %v8461
  %v8698 = vadd.f32 %v6907, %v8463
  %v8699 = vadd.f32 %v6908, %v8471
  %v8700 = vadd.f32 %v6909, %v8478
  %v8701 = vadd.f32 %v6910, %v8479
  %v8702 = vadd.f32 %v6911, %v8487
  %v8703 = vadd.f32 %v6912, %v8495
  %v8704 = vadd.f32 %v6913, %v8496
  %v8705 = vadd.f32 %v6914, %v8504
  %v8706 = vadd.f32 %v6915, %v8512
  %v8707 = vadd.f32 %v6916, %v8511
  %v8708 = vadd.f32 %v6917, %v8520
  %v8709 = vadd.f32 %v6918, %v8528
  %v8710 = vadd.f32 %v6919, %v8527
  %v8711 = vadd.f32 %v6920, %v8529
  %v8712 = vadd.f32 %v6921, %v8545
  %v8713 = vadd.f32 %v6922, %v8544
  %v8714 = vadd.f32 %v6923, %v8546
  %v8715 = vadd.f32 %v6924, %v8554
  %v8716 = vadd.f32 %v6925, %v8561
  %v8717 = vadd.f32 %v6926, %v8562
  %v8718 = vadd.f32 %v6927, %v8570
  %v8719 = vadd.f32 %v6928, %v8578
  %v8720 = vadd.f32 %v6929, %v8579
  %v8721 = vadd.f32 %v6930, %v8587
  %v8722 = vadd.f32 %v6931, %v8595
  %v8723 = vadd.f32 %v6932, %v8594
  %s8724 = scalar_lea.vmem %s6, 28
  %v8725 = vld [vmem:[%s8724] sm:$0xf]
  %v8727 = vsel %vm1780, %v8725, 0
  %8729 = vmatprep.subr.bf16.mxu0 0
  %8730 = vmatpush1.bf16.msra.mxu0 %v8727
  %8731 = vmatprep.subr.bf16.mxu0 0
  %8732 = vmatpush1.bf16.msra.mxu0 0
  %8733 = vmatprep.subr.bf16.mxu0 0
  %8734 = vmatpush1.bf16.msra.mxu0 0
  %8735 = vmatprep.subr.bf16.mxu0 0
  %8736 = vmatpush1.bf16.msra.mxu0 0
  %8737 = vmatprep.subr.bf16.mxu0 0
  %8738 = vmatpush1.bf16.msra.mxu0 0
  %8739 = vmatprep.subr.bf16.mxu0 0
  %8740 = vmatpush1.bf16.msra.mxu0 0
  %8741 = vmatprep.subr.bf16.mxu0 0
  %8742 = vmatpush1.bf16.msra.mxu0 0
  %8743 = vmatprep.subr.bf16.mxu0 0
  %8744 = vmatpush1.bf16.msra.mxu0 0
  %8745 = vmatprep.subr.bf16.mxu0 0
  %8746 = vmatpush1.bf16.msra.mxu0 0
  %8747 = vmatprep.subr.bf16.mxu0 0
  %8748 = vmatpush1.bf16.msra.mxu0 0
  %8749 = vmatprep.subr.bf16.mxu0 0
  %8750 = vmatpush1.bf16.msra.mxu0 0
  %8751 = vmatprep.subr.bf16.mxu0 0
  %8752 = vmatpush1.bf16.msra.mxu0 0
  %8753 = vmatprep.subr.bf16.mxu0 0
  %8754 = vmatpush1.bf16.msra.mxu0 0
  %8755 = vmatprep.subr.bf16.mxu0 0
  %8756 = vmatpush1.bf16.msra.mxu0 0
  %8757 = vmatprep.subr.bf16.mxu0 0
  %8758 = vmatpush1.bf16.msra.mxu0 0
  %8759 = vmatprep.subr.bf16.mxu0 0
  %8760 = vmatpush1.bf16.msra.mxu0 0
  %8761 = vmatprep.mubr.bf16.mxu0 0
  %8762 = vmatmul.mubr.bf16.gmra.mrb[0].mxu0 %v8099
  %v8763 = vpop.f32.mrb[0].mxu0
  %v8764 = vadd.f32 0.0, %v8763
  %v8765 = vpop.f32.mrb[0].mxu0
  %v8766 = vpop.f32.mrb[0].mxu0
  %v8767 = vadd.f32 0.0, %v8766
  %v8768 = vpop.f32.mrb[0].mxu0
  %8769 = vmatprep.mubr.bf16.mxu0 0
  %8770 = vmatmul.mubr.bf16.gmra.mrb[0].mxu0 %v8102
  %v8771 = vpop.f32.mrb[0].mxu0
  %v8772 = vadd.f32 0.0, %v8771
  %v8773 = vpop.f32.mrb[0].mxu0
  %v8774 = vpop.f32.mrb[0].mxu0
  %v8775 = vadd.f32 0.0, %v8774
  %v8776 = vpop.f32.mrb[0].mxu0
  %8777 = vmatprep.mubr.bf16.mxu0 0
  %8778 = vmatmul.mubr.bf16.gmra.mrb[0].mxu0 %v8105
  %v8779 = vpop.f32.mrb[0].mxu0
  %v8780 = vadd.f32 0.0, %v8779
  %v8781 = vpop.f32.mrb[0].mxu0
  %v8782 = vpop.f32.mrb[0].mxu0
  %v8783 = vadd.f32 0.0, %v8782
  %v8784 = vpop.f32.mrb[0].mxu0
  %8785 = vmatprep.mubr.bf16.mxu0 0
  %8786 = vmatmul.mubr.bf16.gmra.mrb[0].mxu0 %v8108
  %v8787 = vpop.f32.mrb[0].mxu0
  %v8788 = vadd.f32 0.0, %v8787
  %v8789 = vpop.f32.mrb[0].mxu0
  %v8790 = vpop.f32.mrb[0].mxu0
  %v8791 = vadd.f32 0.0, %v8790
  %v8792 = vpop.f32.mrb[0].mxu0
  %8793 = vmatprep.mubr.bf16.mxu0 0
  %8794 = vmatmul.mubr.bf16.gmra.mrb[0].mxu0 %v8111
  %v8795 = vpop.f32.mrb[0].mxu0
  %v8796 = vadd.f32 0.0, %v8795
  %v8797 = vpop.f32.mrb[0].mxu0
  %v8798 = vpop.f32.mrb[0].mxu0
  %v8799 = vadd.f32 0.0, %v8798
  %v8800 = vpop.f32.mrb[0].mxu0
  %8801 = vmatprep.mubr.bf16.mxu0 0
  %8802 = vmatmul.mubr.bf16.gmra.mrb[0].mxu0 %v8114
  %v8803 = vpop.f32.mrb[0].mxu0
  %v8804 = vadd.f32 0.0, %v8803
  %v8805 = vpop.f32.mrb[0].mxu0
  %v8806 = vpop.f32.mrb[0].mxu0
  %v8807 = vadd.f32 0.0, %v8806
  %v8808 = vpop.f32.mrb[0].mxu0
  %8809 = vmatprep.mubr.bf16.mxu0 0
  %8810 = vmatmul.mubr.bf16.gmra.mrb[0].mxu0 %v8117
  %v8811 = vpop.f32.mrb[0].mxu0
  %v8812 = vadd.f32 0.0, %v8811
  %v8813 = vpop.f32.mrb[0].mxu0
  %v8814 = vpop.f32.mrb[0].mxu0
  %v8815 = vadd.f32 0.0, %v8814
  %v8816 = vpop.f32.mrb[0].mxu0
  %8817 = vmatprep.mubr.bf16.mxu0 0
  %8818 = vmatmul.mubr.bf16.gmra.mrb[0].mxu0 %v8120
  %v8819 = vpop.f32.mrb[0].mxu0
  %v8820 = vadd.f32 0.0, %v8819
  %v8821 = vpop.f32.mrb[0].mxu0
  %v8822 = vpop.f32.mrb[0].mxu0
  %v8823 = vadd.f32 0.0, %v8822
  %v8824 = vpop.f32.mrb[0].mxu0
  %8825 = vmatprep.mubr.bf16.mxu0 0
  %8826 = vmatmul.mubr.bf16.gmra.mrb[0].mxu0 %v8123
  %v8827 = vpop.f32.mrb[0].mxu0
  %v8828 = vadd.f32 0.0, %v8827
  %v8829 = vpop.f32.mrb[0].mxu0
  %v8830 = vpop.f32.mrb[0].mxu0
  %v8831 = vadd.f32 0.0, %v8830
  %v8832 = vpop.f32.mrb[0].mxu0
  %8833 = vmatprep.mubr.bf16.mxu0 0
  %8834 = vmatmul.mubr.bf16.gmra.mrb[0].mxu0 %v8126
  %v8835 = vpop.f32.mrb[0].mxu0
  %v8836 = vadd.f32 0.0, %v8835
  %v8837 = vpop.f32.mrb[0].mxu0
  %v8838 = vpop.f32.mrb[0].mxu0
  %v8839 = vadd.f32 0.0, %v8838
  %v8840 = vpop.f32.mrb[0].mxu0
  %8841 = vdwg.mxu0
  %v8862 = vcombine.high %v8764, %v8764
  %v8864 = vunpack.c.l.s4 1983009808
  %v8865 = vunpack.c.0.s8 %v8864
  %v8866 = vlaneseq
  %v8867 = vshrl.u32 %v8866, 7
  %v8868 = vsub.s32 %v8865, %v8867
  %v8869 = vrot.slane %v8764, %v8868
  %v8871 = vunpack.c.l.s4 1983009808
  %v8872 = vunpack.c.0.s8 %v8871
  %v8873 = vlaneseq
  %v8874 = vshrl.u32 %v8873, 7
  %v8875 = vsub.s32 %v8872, %v8874
  %v8876 = vrot.slane %v8862, %v8875
  %v8877 = vcombine.high %v8869, %v8869
  %v8878 = vcombine.high %v8876, %v8876
  %v8879 = vcombine.high %v8767, %v8767
  %v8881 = vunpack.c.l.s4 1983009808
  %v8882 = vunpack.c.0.s8 %v8881
  %v8883 = vlaneseq
  %v8884 = vshrl.u32 %v8883, 7
  %v8885 = vsub.s32 %v8882, %v8884
  %v8886 = vrot.slane %v8767, %v8885
  %v8888 = vunpack.c.l.s4 1983009808
  %v8889 = vunpack.c.0.s8 %v8888
  %v8890 = vlaneseq
  %v8891 = vshrl.u32 %v8890, 7
  %v8892 = vsub.s32 %v8889, %v8891
  %v8893 = vrot.slane %v8879, %v8892
  %v8894 = vcombine.high %v8886, %v8886
  %v8895 = vcombine.high %v8893, %v8893
  %v8896 = vcombine.high %v8772, %v8772
  %v8898 = vunpack.c.l.s4 1983009808
  %v8899 = vunpack.c.0.s8 %v8898
  %v8900 = vlaneseq
  %v8901 = vshrl.u32 %v8900, 7
  %v8902 = vsub.s32 %v8899, %v8901
  %v8903 = vrot.slane %v8772, %v8902
  %v8905 = vunpack.c.l.s4 1983009808
  %v8906 = vunpack.c.0.s8 %v8905
  %v8907 = vlaneseq
  %v8908 = vshrl.u32 %v8907, 7
  %v8909 = vsub.s32 %v8906, %v8908
  %v8910 = vrot.slane %v8896, %v8909
  %v8911 = vcombine.high %v8903, %v8903
  %v8912 = vcombine.high %v8910, %v8910
  %v8913 = vcombine.high %v8775, %v8775
  %v8915 = vunpack.c.l.s4 1983009808
  %v8916 = vunpack.c.0.s8 %v8915
  %v8917 = vlaneseq
  %v8918 = vshrl.u32 %v8917, 7
  %v8919 = vsub.s32 %v8916, %v8918
  %v8920 = vrot.slane %v8775, %v8919
  %v8922 = vunpack.c.l.s4 1983009808
  %v8923 = vunpack.c.0.s8 %v8922
  %v8924 = vlaneseq
  %v8925 = vshrl.u32 %v8924, 7
  %v8926 = vsub.s32 %v8923, %v8925
  %v8927 = vrot.slane %v8913, %v8926
  %v8928 = vcombine.high %v8920, %v8920
  %v8929 = vcombine.high %v8927, %v8927
  %v8930 = vcombine.high %v8780, %v8780
  %v8932 = vunpack.c.l.s4 1983009808
  %v8933 = vunpack.c.0.s8 %v8932
  %v8934 = vlaneseq
  %v8935 = vshrl.u32 %v8934, 7
  %v8936 = vsub.s32 %v8933, %v8935
  %v8937 = vrot.slane %v8780, %v8936
  %v8939 = vunpack.c.l.s4 1983009808
  %v8940 = vunpack.c.0.s8 %v8939
  %v8941 = vlaneseq
  %v8942 = vshrl.u32 %v8941, 7
  %v8943 = vsub.s32 %v8940, %v8942
  %v8944 = vrot.slane %v8930, %v8943
  %v8945 = vcombine.high %v8937, %v8937
  %v8946 = vcombine.high %v8944, %v8944
  %v8947 = vcombine.high %v8783, %v8783
  %v8949 = vunpack.c.l.s4 1983009808
  %v8950 = vunpack.c.0.s8 %v8949
  %v8951 = vlaneseq
  %v8952 = vshrl.u32 %v8951, 7
  %v8953 = vsub.s32 %v8950, %v8952
  %v8954 = vrot.slane %v8783, %v8953
  %v8956 = vunpack.c.l.s4 1983009808
  %v8957 = vunpack.c.0.s8 %v8956
  %v8958 = vlaneseq
  %v8959 = vshrl.u32 %v8958, 7
  %v8960 = vsub.s32 %v8957, %v8959
  %v8961 = vrot.slane %v8947, %v8960
  %v8962 = vcombine.high %v8954, %v8954
  %v8963 = vcombine.high %v8961, %v8961
  %v8964 = vcombine.high %v8788, %v8788
  %v8966 = vunpack.c.l.s4 1983009808
  %v8967 = vunpack.c.0.s8 %v8966
  %v8968 = vlaneseq
  %v8969 = vshrl.u32 %v8968, 7
  %v8970 = vsub.s32 %v8967, %v8969
  %v8971 = vrot.slane %v8788, %v8970
  %v8973 = vunpack.c.l.s4 1983009808
  %v8974 = vunpack.c.0.s8 %v8973
  %v8975 = vlaneseq
  %v8976 = vshrl.u32 %v8975, 7
  %v8977 = vsub.s32 %v8974, %v8976
  %v8978 = vrot.slane %v8964, %v8977
  %v8979 = vcombine.high %v8971, %v8971
  %v8980 = vcombine.high %v8978, %v8978
  %v8981 = vcombine.high %v8791, %v8791
  %v8983 = vunpack.c.l.s4 1983009808
  %v8984 = vunpack.c.0.s8 %v8983
  %v8985 = vlaneseq
  %v8986 = vshrl.u32 %v8985, 7
  %v8987 = vsub.s32 %v8984, %v8986
  %v8988 = vrot.slane %v8791, %v8987
  %v8990 = vunpack.c.l.s4 1983009808
  %v8991 = vunpack.c.0.s8 %v8990
  %v8992 = vlaneseq
  %v8993 = vshrl.u32 %v8992, 7
  %v8994 = vsub.s32 %v8991, %v8993
  %v8995 = vrot.slane %v8981, %v8994
  %v8996 = vcombine.high %v8988, %v8988
  %v8997 = vcombine.high %v8995, %v8995
  %v8998 = vcombine.high %v8796, %v8796
  %v9000 = vunpack.c.l.s4 1983009808
  %v9001 = vunpack.c.0.s8 %v9000
  %v9002 = vlaneseq
  %v9003 = vshrl.u32 %v9002, 7
  %v9004 = vsub.s32 %v9001, %v9003
  %v9005 = vrot.slane %v8796, %v9004
  %v9007 = vunpack.c.l.s4 1983009808
  %v9008 = vunpack.c.0.s8 %v9007
  %v9009 = vlaneseq
  %v9010 = vshrl.u32 %v9009, 7
  %v9011 = vsub.s32 %v9008, %v9010
  %v9012 = vrot.slane %v8998, %v9011
  %v9013 = vcombine.high %v9005, %v9005
  %v9014 = vcombine.high %v9012, %v9012
  %v9015 = vcombine.high %v8799, %v8799
  %v9017 = vunpack.c.l.s4 1983009808
  %v9018 = vunpack.c.0.s8 %v9017
  %v9019 = vlaneseq
  %v9020 = vshrl.u32 %v9019, 7
  %v9021 = vsub.s32 %v9018, %v9020
  %v9022 = vrot.slane %v8799, %v9021
  %v9024 = vunpack.c.l.s4 1983009808
  %v9025 = vunpack.c.0.s8 %v9024
  %v9026 = vlaneseq
  %v9027 = vshrl.u32 %v9026, 7
  %v9028 = vsub.s32 %v9025, %v9027
  %v9029 = vrot.slane %v9015, %v9028
  %v9030 = vcombine.high %v9022, %v9022
  %v9031 = vcombine.high %v9029, %v9029
  %v9032 = vcombine.high %v8804, %v8804
  %v9034 = vunpack.c.l.s4 1983009808
  %v9035 = vunpack.c.0.s8 %v9034
  %v9036 = vlaneseq
  %v9037 = vshrl.u32 %v9036, 7
  %v9038 = vsub.s32 %v9035, %v9037
  %v9039 = vrot.slane %v8804, %v9038
  %v9041 = vunpack.c.l.s4 1983009808
  %v9042 = vunpack.c.0.s8 %v9041
  %v9043 = vlaneseq
  %v9044 = vshrl.u32 %v9043, 7
  %v9045 = vsub.s32 %v9042, %v9044
  %v9046 = vrot.slane %v9032, %v9045
  %v9047 = vcombine.high %v9039, %v9039
  %v9048 = vcombine.high %v9046, %v9046
  %v9049 = vcombine.high %v8807, %v8807
  %v9051 = vunpack.c.l.s4 1983009808
  %v9052 = vunpack.c.0.s8 %v9051
  %v9053 = vlaneseq
  %v9054 = vshrl.u32 %v9053, 7
  %v9055 = vsub.s32 %v9052, %v9054
  %v9056 = vrot.slane %v8807, %v9055
  %v9058 = vunpack.c.l.s4 1983009808
  %v9059 = vunpack.c.0.s8 %v9058
  %v9060 = vlaneseq
  %v9061 = vshrl.u32 %v9060, 7
  %v9062 = vsub.s32 %v9059, %v9061
  %v9063 = vrot.slane %v9049, %v9062
  %v9064 = vcombine.high %v9056, %v9056
  %v9065 = vcombine.high %v9063, %v9063
  %v9066 = vcombine.high %v8812, %v8812
  %v9068 = vunpack.c.l.s4 1983009808
  %v9069 = vunpack.c.0.s8 %v9068
  %v9070 = vlaneseq
  %v9071 = vshrl.u32 %v9070, 7
  %v9072 = vsub.s32 %v9069, %v9071
  %v9073 = vrot.slane %v8812, %v9072
  %v9075 = vunpack.c.l.s4 1983009808
  %v9076 = vunpack.c.0.s8 %v9075
  %v9077 = vlaneseq
  %v9078 = vshrl.u32 %v9077, 7
  %v9079 = vsub.s32 %v9076, %v9078
  %v9080 = vrot.slane %v9066, %v9079
  %v9081 = vcombine.high %v9073, %v9073
  %v9082 = vcombine.high %v9080, %v9080
  %v9083 = vcombine.high %v8815, %v8815
  %v9085 = vunpack.c.l.s4 1983009808
  %v9086 = vunpack.c.0.s8 %v9085
  %v9087 = vlaneseq
  %v9088 = vshrl.u32 %v9087, 7
  %v9089 = vsub.s32 %v9086, %v9088
  %v9090 = vrot.slane %v8815, %v9089
  %v9092 = vunpack.c.l.s4 1983009808
  %v9093 = vunpack.c.0.s8 %v9092
  %v9094 = vlaneseq
  %v9095 = vshrl.u32 %v9094, 7
  %v9096 = vsub.s32 %v9093, %v9095
  %v9097 = vrot.slane %v9083, %v9096
  %v9098 = vcombine.high %v9090, %v9090
  %v9099 = vcombine.high %v9097, %v9097
  %v9100 = vcombine.high %v8820, %v8820
  %v9102 = vunpack.c.l.s4 1983009808
  %v9103 = vunpack.c.0.s8 %v9102
  %v9104 = vlaneseq
  %v9105 = vshrl.u32 %v9104, 7
  %v9106 = vsub.s32 %v9103, %v9105
  %v9107 = vrot.slane %v8820, %v9106
  %v9109 = vunpack.c.l.s4 1983009808
  %v9110 = vunpack.c.0.s8 %v9109
  %v9111 = vlaneseq
  %v9112 = vshrl.u32 %v9111, 7
  %v9113 = vsub.s32 %v9110, %v9112
  %v9114 = vrot.slane %v9100, %v9113
  %v9115 = vcombine.high %v9107, %v9107
  %v9116 = vcombine.high %v9114, %v9114
  %v9117 = vcombine.high %v8823, %v8823
  %v9119 = vunpack.c.l.s4 1983009808
  %v9120 = vunpack.c.0.s8 %v9119
  %v9121 = vlaneseq
  %v9122 = vshrl.u32 %v9121, 7
  %v9123 = vsub.s32 %v9120, %v9122
  %v9124 = vrot.slane %v8823, %v9123
  %v9126 = vunpack.c.l.s4 1983009808
  %v9127 = vunpack.c.0.s8 %v9126
  %v9128 = vlaneseq
  %v9129 = vshrl.u32 %v9128, 7
  %v9130 = vsub.s32 %v9127, %v9129
  %v9131 = vrot.slane %v9117, %v9130
  %v9132 = vcombine.high %v9124, %v9124
  %v9133 = vcombine.high %v9131, %v9131
  %v9134 = vcombine.high %v8828, %v8828
  %v9136 = vunpack.c.l.s4 1983009808
  %v9137 = vunpack.c.0.s8 %v9136
  %v9138 = vlaneseq
  %v9139 = vshrl.u32 %v9138, 7
  %v9140 = vsub.s32 %v9137, %v9139
  %v9141 = vrot.slane %v8828, %v9140
  %v9143 = vunpack.c.l.s4 1983009808
  %v9144 = vunpack.c.0.s8 %v9143
  %v9145 = vlaneseq
  %v9146 = vshrl.u32 %v9145, 7
  %v9147 = vsub.s32 %v9144, %v9146
  %v9148 = vrot.slane %v9134, %v9147
  %v9149 = vcombine.high %v9141, %v9141
  %v9150 = vcombine.high %v9148, %v9148
  %v9151 = vcombine.high %v8831, %v8831
  %v9153 = vunpack.c.l.s4 1983009808
  %v9154 = vunpack.c.0.s8 %v9153
  %v9155 = vlaneseq
  %v9156 = vshrl.u32 %v9155, 7
  %v9157 = vsub.s32 %v9154, %v9156
  %v9158 = vrot.slane %v8831, %v9157
  %v9160 = vunpack.c.l.s4 1983009808
  %v9161 = vunpack.c.0.s8 %v9160
  %v9162 = vlaneseq
  %v9163 = vshrl.u32 %v9162, 7
  %v9164 = vsub.s32 %v9161, %v9163
  %v9165 = vrot.slane %v9151, %v9164
  %v9166 = vcombine.high %v9158, %v9158
  %v9167 = vcombine.high %v9165, %v9165
  %v9168 = vcombine.high %v8836, %v8836
  %v9170 = vunpack.c.l.s4 1983009808
  %v9171 = vunpack.c.0.s8 %v9170
  %v9172 = vlaneseq
  %v9173 = vshrl.u32 %v9172, 7
  %v9174 = vsub.s32 %v9171, %v9173
  %v9175 = vrot.slane %v8836, %v9174
  %v9177 = vunpack.c.l.s4 1983009808
  %v9178 = vunpack.c.0.s8 %v9177
  %v9179 = vlaneseq
  %v9180 = vshrl.u32 %v9179, 7
  %v9181 = vsub.s32 %v9178, %v9180
  %v9182 = vrot.slane %v9168, %v9181
  %v9183 = vcombine.high %v9175, %v9175
  %v9184 = vcombine.high %v9182, %v9182
  %v9185 = vcombine.high %v8839, %v8839
  %v9187 = vunpack.c.l.s4 1983009808
  %v9188 = vunpack.c.0.s8 %v9187
  %v9189 = vlaneseq
  %v9190 = vshrl.u32 %v9189, 7
  %v9191 = vsub.s32 %v9188, %v9190
  %v9192 = vrot.slane %v8839, %v9191
  %v9194 = vunpack.c.l.s4 1983009808
  %v9195 = vunpack.c.0.s8 %v9194
  %v9196 = vlaneseq
  %v9197 = vshrl.u32 %v9196, 7
  %v9198 = vsub.s32 %v9195, %v9197
  %v9199 = vrot.slane %v9185, %v9198
  %v9200 = vcombine.high %v9192, %v9192
  %v9201 = vcombine.high %v9199, %v9199
  %v9202 = vrot.slane %v8869, 7
  %v9203 = vrot.slane %v9202, 2
  %v9204 = vrot.slane %v8877, 7
  %v9205 = vsel %vm2796, %v9203, %v9204
  %v9206 = vrot.slane %v9204, 2
  %v9207 = vrot.slane %v8876, 7
  %v9208 = vsel %vm2796, %v9206, %v9207
  %v9209 = vrot.slane %v9207, 2
  %v9210 = vrot.slane %v8878, 7
  %v9211 = vsel %vm2796, %v9209, %v9210
  %v9212 = vrot.slane %v9210, 2
  %v9213 = vrot.slane %v8886, 7
  %v9214 = vsel %vm2796, %v9212, %v9213
  %v9215 = vrot.slane %v8894, 7
  %v9216 = vrot.slane %v9215, 2
  %v9217 = vrot.slane %v8893, 7
  %v9218 = vsel %vm2796, %v9216, %v9217
  %v9219 = vrot.slane %v9217, 2
  %v9220 = vrot.slane %v8895, 7
  %v9221 = vsel %vm2796, %v9219, %v9220
  %v9222 = vrot.slane %v9220, 2
  %v9223 = vrot.slane %v8903, 7
  %v9224 = vsel %vm2796, %v9222, %v9223
  %v9225 = vrot.slane %v9223, 2
  %v9226 = vrot.slane %v8911, 7
  %v9227 = vsel %vm2796, %v9225, %v9226
  %v9228 = vrot.slane %v8910, 7
  %v9229 = vrot.slane %v9228, 2
  %v9230 = vrot.slane %v8912, 7
  %v9231 = vsel %vm2796, %v9229, %v9230
  %v9232 = vrot.slane %v9230, 2
  %v9233 = vrot.slane %v8920, 7
  %v9234 = vsel %vm2796, %v9232, %v9233
  %v9235 = vrot.slane %v9233, 2
  %v9236 = vrot.slane %v8928, 7
  %v9237 = vsel %vm2796, %v9235, %v9236
  %v9238 = vrot.slane %v9236, 2
  %v9239 = vrot.slane %v8927, 7
  %v9240 = vsel %vm2796, %v9238, %v9239
  %v9241 = vrot.slane %v8929, 7
  %v9242 = vrot.slane %v9241, 2
  %v9243 = vrot.slane %v8937, 7
  %v9244 = vsel %vm2796, %v9242, %v9243
  %v9245 = vrot.slane %v9243, 2
  %v9246 = vrot.slane %v8945, 7
  %v9247 = vsel %vm2796, %v9245, %v9246
  %v9248 = vrot.slane %v9246, 2
  %v9249 = vrot.slane %v8944, 7
  %v9250 = vsel %vm2796, %v9248, %v9249
  %v9251 = vrot.slane %v9249, 2
  %v9252 = vrot.slane %v8946, 7
  %v9253 = vsel %vm2796, %v9251, %v9252
  %v9254 = vrot.slane %v8954, 7
  %v9255 = vrot.slane %v9254, 2
  %v9256 = vrot.slane %v8962, 7
  %v9257 = vsel %vm2796, %v9255, %v9256
  %v9258 = vrot.slane %v9256, 2
  %v9259 = vrot.slane %v8961, 7
  %v9260 = vsel %vm2796, %v9258, %v9259
  %v9261 = vrot.slane %v9259, 2
  %v9262 = vrot.slane %v8963, 7
  %v9263 = vsel %vm2796, %v9261, %v9262
  %v9264 = vrot.slane %v9262, 2
  %v9265 = vrot.slane %v8971, 7
  %v9266 = vsel %vm2796, %v9264, %v9265
  %v9267 = vrot.slane %v8979, 7
  %v9268 = vrot.slane %v9267, 2
  %v9269 = vrot.slane %v8978, 7
  %v9270 = vsel %vm2796, %v9268, %v9269
  %v9271 = vrot.slane %v9269, 2
  %v9272 = vrot.slane %v8980, 7
  %v9273 = vsel %vm2796, %v9271, %v9272
  %v9274 = vrot.slane %v9272, 2
  %v9275 = vrot.slane %v8988, 7
  %v9276 = vsel %vm2796, %v9274, %v9275
  %v9277 = vrot.slane %v9275, 2
  %v9278 = vrot.slane %v8996, 7
  %v9279 = vsel %vm2796, %v9277, %v9278
  %v9280 = vrot.slane %v8995, 7
  %v9281 = vrot.slane %v9280, 2
  %v9282 = vrot.slane %v8997, 7
  %v9283 = vsel %vm2796, %v9281, %v9282
  %v9284 = vrot.slane %v9282, 2
  %v9285 = vrot.slane %v9005, 7
  %v9286 = vsel %vm2796, %v9284, %v9285
  %v9287 = vrot.slane %v9285, 2
  %v9288 = vrot.slane %v9013, 7
  %v9289 = vsel %vm2796, %v9287, %v9288
  %v9290 = vrot.slane %v9288, 2
  %v9291 = vrot.slane %v9012, 7
  %v9292 = vsel %vm2796, %v9290, %v9291
  %v9293 = vrot.slane %v9014, 7
  %v9294 = vrot.slane %v9293, 2
  %v9295 = vrot.slane %v9022, 7
  %v9296 = vsel %vm2796, %v9294, %v9295
  %v9297 = vrot.slane %v9295, 2
  %v9298 = vrot.slane %v9030, 7
  %v9299 = vsel %vm2796, %v9297, %v9298
  %v9300 = vrot.slane %v9298, 2
  %v9301 = vrot.slane %v9029, 7
  %v9302 = vsel %vm2796, %v9300, %v9301
  %v9303 = vrot.slane %v9301, 2
  %v9304 = vrot.slane %v9031, 7
  %v9305 = vsel %vm2796, %v9303, %v9304
  %v9306 = vrot.slane %v9039, 7
  %v9307 = vrot.slane %v9306, 2
  %v9308 = vrot.slane %v9047, 7
  %v9309 = vsel %vm2796, %v9307, %v9308
  %v9310 = vrot.slane %v9308, 2
  %v9311 = vrot.slane %v9046, 7
  %v9312 = vsel %vm2796, %v9310, %v9311
  %v9313 = vrot.slane %v9311, 2
  %v9314 = vrot.slane %v9048, 7
  %v9315 = vsel %vm2796, %v9313, %v9314
  %v9316 = vrot.slane %v9314, 2
  %v9317 = vrot.slane %v9056, 7
  %v9318 = vsel %vm2796, %v9316, %v9317
  %v9319 = vrot.slane %v9064, 7
  %v9320 = vrot.slane %v9319, 2
  %v9321 = vrot.slane %v9063, 7
  %v9322 = vsel %vm2796, %v9320, %v9321
  %v9323 = vrot.slane %v9321, 2
  %v9324 = vrot.slane %v9065, 7
  %v9325 = vsel %vm2796, %v9323, %v9324
  %v9326 = vrot.slane %v9324, 2
  %v9327 = vrot.slane %v9073, 7
  %v9328 = vsel %vm2796, %v9326, %v9327
  %v9329 = vrot.slane %v9327, 2
  %v9330 = vrot.slane %v9081, 7
  %v9331 = vsel %vm2796, %v9329, %v9330
  %v9332 = vrot.slane %v9080, 7
  %v9333 = vrot.slane %v9332, 2
  %v9334 = vrot.slane %v9082, 7
  %v9335 = vsel %vm2796, %v9333, %v9334
  %v9336 = vrot.slane %v9334, 2
  %v9337 = vrot.slane %v9090, 7
  %v9338 = vsel %vm2796, %v9336, %v9337
  %v9339 = vrot.slane %v9337, 2
  %v9340 = vrot.slane %v9098, 7
  %v9341 = vsel %vm2796, %v9339, %v9340
  %v9342 = vrot.slane %v9340, 2
  %v9343 = vrot.slane %v9097, 7
  %v9344 = vsel %vm2796, %v9342, %v9343
  %v9345 = vrot.slane %v9099, 7
  %v9346 = vrot.slane %v9345, 2
  %v9347 = vrot.slane %v9107, 7
  %v9348 = vsel %vm2796, %v9346, %v9347
  %v9349 = vrot.slane %v9347, 2
  %v9350 = vrot.slane %v9115, 7
  %v9351 = vsel %vm2796, %v9349, %v9350
  %v9352 = vrot.slane %v9350, 2
  %v9353 = vrot.slane %v9114, 7
  %v9354 = vsel %vm2796, %v9352, %v9353
  %v9355 = vrot.slane %v9353, 2
  %v9356 = vrot.slane %v9116, 7
  %v9357 = vsel %vm2796, %v9355, %v9356
  %v9358 = vrot.slane %v9124, 7
  %v9359 = vrot.slane %v9358, 2
  %v9360 = vrot.slane %v9132, 7
  %v9361 = vsel %vm2796, %v9359, %v9360
  %v9362 = vrot.slane %v9360, 2
  %v9363 = vrot.slane %v9131, 7
  %v9364 = vsel %vm2796, %v9362, %v9363
  %v9365 = vrot.slane %v9363, 2
  %v9366 = vrot.slane %v9133, 7
  %v9367 = vsel %vm2796, %v9365, %v9366
  %v9368 = vrot.slane %v9366, 2
  %v9369 = vrot.slane %v9141, 7
  %v9370 = vsel %vm2796, %v9368, %v9369
  %v9371 = vrot.slane %v9149, 7
  %v9372 = vrot.slane %v9371, 2
  %v9373 = vrot.slane %v9148, 7
  %v9374 = vsel %vm2796, %v9372, %v9373
  %v9375 = vrot.slane %v9373, 2
  %v9376 = vrot.slane %v9150, 7
  %v9377 = vsel %vm2796, %v9375, %v9376
  %v9378 = vrot.slane %v9376, 2
  %v9379 = vrot.slane %v9158, 7
  %v9380 = vsel %vm2796, %v9378, %v9379
  %v9381 = vrot.slane %v9379, 2
  %v9382 = vrot.slane %v9166, 7
  %v9383 = vsel %vm2796, %v9381, %v9382
  %v9384 = vrot.slane %v9165, 7
  %v9385 = vrot.slane %v9384, 2
  %v9386 = vrot.slane %v9167, 7
  %v9387 = vsel %vm2796, %v9385, %v9386
  %v9388 = vrot.slane %v9386, 2
  %v9389 = vrot.slane %v9175, 7
  %v9390 = vsel %vm2796, %v9388, %v9389
  %v9391 = vrot.slane %v9389, 2
  %v9392 = vrot.slane %v9183, 7
  %v9393 = vsel %vm2796, %v9391, %v9392
  %v9394 = vrot.slane %v9392, 2
  %v9395 = vrot.slane %v9182, 7
  %v9396 = vsel %vm2796, %v9394, %v9395
  %v9397 = vrot.slane %v9184, 7
  %v9398 = vrot.slane %v9397, 2
  %v9399 = vrot.slane %v9192, 7
  %v9400 = vsel %vm2796, %v9398, %v9399
  %v9401 = vrot.slane %v9399, 2
  %v9402 = vrot.slane %v9200, 7
  %v9403 = vsel %vm2796, %v9401, %v9402
  %v9404 = vrot.slane %v9402, 2
  %v9405 = vrot.slane %v9199, 7
  %v9406 = vsel %vm2796, %v9404, %v9405
  %v9407 = vrot.slane %v9405, 2
  %v9408 = vrot.slane %v9201, 7
  %v9409 = vsel %vm2796, %v9407, %v9408
  %v9474 = vadd.f32 %v8660, %v9205
  %v9475 = vadd.f32 %v8661, %v9208
  %v9476 = vadd.f32 %v8662, %v9211
  %v9477 = vadd.f32 %v8663, %v9214
  %v9478 = vadd.f32 %v8664, %v9218
  %v9479 = vadd.f32 %v8665, %v9221
  %v9480 = vadd.f32 %v8666, %v9224
  %v9481 = vadd.f32 %v8667, %v9227
  %v9482 = vadd.f32 %v8668, %v9231
  %v9483 = vadd.f32 %v8669, %v9234
  %v9484 = vadd.f32 %v8670, %v9237
  %v9485 = vadd.f32 %v8671, %v9240
  %v9486 = vadd.f32 %v8672, %v9244
  %v9487 = vadd.f32 %v8673, %v9247
  %v9488 = vadd.f32 %v8674, %v9250
  %v9489 = vadd.f32 %v8675, %v9253
  %v9490 = vadd.f32 %v8676, %v9257
  %v9491 = vadd.f32 %v8677, %v9260
  %v9492 = vadd.f32 %v8678, %v9263
  %v9493 = vadd.f32 %v8679, %v9266
  %v9494 = vadd.f32 %v8680, %v9270
  %v9495 = vadd.f32 %v8681, %v9273
  %v9496 = vadd.f32 %v8682, %v9276
  %v9497 = vadd.f32 %v8683, %v9279
  %v9498 = vadd.f32 %v8684, %v9283
  %v9499 = vadd.f32 %v8685, %v9286
  %v9500 = vadd.f32 %v8686, %v9289
  %v9501 = vadd.f32 %v8687, %v9292
  %v9502 = vadd.f32 %v8688, %v9296
  %v9503 = vadd.f32 %v8689, %v9299
  %v9504 = vadd.f32 %v8690, %v9302
  %v9505 = vadd.f32 %v8691, %v9305
  %v9506 = vadd.f32 %v8692, %v9309
  %v9507 = vadd.f32 %v8693, %v9312
  %v9508 = vadd.f32 %v8694, %v9315
  %v9509 = vadd.f32 %v8695, %v9318
  %v9510 = vadd.f32 %v8696, %v9322
  %v9511 = vadd.f32 %v8697, %v9325
  %v9512 = vadd.f32 %v8698, %v9328
  %v9513 = vadd.f32 %v8699, %v9331
  %v9514 = vadd.f32 %v8700, %v9335
  %v9515 = vadd.f32 %v8701, %v9338
  %v9516 = vadd.f32 %v8702, %v9341
  %v9517 = vadd.f32 %v8703, %v9344
  %v9518 = vadd.f32 %v8704, %v9348
  %v9519 = vadd.f32 %v8705, %v9351
  %v9520 = vadd.f32 %v8706, %v9354
  %v9521 = vadd.f32 %v8707, %v9357
  %v9522 = vadd.f32 %v8708, %v9361
  %v9523 = vadd.f32 %v8709, %v9364
  %v9524 = vadd.f32 %v8710, %v9367
  %v9525 = vadd.f32 %v8711, %v9370
  %v9526 = vadd.f32 %v8712, %v9374
  %v9527 = vadd.f32 %v8713, %v9377
  %v9528 = vadd.f32 %v8714, %v9380
  %v9529 = vadd.f32 %v8715, %v9383
  %v9530 = vadd.f32 %v8716, %v9387
  %v9531 = vadd.f32 %v8717, %v9390
  %v9532 = vadd.f32 %v8718, %v9393
  %v9533 = vadd.f32 %v8719, %v9396
  %v9534 = vadd.f32 %v8720, %v9400
  %v9535 = vadd.f32 %v8721, %v9403
  %v9536 = vadd.f32 %v8722, %v9406
  %v9537 = vadd.f32 %v8723, %v9409
  %s9538 = scalar_lea.vmem %s6, 32
  %v9539 = vld [vmem:[%s9538] sm:$0xf]
  %v9541 = vsel %vm1780, %v9539, 0
  %9543 = vmatprep.subr.bf16.mxu0 0
  %9544 = vmatpush1.bf16.msra.mxu0 %v9541
  %9545 = vmatprep.subr.bf16.mxu0 0
  %9546 = vmatpush1.bf16.msra.mxu0 0
  %9547 = vmatprep.subr.bf16.mxu0 0
  %9548 = vmatpush1.bf16.msra.mxu0 0
  %9549 = vmatprep.subr.bf16.mxu0 0
  %9550 = vmatpush1.bf16.msra.mxu0 0
  %9551 = vmatprep.subr.bf16.mxu0 0
  %9552 = vmatpush1.bf16.msra.mxu0 0
  %9553 = vmatprep.subr.bf16.mxu0 0
  %9554 = vmatpush1.bf16.msra.mxu0 0
  %9555 = vmatprep.subr.bf16.mxu0 0
  %9556 = vmatpush1.bf16.msra.mxu0 0
  %9557 = vmatprep.subr.bf16.mxu0 0
  %9558 = vmatpush1.bf16.msra.mxu0 0
  %9559 = vmatprep.subr.bf16.mxu0 0
  %9560 = vmatpush1.bf16.msra.mxu0 0
  %9561 = vmatprep.subr.bf16.mxu0 0
  %9562 = vmatpush1.bf16.msra.mxu0 0
  %9563 = vmatprep.subr.bf16.mxu0 0
  %9564 = vmatpush1.bf16.msra.mxu0 0
  %9565 = vmatprep.subr.bf16.mxu0 0
  %9566 = vmatpush1.bf16.msra.mxu0 0
  %9567 = vmatprep.subr.bf16.mxu0 0
  %9568 = vmatpush1.bf16.msra.mxu0 0
  %9569 = vmatprep.subr.bf16.mxu0 0
  %9570 = vmatpush1.bf16.msra.mxu0 0
  %9571 = vmatprep.subr.bf16.mxu0 0
  %9572 = vmatpush1.bf16.msra.mxu0 0
  %9573 = vmatprep.subr.bf16.mxu0 0
  %9574 = vmatpush1.bf16.msra.mxu0 0
  %9575 = vmatprep.mubr.bf16.mxu0 0
  %9576 = vmatmul.mubr.bf16.gmra.mrb[0].mxu0 %v8099
  %v9577 = vpop.f32.mrb[0].mxu0
  %v9578 = vadd.f32 0.0, %v9577
  %v9579 = vpop.f32.mrb[0].mxu0
  %v9580 = vpop.f32.mrb[0].mxu0
  %v9581 = vadd.f32 0.0, %v9580
  %v9582 = vpop.f32.mrb[0].mxu0
  %9583 = vmatprep.mubr.bf16.mxu0 0
  %9584 = vmatmul.mubr.bf16.gmra.mrb[0].mxu0 %v8102
  %v9585 = vpop.f32.mrb[0].mxu0
  %v9586 = vadd.f32 0.0, %v9585
  %v9587 = vpop.f32.mrb[0].mxu0
  %v9588 = vpop.f32.mrb[0].mxu0
  %v9589 = vadd.f32 0.0, %v9588
  %v9590 = vpop.f32.mrb[0].mxu0
  %9591 = vmatprep.mubr.bf16.mxu0 0
  %9592 = vmatmul.mubr.bf16.gmra.mrb[0].mxu0 %v8105
  %v9593 = vpop.f32.mrb[0].mxu0
  %v9594 = vadd.f32 0.0, %v9593
  %v9595 = vpop.f32.mrb[0].mxu0
  %v9596 = vpop.f32.mrb[0].mxu0
  %v9597 = vadd.f32 0.0, %v9596
  %v9598 = vpop.f32.mrb[0].mxu0
  %9599 = vmatprep.mubr.bf16.mxu0 0
  %9600 = vmatmul.mubr.bf16.gmra.mrb[0].mxu0 %v8108
  %v9601 = vpop.f32.mrb[0].mxu0
  %v9602 = vadd.f32 0.0, %v9601
  %v9603 = vpop.f32.mrb[0].mxu0
  %v9604 = vpop.f32.mrb[0].mxu0
  %v9605 = vadd.f32 0.0, %v9604
  %v9606 = vpop.f32.mrb[0].mxu0
  %9607 = vmatprep.mubr.bf16.mxu0 0
  %9608 = vmatmul.mubr.bf16.gmra.mrb[0].mxu0 %v8111
  %v9609 = vpop.f32.mrb[0].mxu0
  %v9610 = vadd.f32 0.0, %v9609
  %v9611 = vpop.f32.mrb[0].mxu0
  %v9612 = vpop.f32.mrb[0].mxu0
  %v9613 = vadd.f32 0.0, %v9612
  %v9614 = vpop.f32.mrb[0].mxu0
  %9615 = vmatprep.mubr.bf16.mxu0 0
  %9616 = vmatmul.mubr.bf16.gmra.mrb[0].mxu0 %v8114
  %v9617 = vpop.f32.mrb[0].mxu0
  %v9618 = vadd.f32 0.0, %v9617
  %v9619 = vpop.f32.mrb[0].mxu0
  %v9620 = vpop.f32.mrb[0].mxu0
  %v9621 = vadd.f32 0.0, %v9620
  %v9622 = vpop.f32.mrb[0].mxu0
  %9623 = vmatprep.mubr.bf16.mxu0 0
  %9624 = vmatmul.mubr.bf16.gmra.mrb[0].mxu0 %v8117
  %v9625 = vpop.f32.mrb[0].mxu0
  %v9626 = vadd.f32 0.0, %v9625
  %v9627 = vpop.f32.mrb[0].mxu0
  %v9628 = vpop.f32.mrb[0].mxu0
  %v9629 = vadd.f32 0.0, %v9628
  %v9630 = vpop.f32.mrb[0].mxu0
  %9631 = vmatprep.mubr.bf16.mxu0 0
  %9632 = vmatmul.mubr.bf16.gmra.mrb[0].mxu0 %v8120
  %v9633 = vpop.f32.mrb[0].mxu0
  %v9634 = vadd.f32 0.0, %v9633
  %v9635 = vpop.f32.mrb[0].mxu0
  %v9636 = vpop.f32.mrb[0].mxu0
  %v9637 = vadd.f32 0.0, %v9636
  %v9638 = vpop.f32.mrb[0].mxu0
  %9639 = vmatprep.mubr.bf16.mxu0 0
  %9640 = vmatmul.mubr.bf16.gmra.mrb[0].mxu0 %v8123
  %v9641 = vpop.f32.mrb[0].mxu0
  %v9642 = vadd.f32 0.0, %v9641
  %v9643 = vpop.f32.mrb[0].mxu0
  %v9644 = vpop.f32.mrb[0].mxu0
  %v9645 = vadd.f32 0.0, %v9644
  %v9646 = vpop.f32.mrb[0].mxu0
  %9647 = vmatprep.mubr.bf16.mxu0 0
  %9648 = vmatmul.mubr.bf16.gmra.mrb[0].mxu0 %v8126
  %v9649 = vpop.f32.mrb[0].mxu0
  %v9650 = vadd.f32 0.0, %v9649
  %v9651 = vpop.f32.mrb[0].mxu0
  %v9652 = vpop.f32.mrb[0].mxu0
  %v9653 = vadd.f32 0.0, %v9652
  %v9654 = vpop.f32.mrb[0].mxu0
  %9655 = vdwg.mxu0
  %v9676 = vcombine.high %v9578, %v9578
  %v9678 = vunpack.c.l.s4 1983009808
  %v9679 = vunpack.c.0.s8 %v9678
  %v9680 = vlaneseq
  %v9681 = vshrl.u32 %v9680, 7
  %v9682 = vsub.s32 %v9679, %v9681
  %v9683 = vrot.slane %v9578, %v9682
  %v9685 = vunpack.c.l.s4 1983009808
  %v9686 = vunpack.c.0.s8 %v9685
  %v9687 = vlaneseq
  %v9688 = vshrl.u32 %v9687, 7
  %v9689 = vsub.s32 %v9686, %v9688
  %v9690 = vrot.slane %v9676, %v9689
  %v9691 = vcombine.high %v9683, %v9683
  %v9692 = vcombine.high %v9690, %v9690
  %v9693 = vcombine.high %v9581, %v9581
  %v9695 = vunpack.c.l.s4 1983009808
  %v9696 = vunpack.c.0.s8 %v9695
  %v9697 = vlaneseq
  %v9698 = vshrl.u32 %v9697, 7
  %v9699 = vsub.s32 %v9696, %v9698
  %v9700 = vrot.slane %v9581, %v9699
  %v9702 = vunpack.c.l.s4 1983009808
  %v9703 = vunpack.c.0.s8 %v9702
  %v9704 = vlaneseq
  %v9705 = vshrl.u32 %v9704, 7
  %v9706 = vsub.s32 %v9703, %v9705
  %v9707 = vrot.slane %v9693, %v9706
  %v9708 = vcombine.high %v9707, %v9707
  %v9709 = vcombine.high %v9586, %v9586
  %v9711 = vunpack.c.l.s4 1983009808
  %v9712 = vunpack.c.0.s8 %v9711
  %v9713 = vlaneseq
  %v9714 = vshrl.u32 %v9713, 7
  %v9715 = vsub.s32 %v9712, %v9714
  %v9716 = vrot.slane %v9586, %v9715
  %v9718 = vunpack.c.l.s4 1983009808
  %v9719 = vunpack.c.0.s8 %v9718
  %v9720 = vlaneseq
  %v9721 = vshrl.u32 %v9720, 7
  %v9722 = vsub.s32 %v9719, %v9721
  %v9723 = vrot.slane %v9709, %v9722
  %v9724 = vcombine.high %v9716, %v9716
  %v9725 = vcombine.high %v9723, %v9723
  %v9726 = vcombine.high %v9589, %v9589
  %v9728 = vunpack.c.l.s4 1983009808
  %v9729 = vunpack.c.0.s8 %v9728
  %v9730 = vlaneseq
  %v9731 = vshrl.u32 %v9730, 7
  %v9732 = vsub.s32 %v9729, %v9731
  %v9733 = vrot.slane %v9589, %v9732
  %v9735 = vunpack.c.l.s4 1983009808
  %v9736 = vunpack.c.0.s8 %v9735
  %v9737 = vlaneseq
  %v9738 = vshrl.u32 %v9737, 7
  %v9739 = vsub.s32 %v9736, %v9738
  %v9740 = vrot.slane %v9726, %v9739
  %v9741 = vcombine.high %v9733, %v9733
  %v9742 = vcombine.high %v9594, %v9594
  %v9744 = vunpack.c.l.s4 1983009808
  %v9745 = vunpack.c.0.s8 %v9744
  %v9746 = vlaneseq
  %v9747 = vshrl.u32 %v9746, 7
  %v9748 = vsub.s32 %v9745, %v9747
  %v9749 = vrot.slane %v9594, %v9748
  %v9751 = vunpack.c.l.s4 1983009808
  %v9752 = vunpack.c.0.s8 %v9751
  %v9753 = vlaneseq
  %v9754 = vshrl.u32 %v9753, 7
  %v9755 = vsub.s32 %v9752, %v9754
  %v9756 = vrot.slane %v9742, %v9755
  %v9757 = vcombine.high %v9749, %v9749
  %v9758 = vcombine.high %v9756, %v9756
  %v9759 = vcombine.high %v9597, %v9597
  %v9761 = vunpack.c.l.s4 1983009808
  %v9762 = vunpack.c.0.s8 %v9761
  %v9763 = vlaneseq
  %v9764 = vshrl.u32 %v9763, 7
  %v9765 = vsub.s32 %v9762, %v9764
  %v9766 = vrot.slane %v9597, %v9765
  %v9768 = vunpack.c.l.s4 1983009808
  %v9769 = vunpack.c.0.s8 %v9768
  %v9770 = vlaneseq
  %v9771 = vshrl.u32 %v9770, 7
  %v9772 = vsub.s32 %v9769, %v9771
  %v9773 = vrot.slane %v9759, %v9772
  %v9774 = vcombine.high %v9766, %v9766
  %v9775 = vcombine.high %v9773, %v9773
  %v9776 = vcombine.high %v9602, %v9602
  %v9778 = vunpack.c.l.s4 1983009808
  %v9779 = vunpack.c.0.s8 %v9778
  %v9780 = vlaneseq
  %v9781 = vshrl.u32 %v9780, 7
  %v9782 = vsub.s32 %v9779, %v9781
  %v9783 = vrot.slane %v9602, %v9782
  %v9785 = vunpack.c.l.s4 1983009808
  %v9786 = vunpack.c.0.s8 %v9785
  %v9787 = vlaneseq
  %v9788 = vshrl.u32 %v9787, 7
  %v9789 = vsub.s32 %v9786, %v9788
  %v9790 = vrot.slane %v9776, %v9789
  %v9791 = vcombine.high %v9790, %v9790
  %v9792 = vcombine.high %v9605, %v9605
  %v9794 = vunpack.c.l.s4 1983009808
  %v9795 = vunpack.c.0.s8 %v9794
  %v9796 = vlaneseq
  %v9797 = vshrl.u32 %v9796, 7
  %v9798 = vsub.s32 %v9795, %v9797
  %v9799 = vrot.slane %v9605, %v9798
  %v9801 = vunpack.c.l.s4 1983009808
  %v9802 = vunpack.c.0.s8 %v9801
  %v9803 = vlaneseq
  %v9804 = vshrl.u32 %v9803, 7
  %v9805 = vsub.s32 %v9802, %v9804
  %v9806 = vrot.slane %v9792, %v9805
  %v9807 = vcombine.high %v9799, %v9799
  %v9808 = vcombine.high %v9806, %v9806
  %v9809 = vcombine.high %v9610, %v9610
  %v9811 = vunpack.c.l.s4 1983009808
  %v9812 = vunpack.c.0.s8 %v9811
  %v9813 = vlaneseq
  %v9814 = vshrl.u32 %v9813, 7
  %v9815 = vsub.s32 %v9812, %v9814
  %v9816 = vrot.slane %v9610, %v9815
  %v9818 = vunpack.c.l.s4 1983009808
  %v9819 = vunpack.c.0.s8 %v9818
  %v9820 = vlaneseq
  %v9821 = vshrl.u32 %v9820, 7
  %v9822 = vsub.s32 %v9819, %v9821
  %v9823 = vrot.slane %v9809, %v9822
  %v9824 = vcombine.high %v9816, %v9816
  %v9825 = vcombine.high %v9613, %v9613
  %v9827 = vunpack.c.l.s4 1983009808
  %v9828 = vunpack.c.0.s8 %v9827
  %v9829 = vlaneseq
  %v9830 = vshrl.u32 %v9829, 7
  %v9831 = vsub.s32 %v9828, %v9830
  %v9832 = vrot.slane %v9613, %v9831
  %v9834 = vunpack.c.l.s4 1983009808
  %v9835 = vunpack.c.0.s8 %v9834
  %v9836 = vlaneseq
  %v9837 = vshrl.u32 %v9836, 7
  %v9838 = vsub.s32 %v9835, %v9837
  %v9839 = vrot.slane %v9825, %v9838
  %v9840 = vcombine.high %v9832, %v9832
  %v9841 = vcombine.high %v9839, %v9839
  %v9842 = vcombine.high %v9618, %v9618
  %v9844 = vunpack.c.l.s4 1983009808
  %v9845 = vunpack.c.0.s8 %v9844
  %v9846 = vlaneseq
  %v9847 = vshrl.u32 %v9846, 7
  %v9848 = vsub.s32 %v9845, %v9847
  %v9849 = vrot.slane %v9618, %v9848
  %v9851 = vunpack.c.l.s4 1983009808
  %v9852 = vunpack.c.0.s8 %v9851
  %v9853 = vlaneseq
  %v9854 = vshrl.u32 %v9853, 7
  %v9855 = vsub.s32 %v9852, %v9854
  %v9856 = vrot.slane %v9842, %v9855
  %v9857 = vcombine.high %v9849, %v9849
  %v9858 = vcombine.high %v9856, %v9856
  %v9859 = vcombine.high %v9621, %v9621
  %v9861 = vunpack.c.l.s4 1983009808
  %v9862 = vunpack.c.0.s8 %v9861
  %v9863 = vlaneseq
  %v9864 = vshrl.u32 %v9863, 7
  %v9865 = vsub.s32 %v9862, %v9864
  %v9866 = vrot.slane %v9621, %v9865
  %v9868 = vunpack.c.l.s4 1983009808
  %v9869 = vunpack.c.0.s8 %v9868
  %v9870 = vlaneseq
  %v9871 = vshrl.u32 %v9870, 7
  %v9872 = vsub.s32 %v9869, %v9871
  %v9873 = vrot.slane %v9859, %v9872
  %v9874 = vcombine.high %v9873, %v9873
  %v9875 = vcombine.high %v9626, %v9626
  %v9877 = vunpack.c.l.s4 1983009808
  %v9878 = vunpack.c.0.s8 %v9877
  %v9879 = vlaneseq
  %v9880 = vshrl.u32 %v9879, 7
  %v9881 = vsub.s32 %v9878, %v9880
  %v9882 = vrot.slane %v9626, %v9881
  %v9884 = vunpack.c.l.s4 1983009808
  %v9885 = vunpack.c.0.s8 %v9884
  %v9886 = vlaneseq
  %v9887 = vshrl.u32 %v9886, 7
  %v9888 = vsub.s32 %v9885, %v9887
  %v9889 = vrot.slane %v9875, %v9888
  %v9890 = vcombine.high %v9882, %v9882
  %v9891 = vcombine.high %v9889, %v9889
  %v9892 = vcombine.high %v9629, %v9629
  %v9894 = vunpack.c.l.s4 1983009808
  %v9895 = vunpack.c.0.s8 %v9894
  %v9896 = vlaneseq
  %v9897 = vshrl.u32 %v9896, 7
  %v9898 = vsub.s32 %v9895, %v9897
  %v9899 = vrot.slane %v9629, %v9898
  %v9901 = vunpack.c.l.s4 1983009808
  %v9902 = vunpack.c.0.s8 %v9901
  %v9903 = vlaneseq
  %v9904 = vshrl.u32 %v9903, 7
  %v9905 = vsub.s32 %v9902, %v9904
  %v9906 = vrot.slane %v9892, %v9905
  %v9907 = vcombine.high %v9899, %v9899
  %v9908 = vcombine.high %v9634, %v9634
  %v9910 = vunpack.c.l.s4 1983009808
  %v9911 = vunpack.c.0.s8 %v9910
  %v9912 = vlaneseq
  %v9913 = vshrl.u32 %v9912, 7
  %v9914 = vsub.s32 %v9911, %v9913
  %v9915 = vrot.slane %v9634, %v9914
  %v9917 = vunpack.c.l.s4 1983009808
  %v9918 = vunpack.c.0.s8 %v9917
  %v9919 = vlaneseq
  %v9920 = vshrl.u32 %v9919, 7
  %v9921 = vsub.s32 %v9918, %v9920
  %v9922 = vrot.slane %v9908, %v9921
  %v9923 = vcombine.high %v9915, %v9915
  %v9924 = vcombine.high %v9922, %v9922
  %v9925 = vcombine.high %v9637, %v9637
  %v9927 = vunpack.c.l.s4 1983009808
  %v9928 = vunpack.c.0.s8 %v9927
  %v9929 = vlaneseq
  %v9930 = vshrl.u32 %v9929, 7
  %v9931 = vsub.s32 %v9928, %v9930
  %v9932 = vrot.slane %v9637, %v9931
  %v9934 = vunpack.c.l.s4 1983009808
  %v9935 = vunpack.c.0.s8 %v9934
  %v9936 = vlaneseq
  %v9937 = vshrl.u32 %v9936, 7
  %v9938 = vsub.s32 %v9935, %v9937
  %v9939 = vrot.slane %v9925, %v9938
  %v9940 = vcombine.high %v9932, %v9932
  %v9941 = vcombine.high %v9939, %v9939
  %v9942 = vcombine.high %v9642, %v9642
  %v9944 = vunpack.c.l.s4 1983009808
  %v9945 = vunpack.c.0.s8 %v9944
  %v9946 = vlaneseq
  %v9947 = vshrl.u32 %v9946, 7
  %v9948 = vsub.s32 %v9945, %v9947
  %v9949 = vrot.slane %v9642, %v9948
  %v9951 = vunpack.c.l.s4 1983009808
  %v9952 = vunpack.c.0.s8 %v9951
  %v9953 = vlaneseq
  %v9954 = vshrl.u32 %v9953, 7
  %v9955 = vsub.s32 %v9952, %v9954
  %v9956 = vrot.slane %v9942, %v9955
  %v9957 = vcombine.high %v9956, %v9956
  %v9958 = vcombine.high %v9645, %v9645
  %v9960 = vunpack.c.l.s4 1983009808
  %v9961 = vunpack.c.0.s8 %v9960
  %v9962 = vlaneseq
  %v9963 = vshrl.u32 %v9962, 7
  %v9964 = vsub.s32 %v9961, %v9963
  %v9965 = vrot.slane %v9645, %v9964
  %v9967 = vunpack.c.l.s4 1983009808
  %v9968 = vunpack.c.0.s8 %v9967
  %v9969 = vlaneseq
  %v9970 = vshrl.u32 %v9969, 7
  %v9971 = vsub.s32 %v9968, %v9970
  %v9972 = vrot.slane %v9958, %v9971
  %v9973 = vcombine.high %v9965, %v9965
  %v9974 = vcombine.high %v9972, %v9972
  %v9975 = vcombine.high %v9650, %v9650
  %v9977 = vunpack.c.l.s4 1983009808
  %v9978 = vunpack.c.0.s8 %v9977
  %v9979 = vlaneseq
  %v9980 = vshrl.u32 %v9979, 7
  %v9981 = vsub.s32 %v9978, %v9980
  %v9982 = vrot.slane %v9650, %v9981
  %v9984 = vunpack.c.l.s4 1983009808
  %v9985 = vunpack.c.0.s8 %v9984
  %v9986 = vlaneseq
  %v9987 = vshrl.u32 %v9986, 7
  %v9988 = vsub.s32 %v9985, %v9987
  %v9989 = vrot.slane %v9975, %v9988
  %v9990 = vcombine.high %v9982, %v9982
  %v9991 = vcombine.high %v9653, %v9653
  %v9993 = vunpack.c.l.s4 1983009808
  %v9994 = vunpack.c.0.s8 %v9993
  %v9995 = vlaneseq
  %v9996 = vshrl.u32 %v9995, 7
  %v9997 = vsub.s32 %v9994, %v9996
  %v9998 = vrot.slane %v9653, %v9997
  %v10000 = vunpack.c.l.s4 1983009808
  %v10001 = vunpack.c.0.s8 %v10000
  %v10002 = vlaneseq
  %v10003 = vshrl.u32 %v10002, 7
  %v10004 = vsub.s32 %v10001, %v10003
  %v10005 = vrot.slane %v9991, %v10004
  %v10006 = vcombine.high %v9998, %v9998
  %v10007 = vcombine.high %v10005, %v10005
  %v10072 = vadd.f32 %v9474, %v9691
  %v10073 = vadd.f32 %v9475, %v9690
  %v10074 = vadd.f32 %v9476, %v9692
  %v10075 = vadd.f32 %v9477, %v9700
  %v10076 = vadd.f32 %v9478, %v9707
  %v10077 = vadd.f32 %v9479, %v9708
  %v10078 = vadd.f32 %v9480, %v9716
  %v10079 = vadd.f32 %v9481, %v9724
  %v10080 = vadd.f32 %v9482, %v9725
  %v10081 = vadd.f32 %v9483, %v9733
  %v10082 = vadd.f32 %v9484, %v9741
  %v10083 = vadd.f32 %v9485, %v9740
  %v10084 = vadd.f32 %v9486, %v9749
  %v10085 = vadd.f32 %v9487, %v9757
  %v10086 = vadd.f32 %v9488, %v9756
  %v10087 = vadd.f32 %v9489, %v9758
  %v10088 = vadd.f32 %v9490, %v9774
  %v10089 = vadd.f32 %v9491, %v9773
  %v10090 = vadd.f32 %v9492, %v9775
  %v10091 = vadd.f32 %v9493, %v9783
  %v10092 = vadd.f32 %v9494, %v9790
  %v10093 = vadd.f32 %v9495, %v9791
  %v10094 = vadd.f32 %v9496, %v9799
  %v10095 = vadd.f32 %v9497, %v9807
  %v10096 = vadd.f32 %v9498, %v9808
  %v10097 = vadd.f32 %v9499, %v9816
  %v10098 = vadd.f32 %v9500, %v9824
  %v10099 = vadd.f32 %v9501, %v9823
  %v10100 = vadd.f32 %v9502, %v9832
  %v10101 = vadd.f32 %v9503, %v9840
  %v10102 = vadd.f32 %v9504, %v9839
  %v10103 = vadd.f32 %v9505, %v9841
  %v10104 = vadd.f32 %v9506, %v9857
  %v10105 = vadd.f32 %v9507, %v9856
  %v10106 = vadd.f32 %v9508, %v9858
  %v10107 = vadd.f32 %v9509, %v9866
  %v10108 = vadd.f32 %v9510, %v9873
  %v10109 = vadd.f32 %v9511, %v9874
  %v10110 = vadd.f32 %v9512, %v9882
  %v10111 = vadd.f32 %v9513, %v9890
  %v10112 = vadd.f32 %v9514, %v9891
  %v10113 = vadd.f32 %v9515, %v9899
  %v10114 = vadd.f32 %v9516, %v9907
  %v10115 = vadd.f32 %v9517, %v9906
  %v10116 = vadd.f32 %v9518, %v9915
  %v10117 = vadd.f32 %v9519, %v9923
  %v10118 = vadd.f32 %v9520, %v9922
  %v10119 = vadd.f32 %v9521, %v9924
  %v10120 = vadd.f32 %v9522, %v9940
  %v10121 = vadd.f32 %v9523, %v9939
  %v10122 = vadd.f32 %v9524, %v9941
  %v10123 = vadd.f32 %v9525, %v9949
  %v10124 = vadd.f32 %v9526, %v9956
  %v10125 = vadd.f32 %v9527, %v9957
  %v10126 = vadd.f32 %v9528, %v9965
  %v10127 = vadd.f32 %v9529, %v9973
  %v10128 = vadd.f32 %v9530, %v9974
  %v10129 = vadd.f32 %v9531, %v9982
  %v10130 = vadd.f32 %v9532, %v9990
  %v10131 = vadd.f32 %v9533, %v9989
  %v10132 = vadd.f32 %v9534, %v9998
  %v10133 = vadd.f32 %v9535, %v10006
  %v10134 = vadd.f32 %v9536, %v10005
  %v10135 = vadd.f32 %v9537, %v10007
  %v10136 = vld [vmem:[%s7] sm:$0x1]
  %v10138 = vlaneseq
  %v10139 = vshrl.u32 %v10138, 7
  %v10140 = vsub.s32 0, %v10139
  %v10141 = vrot.slane %v10136, %v10140
  %v10142 = vcombine.high %v10141, %v10141
  %v10144 = vunpack.c.l.s4 1983009808
  %v10145 = vunpack.c.0.s8 %v10144
  %v10146 = vlaneseq
  %v10147 = vshrl.u32 %v10146, 7
  %v10148 = vsub.s32 %v10145, %v10147
  %v10149 = vrot.slane %v10141, %v10148
  %v10151 = vunpack.c.l.s4 1983009808
  %v10152 = vunpack.c.0.s8 %v10151
  %v10153 = vlaneseq
  %v10154 = vshrl.u32 %v10153, 7
  %v10155 = vsub.s32 %v10152, %v10154
  %v10156 = vrot.slane %v10142, %v10155
  %v10157 = vcombine.high %v10149, %v10149
  %v10158 = vcombine.high %v10156, %v10156
  %v10163 = vmul.f32 %v10072, %v10149
  %v10164 = vmul.f32 %v10073, %v10157
  %v10165 = vmul.f32 %v10074, %v10156
  %v10166 = vmul.f32 %v10075, %v10158
  %v10167 = vmul.f32 %v10076, %v10149
  %v10168 = vmul.f32 %v10077, %v10157
  %v10169 = vmul.f32 %v10078, %v10156
  %v10170 = vmul.f32 %v10079, %v10158
  %v10171 = vmul.f32 %v10080, %v10149
  %v10172 = vmul.f32 %v10081, %v10157
  %v10173 = vmul.f32 %v10082, %v10156
  %v10174 = vmul.f32 %v10083, %v10158
  %v10175 = vmul.f32 %v10084, %v10149
  %v10176 = vmul.f32 %v10085, %v10157
  %v10177 = vmul.f32 %v10086, %v10156
  %v10178 = vmul.f32 %v10087, %v10158
  %v10179 = vmul.f32 %v10088, %v10149
  %v10180 = vmul.f32 %v10089, %v10157
  %v10181 = vmul.f32 %v10090, %v10156
  %v10182 = vmul.f32 %v10091, %v10158
  %v10183 = vmul.f32 %v10092, %v10149
  %v10184 = vmul.f32 %v10093, %v10157
  %v10185 = vmul.f32 %v10094, %v10156
  %v10186 = vmul.f32 %v10095, %v10158
  %v10187 = vmul.f32 %v10096, %v10149
  %v10188 = vmul.f32 %v10097, %v10157
  %v10189 = vmul.f32 %v10098, %v10156
  %v10190 = vmul.f32 %v10099, %v10158
  %v10191 = vmul.f32 %v10100, %v10149
  %v10192 = vmul.f32 %v10101, %v10157
  %v10193 = vmul.f32 %v10102, %v10156
  %v10194 = vmul.f32 %v10103, %v10158
  %v10195 = vmul.f32 %v10104, %v10149
  %v10196 = vmul.f32 %v10105, %v10157
  %v10197 = vmul.f32 %v10106, %v10156
  %v10198 = vmul.f32 %v10107, %v10158
  %v10199 = vmul.f32 %v10108, %v10149
  %v10200 = vmul.f32 %v10109, %v10157
  %v10201 = vmul.f32 %v10110, %v10156
  %v10202 = vmul.f32 %v10111, %v10158
  %v10203 = vmul.f32 %v10112, %v10149
  %v10204 = vmul.f32 %v10113, %v10157
  %v10205 = vmul.f32 %v10114, %v10156
  %v10206 = vmul.f32 %v10115, %v10158
  %v10207 = vmul.f32 %v10116, %v10149
  %v10208 = vmul.f32 %v10117, %v10157
  %v10209 = vmul.f32 %v10118, %v10156
  %v10210 = vmul.f32 %v10119, %v10158
  %v10211 = vmul.f32 %v10120, %v10149
  %v10212 = vmul.f32 %v10121, %v10157
  %v10213 = vmul.f32 %v10122, %v10156
  %v10214 = vmul.f32 %v10123, %v10158
  %v10215 = vmul.f32 %v10124, %v10149
  %v10216 = vmul.f32 %v10125, %v10157
  %v10217 = vmul.f32 %v10126, %v10156
  %v10218 = vmul.f32 %v10127, %v10158
  %v10219 = vmul.f32 %v10128, %v10149
  %v10220 = vmul.f32 %v10129, %v10157
  %v10221 = vmul.f32 %v10130, %v10156
  %v10222 = vmul.f32 %v10131, %v10158
  %v10223 = vmul.f32 %v10132, %v10149
  %v10224 = vmul.f32 %v10133, %v10157
  %v10225 = vmul.f32 %v10134, %v10156
  %v10226 = vmul.f32 %v10135, %v10158
  %v10227 = vld [vmem:[%s8] sm:$0x1]
  %v10229 = vlaneseq
  %v10230 = vshrl.u32 %v10229, 7
  %v10231 = vsub.s32 0, %v10230
  %v10232 = vrot.slane %v10227, %v10231
  %v10233 = vcombine.high %v10232, %v10232
  %v10235 = vunpack.c.l.s4 1983009808
  %v10236 = vunpack.c.0.s8 %v10235
  %v10237 = vlaneseq
  %v10238 = vshrl.u32 %v10237, 7
  %v10239 = vsub.s32 %v10236, %v10238
  %v10240 = vrot.slane %v10232, %v10239
  %v10242 = vunpack.c.l.s4 1983009808
  %v10243 = vunpack.c.0.s8 %v10242
  %v10244 = vlaneseq
  %v10245 = vshrl.u32 %v10244, 7
  %v10246 = vsub.s32 %v10243, %v10245
  %v10247 = vrot.slane %v10233, %v10246
  %v10248 = vcombine.high %v10240, %v10240
  %v10249 = vcombine.high %v10247, %v10247
  %v10254 = vadd.f32 %v10163, %v10240
  %v10255 = vadd.f32 %v10164, %v10248
  %v10256 = vadd.f32 %v10165, %v10247
  %v10257 = vadd.f32 %v10166, %v10249
  %v10258 = vadd.f32 %v10167, %v10240
  %v10259 = vadd.f32 %v10168, %v10248
  %v10260 = vadd.f32 %v10169, %v10247
  %v10261 = vadd.f32 %v10170, %v10249
  %v10262 = vadd.f32 %v10171, %v10240
  %v10263 = vadd.f32 %v10172, %v10248
  %v10264 = vadd.f32 %v10173, %v10247
  %v10265 = vadd.f32 %v10174, %v10249
  %v10266 = vadd.f32 %v10175, %v10240
  %v10267 = vadd.f32 %v10176, %v10248
  %v10268 = vadd.f32 %v10177, %v10247
  %v10269 = vadd.f32 %v10178, %v10249
  %v10270 = vadd.f32 %v10179, %v10240
  %v10271 = vadd.f32 %v10180, %v10248
  %v10272 = vadd.f32 %v10181, %v10247
  %v10273 = vadd.f32 %v10182, %v10249
  %v10274 = vadd.f32 %v10183, %v10240
  %v10275 = vadd.f32 %v10184, %v10248
  %v10276 = vadd.f32 %v10185, %v10247
  %v10277 = vadd.f32 %v10186, %v10249
  %v10278 = vadd.f32 %v10187, %v10240
  %v10279 = vadd.f32 %v10188, %v10248
  %v10280 = vadd.f32 %v10189, %v10247
  %v10281 = vadd.f32 %v10190, %v10249
  %v10282 = vadd.f32 %v10191, %v10240
  %v10283 = vadd.f32 %v10192, %v10248
  %v10284 = vadd.f32 %v10193, %v10247
  %v10285 = vadd.f32 %v10194, %v10249
  %v10286 = vadd.f32 %v10195, %v10240
  %v10287 = vadd.f32 %v10196, %v10248
  %v10288 = vadd.f32 %v10197, %v10247
  %v10289 = vadd.f32 %v10198, %v10249
  %v10290 = vadd.f32 %v10199, %v10240
  %v10291 = vadd.f32 %v10200, %v10248
  %v10292 = vadd.f32 %v10201, %v10247
  %v10293 = vadd.f32 %v10202, %v10249
  %v10294 = vadd.f32 %v10203, %v10240
  %v10295 = vadd.f32 %v10204, %v10248
  %v10296 = vadd.f32 %v10205, %v10247
  %v10297 = vadd.f32 %v10206, %v10249
  %v10298 = vadd.f32 %v10207, %v10240
  %v10299 = vadd.f32 %v10208, %v10248
  %v10300 = vadd.f32 %v10209, %v10247
  %v10301 = vadd.f32 %v10210, %v10249
  %v10302 = vadd.f32 %v10211, %v10240
  %v10303 = vadd.f32 %v10212, %v10248
  %v10304 = vadd.f32 %v10213, %v10247
  %v10305 = vadd.f32 %v10214, %v10249
  %v10306 = vadd.f32 %v10215, %v10240
  %v10307 = vadd.f32 %v10216, %v10248
  %v10308 = vadd.f32 %v10217, %v10247
  %v10309 = vadd.f32 %v10218, %v10249
  %v10310 = vadd.f32 %v10219, %v10240
  %v10311 = vadd.f32 %v10220, %v10248
  %v10312 = vadd.f32 %v10221, %v10247
  %v10313 = vadd.f32 %v10222, %v10249
  %v10314 = vadd.f32 %v10223, %v10240
  %v10315 = vadd.f32 %v10224, %v10248
  %v10316 = vadd.f32 %v10225, %v10247
  %v10317 = vadd.f32 %v10226, %v10249
  %v10318 = vmax.f32 %v10254, 0.0
  %v10319 = vmax.f32 %v10255, 0.0
  %v10320 = vmax.f32 %v10256, 0.0
  %v10321 = vmax.f32 %v10257, 0.0
  %v10322 = vmax.f32 %v10258, 0.0
  %v10323 = vmax.f32 %v10259, 0.0
  %v10324 = vmax.f32 %v10260, 0.0
  %v10325 = vmax.f32 %v10261, 0.0
  %v10326 = vmax.f32 %v10262, 0.0
  %v10327 = vmax.f32 %v10263, 0.0
  %v10328 = vmax.f32 %v10264, 0.0
  %v10329 = vmax.f32 %v10265, 0.0
  %v10330 = vmax.f32 %v10266, 0.0
  %v10331 = vmax.f32 %v10267, 0.0
  %v10332 = vmax.f32 %v10268, 0.0
  %v10333 = vmax.f32 %v10269, 0.0
  %v10334 = vmax.f32 %v10270, 0.0
  %v10335 = vmax.f32 %v10271, 0.0
  %v10336 = vmax.f32 %v10272, 0.0
  %v10337 = vmax.f32 %v10273, 0.0
  %v10338 = vmax.f32 %v10274, 0.0
  %v10339 = vmax.f32 %v10275, 0.0
  %v10340 = vmax.f32 %v10276, 0.0
  %v10341 = vmax.f32 %v10277, 0.0
  %v10342 = vmax.f32 %v10278, 0.0
  %v10343 = vmax.f32 %v10279, 0.0
  %v10344 = vmax.f32 %v10280, 0.0
  %v10345 = vmax.f32 %v10281, 0.0
  %v10346 = vmax.f32 %v10282, 0.0
  %v10347 = vmax.f32 %v10283, 0.0
  %v10348 = vmax.f32 %v10284, 0.0
  %v10349 = vmax.f32 %v10285, 0.0
  %v10350 = vmax.f32 %v10286, 0.0
  %v10351 = vmax.f32 %v10287, 0.0
  %v10352 = vmax.f32 %v10288, 0.0
  %v10353 = vmax.f32 %v10289, 0.0
  %v10354 = vmax.f32 %v10290, 0.0
  %v10355 = vmax.f32 %v10291, 0.0
  %v10356 = vmax.f32 %v10292, 0.0
  %v10357 = vmax.f32 %v10293, 0.0
  %v10358 = vmax.f32 %v10294, 0.0
  %v10359 = vmax.f32 %v10295, 0.0
  %v10360 = vmax.f32 %v10296, 0.0
  %v10361 = vmax.f32 %v10297, 0.0
  %v10362 = vmax.f32 %v10298, 0.0
  %v10363 = vmax.f32 %v10299, 0.0
  %v10364 = vmax.f32 %v10300, 0.0
  %v10365 = vmax.f32 %v10301, 0.0
  %v10366 = vmax.f32 %v10302, 0.0
  %v10367 = vmax.f32 %v10303, 0.0
  %v10368 = vmax.f32 %v10304, 0.0
  %v10369 = vmax.f32 %v10305, 0.0
  %v10370 = vmax.f32 %v10306, 0.0
  %v10371 = vmax.f32 %v10307, 0.0
  %v10372 = vmax.f32 %v10308, 0.0
  %v10373 = vmax.f32 %v10309, 0.0
  %v10374 = vmax.f32 %v10310, 0.0
  %v10375 = vmax.f32 %v10311, 0.0
  %v10376 = vmax.f32 %v10312, 0.0
  %v10377 = vmax.f32 %v10313, 0.0
  %v10378 = vmax.f32 %v10314, 0.0
  %v10379 = vmax.f32 %v10315, 0.0
  %v10380 = vmax.f32 %v10316, 0.0
  %v10381 = vmax.f32 %v10317, 0.0
  %v10446 = vcombine.low %v10318, %v10319
  %v10447 = vcombine.low %v10320, %v10321
  %v10449 = vunpack.c.l.s4 1983009808
  %v10450 = vunpack.c.0.s8 %v10449
  %v10451 = vlaneseq
  %v10452 = vshrl.u32 %v10451, 7
  %v10453 = vsub.s32 %v10450, %v10452
  %v10454 = vrot.slane %v10446, %v10453
  %v10456 = vunpack.c.l.s4 1983009808
  %v10457 = vunpack.c.0.s8 %v10456
  %v10458 = vlaneseq
  %v10459 = vshrl.u32 %v10458, 7
  %v10460 = vsub.s32 %v10457, %v10459
  %v10461 = vrot.slane %v10447, %v10460
  %v10462 = vcombine.low %v10454, %v10461
  %v10463 = vcombine.low %v10322, %v10323
  %v10464 = vcombine.low %v10324, %v10325
  %v10466 = vunpack.c.l.s4 1983009808
  %v10467 = vunpack.c.0.s8 %v10466
  %v10468 = vlaneseq
  %v10469 = vshrl.u32 %v10468, 7
  %v10470 = vsub.s32 %v10467, %v10469
  %v10471 = vrot.slane %v10463, %v10470
  %v10473 = vunpack.c.l.s4 1983009808
  %v10474 = vunpack.c.0.s8 %v10473
  %v10475 = vlaneseq
  %v10476 = vshrl.u32 %v10475, 7
  %v10477 = vsub.s32 %v10474, %v10476
  %v10478 = vrot.slane %v10464, %v10477
  %v10479 = vcombine.low %v10471, %v10478
  %v10480 = vcombine.low %v10326, %v10327
  %v10481 = vcombine.low %v10328, %v10329
  %v10483 = vunpack.c.l.s4 1983009808
  %v10484 = vunpack.c.0.s8 %v10483
  %v10485 = vlaneseq
  %v10486 = vshrl.u32 %v10485, 7
  %v10487 = vsub.s32 %v10484, %v10486
  %v10488 = vrot.slane %v10480, %v10487
  %v10490 = vunpack.c.l.s4 1983009808
  %v10491 = vunpack.c.0.s8 %v10490
  %v10492 = vlaneseq
  %v10493 = vshrl.u32 %v10492, 7
  %v10494 = vsub.s32 %v10491, %v10493
  %v10495 = vrot.slane %v10481, %v10494
  %v10496 = vcombine.low %v10488, %v10495
  %v10497 = vcombine.low %v10330, %v10331
  %v10498 = vcombine.low %v10332, %v10333
  %v10500 = vunpack.c.l.s4 1983009808
  %v10501 = vunpack.c.0.s8 %v10500
  %v10502 = vlaneseq
  %v10503 = vshrl.u32 %v10502, 7
  %v10504 = vsub.s32 %v10501, %v10503
  %v10505 = vrot.slane %v10497, %v10504
  %v10507 = vunpack.c.l.s4 1983009808
  %v10508 = vunpack.c.0.s8 %v10507
  %v10509 = vlaneseq
  %v10510 = vshrl.u32 %v10509, 7
  %v10511 = vsub.s32 %v10508, %v10510
  %v10512 = vrot.slane %v10498, %v10511
  %v10513 = vcombine.low %v10505, %v10512
  %v10514 = vcombine.low %v10334, %v10335
  %v10515 = vcombine.low %v10336, %v10337
  %v10517 = vunpack.c.l.s4 1983009808
  %v10518 = vunpack.c.0.s8 %v10517
  %v10519 = vlaneseq
  %v10520 = vshrl.u32 %v10519, 7
  %v10521 = vsub.s32 %v10518, %v10520
  %v10522 = vrot.slane %v10514, %v10521
  %v10524 = vunpack.c.l.s4 1983009808
  %v10525 = vunpack.c.0.s8 %v10524
  %v10526 = vlaneseq
  %v10527 = vshrl.u32 %v10526, 7
  %v10528 = vsub.s32 %v10525, %v10527
  %v10529 = vrot.slane %v10515, %v10528
  %v10530 = vcombine.low %v10522, %v10529
  %v10531 = vcombine.low %v10338, %v10339
  %v10532 = vcombine.low %v10340, %v10341
  %v10534 = vunpack.c.l.s4 1983009808
  %v10535 = vunpack.c.0.s8 %v10534
  %v10536 = vlaneseq
  %v10537 = vshrl.u32 %v10536, 7
  %v10538 = vsub.s32 %v10535, %v10537
  %v10539 = vrot.slane %v10531, %v10538
  %v10541 = vunpack.c.l.s4 1983009808
  %v10542 = vunpack.c.0.s8 %v10541
  %v10543 = vlaneseq
  %v10544 = vshrl.u32 %v10543, 7
  %v10545 = vsub.s32 %v10542, %v10544
  %v10546 = vrot.slane %v10532, %v10545
  %v10547 = vcombine.low %v10539, %v10546
  %v10548 = vcombine.low %v10342, %v10343
  %v10549 = vcombine.low %v10344, %v10345
  %v10551 = vunpack.c.l.s4 1983009808
  %v10552 = vunpack.c.0.s8 %v10551
  %v10553 = vlaneseq
  %v10554 = vshrl.u32 %v10553, 7
  %v10555 = vsub.s32 %v10552, %v10554
  %v10556 = vrot.slane %v10548, %v10555
  %v10558 = vunpack.c.l.s4 1983009808
  %v10559 = vunpack.c.0.s8 %v10558
  %v10560 = vlaneseq
  %v10561 = vshrl.u32 %v10560, 7
  %v10562 = vsub.s32 %v10559, %v10561
  %v10563 = vrot.slane %v10549, %v10562
  %v10564 = vcombine.low %v10556, %v10563
  %v10565 = vcombine.low %v10346, %v10347
  %v10566 = vcombine.low %v10348, %v10349
  %v10568 = vunpack.c.l.s4 1983009808
  %v10569 = vunpack.c.0.s8 %v10568
  %v10570 = vlaneseq
  %v10571 = vshrl.u32 %v10570, 7
  %v10572 = vsub.s32 %v10569, %v10571
  %v10573 = vrot.slane %v10565, %v10572
  %v10575 = vunpack.c.l.s4 1983009808
  %v10576 = vunpack.c.0.s8 %v10575
  %v10577 = vlaneseq
  %v10578 = vshrl.u32 %v10577, 7
  %v10579 = vsub.s32 %v10576, %v10578
  %v10580 = vrot.slane %v10566, %v10579
  %v10581 = vcombine.low %v10573, %v10580
  %v10582 = vcombine.low %v10350, %v10351
  %v10583 = vcombine.low %v10352, %v10353
  %v10585 = vunpack.c.l.s4 1983009808
  %v10586 = vunpack.c.0.s8 %v10585
  %v10587 = vlaneseq
  %v10588 = vshrl.u32 %v10587, 7
  %v10589 = vsub.s32 %v10586, %v10588
  %v10590 = vrot.slane %v10582, %v10589
  %v10592 = vunpack.c.l.s4 1983009808
  %v10593 = vunpack.c.0.s8 %v10592
  %v10594 = vlaneseq
  %v10595 = vshrl.u32 %v10594, 7
  %v10596 = vsub.s32 %v10593, %v10595
  %v10597 = vrot.slane %v10583, %v10596
  %v10598 = vcombine.low %v10590, %v10597
  %v10599 = vcombine.low %v10354, %v10355
  %v10600 = vcombine.low %v10356, %v10357
  %v10602 = vunpack.c.l.s4 1983009808
  %v10603 = vunpack.c.0.s8 %v10602
  %v10604 = vlaneseq
  %v10605 = vshrl.u32 %v10604, 7
  %v10606 = vsub.s32 %v10603, %v10605
  %v10607 = vrot.slane %v10599, %v10606
  %v10609 = vunpack.c.l.s4 1983009808
  %v10610 = vunpack.c.0.s8 %v10609
  %v10611 = vlaneseq
  %v10612 = vshrl.u32 %v10611, 7
  %v10613 = vsub.s32 %v10610, %v10612
  %v10614 = vrot.slane %v10600, %v10613
  %v10615 = vcombine.low %v10607, %v10614
  %v10616 = vcombine.low %v10358, %v10359
  %v10617 = vcombine.low %v10360, %v10361
  %v10619 = vunpack.c.l.s4 1983009808
  %v10620 = vunpack.c.0.s8 %v10619
  %v10621 = vlaneseq
  %v10622 = vshrl.u32 %v10621, 7
  %v10623 = vsub.s32 %v10620, %v10622
  %v10624 = vrot.slane %v10616, %v10623
  %v10626 = vunpack.c.l.s4 1983009808
  %v10627 = vunpack.c.0.s8 %v10626
  %v10628 = vlaneseq
  %v10629 = vshrl.u32 %v10628, 7
  %v10630 = vsub.s32 %v10627, %v10629
  %v10631 = vrot.slane %v10617, %v10630
  %v10632 = vcombine.low %v10624, %v10631
  %v10633 = vcombine.low %v10362, %v10363
  %v10634 = vcombine.low %v10364, %v10365
  %v10636 = vunpack.c.l.s4 1983009808
  %v10637 = vunpack.c.0.s8 %v10636
  %v10638 = vlaneseq
  %v10639 = vshrl.u32 %v10638, 7
  %v10640 = vsub.s32 %v10637, %v10639
  %v10641 = vrot.slane %v10633, %v10640
  %v10643 = vunpack.c.l.s4 1983009808
  %v10644 = vunpack.c.0.s8 %v10643
  %v10645 = vlaneseq
  %v10646 = vshrl.u32 %v10645, 7
  %v10647 = vsub.s32 %v10644, %v10646
  %v10648 = vrot.slane %v10634, %v10647
  %v10649 = vcombine.low %v10641, %v10648
  %v10650 = vcombine.low %v10366, %v10367
  %v10651 = vcombine.low %v10368, %v10369
  %v10653 = vunpack.c.l.s4 1983009808
  %v10654 = vunpack.c.0.s8 %v10653
  %v10655 = vlaneseq
  %v10656 = vshrl.u32 %v10655, 7
  %v10657 = vsub.s32 %v10654, %v10656
  %v10658 = vrot.slane %v10650, %v10657
  %v10660 = vunpack.c.l.s4 1983009808
  %v10661 = vunpack.c.0.s8 %v10660
  %v10662 = vlaneseq
  %v10663 = vshrl.u32 %v10662, 7
  %v10664 = vsub.s32 %v10661, %v10663
  %v10665 = vrot.slane %v10651, %v10664
  %v10666 = vcombine.low %v10658, %v10665
  %v10667 = vcombine.low %v10370, %v10371
  %v10668 = vcombine.low %v10372, %v10373
  %v10670 = vunpack.c.l.s4 1983009808
  %v10671 = vunpack.c.0.s8 %v10670
  %v10672 = vlaneseq
  %v10673 = vshrl.u32 %v10672, 7
  %v10674 = vsub.s32 %v10671, %v10673
  %v10675 = vrot.slane %v10667, %v10674
  %v10677 = vunpack.c.l.s4 1983009808
  %v10678 = vunpack.c.0.s8 %v10677
  %v10679 = vlaneseq
  %v10680 = vshrl.u32 %v10679, 7
  %v10681 = vsub.s32 %v10678, %v10680
  %v10682 = vrot.slane %v10668, %v10681
  %v10683 = vcombine.low %v10675, %v10682
  %v10684 = vcombine.low %v10374, %v10375
  %v10685 = vcombine.low %v10376, %v10377
  %v10687 = vunpack.c.l.s4 1983009808
  %v10688 = vunpack.c.0.s8 %v10687
  %v10689 = vlaneseq
  %v10690 = vshrl.u32 %v10689, 7
  %v10691 = vsub.s32 %v10688, %v10690
  %v10692 = vrot.slane %v10684, %v10691
  %v10694 = vunpack.c.l.s4 1983009808
  %v10695 = vunpack.c.0.s8 %v10694
  %v10696 = vlaneseq
  %v10697 = vshrl.u32 %v10696, 7
  %v10698 = vsub.s32 %v10695, %v10697
  %v10699 = vrot.slane %v10685, %v10698
  %v10700 = vcombine.low %v10692, %v10699
  %v10701 = vcombine.low %v10378, %v10379
  %v10702 = vcombine.low %v10380, %v10381
  %v10704 = vunpack.c.l.s4 1983009808
  %v10705 = vunpack.c.0.s8 %v10704
  %v10706 = vlaneseq
  %v10707 = vshrl.u32 %v10706, 7
  %v10708 = vsub.s32 %v10705, %v10707
  %v10709 = vrot.slane %v10701, %v10708
  %v10711 = vunpack.c.l.s4 1983009808
  %v10712 = vunpack.c.0.s8 %v10711
  %v10713 = vlaneseq
  %v10714 = vshrl.u32 %v10713, 7
  %v10715 = vsub.s32 %v10712, %v10714
  %v10716 = vrot.slane %v10702, %v10715
  %v10717 = vcombine.low %v10709, %v10716
  %v10734 = vpack.c.bf16 %v10479, %v10462
  %v10735 = vpack.c.bf16 %v10513, %v10496
  %v10736 = vpack.c.bf16 %v10547, %v10530
  %v10737 = vpack.c.bf16 %v10581, %v10564
  %v10738 = vpack.c.bf16 %v10615, %v10598
  %v10739 = vpack.c.bf16 %v10649, %v10632
  %v10740 = vpack.c.bf16 %v10683, %v10666
  %v10741 = vpack.c.bf16 %v10717, %v10700
  %v10742 = vld [vmem:[%s9] sm:$0xf]
  %v10743 = vld [vmem:[%s0] sm:$0xf]
  %v10744 = vld [vmem:[%s0 + $0x4] sm:$0xf]
  %v10745 = vld [vmem:[%s0 + $0x8] sm:$0xf]
  %v10746 = vld [vmem:[%s0 + $0xc] sm:$0xf]
  %v10747 = vld [vmem:[%s0 + $0x10] sm:$0xf]
  %v10748 = vld [vmem:[%s0 + $0x14] sm:$0xf]
  %v10749 = vld [vmem:[%s0 + $0x18] sm:$0xf]
  %v10750 = vld [vmem:[%s0 + $0x1c] sm:$0xf]
  %v10751 = vld [vmem:[%s0 + $0x20] sm:$0xf]
  %v10752 = vld [vmem:[%s0 + $0x24] sm:$0xf]
  %v10753 = vld [vmem:[%s0 + $0x28] sm:$0xf]
  %v10754 = vld [vmem:[%s0 + $0x2c] sm:$0xf]
  %v10755 = vld [vmem:[%s0 + $0x30] sm:$0xf]
  %v10756 = vld [vmem:[%s0 + $0x34] sm:$0xf]
  %v10757 = vld [vmem:[%s0 + $0x38] sm:$0xf]
  %v10758 = vld [vmem:[%s0 + $0x3c] sm:$0xf]
  %v10759 = vunpack.c.l.bf16 %v10743
  %v10760 = vunpack.c.l.bf16 %v10744
  %v10761 = vunpack.c.l.bf16 %v10745
  %v10762 = vunpack.c.l.bf16 %v10746
  %v10763 = vunpack.c.l.bf16 %v10747
  %v10764 = vunpack.c.l.bf16 %v10748
  %v10765 = vunpack.c.l.bf16 %v10749
  %v10766 = vunpack.c.l.bf16 %v10750
  %v10767 = vunpack.c.l.bf16 %v10751
  %v10768 = vunpack.c.l.bf16 %v10752
  %v10769 = vunpack.c.l.bf16 %v10753
  %v10770 = vunpack.c.l.bf16 %v10754
  %v10771 = vunpack.c.l.bf16 %v10755
  %v10772 = vunpack.c.l.bf16 %v10756
  %v10773 = vunpack.c.l.bf16 %v10757
  %v10774 = vunpack.c.l.bf16 %v10758
  %v10775 = vld [vmem:[%s1] sm:$0x1]
  %v10777 = vlaneseq
  %v10778 = vshrl.u32 %v10777, 7
  %v10779 = vsub.s32 0, %v10778
  %v10780 = vrot.slane %v10775, %v10779
  %v10782 = vmul.f32 %v10759, %v10780
  %v10783 = vmul.f32 %v10760, %v10780
  %v10784 = vmul.f32 %v10761, %v10780
  %v10785 = vmul.f32 %v10762, %v10780
  %v10786 = vmul.f32 %v10763, %v10780
  %v10787 = vmul.f32 %v10764, %v10780
  %v10788 = vmul.f32 %v10765, %v10780
  %v10789 = vmul.f32 %v10766, %v10780
  %v10790 = vmul.f32 %v10767, %v10780
  %v10791 = vmul.f32 %v10768, %v10780
  %v10792 = vmul.f32 %v10769, %v10780
  %v10793 = vmul.f32 %v10770, %v10780
  %v10794 = vmul.f32 %v10771, %v10780
  %v10795 = vmul.f32 %v10772, %v10780
  %v10796 = vmul.f32 %v10773, %v10780
  %v10797 = vmul.f32 %v10774, %v10780
  %v10798 = vld [vmem:[%s2] sm:$0x1]
  %v10800 = vlaneseq
  %v10801 = vshrl.u32 %v10800, 7
  %v10802 = vsub.s32 0, %v10801
  %v10803 = vrot.slane %v10798, %v10802
  %v10805 = vadd.f32 %v10782, %v10803
  %v10806 = vadd.f32 %v10783, %v10803
  %v10807 = vadd.f32 %v10784, %v10803
  %v10808 = vadd.f32 %v10785, %v10803
  %v10809 = vadd.f32 %v10786, %v10803
  %v10810 = vadd.f32 %v10787, %v10803
  %v10811 = vadd.f32 %v10788, %v10803
  %v10812 = vadd.f32 %v10789, %v10803
  %v10813 = vadd.f32 %v10790, %v10803
  %v10814 = vadd.f32 %v10791, %v10803
  %v10815 = vadd.f32 %v10792, %v10803
  %v10816 = vadd.f32 %v10793, %v10803
  %v10817 = vadd.f32 %v10794, %v10803
  %v10818 = vadd.f32 %v10795, %v10803
  %v10819 = vadd.f32 %v10796, %v10803
  %v10820 = vadd.f32 %v10797, %v10803
  %v10821 = vmax.f32 %v10805, 0.0
  %v10822 = vmax.f32 %v10806, 0.0
  %v10823 = vmax.f32 %v10807, 0.0
  %v10824 = vmax.f32 %v10808, 0.0
  %v10825 = vmax.f32 %v10809, 0.0
  %v10826 = vmax.f32 %v10810, 0.0
  %v10827 = vmax.f32 %v10811, 0.0
  %v10828 = vmax.f32 %v10812, 0.0
  %v10829 = vmax.f32 %v10813, 0.0
  %v10830 = vmax.f32 %v10814, 0.0
  %v10831 = vmax.f32 %v10815, 0.0
  %v10832 = vmax.f32 %v10816, 0.0
  %v10833 = vmax.f32 %v10817, 0.0
  %v10834 = vmax.f32 %v10818, 0.0
  %v10835 = vmax.f32 %v10819, 0.0
  %v10836 = vmax.f32 %v10820, 0.0
  %v10837 = vpack.c.bf16 %v10822, %v10821
  %v10838 = vpack.c.bf16 %v10824, %v10823
  %v10839 = vpack.c.bf16 %v10826, %v10825
  %v10840 = vpack.c.bf16 %v10828, %v10827
  %v10841 = vpack.c.bf16 %v10830, %v10829
  %v10842 = vpack.c.bf16 %v10832, %v10831
  %v10843 = vpack.c.bf16 %v10834, %v10833
  %v10844 = vpack.c.bf16 %v10836, %v10835
  %v10845 = vld [vmem:[%s10] sm:$0xf]
  %v10846 = vld [vmem:[%s10 + $0x4] sm:$0xf]
  %v10849 = vunpack.c.l.b16 %v10845
  %v10850 = vunpack.c.l.b16 %v10846
  %v10851 = vpack.c.b16 %v10850, %v10849
  %v10854 = vsel %vm149, %v10837, 0
  %v10857 = vsel %vm149, %v10838, 0
  %v10860 = vsel %vm149, %v10839, 0
  %v10863 = vsel %vm149, %v10840, 0
  %v10866 = vsel %vm149, %v10841, 0
  %v10869 = vsel %vm149, %v10842, 0
  %v10872 = vsel %vm149, %v10843, 0
  %v10875 = vsel %vm149, %v10844, 0
  %10877 = vmatprep.subr.bf16.mxu0 0
  %10878 = vmatpush1.bf16.msra.mxu0 %v10851
  %10879 = vmatprep.subr.bf16.mxu0 0
  %10880 = vmatpush1.bf16.msra.mxu0 0
  %10881 = vmatprep.subr.bf16.mxu0 0
  %10882 = vmatpush1.bf16.msra.mxu0 0
  %10883 = vmatprep.subr.bf16.mxu0 0
  %10884 = vmatpush1.bf16.msra.mxu0 0
  %10885 = vmatprep.subr.bf16.mxu0 0
  %10886 = vmatpush1.bf16.msra.mxu0 0
  %10887 = vmatprep.subr.bf16.mxu0 0
  %10888 = vmatpush1.bf16.msra.mxu0 0
  %10889 = vmatprep.subr.bf16.mxu0 0
  %10890 = vmatpush1.bf16.msra.mxu0 0
  %10891 = vmatprep.subr.bf16.mxu0 0
  %10892 = vmatpush1.bf16.msra.mxu0 0
  %10893 = vmatprep.subr.bf16.mxu0 0
  %10894 = vmatpush1.bf16.msra.mxu0 0
  %10895 = vmatprep.subr.bf16.mxu0 0
  %10896 = vmatpush1.bf16.msra.mxu0 0
  %10897 = vmatprep.subr.bf16.mxu0 0
  %10898 = vmatpush1.bf16.msra.mxu0 0
  %10899 = vmatprep.subr.bf16.mxu0 0
  %10900 = vmatpush1.bf16.msra.mxu0 0
  %10901 = vmatprep.subr.bf16.mxu0 0
  %10902 = vmatpush1.bf16.msra.mxu0 0
  %10903 = vmatprep.subr.bf16.mxu0 0
  %10904 = vmatpush1.bf16.msra.mxu0 0
  %10905 = vmatprep.subr.bf16.mxu0 0
  %10906 = vmatpush1.bf16.msra.mxu0 0
  %10907 = vmatprep.subr.bf16.mxu0 0
  %10908 = vmatpush1.bf16.msra.mxu0 0
  %10909 = vmatprep.mubr.bf16.mxu0 0
  %10910 = vmatmul.mubr.bf16.gmra.mrb[0].mxu0 %v10854
  %v10911 = vpop.f32.mrb[0].mxu0
  %v10912 = vadd.f32 0.0, %v10911
  %v10913 = vpop.f32.mrb[0].mxu0
  %v10914 = vpop.f32.mrb[0].mxu0
  %v10915 = vadd.f32 0.0, %v10914
  %v10916 = vpop.f32.mrb[0].mxu0
  %10917 = vmatprep.mubr.bf16.mxu0 0
  %10918 = vmatmul.mubr.bf16.gmra.mrb[0].mxu0 %v10857
  %v10919 = vpop.f32.mrb[0].mxu0
  %v10920 = vadd.f32 0.0, %v10919
  %v10921 = vpop.f32.mrb[0].mxu0
  %v10922 = vpop.f32.mrb[0].mxu0
  %v10923 = vadd.f32 0.0, %v10922
  %v10924 = vpop.f32.mrb[0].mxu0
  %10925 = vmatprep.mubr.bf16.mxu0 0
  %10926 = vmatmul.mubr.bf16.gmra.mrb[0].mxu0 %v10860
  %v10927 = vpop.f32.mrb[0].mxu0
  %v10928 = vadd.f32 0.0, %v10927
  %v10929 = vpop.f32.mrb[0].mxu0
  %v10930 = vpop.f32.mrb[0].mxu0
  %v10931 = vadd.f32 0.0, %v10930
  %v10932 = vpop.f32.mrb[0].mxu0
  %10933 = vmatprep.mubr.bf16.mxu0 0
  %10934 = vmatmul.mubr.bf16.gmra.mrb[0].mxu0 %v10863
  %v10935 = vpop.f32.mrb[0].mxu0
  %v10936 = vadd.f32 0.0, %v10935
  %v10937 = vpop.f32.mrb[0].mxu0
  %v10938 = vpop.f32.mrb[0].mxu0
  %v10939 = vadd.f32 0.0, %v10938
  %v10940 = vpop.f32.mrb[0].mxu0
  %10941 = vmatprep.mubr.bf16.mxu0 0
  %10942 = vmatmul.mubr.bf16.gmra.mrb[0].mxu0 %v10866
  %v10943 = vpop.f32.mrb[0].mxu0
  %v10944 = vadd.f32 0.0, %v10943
  %v10945 = vpop.f32.mrb[0].mxu0
  %v10946 = vpop.f32.mrb[0].mxu0
  %v10947 = vadd.f32 0.0, %v10946
  %v10948 = vpop.f32.mrb[0].mxu0
  %10949 = vmatprep.mubr.bf16.mxu0 0
  %10950 = vmatmul.mubr.bf16.gmra.mrb[0].mxu0 %v10869
  %v10951 = vpop.f32.mrb[0].mxu0
  %v10952 = vadd.f32 0.0, %v10951
  %v10953 = vpop.f32.mrb[0].mxu0
  %v10954 = vpop.f32.mrb[0].mxu0
  %v10955 = vadd.f32 0.0, %v10954
  %v10956 = vpop.f32.mrb[0].mxu0
  %10957 = vmatprep.mubr.bf16.mxu0 0
  %10958 = vmatmul.mubr.bf16.gmra.mrb[0].mxu0 %v10872
  %v10959 = vpop.f32.mrb[0].mxu0
  %v10960 = vadd.f32 0.0, %v10959
  %v10961 = vpop.f32.mrb[0].mxu0
  %v10962 = vpop.f32.mrb[0].mxu0
  %v10963 = vadd.f32 0.0, %v10962
  %v10964 = vpop.f32.mrb[0].mxu0
  %10965 = vmatprep.mubr.bf16.mxu0 0
  %10966 = vmatmul.mubr.bf16.gmra.mrb[0].mxu0 %v10875
  %v10967 = vpop.f32.mrb[0].mxu0
  %v10968 = vadd.f32 0.0, %v10967
  %v10969 = vpop.f32.mrb[0].mxu0
  %v10970 = vpop.f32.mrb[0].mxu0
  %v10971 = vadd.f32 0.0, %v10970
  %v10972 = vpop.f32.mrb[0].mxu0
  %10973 = vdwg.mxu0
  %v10975 = vsel %vm1749, %v10734, 0
  %v10978 = vsel %vm1749, %v10735, 0
  %v10981 = vsel %vm1749, %v10736, 0
  %v10984 = vsel %vm1749, %v10737, 0
  %v10987 = vsel %vm1749, %v10738, 0
  %v10990 = vsel %vm1749, %v10739, 0
  %v10993 = vsel %vm1749, %v10740, 0
  %v10996 = vsel %vm1749, %v10741, 0
  %v10999 = vsel %vm1780, %v10742, 0
  %11001 = vmatprep.subr.bf16.mxu0 0
  %11002 = vmatpush1.bf16.msra.mxu0 %v10999
  %11003 = vmatprep.subr.bf16.mxu0 0
  %11004 = vmatpush1.bf16.msra.mxu0 0
  %11005 = vmatprep.subr.bf16.mxu0 0
  %11006 = vmatpush1.bf16.msra.mxu0 0
  %11007 = vmatprep.subr.bf16.mxu0 0
  %11008 = vmatpush1.bf16.msra.mxu0 0
  %11009 = vmatprep.subr.bf16.mxu0 0
  %11010 = vmatpush1.bf16.msra.mxu0 0
  %11011 = vmatprep.subr.bf16.mxu0 0
  %11012 = vmatpush1.bf16.msra.mxu0 0
  %11013 = vmatprep.subr.bf16.mxu0 0
  %11014 = vmatpush1.bf16.msra.mxu0 0
  %11015 = vmatprep.subr.bf16.mxu0 0
  %11016 = vmatpush1.bf16.msra.mxu0 0
  %11017 = vmatprep.subr.bf16.mxu0 0
  %11018 = vmatpush1.bf16.msra.mxu0 0
  %11019 = vmatprep.subr.bf16.mxu0 0
  %11020 = vmatpush1.bf16.msra.mxu0 0
  %11021 = vmatprep.subr.bf16.mxu0 0
  %11022 = vmatpush1.bf16.msra.mxu0 0
  %11023 = vmatprep.subr.bf16.mxu0 0
  %11024 = vmatpush1.bf16.msra.mxu0 0
  %11025 = vmatprep.subr.bf16.mxu0 0
  %11026 = vmatpush1.bf16.msra.mxu0 0
  %11027 = vmatprep.subr.bf16.mxu0 0
  %11028 = vmatpush1.bf16.msra.mxu0 0
  %11029 = vmatprep.subr.bf16.mxu0 0
  %11030 = vmatpush1.bf16.msra.mxu0 0
  %11031 = vmatprep.subr.bf16.mxu0 0
  %11032 = vmatpush1.bf16.msra.mxu0 0
  %11033 = vmatprep.mubr.bf16.mxu0 0
  %11034 = vmatmul.mubr.bf16.gmra.mrb[0].mxu0 %v10975
  %v11035 = vpop.f32.mrb[0].mxu0
  %v11036 = vadd.f32 %v10912, %v11035
  %v11037 = vpop.f32.mrb[0].mxu0
  %v11038 = vpop.f32.mrb[0].mxu0
  %v11039 = vadd.f32 %v10915, %v11038
  %v11040 = vpop.f32.mrb[0].mxu0
  %11041 = vmatprep.mubr.bf16.mxu0 0
  %11042 = vmatmul.mubr.bf16.gmra.mrb[0].mxu0 %v10978
  %v11043 = vpop.f32.mrb[0].mxu0
  %v11044 = vadd.f32 %v10920, %v11043
  %v11045 = vpop.f32.mrb[0].mxu0
  %v11046 = vpop.f32.mrb[0].mxu0
  %v11047 = vadd.f32 %v10923, %v11046
  %v11048 = vpop.f32.mrb[0].mxu0
  %11049 = vmatprep.mubr.bf16.mxu0 0
  %11050 = vmatmul.mubr.bf16.gmra.mrb[0].mxu0 %v10981
  %v11051 = vpop.f32.mrb[0].mxu0
  %v11052 = vadd.f32 %v10928, %v11051
  %v11053 = vpop.f32.mrb[0].mxu0
  %v11054 = vpop.f32.mrb[0].mxu0
  %v11055 = vadd.f32 %v10931, %v11054
  %v11056 = vpop.f32.mrb[0].mxu0
  %11057 = vmatprep.mubr.bf16.mxu0 0
  %11058 = vmatmul.mubr.bf16.gmra.mrb[0].mxu0 %v10984
  %v11059 = vpop.f32.mrb[0].mxu0
  %v11060 = vadd.f32 %v10936, %v11059
  %v11061 = vpop.f32.mrb[0].mxu0
  %v11062 = vpop.f32.mrb[0].mxu0
  %v11063 = vadd.f32 %v10939, %v11062
  %v11064 = vpop.f32.mrb[0].mxu0
  %11065 = vmatprep.mubr.bf16.mxu0 0
  %11066 = vmatmul.mubr.bf16.gmra.mrb[0].mxu0 %v10987
  %v11067 = vpop.f32.mrb[0].mxu0
  %v11068 = vadd.f32 %v10944, %v11067
  %v11069 = vpop.f32.mrb[0].mxu0
  %v11070 = vpop.f32.mrb[0].mxu0
  %v11071 = vadd.f32 %v10947, %v11070
  %v11072 = vpop.f32.mrb[0].mxu0
  %11073 = vmatprep.mubr.bf16.mxu0 0
  %11074 = vmatmul.mubr.bf16.gmra.mrb[0].mxu0 %v10990
  %v11075 = vpop.f32.mrb[0].mxu0
  %v11076 = vadd.f32 %v10952, %v11075
  %v11077 = vpop.f32.mrb[0].mxu0
  %v11078 = vpop.f32.mrb[0].mxu0
  %v11079 = vadd.f32 %v10955, %v11078
  %v11080 = vpop.f32.mrb[0].mxu0
  %11081 = vmatprep.mubr.bf16.mxu0 0
  %11082 = vmatmul.mubr.bf16.gmra.mrb[0].mxu0 %v10993
  %v11083 = vpop.f32.mrb[0].mxu0
  %v11084 = vadd.f32 %v10960, %v11083
  %v11085 = vpop.f32.mrb[0].mxu0
  %v11086 = vpop.f32.mrb[0].mxu0
  %v11087 = vadd.f32 %v10963, %v11086
  %v11088 = vpop.f32.mrb[0].mxu0
  %11089 = vmatprep.mubr.bf16.mxu0 0
  %11090 = vmatmul.mubr.bf16.gmra.mrb[0].mxu0 %v10996
  %v11091 = vpop.f32.mrb[0].mxu0
  %v11092 = vadd.f32 %v10968, %v11091
  %v11093 = vpop.f32.mrb[0].mxu0
  %v11094 = vpop.f32.mrb[0].mxu0
  %v11095 = vadd.f32 %v10971, %v11094
  %v11096 = vpop.f32.mrb[0].mxu0
  %11097 = vdwg.mxu0
  %v11098 = vpack.c.bf16 %v11039, %v11036
  %v11099 = vpack.c.bf16 %v11047, %v11044
  %v11100 = vpack.c.bf16 %v11055, %v11052
  %v11101 = vpack.c.bf16 %v11063, %v11060
  %v11102 = vpack.c.bf16 %v11071, %v11068
  %v11103 = vpack.c.bf16 %v11079, %v11076
  %v11104 = vpack.c.bf16 %v11087, %v11084
  %v11105 = vpack.c.bf16 %v11095, %v11092
  %v11114 = vunpack.c.l.b16 %v11098
  %v11115 = vunpack.c.h.b16 %v11098
  %v11116 = vunpack.c.l.b16 %v11099
  %v11117 = vunpack.c.h.b16 %v11099
  %v11118 = vunpack.c.l.b16 %v11100
  %v11119 = vunpack.c.h.b16 %v11100
  %v11120 = vunpack.c.l.b16 %v11101
  %v11121 = vunpack.c.h.b16 %v11101
  %v11122 = vunpack.c.l.b16 %v11102
  %v11123 = vunpack.c.h.b16 %v11102
  %v11124 = vunpack.c.l.b16 %v11103
  %v11125 = vunpack.c.h.b16 %v11103
  %v11126 = vunpack.c.l.b16 %v11104
  %v11127 = vunpack.c.h.b16 %v11104
  %v11128 = vunpack.c.l.b16 %v11105
  %v11129 = vunpack.c.h.b16 %v11105
  %v11130 = vpack.c.b16 %v11114, %v11114
  %v11131 = vpack.c.b16 %v11115, %v11115
  %v11132 = vpack.c.b16 %v11116, %v11116
  %v11133 = vpack.c.b16 %v11117, %v11117
  %v11134 = vpack.c.b16 %v11118, %v11118
  %v11135 = vpack.c.b16 %v11119, %v11119
  %v11136 = vpack.c.b16 %v11120, %v11120
  %v11137 = vpack.c.b16 %v11121, %v11121
  %v11138 = vpack.c.b16 %v11122, %v11122
  %v11139 = vpack.c.b16 %v11123, %v11123
  %v11140 = vpack.c.b16 %v11124, %v11124
  %v11141 = vpack.c.b16 %v11125, %v11125
  %v11142 = vpack.c.b16 %v11126, %v11126
  %v11143 = vpack.c.b16 %v11127, %v11127
  %v11144 = vpack.c.b16 %v11128, %v11128
  %v11145 = vpack.c.b16 %v11129, %v11129
  %vm11162 = vcmask 257024
  %11163 = vst.msk [vmem:[%s11] sm:$0xf] %vm11162, %v11130
  %11164 = vst.msk [vmem:[%s11 + $0x4] sm:$0xf] %vm11162, %v11131
  %11165 = vst.msk [vmem:[%s11 + $0x8] sm:$0xf] %vm11162, %v11132
  %11166 = vst.msk [vmem:[%s11 + $0xc] sm:$0xf] %vm11162, %v11133
  %11167 = vst.msk [vmem:[%s11 + $0x10] sm:$0xf] %vm11162, %v11134
  %11168 = vst.msk [vmem:[%s11 + $0x14] sm:$0xf] %vm11162, %v11135
  %11169 = vst.msk [vmem:[%s11 + $0x18] sm:$0xf] %vm11162, %v11136
  %11170 = vst.msk [vmem:[%s11 + $0x1c] sm:$0xf] %vm11162, %v11137
  %11171 = vst.msk [vmem:[%s11 + $0x20] sm:$0xf] %vm11162, %v11138
  %11172 = vst.msk [vmem:[%s11 + $0x24] sm:$0xf] %vm11162, %v11139
  %11173 = vst.msk [vmem:[%s11 + $0x28] sm:$0xf] %vm11162, %v11140
  %11174 = vst.msk [vmem:[%s11 + $0x2c] sm:$0xf] %vm11162, %v11141
  %11175 = vst.msk [vmem:[%s11 + $0x30] sm:$0xf] %vm11162, %v11142
  %11176 = vst.msk [vmem:[%s11 + $0x34] sm:$0xf] %vm11162, %v11143
  %11177 = vst.msk [vmem:[%s11 + $0x38] sm:$0xf] %vm11162, %v11144
  %11178 = vst.msk [vmem:[%s11 + $0x3c] sm:$0xf] %vm11162, %v11145
  // Predicated region
  $region46: #{tpu_custom_call.1} parent=0 // pred_check
    _
  $region47: #{tpu_custom_call.1} parent=0 // pred_check_branch
    %11180 = sbr.rel (0) target = $region49
  $region48: #{tpu_custom_call.1} parent=0 // pred_region
    _
  $region49: #{tpu_custom_call.1} parent=0 // pred_fallthru
    _
  // Predicated region
  $region50: #{tpu_custom_call.1} parent=0 // pred_check
    _
  $region51: #{tpu_custom_call.1} parent=0 // pred_check_branch
    %11182 = sbr.rel (0) target = $region53
  $region52: #{tpu_custom_call.1} parent=0 // pred_region
    _
  $region53: #{tpu_custom_call.1} parent=0 // pred_fallthru
    _

</llo_original>
